<compile_context>
chip_gen: v5e
topology: v5e:2x2
jax: 0.10.0
libtpu: 0.0.40
codegen_flags: <defaults>
</compile_context>

<pallas_src>
import functools
import math

import jax
import jax.numpy as jnp
from jax.experimental import pallas as pl
from jax.experimental.pallas import tpu as pltpu

# -------- config: small, lane-dense stand-in for xlm-roberta-large -----------
HIDDEN = 128
NUM_HEADS = 2
HEAD_DIM = HIDDEN // NUM_HEADS
NUM_LAYERS = 2
INTERMEDIATE = 512
VOCAB = 256          # tokenizer_len
SEQ = 128
MAX_POS = SEQ + 2    # headroom for cumsum(mask)+pad_idx position ids
NUM_LABELS = 3       # label_nbr
CLS_PAD = 128        # classifier output padded to a lane-dense width
PAD_IDX = 1
LN_EPS = 1e-5


# ----------------------------- shared math -----------------------------------
def _ln(y, g, b, eps):
    """LayerNorm over the last axis, f32 statistics."""
    mu = jnp.mean(y, axis=-1, keepdims=True)
    yc = y - mu
    var = jnp.mean(yc * yc, axis=-1, keepdims=True)
    return yc * jax.lax.rsqrt(var + eps) * g + b


# ----------------------------- fused encoder kernel ---------------------------
def _encoder_kernel(x_ref, mask_ref,
                    emb_g_ref, emb_b_ref,
                    wqkv_ref, bqkv_ref, wo_ref, bo_ref, ln1_g_ref, ln1_b_ref,
                    wi_ref, bi_ref, wo2_ref, bo2_ref, ln2_g_ref, ln2_b_ref,
                    pool_w_ref, pool_b_ref, cls_w_ref, cls_b_ref,
                    o_ref, ctx_scratch,
                    *, num_layers, num_heads, head_dim, eps):
    """One batch element end-to-end: emb LN -> L transformer layers -> pooler -> classifier."""
    H = num_heads * head_dim
    mask = mask_ref[0]                                   # (1, S) additive bias
    x = _ln(x_ref[0], emb_g_ref[...], emb_b_ref[...], eps)   # (S, H) f32

    for l in range(num_layers):                          # static unroll (tiny L)
        # ---- attention block -------------------------------------------------
        qkv = jnp.dot(x.astype(jnp.bfloat16), wqkv_ref[l],
                      preferred_element_type=jnp.float32)
        qkv = qkv + bqkv_ref[l]                          # (S, 3H); 1/sqrt(D) folded into q

        for h in range(num_heads):                       # static, tiny head count
            lo = h * head_dim
            qh = qkv[:, lo:lo + head_dim].astype(jnp.bfloat16)
            kh = qkv[:, H + lo:H + lo + head_dim].astype(jnp.bfloat16)
            vh = qkv[:, 2 * H + lo:2 * H + lo + head_dim].astype(jnp.bfloat16)

            s = jax.lax.dot_general(qh, kh, (((1,), (1,)), ((), ())),
                                    preferred_element_type=jnp.float32)   # (S, S)
            s = s + mask
            s = s - jnp.max(s, axis=-1, keepdims=True)
            p = jnp.exp(s)
            p = p * pl.reciprocal(jnp.sum(p, axis=-1, keepdims=True), approx=True)

            # per-head context stored at its static lane offset; one K=128
            # out-projection matmul afterwards (instead of per-head K=64 adds)
            ctx_scratch[:, lo:lo + head_dim] = jnp.dot(
                p.astype(jnp.bfloat16), vh, preferred_element_type=jnp.float32)

        attn = jnp.dot(ctx_scratch[...].astype(jnp.bfloat16), wo_ref[l],
                       preferred_element_type=jnp.float32) + bo_ref[l]
        x = _ln(x + attn, ln1_g_ref[l], ln1_b_ref[l], eps)

        # ---- FFN block -------------------------------------------------------
        hpre = jnp.dot(x.astype(jnp.bfloat16), wi_ref[l],
                       preferred_element_type=jnp.float32) + bi_ref[l]
        # GELU (tanh approximation), kept in f32 (v5e has no bf16 VPU/EUP).
        # TODO(synk): HF XLM-R uses the exact erf GELU; tanh approx differs ~1e-3.
        c = math.sqrt(2.0 / math.pi)
        hact = 0.5 * hpre * (1.0 + jnp.tanh(c * (hpre + 0.044715 * hpre * hpre * hpre)))
        ffn = jnp.dot(hact.astype(jnp.bfloat16), wo2_ref[l],
                      preferred_element_type=jnp.float32) + bo2_ref[l]
        x = _ln(x + ffn, ln2_g_ref[l], ln2_b_ref[l], eps)

    # ---- pooler (dense + tanh) + classifier; dropout = identity (eval) -------
    # take the first 8 rows (one sublane tile); row 0 is the CLS token
    cls8 = x[0:8, :].astype(jnp.bfloat16)
    pooled = jnp.tanh(jnp.dot(cls8, pool_w_ref[...],
                              preferred_element_type=jnp.float32) + pool_b_ref[...])
    logits8 = jnp.dot(pooled.astype(jnp.bfloat16), cls_w_ref[...],
                      preferred_element_type=jnp.float32) + cls_b_ref[...]
    o_ref[0] = logits8[0:1, :]                           # (1, CLS_PAD) lane-dense store


def encoder_forward(params, x_emb, mask_bias):
    B, S, Hd = x_emb.shape
    L, I = NUM_LAYERS, INTERMEDIATE
    kernel = functools.partial(_encoder_kernel, num_layers=L,
                               num_heads=NUM_HEADS, head_dim=HEAD_DIM, eps=LN_EPS)

    def batch3(b): return (b, 0, 0)     # per-batch tiles
    def rep2(b): return (0, 0)          # replicated 2-D weights (DMA'd once)
    def rep3(b): return (0, 0, 0)       # replicated stacked (L, ..) weights

    in_specs = [
        pl.BlockSpec((1, S, Hd), batch3),           # x_emb
        pl.BlockSpec((1, 1, S), batch3),            # mask_bias
        pl.BlockSpec((1, Hd), rep2),                # emb_ln_g
        pl.BlockSpec((1, Hd), rep2),                # emb_ln_b
        pl.BlockSpec((L, Hd, 3 * Hd), rep3),        # wqkv (scale folded into Wq)
        pl.BlockSpec((L, 1, 3 * Hd), rep3),         # bqkv
        pl.BlockSpec((L, Hd, Hd), rep3),            # wo
        pl.BlockSpec((L, 1, Hd), rep3),             # bo
        pl.BlockSpec((L, 1, Hd), rep3),             # ln1_g
        pl.BlockSpec((L, 1, Hd), rep3),             # ln1_b
        pl.BlockSpec((L, Hd, I), rep3),             # wi
        pl.BlockSpec((L, 1, I), rep3),              # bi
        pl.BlockSpec((L, I, Hd), rep3),             # wo2
        pl.BlockSpec((L, 1, Hd), rep3),             # bo2
        pl.BlockSpec((L, 1, Hd), rep3),             # ln2_g
        pl.BlockSpec((L, 1, Hd), rep3),             # ln2_b
        pl.BlockSpec((Hd, Hd), rep2),               # pool_w
        pl.BlockSpec((1, Hd), rep2),                # pool_b
        pl.BlockSpec((Hd, CLS_PAD), rep2),          # cls_w_pad
        pl.BlockSpec((1, CLS_PAD), rep2),           # cls_b_pad
    ]

    return pl.pallas_call(
        kernel,
        out_shape=jax.ShapeDtypeStruct((B, 1, CLS_PAD), jnp.float32),
        grid=(B,),
        in_specs=in_specs,
        out_specs=pl.BlockSpec((1, 1, CLS_PAD), batch3),
        scratch_shapes=[pltpu.VMEM((SEQ, HIDDEN), jnp.float32)],   # ctx concat buffer
        compiler_params=pltpu.CompilerParams(dimension_semantics=("parallel",)),
    )(x_emb, mask_bias,
      params["emb_ln_g"], params["emb_ln_b"],
      params["wqkv"], params["bqkv"], params["wo"], params["bo"],
      params["ln1_g"], params["ln1_b"],
      params["wi"], params["bi"], params["wo2"], params["bo2"],
      params["ln2_g"], params["ln2_b"],
      params["pool_w"], params["pool_b"],
      params["cls_w_pad"], params["cls_b_pad"])


# ------------------------------- parameters -----------------------------------
def init_params(key):
    keys = iter(jax.random.split(key, 32))

    def rnd(shape):
        return 0.02 * jax.random.normal(next(keys), shape, dtype=jnp.float32)

    scale = 1.0 / math.sqrt(HEAD_DIM)
    # fused Wq|Wk|Wv with the 1/sqrt(D) attention scale folded into Wq / bq
    wqkv = rnd((NUM_LAYERS, HIDDEN, 3 * HIDDEN))
    wqkv = wqkv.at[:, :, :HIDDEN].multiply(scale)
    bqkv = rnd((NUM_LAYERS, 1, 3 * HIDDEN))
    bqkv = bqkv.at[:, :, :HIDDEN].multiply(scale)

    cls_w = rnd((HIDDEN, NUM_LABELS))
    cls_w_pad = jnp.zeros((HIDDEN, CLS_PAD), jnp.float32).at[:, :NUM_LABELS].set(cls_w)
    cls_b_pad = jnp.zeros((1, CLS_PAD), jnp.float32).at[:, :NUM_LABELS].set(rnd((1, NUM_LABELS)))

    return {
        "word_emb": rnd((VOCAB, HIDDEN)),
        "pos_emb": rnd((MAX_POS, HIDDEN)),
        "type_emb": rnd((1, HIDDEN)),
        "emb_ln_g": jnp.ones((1, HIDDEN), jnp.float32),
        "emb_ln_b": jnp.zeros((1, HIDDEN), jnp.float32),
        "wqkv": wqkv.astype(jnp.bfloat16),
        "bqkv": bqkv,
        "wo": rnd((NUM_LAYERS, HIDDEN, HIDDEN)).astype(jnp.bfloat16),
        "bo": rnd((NUM_LAYERS, 1, HIDDEN)),
        "ln1_g": jnp.ones((NUM_LAYERS, 1, HIDDEN), jnp.float32),
        "ln1_b": jnp.zeros((NUM_LAYERS, 1, HIDDEN), jnp.float32),
        "wi": rnd((NUM_LAYERS, HIDDEN, INTERMEDIATE)).astype(jnp.bfloat16),
        "bi": rnd((NUM_LAYERS, 1, INTERMEDIATE)),
        "wo2": rnd((NUM_LAYERS, INTERMEDIATE, HIDDEN)).astype(jnp.bfloat16),
        "bo2": rnd((NUM_LAYERS, 1, HIDDEN)),
        "ln2_g": jnp.ones((NUM_LAYERS, 1, HIDDEN), jnp.float32),
        "ln2_b": jnp.zeros((NUM_LAYERS, 1, HIDDEN), jnp.float32),
        "pool_w": rnd((HIDDEN, HIDDEN)).astype(jnp.bfloat16),
        "pool_b": rnd((1, HIDDEN)),
        "cls_w_pad": cls_w_pad.astype(jnp.bfloat16),
        "cls_b_pad": cls_b_pad,
    }


# ------------------------------- forward pass ----------------------------------
def forward(params, input_ids, attention_mask):
    B, S = input_ids.shape

    mask_f = attention_mask.astype(jnp.float32)
    mask_bias = ((1.0 - mask_f) * -1e9).reshape(B, 1, S)         # additive attention bias

    # XLM-R position ids: derived from input_ids != padding_idx (HF rule)
    pad_mask = (input_ids != PAD_IDX).astype(jnp.int32)
    pos_ids = jnp.cumsum(pad_mask, axis=1) * pad_mask + PAD_IDX

    # embedding gathers stay in XLA (no efficient Pallas equivalent needed here)
    x = (jnp.take(params["word_emb"], input_ids, axis=0)
         + jnp.take(params["pos_emb"], pos_ids, axis=0)
         + params["type_emb"][0][None, None, :])                 # (B, S, H) f32

    logits_pad = encoder_forward(params, x, mask_bias)           # (B, 1, CLS_PAD)
    return logits_pad[:, 0, :NUM_LABELS]                         # (B, NUM_LABELS)


# ------------------------------------ main --------------------------------------
if __name__ == "__main__":
    key = jax.random.PRNGKey(0)
    k_params, k_ids = jax.random.split(key)

    params = init_params(k_params)

    B, S = 2, SEQ
    input_ids = jax.random.randint(k_ids, (B, S), 2, VOCAB, dtype=jnp.int32)
    attention_mask = jnp.ones((B, S), dtype=jnp.int32)
    # make the second sequence shorter (last 40 tokens padded)
    attention_mask = attention_mask.at[1, S - 40:].set(0)
    input_ids = jnp.where(attention_mask == 1, input_ids, PAD_IDX)

    logits = jax.jit(forward)(params, input_ids, attention_mask)
    jax.block_until_ready(logits)
    assert logits.shape == (B, NUM_LABELS)
    print("KERNEL_OK")
</pallas_src>

<mosaic_0001>
module attributes {stable_mosaic.version = 11 : i64} {
  func.func @_encoder_kernel(%arg0: i32, %arg1: memref<1x128x128xf32, #tpu.memory_space<vmem>>, %arg2: memref<1x1x128xf32, #tpu.memory_space<vmem>>, %arg3: memref<1x128xf32, #tpu.memory_space<vmem>>, %arg4: memref<1x128xf32, #tpu.memory_space<vmem>>, %arg5: memref<2x128x384xbf16, #tpu.memory_space<vmem>>, %arg6: memref<2x1x384xf32, #tpu.memory_space<vmem>>, %arg7: memref<2x128x128xbf16, #tpu.memory_space<vmem>>, %arg8: memref<2x1x128xf32, #tpu.memory_space<vmem>>, %arg9: memref<2x1x128xf32, #tpu.memory_space<vmem>>, %arg10: memref<2x1x128xf32, #tpu.memory_space<vmem>>, %arg11: memref<2x128x512xbf16, #tpu.memory_space<vmem>>, %arg12: memref<2x1x512xf32, #tpu.memory_space<vmem>>, %arg13: memref<2x512x128xbf16, #tpu.memory_space<vmem>>, %arg14: memref<2x1x128xf32, #tpu.memory_space<vmem>>, %arg15: memref<2x1x128xf32, #tpu.memory_space<vmem>>, %arg16: memref<2x1x128xf32, #tpu.memory_space<vmem>>, %arg17: memref<128x128xbf16, #tpu.memory_space<vmem>>, %arg18: memref<1x128xf32, #tpu.memory_space<vmem>>, %arg19: memref<128x128xbf16, #tpu.memory_space<vmem>>, %arg20: memref<1x128xf32, #tpu.memory_space<vmem>>, %arg21: memref<1x1x128xf32, #tpu.memory_space<vmem>>, %arg22: memref<128x128xf32, #tpu.memory_space<vmem>>) attributes {dimension_semantics = [#tpu.dimension_semantics<parallel>], iteration_bounds = array<i64: 2>, scalar_prefetch = 0 : i64, scratch_operands = 1 : i64, tpu.core_type = #tpu.core_type<tc>, window_params = [{transform_indices = @transform_0, window_bounds = array<i64: 1, 128, 128>}, {transform_indices = @transform_1, window_bounds = array<i64: 1, 1, 128>}, {pipeline_mode = #tpu.pipeline_mode<synchronous>, transform_indices = @transform_2, window_bounds = array<i64: 1, 128>}, {pipeline_mode = #tpu.pipeline_mode<synchronous>, transform_indices = @transform_3, window_bounds = array<i64: 1, 128>}, {pipeline_mode = #tpu.pipeline_mode<synchronous>, transform_indices = @transform_4, window_bounds = array<i64: 2, 128, 384>}, {pipeline_mode = #tpu.pipeline_mode<synchronous>, transform_indices = @transform_5, window_bounds = array<i64: 2, 1, 384>}, {pipeline_mode = #tpu.pipeline_mode<synchronous>, transform_indices = @transform_6, window_bounds = array<i64: 2, 128, 128>}, {pipeline_mode = #tpu.pipeline_mode<synchronous>, transform_indices = @transform_7, window_bounds = array<i64: 2, 1, 128>}, {pipeline_mode = #tpu.pipeline_mode<synchronous>, transform_indices = @transform_8, window_bounds = array<i64: 2, 1, 128>}, {pipeline_mode = #tpu.pipeline_mode<synchronous>, transform_indices = @transform_9, window_bounds = array<i64: 2, 1, 128>}, {pipeline_mode = #tpu.pipeline_mode<synchronous>, transform_indices = @transform_10, window_bounds = array<i64: 2, 128, 512>}, {pipeline_mode = #tpu.pipeline_mode<synchronous>, transform_indices = @transform_11, window_bounds = array<i64: 2, 1, 512>}, {pipeline_mode = #tpu.pipeline_mode<synchronous>, transform_indices = @transform_12, window_bounds = array<i64: 2, 512, 128>}, {pipeline_mode = #tpu.pipeline_mode<synchronous>, transform_indices = @transform_13, window_bounds = array<i64: 2, 1, 128>}, {pipeline_mode = #tpu.pipeline_mode<synchronous>, transform_indices = @transform_14, window_bounds = array<i64: 2, 1, 128>}, {pipeline_mode = #tpu.pipeline_mode<synchronous>, transform_indices = @transform_15, window_bounds = array<i64: 2, 1, 128>}, {pipeline_mode = #tpu.pipeline_mode<synchronous>, transform_indices = @transform_16, window_bounds = array<i64: 128, 128>}, {pipeline_mode = #tpu.pipeline_mode<synchronous>, transform_indices = @transform_17, window_bounds = array<i64: 1, 128>}, {pipeline_mode = #tpu.pipeline_mode<synchronous>, transform_indices = @transform_18, window_bounds = array<i64: 128, 128>}, {pipeline_mode = #tpu.pipeline_mode<synchronous>, transform_indices = @transform_19, window_bounds = array<i64: 1, 128>}, {transform_indices = @transform_20, window_bounds = array<i64: 1, 1, 128>}]} {
    %c0 = arith.constant 0 : index
    %c0_0 = arith.constant 0 : index
    %c0_1 = arith.constant 0 : index
    %0 = vector.load %arg2[%c0, %c0_0, %c0_1] : memref<1x1x128xf32, #tpu.memory_space<vmem>>, vector<1x1x128xf32>
    %1 = vector.shape_cast %0 : vector<1x1x128xf32> to vector<1x128xf32>
    %c0_2 = arith.constant 0 : index
    %c0_3 = arith.constant 0 : index
    %c0_4 = arith.constant 0 : index
    %2 = vector.load %arg1[%c0_2, %c0_3, %c0_4] : memref<1x128x128xf32, #tpu.memory_space<vmem>>, vector<1x128x128xf32>
    %3 = vector.shape_cast %2 : vector<1x128x128xf32> to vector<128x128xf32>
    %c0_5 = arith.constant 0 : index
    %c0_6 = arith.constant 0 : index
    %4 = vector.load %arg3[%c0_5, %c0_6] : memref<1x128xf32, #tpu.memory_space<vmem>>, vector<1x128xf32>
    %c0_7 = arith.constant 0 : index
    %c0_8 = arith.constant 0 : index
    %5 = vector.load %arg4[%c0_7, %c0_8] : memref<1x128xf32, #tpu.memory_space<vmem>>, vector<1x128xf32>
    %cst = arith.constant dense<0.000000e+00> : vector<128xf32>
    %6 = vector.multi_reduction <add>, %3, %cst [1] : vector<128x128xf32> to vector<128xf32>
    %7 = vector.shape_cast %6 : vector<128xf32> to vector<128x1xf32>
    %cst_9 = arith.constant 1.280000e+02 : f32
    %8 = vector.broadcast %cst_9 : f32 to vector<128x1xf32>
    %9 = arith.divf %7, %8 : vector<128x1xf32>
    %10 = vector.broadcast %9 : vector<128x1xf32> to vector<128x128xf32>
    %11 = arith.subf %3, %10 : vector<128x128xf32>
    %12 = arith.mulf %11, %11 : vector<128x128xf32>
    %cst_10 = arith.constant dense<0.000000e+00> : vector<128xf32>
    %13 = vector.multi_reduction <add>, %12, %cst_10 [1] : vector<128x128xf32> to vector<128xf32>
    %14 = vector.shape_cast %13 : vector<128xf32> to vector<128x1xf32>
    %cst_11 = arith.constant 1.280000e+02 : f32
    %15 = vector.broadcast %cst_11 : f32 to vector<128x1xf32>
    %16 = arith.divf %14, %15 : vector<128x1xf32>
    %cst_12 = arith.constant 9.99999974E-6 : f32
    %17 = vector.broadcast %cst_12 : f32 to vector<128x1xf32>
    %18 = arith.addf %16, %17 : vector<128x1xf32>
    %19 = math.rsqrt %18 : vector<128x1xf32>
    %20 = vector.broadcast %19 : vector<128x1xf32> to vector<128x128xf32>
    %21 = arith.mulf %11, %20 : vector<128x128xf32>
    %22 = vector.broadcast %4 : vector<1x128xf32> to vector<128x128xf32>
    %23 = arith.mulf %21, %22 : vector<128x128xf32>
    %24 = vector.broadcast %5 : vector<1x128xf32> to vector<128x128xf32>
    %25 = arith.addf %23, %24 : vector<128x128xf32>
    %26 = arith.truncf %25 : vector<128x128xf32> to vector<128x128xbf16>
    %c0_13 = arith.constant 0 : index
    %c0_14 = arith.constant 0 : index
    %c0_15 = arith.constant 0 : index
    %27 = vector.load %arg5[%c0_13, %c0_14, %c0_15] : memref<2x128x384xbf16, #tpu.memory_space<vmem>>, vector<1x128x384xbf16>
    %28 = vector.shape_cast %27 : vector<1x128x384xbf16> to vector<128x384xbf16>
    %cst_16 = arith.constant dense<0.000000e+00> : vector<128x384xf32>
    %29 = tpu.matmul %26, %28, %cst_16 {dimension_numbers = #tpu.dot_dimension_numbers<[1], [0], [0], [1], [0, 0, 1, 1], [], []>} : vector<128x128xbf16>, vector<128x384xbf16>, vector<128x384xf32> -> vector<128x384xf32>
    %c0_17 = arith.constant 0 : index
    %c0_18 = arith.constant 0 : index
    %c0_19 = arith.constant 0 : index
    %30 = vector.load %arg6[%c0_17, %c0_18, %c0_19] : memref<2x1x384xf32, #tpu.memory_space<vmem>>, vector<1x1x384xf32>
    %31 = vector.shape_cast %30 : vector<1x1x384xf32> to vector<1x384xf32>
    %32 = vector.broadcast %31 : vector<1x384xf32> to vector<128x384xf32>
    %33 = arith.addf %29, %32 : vector<128x384xf32>
    %34 = vector.extract_strided_slice %33 {offsets = [0, 0], sizes = [128, 64], strides = [1, 1]} : vector<128x384xf32> to vector<128x64xf32>
    %35 = arith.truncf %34 : vector<128x64xf32> to vector<128x64xbf16>
    %36 = vector.extract_strided_slice %33 {offsets = [0, 128], sizes = [128, 64], strides = [1, 1]} : vector<128x384xf32> to vector<128x64xf32>
    %37 = arith.truncf %36 : vector<128x64xf32> to vector<128x64xbf16>
    %38 = vector.extract_strided_slice %33 {offsets = [0, 256], sizes = [128, 64], strides = [1, 1]} : vector<128x384xf32> to vector<128x64xf32>
    %39 = arith.truncf %38 : vector<128x64xf32> to vector<128x64xbf16>
    %cst_20 = arith.constant dense<0.000000e+00> : vector<128x128xf32>
    %40 = tpu.matmul %35, %37, %cst_20 {dimension_numbers = #tpu.dot_dimension_numbers<[1], [1], [0], [0], [0, 0, 1, 0], [], []>} : vector<128x64xbf16>, vector<128x64xbf16>, vector<128x128xf32> -> vector<128x128xf32>
    %41 = vector.broadcast %1 : vector<1x128xf32> to vector<128x128xf32>
    %42 = arith.addf %40, %41 : vector<128x128xf32>
    %cst_21 = arith.constant dense<0xFF800000> : vector<128xf32>
    %43 = vector.multi_reduction <maximumf>, %42, %cst_21 [1] : vector<128x128xf32> to vector<128xf32>
    %44 = vector.shape_cast %43 : vector<128xf32> to vector<128x1xf32>
    %45 = vector.broadcast %44 : vector<128x1xf32> to vector<128x128xf32>
    %46 = arith.subf %42, %45 : vector<128x128xf32>
    %47 = math.exp %46 : vector<128x128xf32>
    %cst_22 = arith.constant dense<0.000000e+00> : vector<128xf32>
    %48 = vector.multi_reduction <add>, %47, %cst_22 [1] : vector<128x128xf32> to vector<128xf32>
    %49 = vector.shape_cast %48 : vector<128xf32> to vector<128x1xf32>
    %50 = tpu.reciprocal %49 {approx = true} : vector<128x1xf32> -> vector<128x1xf32>
    %51 = vector.broadcast %50 : vector<128x1xf32> to vector<128x128xf32>
    %52 = arith.mulf %47, %51 : vector<128x128xf32>
    %53 = arith.truncf %52 : vector<128x128xf32> to vector<128x128xbf16>
    %cst_23 = arith.constant dense<0.000000e+00> : vector<128x64xf32>
    %54 = tpu.matmul %53, %39, %cst_23 {dimension_numbers = #tpu.dot_dimension_numbers<[1], [0], [0], [1], [0, 0, 1, 1], [], []>} : vector<128x128xbf16>, vector<128x64xbf16>, vector<128x64xf32> -> vector<128x64xf32>
    %c0_24 = arith.constant 0 : index
    %c0_25 = arith.constant 0 : index
    %55 = vector.load %arg22[%c0_24, %c0_25] : memref<128x128xf32, #tpu.memory_space<vmem>>, vector<128x64xf32>
    tpu.vector_store %arg22[%c0_24, %c0_25], %54 {strides = array<i32>} : memref<128x128xf32, #tpu.memory_space<vmem>>, vector<128x64xf32>,
    %56 = vector.extract_strided_slice %33 {offsets = [0, 64], sizes = [128, 64], strides = [1, 1]} : vector<128x384xf32> to vector<128x64xf32>
    %57 = arith.truncf %56 : vector<128x64xf32> to vector<128x64xbf16>
    %58 = vector.extract_strided_slice %33 {offsets = [0, 192], sizes = [128, 64], strides = [1, 1]} : vector<128x384xf32> to vector<128x64xf32>
    %59 = arith.truncf %58 : vector<128x64xf32> to vector<128x64xbf16>
    %60 = vector.extract_strided_slice %33 {offsets = [0, 320], sizes = [128, 64], strides = [1, 1]} : vector<128x384xf32> to vector<128x64xf32>
    %61 = arith.truncf %60 : vector<128x64xf32> to vector<128x64xbf16>
    %cst_26 = arith.constant dense<0.000000e+00> : vector<128x128xf32>
    %62 = tpu.matmul %57, %59, %cst_26 {dimension_numbers = #tpu.dot_dimension_numbers<[1], [1], [0], [0], [0, 0, 1, 0], [], []>} : vector<128x64xbf16>, vector<128x64xbf16>, vector<128x128xf32> -> vector<128x128xf32>
    %63 = vector.broadcast %1 : vector<1x128xf32> to vector<128x128xf32>
    %64 = arith.addf %62, %63 : vector<128x128xf32>
    %cst_27 = arith.constant dense<0xFF800000> : vector<128xf32>
    %65 = vector.multi_reduction <maximumf>, %64, %cst_27 [1] : vector<128x128xf32> to vector<128xf32>
    %66 = vector.shape_cast %65 : vector<128xf32> to vector<128x1xf32>
    %67 = vector.broadcast %66 : vector<128x1xf32> to vector<128x128xf32>
    %68 = arith.subf %64, %67 : vector<128x128xf32>
    %69 = math.exp %68 : vector<128x128xf32>
    %cst_28 = arith.constant dense<0.000000e+00> : vector<128xf32>
    %70 = vector.multi_reduction <add>, %69, %cst_28 [1] : vector<128x128xf32> to vector<128xf32>
    %71 = vector.shape_cast %70 : vector<128xf32> to vector<128x1xf32>
    %72 = tpu.reciprocal %71 {approx = true} : vector<128x1xf32> -> vector<128x1xf32>
    %73 = vector.broadcast %72 : vector<128x1xf32> to vector<128x128xf32>
    %74 = arith.mulf %69, %73 : vector<128x128xf32>
    %75 = arith.truncf %74 : vector<128x128xf32> to vector<128x128xbf16>
    %cst_29 = arith.constant dense<0.000000e+00> : vector<128x64xf32>
    %76 = tpu.matmul %75, %61, %cst_29 {dimension_numbers = #tpu.dot_dimension_numbers<[1], [0], [0], [1], [0, 0, 1, 1], [], []>} : vector<128x128xbf16>, vector<128x64xbf16>, vector<128x64xf32> -> vector<128x64xf32>
    %c0_30 = arith.constant 0 : index
    %c64 = arith.constant 64 : index
    %77 = vector.load %arg22[%c0_30, %c64] : memref<128x128xf32, #tpu.memory_space<vmem>>, vector<128x64xf32>
    tpu.vector_store %arg22[%c0_30, %c64], %76 {strides = array<i32>} : memref<128x128xf32, #tpu.memory_space<vmem>>, vector<128x64xf32>,
    %c0_31 = arith.constant 0 : index
    %c0_32 = arith.constant 0 : index
    %78 = vector.load %arg22[%c0_31, %c0_32] : memref<128x128xf32, #tpu.memory_space<vmem>>, vector<128x128xf32>
    %79 = arith.truncf %78 : vector<128x128xf32> to vector<128x128xbf16>
    %c0_33 = arith.constant 0 : index
    %c0_34 = arith.constant 0 : index
    %c0_35 = arith.constant 0 : index
    %80 = vector.load %arg7[%c0_33, %c0_34, %c0_35] : memref<2x128x128xbf16, #tpu.memory_space<vmem>>, vector<1x128x128xbf16>
    %81 = vector.shape_cast %80 : vector<1x128x128xbf16> to vector<128x128xbf16>
    %cst_36 = arith.constant dense<0.000000e+00> : vector<128x128xf32>
    %82 = tpu.matmul %79, %81, %cst_36 {dimension_numbers = #tpu.dot_dimension_numbers<[1], [0], [0], [1], [0, 0, 1, 1], [], []>} : vector<128x128xbf16>, vector<128x128xbf16>, vector<128x128xf32> -> vector<128x128xf32>
    %c0_37 = arith.constant 0 : index
    %c0_38 = arith.constant 0 : index
    %c0_39 = arith.constant 0 : index
    %83 = vector.load %arg8[%c0_37, %c0_38, %c0_39] : memref<2x1x128xf32, #tpu.memory_space<vmem>>, vector<1x1x128xf32>
    %84 = vector.shape_cast %83 : vector<1x1x128xf32> to vector<1x128xf32>
    %85 = vector.broadcast %84 : vector<1x128xf32> to vector<128x128xf32>
    %86 = arith.addf %82, %85 : vector<128x128xf32>
    %87 = arith.addf %25, %86 : vector<128x128xf32>
    %c0_40 = arith.constant 0 : index
    %c0_41 = arith.constant 0 : index
    %c0_42 = arith.constant 0 : index
    %88 = vector.load %arg9[%c0_40, %c0_41, %c0_42] : memref<2x1x128xf32, #tpu.memory_space<vmem>>, vector<1x1x128xf32>
    %89 = vector.shape_cast %88 : vector<1x1x128xf32> to vector<1x128xf32>
    %c0_43 = arith.constant 0 : index
    %c0_44 = arith.constant 0 : index
    %c0_45 = arith.constant 0 : index
    %90 = vector.load %arg10[%c0_43, %c0_44, %c0_45] : memref<2x1x128xf32, #tpu.memory_space<vmem>>, vector<1x1x128xf32>
    %91 = vector.shape_cast %90 : vector<1x1x128xf32> to vector<1x128xf32>
    %cst_46 = arith.constant dense<0.000000e+00> : vector<128xf32>
    %92 = vector.multi_reduction <add>, %87, %cst_46 [1] : vector<128x128xf32> to vector<128xf32>
    %93 = vector.shape_cast %92 : vector<128xf32> to vector<128x1xf32>
    %cst_47 = arith.constant 1.280000e+02 : f32
    %94 = vector.broadcast %cst_47 : f32 to vector<128x1xf32>
    %95 = arith.divf %93, %94 : vector<128x1xf32>
    %96 = vector.broadcast %95 : vector<128x1xf32> to vector<128x128xf32>
    %97 = arith.subf %87, %96 : vector<128x128xf32>
    %98 = arith.mulf %97, %97 : vector<128x128xf32>
    %cst_48 = arith.constant dense<0.000000e+00> : vector<128xf32>
    %99 = vector.multi_reduction <add>, %98, %cst_48 [1] : vector<128x128xf32> to vector<128xf32>
    %100 = vector.shape_cast %99 : vector<128xf32> to vector<128x1xf32>
    %cst_49 = arith.constant 1.280000e+02 : f32
    %101 = vector.broadcast %cst_49 : f32 to vector<128x1xf32>
    %102 = arith.divf %100, %101 : vector<128x1xf32>
    %cst_50 = arith.constant 9.99999974E-6 : f32
    %103 = vector.broadcast %cst_50 : f32 to vector<128x1xf32>
    %104 = arith.addf %102, %103 : vector<128x1xf32>
    %105 = math.rsqrt %104 : vector<128x1xf32>
    %106 = vector.broadcast %105 : vector<128x1xf32> to vector<128x128xf32>
    %107 = arith.mulf %97, %106 : vector<128x128xf32>
    %108 = vector.broadcast %89 : vector<1x128xf32> to vector<128x128xf32>
    %109 = arith.mulf %107, %108 : vector<128x128xf32>
    %110 = vector.broadcast %91 : vector<1x128xf32> to vector<128x128xf32>
    %111 = arith.addf %109, %110 : vector<128x128xf32>
    %112 = arith.truncf %111 : vector<128x128xf32> to vector<128x128xbf16>
    %c0_51 = arith.constant 0 : index
    %c0_52 = arith.constant 0 : index
    %c0_53 = arith.constant 0 : index
    %113 = vector.load %arg11[%c0_51, %c0_52, %c0_53] : memref<2x128x512xbf16, #tpu.memory_space<vmem>>, vector<1x128x512xbf16>
    %114 = vector.shape_cast %113 : vector<1x128x512xbf16> to vector<128x512xbf16>
    %cst_54 = arith.constant dense<0.000000e+00> : vector<128x512xf32>
    %115 = tpu.matmul %112, %114, %cst_54 {dimension_numbers = #tpu.dot_dimension_numbers<[1], [0], [0], [1], [0, 0, 1, 1], [], []>} : vector<128x128xbf16>, vector<128x512xbf16>, vector<128x512xf32> -> vector<128x512xf32>
    %c0_55 = arith.constant 0 : index
    %c0_56 = arith.constant 0 : index
    %c0_57 = arith.constant 0 : index
    %116 = vector.load %arg12[%c0_55, %c0_56, %c0_57] : memref<2x1x512xf32, #tpu.memory_space<vmem>>, vector<1x1x512xf32>
    %117 = vector.shape_cast %116 : vector<1x1x512xf32> to vector<1x512xf32>
    %118 = vector.broadcast %117 : vector<1x512xf32> to vector<128x512xf32>
    %119 = arith.addf %115, %118 : vector<128x512xf32>
    %cst_58 = arith.constant 5.000000e-01 : f32
    %120 = vector.broadcast %cst_58 : f32 to vector<128x512xf32>
    %121 = arith.mulf %120, %119 : vector<128x512xf32>
    %cst_59 = arith.constant 4.471500e-02 : f32
    %122 = vector.broadcast %cst_59 : f32 to vector<128x512xf32>
    %123 = arith.mulf %122, %119 : vector<128x512xf32>
    %124 = arith.mulf %123, %119 : vector<128x512xf32>
    %125 = arith.mulf %124, %119 : vector<128x512xf32>
    %126 = arith.addf %119, %125 : vector<128x512xf32>
    %cst_60 = arith.constant 0.797884583 : f32
    %127 = vector.broadcast %cst_60 : f32 to vector<128x512xf32>
    %128 = arith.mulf %127, %126 : vector<128x512xf32>
    %129 = math.tanh %128 : vector<128x512xf32>
    %cst_61 = arith.constant 1.000000e+00 : f32
    %130 = vector.broadcast %cst_61 : f32 to vector<128x512xf32>
    %131 = arith.addf %130, %129 : vector<128x512xf32>
    %132 = arith.mulf %121, %131 : vector<128x512xf32>
    %133 = arith.truncf %132 : vector<128x512xf32> to vector<128x512xbf16>
    %c0_62 = arith.constant 0 : index
    %c0_63 = arith.constant 0 : index
    %c0_64 = arith.constant 0 : index
    %134 = vector.load %arg13[%c0_62, %c0_63, %c0_64] : memref<2x512x128xbf16, #tpu.memory_space<vmem>>, vector<1x512x128xbf16>
    %135 = vector.shape_cast %134 : vector<1x512x128xbf16> to vector<512x128xbf16>
    %cst_65 = arith.constant dense<0.000000e+00> : vector<128x128xf32>
    %136 = tpu.matmul %133, %135, %cst_65 {dimension_numbers = #tpu.dot_dimension_numbers<[1], [0], [0], [1], [0, 0, 1, 1], [], []>} : vector<128x512xbf16>, vector<512x128xbf16>, vector<128x128xf32> -> vector<128x128xf32>
    %c0_66 = arith.constant 0 : index
    %c0_67 = arith.constant 0 : index
    %c0_68 = arith.constant 0 : index
    %137 = vector.load %arg14[%c0_66, %c0_67, %c0_68] : memref<2x1x128xf32, #tpu.memory_space<vmem>>, vector<1x1x128xf32>
    %138 = vector.shape_cast %137 : vector<1x1x128xf32> to vector<1x128xf32>
    %139 = vector.broadcast %138 : vector<1x128xf32> to vector<128x128xf32>
    %140 = arith.addf %136, %139 : vector<128x128xf32>
    %141 = arith.addf %111, %140 : vector<128x128xf32>
    %c0_69 = arith.constant 0 : index
    %c0_70 = arith.constant 0 : index
    %c0_71 = arith.constant 0 : index
    %142 = vector.load %arg15[%c0_69, %c0_70, %c0_71] : memref<2x1x128xf32, #tpu.memory_space<vmem>>, vector<1x1x128xf32>
    %143 = vector.shape_cast %142 : vector<1x1x128xf32> to vector<1x128xf32>
    %c0_72 = arith.constant 0 : index
    %c0_73 = arith.constant 0 : index
    %c0_74 = arith.constant 0 : index
    %144 = vector.load %arg16[%c0_72, %c0_73, %c0_74] : memref<2x1x128xf32, #tpu.memory_space<vmem>>, vector<1x1x128xf32>
    %145 = vector.shape_cast %144 : vector<1x1x128xf32> to vector<1x128xf32>
    %cst_75 = arith.constant dense<0.000000e+00> : vector<128xf32>
    %146 = vector.multi_reduction <add>, %141, %cst_75 [1] : vector<128x128xf32> to vector<128xf32>
    %147 = vector.shape_cast %146 : vector<128xf32> to vector<128x1xf32>
    %cst_76 = arith.constant 1.280000e+02 : f32
    %148 = vector.broadcast %cst_76 : f32 to vector<128x1xf32>
    %149 = arith.divf %147, %148 : vector<128x1xf32>
    %150 = vector.broadcast %149 : vector<128x1xf32> to vector<128x128xf32>
    %151 = arith.subf %141, %150 : vector<128x128xf32>
    %152 = arith.mulf %151, %151 : vector<128x128xf32>
    %cst_77 = arith.constant dense<0.000000e+00> : vector<128xf32>
    %153 = vector.multi_reduction <add>, %152, %cst_77 [1] : vector<128x128xf32> to vector<128xf32>
    %154 = vector.shape_cast %153 : vector<128xf32> to vector<128x1xf32>
    %cst_78 = arith.constant 1.280000e+02 : f32
    %155 = vector.broadcast %cst_78 : f32 to vector<128x1xf32>
    %156 = arith.divf %154, %155 : vector<128x1xf32>
    %cst_79 = arith.constant 9.99999974E-6 : f32
    %157 = vector.broadcast %cst_79 : f32 to vector<128x1xf32>
    %158 = arith.addf %156, %157 : vector<128x1xf32>
    %159 = math.rsqrt %158 : vector<128x1xf32>
    %160 = vector.broadcast %159 : vector<128x1xf32> to vector<128x128xf32>
    %161 = arith.mulf %151, %160 : vector<128x128xf32>
    %162 = vector.broadcast %143 : vector<1x128xf32> to vector<128x128xf32>
    %163 = arith.mulf %161, %162 : vector<128x128xf32>
    %164 = vector.broadcast %145 : vector<1x128xf32> to vector<128x128xf32>
    %165 = arith.addf %163, %164 : vector<128x128xf32>
    %166 = arith.truncf %165 : vector<128x128xf32> to vector<128x128xbf16>
    %c1 = arith.constant 1 : index
    %c0_80 = arith.constant 0 : index
    %c0_81 = arith.constant 0 : index
    %167 = vector.load %arg5[%c1, %c0_80, %c0_81] : memref<2x128x384xbf16, #tpu.memory_space<vmem>>, vector<1x128x384xbf16>
    %168 = vector.shape_cast %167 : vector<1x128x384xbf16> to vector<128x384xbf16>
    %cst_82 = arith.constant dense<0.000000e+00> : vector<128x384xf32>
    %169 = tpu.matmul %166, %168, %cst_82 {dimension_numbers = #tpu.dot_dimension_numbers<[1], [0], [0], [1], [0, 0, 1, 1], [], []>} : vector<128x128xbf16>, vector<128x384xbf16>, vector<128x384xf32> -> vector<128x384xf32>
    %c1_83 = arith.constant 1 : index
    %c0_84 = arith.constant 0 : index
    %c0_85 = arith.constant 0 : index
    %170 = vector.load %arg6[%c1_83, %c0_84, %c0_85] : memref<2x1x384xf32, #tpu.memory_space<vmem>>, vector<1x1x384xf32>
    %171 = vector.shape_cast %170 : vector<1x1x384xf32> to vector<1x384xf32>
    %172 = vector.broadcast %171 : vector<1x384xf32> to vector<128x384xf32>
    %173 = arith.addf %169, %172 : vector<128x384xf32>
    %174 = vector.extract_strided_slice %173 {offsets = [0, 0], sizes = [128, 64], strides = [1, 1]} : vector<128x384xf32> to vector<128x64xf32>
    %175 = arith.truncf %174 : vector<128x64xf32> to vector<128x64xbf16>
    %176 = vector.extract_strided_slice %173 {offsets = [0, 128], sizes = [128, 64], strides = [1, 1]} : vector<128x384xf32> to vector<128x64xf32>
    %177 = arith.truncf %176 : vector<128x64xf32> to vector<128x64xbf16>
    %178 = vector.extract_strided_slice %173 {offsets = [0, 256], sizes = [128, 64], strides = [1, 1]} : vector<128x384xf32> to vector<128x64xf32>
    %179 = arith.truncf %178 : vector<128x64xf32> to vector<128x64xbf16>
    %cst_86 = arith.constant dense<0.000000e+00> : vector<128x128xf32>
    %180 = tpu.matmul %175, %177, %cst_86 {dimension_numbers = #tpu.dot_dimension_numbers<[1], [1], [0], [0], [0, 0, 1, 0], [], []>} : vector<128x64xbf16>, vector<128x64xbf16>, vector<128x128xf32> -> vector<128x128xf32>
    %181 = vector.broadcast %1 : vector<1x128xf32> to vector<128x128xf32>
    %182 = arith.addf %180, %181 : vector<128x128xf32>
    %cst_87 = arith.constant dense<0xFF800000> : vector<128xf32>
    %183 = vector.multi_reduction <maximumf>, %182, %cst_87 [1] : vector<128x128xf32> to vector<128xf32>
    %184 = vector.shape_cast %183 : vector<128xf32> to vector<128x1xf32>
    %185 = vector.broadcast %184 : vector<128x1xf32> to vector<128x128xf32>
    %186 = arith.subf %182, %185 : vector<128x128xf32>
    %187 = math.exp %186 : vector<128x128xf32>
    %cst_88 = arith.constant dense<0.000000e+00> : vector<128xf32>
    %188 = vector.multi_reduction <add>, %187, %cst_88 [1] : vector<128x128xf32> to vector<128xf32>
    %189 = vector.shape_cast %188 : vector<128xf32> to vector<128x1xf32>
    %190 = tpu.reciprocal %189 {approx = true} : vector<128x1xf32> -> vector<128x1xf32>
    %191 = vector.broadcast %190 : vector<128x1xf32> to vector<128x128xf32>
    %192 = arith.mulf %187, %191 : vector<128x128xf32>
    %193 = arith.truncf %192 : vector<128x128xf32> to vector<128x128xbf16>
    %cst_89 = arith.constant dense<0.000000e+00> : vector<128x64xf32>
    %194 = tpu.matmul %193, %179, %cst_89 {dimension_numbers = #tpu.dot_dimension_numbers<[1], [0], [0], [1], [0, 0, 1, 1], [], []>} : vector<128x128xbf16>, vector<128x64xbf16>, vector<128x64xf32> -> vector<128x64xf32>
    %c0_90 = arith.constant 0 : index
    %c0_91 = arith.constant 0 : index
    %195 = vector.load %arg22[%c0_90, %c0_91] : memref<128x128xf32, #tpu.memory_space<vmem>>, vector<128x64xf32>
    tpu.vector_store %arg22[%c0_90, %c0_91], %194 {strides = array<i32>} : memref<128x128xf32, #tpu.memory_space<vmem>>, vector<128x64xf32>,
    %196 = vector.extract_strided_slice %173 {offsets = [0, 64], sizes = [128, 64], strides = [1, 1]} : vector<128x384xf32> to vector<128x64xf32>
    %197 = arith.truncf %196 : vector<128x64xf32> to vector<128x64xbf16>
    %198 = vector.extract_strided_slice %173 {offsets = [0, 192], sizes = [128, 64], strides = [1, 1]} : vector<128x384xf32> to vector<128x64xf32>
    %199 = arith.truncf %198 : vector<128x64xf32> to vector<128x64xbf16>
    %200 = vector.extract_strided_slice %173 {offsets = [0, 320], sizes = [128, 64], strides = [1, 1]} : vector<128x384xf32> to vector<128x64xf32>
    %201 = arith.truncf %200 : vector<128x64xf32> to vector<128x64xbf16>
    %cst_92 = arith.constant dense<0.000000e+00> : vector<128x128xf32>
    %202 = tpu.matmul %197, %199, %cst_92 {dimension_numbers = #tpu.dot_dimension_numbers<[1], [1], [0], [0], [0, 0, 1, 0], [], []>} : vector<128x64xbf16>, vector<128x64xbf16>, vector<128x128xf32> -> vector<128x128xf32>
    %203 = vector.broadcast %1 : vector<1x128xf32> to vector<128x128xf32>
    %204 = arith.addf %202, %203 : vector<128x128xf32>
    %cst_93 = arith.constant dense<0xFF800000> : vector<128xf32>
    %205 = vector.multi_reduction <maximumf>, %204, %cst_93 [1] : vector<128x128xf32> to vector<128xf32>
    %206 = vector.shape_cast %205 : vector<128xf32> to vector<128x1xf32>
    %207 = vector.broadcast %206 : vector<128x1xf32> to vector<128x128xf32>
    %208 = arith.subf %204, %207 : vector<128x128xf32>
    %209 = math.exp %208 : vector<128x128xf32>
    %cst_94 = arith.constant dense<0.000000e+00> : vector<128xf32>
    %210 = vector.multi_reduction <add>, %209, %cst_94 [1] : vector<128x128xf32> to vector<128xf32>
    %211 = vector.shape_cast %210 : vector<128xf32> to vector<128x1xf32>
    %212 = tpu.reciprocal %211 {approx = true} : vector<128x1xf32> -> vector<128x1xf32>
    %213 = vector.broadcast %212 : vector<128x1xf32> to vector<128x128xf32>
    %214 = arith.mulf %209, %213 : vector<128x128xf32>
    %215 = arith.truncf %214 : vector<128x128xf32> to vector<128x128xbf16>
    %cst_95 = arith.constant dense<0.000000e+00> : vector<128x64xf32>
    %216 = tpu.matmul %215, %201, %cst_95 {dimension_numbers = #tpu.dot_dimension_numbers<[1], [0], [0], [1], [0, 0, 1, 1], [], []>} : vector<128x128xbf16>, vector<128x64xbf16>, vector<128x64xf32> -> vector<128x64xf32>
    %c0_96 = arith.constant 0 : index
    %c64_97 = arith.constant 64 : index
    %217 = vector.load %arg22[%c0_96, %c64_97] : memref<128x128xf32, #tpu.memory_space<vmem>>, vector<128x64xf32>
    tpu.vector_store %arg22[%c0_96, %c64_97], %216 {strides = array<i32>} : memref<128x128xf32, #tpu.memory_space<vmem>>, vector<128x64xf32>,
    %c0_98 = arith.constant 0 : index
    %c0_99 = arith.constant 0 : index
    %218 = vector.load %arg22[%c0_98, %c0_99] : memref<128x128xf32, #tpu.memory_space<vmem>>, vector<128x128xf32>
    %219 = arith.truncf %218 : vector<128x128xf32> to vector<128x128xbf16>
    %c1_100 = arith.constant 1 : index
    %c0_101 = arith.constant 0 : index
    %c0_102 = arith.constant 0 : index
    %220 = vector.load %arg7[%c1_100, %c0_101, %c0_102] : memref<2x128x128xbf16, #tpu.memory_space<vmem>>, vector<1x128x128xbf16>
    %221 = vector.shape_cast %220 : vector<1x128x128xbf16> to vector<128x128xbf16>
    %cst_103 = arith.constant dense<0.000000e+00> : vector<128x128xf32>
    %222 = tpu.matmul %219, %221, %cst_103 {dimension_numbers = #tpu.dot_dimension_numbers<[1], [0], [0], [1], [0, 0, 1, 1], [], []>} : vector<128x128xbf16>, vector<128x128xbf16>, vector<128x128xf32> -> vector<128x128xf32>
    %c1_104 = arith.constant 1 : index
    %c0_105 = arith.constant 0 : index
    %c0_106 = arith.constant 0 : index
    %223 = vector.load %arg8[%c1_104, %c0_105, %c0_106] : memref<2x1x128xf32, #tpu.memory_space<vmem>>, vector<1x1x128xf32>
    %224 = vector.shape_cast %223 : vector<1x1x128xf32> to vector<1x128xf32>
    %225 = vector.broadcast %224 : vector<1x128xf32> to vector<128x128xf32>
    %226 = arith.addf %222, %225 : vector<128x128xf32>
    %227 = arith.addf %165, %226 : vector<128x128xf32>
    %c1_107 = arith.constant 1 : index
    %c0_108 = arith.constant 0 : index
    %c0_109 = arith.constant 0 : index
    %228 = vector.load %arg9[%c1_107, %c0_108, %c0_109] : memref<2x1x128xf32, #tpu.memory_space<vmem>>, vector<1x1x128xf32>
    %229 = vector.shape_cast %228 : vector<1x1x128xf32> to vector<1x128xf32>
    %c1_110 = arith.constant 1 : index
    %c0_111 = arith.constant 0 : index
    %c0_112 = arith.constant 0 : index
    %230 = vector.load %arg10[%c1_110, %c0_111, %c0_112] : memref<2x1x128xf32, #tpu.memory_space<vmem>>, vector<1x1x128xf32>
    %231 = vector.shape_cast %230 : vector<1x1x128xf32> to vector<1x128xf32>
    %cst_113 = arith.constant dense<0.000000e+00> : vector<128xf32>
    %232 = vector.multi_reduction <add>, %227, %cst_113 [1] : vector<128x128xf32> to vector<128xf32>
    %233 = vector.shape_cast %232 : vector<128xf32> to vector<128x1xf32>
    %cst_114 = arith.constant 1.280000e+02 : f32
    %234 = vector.broadcast %cst_114 : f32 to vector<128x1xf32>
    %235 = arith.divf %233, %234 : vector<128x1xf32>
    %236 = vector.broadcast %235 : vector<128x1xf32> to vector<128x128xf32>
    %237 = arith.subf %227, %236 : vector<128x128xf32>
    %238 = arith.mulf %237, %237 : vector<128x128xf32>
    %cst_115 = arith.constant dense<0.000000e+00> : vector<128xf32>
    %239 = vector.multi_reduction <add>, %238, %cst_115 [1] : vector<128x128xf32> to vector<128xf32>
    %240 = vector.shape_cast %239 : vector<128xf32> to vector<128x1xf32>
    %cst_116 = arith.constant 1.280000e+02 : f32
    %241 = vector.broadcast %cst_116 : f32 to vector<128x1xf32>
    %242 = arith.divf %240, %241 : vector<128x1xf32>
    %cst_117 = arith.constant 9.99999974E-6 : f32
    %243 = vector.broadcast %cst_117 : f32 to vector<128x1xf32>
    %244 = arith.addf %242, %243 : vector<128x1xf32>
    %245 = math.rsqrt %244 : vector<128x1xf32>
    %246 = vector.broadcast %245 : vector<128x1xf32> to vector<128x128xf32>
    %247 = arith.mulf %237, %246 : vector<128x128xf32>
    %248 = vector.broadcast %229 : vector<1x128xf32> to vector<128x128xf32>
    %249 = arith.mulf %247, %248 : vector<128x128xf32>
    %250 = vector.broadcast %231 : vector<1x128xf32> to vector<128x128xf32>
    %251 = arith.addf %249, %250 : vector<128x128xf32>
    %252 = arith.truncf %251 : vector<128x128xf32> to vector<128x128xbf16>
    %c1_118 = arith.constant 1 : index
    %c0_119 = arith.constant 0 : index
    %c0_120 = arith.constant 0 : index
    %253 = vector.load %arg11[%c1_118, %c0_119, %c0_120] : memref<2x128x512xbf16, #tpu.memory_space<vmem>>, vector<1x128x512xbf16>
    %254 = vector.shape_cast %253 : vector<1x128x512xbf16> to vector<128x512xbf16>
    %cst_121 = arith.constant dense<0.000000e+00> : vector<128x512xf32>
    %255 = tpu.matmul %252, %254, %cst_121 {dimension_numbers = #tpu.dot_dimension_numbers<[1], [0], [0], [1], [0, 0, 1, 1], [], []>} : vector<128x128xbf16>, vector<128x512xbf16>, vector<128x512xf32> -> vector<128x512xf32>
    %c1_122 = arith.constant 1 : index
    %c0_123 = arith.constant 0 : index
    %c0_124 = arith.constant 0 : index
    %256 = vector.load %arg12[%c1_122, %c0_123, %c0_124] : memref<2x1x512xf32, #tpu.memory_space<vmem>>, vector<1x1x512xf32>
    %257 = vector.shape_cast %256 : vector<1x1x512xf32> to vector<1x512xf32>
    %258 = vector.broadcast %257 : vector<1x512xf32> to vector<128x512xf32>
    %259 = arith.addf %255, %258 : vector<128x512xf32>
    %cst_125 = arith.constant 5.000000e-01 : f32
    %260 = vector.broadcast %cst_125 : f32 to vector<128x512xf32>
    %261 = arith.mulf %260, %259 : vector<128x512xf32>
    %cst_126 = arith.constant 4.471500e-02 : f32
    %262 = vector.broadcast %cst_126 : f32 to vector<128x512xf32>
    %263 = arith.mulf %262, %259 : vector<128x512xf32>
    %264 = arith.mulf %263, %259 : vector<128x512xf32>
    %265 = arith.mulf %264, %259 : vector<128x512xf32>
    %266 = arith.addf %259, %265 : vector<128x512xf32>
    %cst_127 = arith.constant 0.797884583 : f32
    %267 = vector.broadcast %cst_127 : f32 to vector<128x512xf32>
    %268 = arith.mulf %267, %266 : vector<128x512xf32>
    %269 = math.tanh %268 : vector<128x512xf32>
    %cst_128 = arith.constant 1.000000e+00 : f32
    %270 = vector.broadcast %cst_128 : f32 to vector<128x512xf32>
    %271 = arith.addf %270, %269 : vector<128x512xf32>
    %272 = arith.mulf %261, %271 : vector<128x512xf32>
    %273 = arith.truncf %272 : vector<128x512xf32> to vector<128x512xbf16>
    %c1_129 = arith.constant 1 : index
    %c0_130 = arith.constant 0 : index
    %c0_131 = arith.constant 0 : index
    %274 = vector.load %arg13[%c1_129, %c0_130, %c0_131] : memref<2x512x128xbf16, #tpu.memory_space<vmem>>, vector<1x512x128xbf16>
    %275 = vector.shape_cast %274 : vector<1x512x128xbf16> to vector<512x128xbf16>
    %cst_132 = arith.constant dense<0.000000e+00> : vector<128x128xf32>
    %276 = tpu.matmul %273, %275, %cst_132 {dimension_numbers = #tpu.dot_dimension_numbers<[1], [0], [0], [1], [0, 0, 1, 1], [], []>} : vector<128x512xbf16>, vector<512x128xbf16>, vector<128x128xf32> -> vector<128x128xf32>
    %c1_133 = arith.constant 1 : index
    %c0_134 = arith.constant 0 : index
    %c0_135 = arith.constant 0 : index
    %277 = vector.load %arg14[%c1_133, %c0_134, %c0_135] : memref<2x1x128xf32, #tpu.memory_space<vmem>>, vector<1x1x128xf32>
    %278 = vector.shape_cast %277 : vector<1x1x128xf32> to vector<1x128xf32>
    %279 = vector.broadcast %278 : vector<1x128xf32> to vector<128x128xf32>
    %280 = arith.addf %276, %279 : vector<128x128xf32>
    %281 = arith.addf %251, %280 : vector<128x128xf32>
    %c1_136 = arith.constant 1 : index
    %c0_137 = arith.constant 0 : index
    %c0_138 = arith.constant 0 : index
    %282 = vector.load %arg15[%c1_136, %c0_137, %c0_138] : memref<2x1x128xf32, #tpu.memory_space<vmem>>, vector<1x1x128xf32>
    %283 = vector.shape_cast %282 : vector<1x1x128xf32> to vector<1x128xf32>
    %c1_139 = arith.constant 1 : index
    %c0_140 = arith.constant 0 : index
    %c0_141 = arith.constant 0 : index
    %284 = vector.load %arg16[%c1_139, %c0_140, %c0_141] : memref<2x1x128xf32, #tpu.memory_space<vmem>>, vector<1x1x128xf32>
    %285 = vector.shape_cast %284 : vector<1x1x128xf32> to vector<1x128xf32>
    %cst_142 = arith.constant dense<0.000000e+00> : vector<128xf32>
    %286 = vector.multi_reduction <add>, %281, %cst_142 [1] : vector<128x128xf32> to vector<128xf32>
    %287 = vector.shape_cast %286 : vector<128xf32> to vector<128x1xf32>
    %cst_143 = arith.constant 1.280000e+02 : f32
    %288 = vector.broadcast %cst_143 : f32 to vector<128x1xf32>
    %289 = arith.divf %287, %288 : vector<128x1xf32>
    %290 = vector.broadcast %289 : vector<128x1xf32> to vector<128x128xf32>
    %291 = arith.subf %281, %290 : vector<128x128xf32>
    %292 = arith.mulf %291, %291 : vector<128x128xf32>
    %cst_144 = arith.constant dense<0.000000e+00> : vector<128xf32>
    %293 = vector.multi_reduction <add>, %292, %cst_144 [1] : vector<128x128xf32> to vector<128xf32>
    %294 = vector.shape_cast %293 : vector<128xf32> to vector<128x1xf32>
    %cst_145 = arith.constant 1.280000e+02 : f32
    %295 = vector.broadcast %cst_145 : f32 to vector<128x1xf32>
    %296 = arith.divf %294, %295 : vector<128x1xf32>
    %cst_146 = arith.constant 9.99999974E-6 : f32
    %297 = vector.broadcast %cst_146 : f32 to vector<128x1xf32>
    %298 = arith.addf %296, %297 : vector<128x1xf32>
    %299 = math.rsqrt %298 : vector<128x1xf32>
    %300 = vector.broadcast %299 : vector<128x1xf32> to vector<128x128xf32>
    %301 = arith.mulf %291, %300 : vector<128x128xf32>
    %302 = vector.broadcast %283 : vector<1x128xf32> to vector<128x128xf32>
    %303 = arith.mulf %301, %302 : vector<128x128xf32>
    %304 = vector.broadcast %285 : vector<1x128xf32> to vector<128x128xf32>
    %305 = arith.addf %303, %304 : vector<128x128xf32>
    %306 = vector.extract_strided_slice %305 {offsets = [0, 0], sizes = [8, 128], strides = [1, 1]} : vector<128x128xf32> to vector<8x128xf32>
    %307 = arith.truncf %306 : vector<8x128xf32> to vector<8x128xbf16>
    %c0_147 = arith.constant 0 : index
    %c0_148 = arith.constant 0 : index
    %308 = vector.load %arg17[%c0_147, %c0_148] : memref<128x128xbf16, #tpu.memory_space<vmem>>, vector<128x128xbf16>
    %cst_149 = arith.constant dense<0.000000e+00> : vector<8x128xf32>
    %309 = tpu.matmul %307, %308, %cst_149 {dimension_numbers = #tpu.dot_dimension_numbers<[1], [0], [0], [1], [0, 0, 1, 1], [], []>} : vector<8x128xbf16>, vector<128x128xbf16>, vector<8x128xf32> -> vector<8x128xf32>
    %c0_150 = arith.constant 0 : index
    %c0_151 = arith.constant 0 : index
    %310 = vector.load %arg18[%c0_150, %c0_151] : memref<1x128xf32, #tpu.memory_space<vmem>>, vector<1x128xf32>
    %311 = vector.broadcast %310 : vector<1x128xf32> to vector<8x128xf32>
    %312 = arith.addf %309, %311 : vector<8x128xf32>
    %313 = math.tanh %312 : vector<8x128xf32>
    %314 = arith.truncf %313 : vector<8x128xf32> to vector<8x128xbf16>
    %c0_152 = arith.constant 0 : index
    %c0_153 = arith.constant 0 : index
    %315 = vector.load %arg19[%c0_152, %c0_153] : memref<128x128xbf16, #tpu.memory_space<vmem>>, vector<128x128xbf16>
    %cst_154 = arith.constant dense<0.000000e+00> : vector<8x128xf32>
    %316 = tpu.matmul %314, %315, %cst_154 {dimension_numbers = #tpu.dot_dimension_numbers<[1], [0], [0], [1], [0, 0, 1, 1], [], []>} : vector<8x128xbf16>, vector<128x128xbf16>, vector<8x128xf32> -> vector<8x128xf32>
    %c0_155 = arith.constant 0 : index
    %c0_156 = arith.constant 0 : index
    %317 = vector.load %arg20[%c0_155, %c0_156] : memref<1x128xf32, #tpu.memory_space<vmem>>, vector<1x128xf32>
    %318 = vector.broadcast %317 : vector<1x128xf32> to vector<8x128xf32>
    %319 = arith.addf %316, %318 : vector<8x128xf32>
    %320 = vector.extract_strided_slice %319 {offsets = [0, 0], sizes = [1, 128], strides = [1, 1]} : vector<8x128xf32> to vector<1x128xf32>
    %c0_157 = arith.constant 0 : index
    %c0_158 = arith.constant 0 : index
    %c0_159 = arith.constant 0 : index
    %321 = vector.load %arg21[%c0_157, %c0_158, %c0_159] : memref<1x1x128xf32, #tpu.memory_space<vmem>>, vector<1x1x128xf32>
    %322 = vector.shape_cast %321 : vector<1x1x128xf32> to vector<1x128xf32>
    %323 = vector.shape_cast %320 : vector<1x128xf32> to vector<1x1x128xf32>
    tpu.vector_store %arg21[%c0_157, %c0_158, %c0_159], %323 {strides = array<i32>} : memref<1x1x128xf32, #tpu.memory_space<vmem>>, vector<1x1x128xf32>,
    return
  }
  func.func @transform_0(%arg0: i32) -> (i32, i32, i32) {
    %c0_i32 = arith.constant 0 : i32
    %c0_i32_0 = arith.constant 0 : i32
    %c0_i32_1 = arith.constant 0 : i32
    return %arg0, %c0_i32, %c0_i32_0 : i32, i32, i32
  }
  func.func @transform_1(%arg0: i32) -> (i32, i32, i32) {
    %c0_i32 = arith.constant 0 : i32
    %c0_i32_0 = arith.constant 0 : i32
    %c0_i32_1 = arith.constant 0 : i32
    return %arg0, %c0_i32, %c0_i32_0 : i32, i32, i32
  }
  func.func @transform_2(%arg0: i32) -> (i32, i32) {
    %c0_i32 = arith.constant 0 : i32
    %c0_i32_0 = arith.constant 0 : i32
    %c0_i32_1 = arith.constant 0 : i32
    return %c0_i32, %c0_i32_0 : i32, i32
  }
  func.func @transform_3(%arg0: i32) -> (i32, i32) {
    %c0_i32 = arith.constant 0 : i32
    %c0_i32_0 = arith.constant 0 : i32
    %c0_i32_1 = arith.constant 0 : i32
    return %c0_i32, %c0_i32_0 : i32, i32
  }
  func.func @transform_4(%arg0: i32) -> (i32, i32, i32) {
    %c0_i32 = arith.constant 0 : i32
    %c0_i32_0 = arith.constant 0 : i32
    %c0_i32_1 = arith.constant 0 : i32
    %c0_i32_2 = arith.constant 0 : i32
    return %c0_i32, %c0_i32_0, %c0_i32_1 : i32, i32, i32
  }
  func.func @transform_5(%arg0: i32) -> (i32, i32, i32) {
    %c0_i32 = arith.constant 0 : i32
    %c0_i32_0 = arith.constant 0 : i32
    %c0_i32_1 = arith.constant 0 : i32
    %c0_i32_2 = arith.constant 0 : i32
    return %c0_i32, %c0_i32_0, %c0_i32_1 : i32, i32, i32
  }
  func.func @transform_6(%arg0: i32) -> (i32, i32, i32) {
    %c0_i32 = arith.constant 0 : i32
    %c0_i32_0 = arith.constant 0 : i32
    %c0_i32_1 = arith.constant 0 : i32
    %c0_i32_2 = arith.constant 0 : i32
    return %c0_i32, %c0_i32_0, %c0_i32_1 : i32, i32, i32
  }
  func.func @transform_7(%arg0: i32) -> (i32, i32, i32) {
    %c0_i32 = arith.constant 0 : i32
    %c0_i32_0 = arith.constant 0 : i32
    %c0_i32_1 = arith.constant 0 : i32
    %c0_i32_2 = arith.constant 0 : i32
    return %c0_i32, %c0_i32_0, %c0_i32_1 : i32, i32, i32
  }
  func.func @transform_8(%arg0: i32) -> (i32, i32, i32) {
    %c0_i32 = arith.constant 0 : i32
    %c0_i32_0 = arith.constant 0 : i32
    %c0_i32_1 = arith.constant 0 : i32
    %c0_i32_2 = arith.constant 0 : i32
    return %c0_i32, %c0_i32_0, %c0_i32_1 : i32, i32, i32
  }
  func.func @transform_9(%arg0: i32) -> (i32, i32, i32) {
    %c0_i32 = arith.constant 0 : i32
    %c0_i32_0 = arith.constant 0 : i32
    %c0_i32_1 = arith.constant 0 : i32
    %c0_i32_2 = arith.constant 0 : i32
    return %c0_i32, %c0_i32_0, %c0_i32_1 : i32, i32, i32
  }
  func.func @transform_10(%arg0: i32) -> (i32, i32, i32) {
    %c0_i32 = arith.constant 0 : i32
    %c0_i32_0 = arith.constant 0 : i32
    %c0_i32_1 = arith.constant 0 : i32
    %c0_i32_2 = arith.constant 0 : i32
    return %c0_i32, %c0_i32_0, %c0_i32_1 : i32, i32, i32
  }
  func.func @transform_11(%arg0: i32) -> (i32, i32, i32) {
    %c0_i32 = arith.constant 0 : i32
    %c0_i32_0 = arith.constant 0 : i32
    %c0_i32_1 = arith.constant 0 : i32
    %c0_i32_2 = arith.constant 0 : i32
    return %c0_i32, %c0_i32_0, %c0_i32_1 : i32, i32, i32
  }
  func.func @transform_12(%arg0: i32) -> (i32, i32, i32) {
    %c0_i32 = arith.constant 0 : i32
    %c0_i32_0 = arith.constant 0 : i32
    %c0_i32_1 = arith.constant 0 : i32
    %c0_i32_2 = arith.constant 0 : i32
    return %c0_i32, %c0_i32_0, %c0_i32_1 : i32, i32, i32
  }
  func.func @transform_13(%arg0: i32) -> (i32, i32, i32) {
    %c0_i32 = arith.constant 0 : i32
    %c0_i32_0 = arith.constant 0 : i32
    %c0_i32_1 = arith.constant 0 : i32
    %c0_i32_2 = arith.constant 0 : i32
    return %c0_i32, %c0_i32_0, %c0_i32_1 : i32, i32, i32
  }
  func.func @transform_14(%arg0: i32) -> (i32, i32, i32) {
    %c0_i32 = arith.constant 0 : i32
    %c0_i32_0 = arith.constant 0 : i32
    %c0_i32_1 = arith.constant 0 : i32
    %c0_i32_2 = arith.constant 0 : i32
    return %c0_i32, %c0_i32_0, %c0_i32_1 : i32, i32, i32
  }
  func.func @transform_15(%arg0: i32) -> (i32, i32, i32) {
    %c0_i32 = arith.constant 0 : i32
    %c0_i32_0 = arith.constant 0 : i32
    %c0_i32_1 = arith.constant 0 : i32
    %c0_i32_2 = arith.constant 0 : i32
    return %c0_i32, %c0_i32_0, %c0_i32_1 : i32, i32, i32
  }
  func.func @transform_16(%arg0: i32) -> (i32, i32) {
    %c0_i32 = arith.constant 0 : i32
    %c0_i32_0 = arith.constant 0 : i32
    %c0_i32_1 = arith.constant 0 : i32
    return %c0_i32, %c0_i32_0 : i32, i32
  }
  func.func @transform_17(%arg0: i32) -> (i32, i32) {
    %c0_i32 = arith.constant 0 : i32
    %c0_i32_0 = arith.constant 0 : i32
    %c0_i32_1 = arith.constant 0 : i32
    return %c0_i32, %c0_i32_0 : i32, i32
  }
  func.func @transform_18(%arg0: i32) -> (i32, i32) {
    %c0_i32 = arith.constant 0 : i32
    %c0_i32_0 = arith.constant 0 : i32
    %c0_i32_1 = arith.constant 0 : i32
    return %c0_i32, %c0_i32_0 : i32, i32
  }
  func.func @transform_19(%arg0: i32) -> (i32, i32) {
    %c0_i32 = arith.constant 0 : i32
    %c0_i32_0 = arith.constant 0 : i32
    %c0_i32_1 = arith.constant 0 : i32
    return %c0_i32, %c0_i32_0 : i32, i32
  }
  func.func @transform_20(%arg0: i32) -> (i32, i32, i32) {
    %c0_i32 = arith.constant 0 : i32
    %c0_i32_0 = arith.constant 0 : i32
    %c0_i32_1 = arith.constant 0 : i32
    return %arg0, %c0_i32, %c0_i32_0 : i32, i32, i32
  }
}

</mosaic_0001>

<llo_original>
// kernel: forward.1
$region0: #{forward.1}
  #allocation0 [shape = 'u32[]', space=smem, size = 0x4, offset = 0x4, fixed_abs, tag = 'smem constant byte address 0x4 - core index']
  #allocation1 [shape = 'u32[72,128]{1,0:T(1,128)}', space=vmem, size = 0x9000, scoped, tag = 'internal scratch']
  #allocation2 [shape = 'f32[128,128]{1,0:T(8,128)}', space=vmem, size = 0x10000, scoped, tag = 'scratch operand']
  %s0 = inlined_call_operand.vmem [shape: f32[2,128,128], index: 0, kind: input, shape index: {}]
  %s1 = inlined_call_operand.vmem [shape: f32[2,1,128], index: 1, kind: input, shape index: {}]
  %s2 = inlined_call_operand.vmem [shape: f32[1,128], index: 2, kind: input, shape index: {}]
  %s3 = inlined_call_operand.vmem [shape: f32[1,128], index: 3, kind: input, shape index: {}]
  %s4 = inlined_call_operand.vmem [shape: bf16[2,128,384], index: 4, kind: input, shape index: {}]
  %s5 = inlined_call_operand.vmem [shape: f32[2,1,384], index: 5, kind: input, shape index: {}]
  %s6 = inlined_call_operand.vmem [shape: bf16[2,128,128], index: 6, kind: input, shape index: {}]
  %s7 = inlined_call_operand.vmem [shape: f32[2,1,128], index: 7, kind: input, shape index: {}]
  %s8 = inlined_call_operand.vmem [shape: f32[2,1,128], index: 8, kind: input, shape index: {}]
  %s9 = inlined_call_operand.vmem [shape: f32[2,1,128], index: 9, kind: input, shape index: {}]
  %s10 = inlined_call_operand.vmem [shape: bf16[2,128,512], index: 10, kind: input, shape index: {}]
  %s11 = inlined_call_operand.vmem [shape: f32[2,1,512], index: 11, kind: input, shape index: {}]
  %s12 = inlined_call_operand.vmem [shape: bf16[2,512,128], index: 12, kind: input, shape index: {}]
  %s13 = inlined_call_operand.vmem [shape: f32[2,1,128], index: 13, kind: input, shape index: {}]
  %s14 = inlined_call_operand.vmem [shape: f32[2,1,128], index: 14, kind: input, shape index: {}]
  %s15 = inlined_call_operand.vmem [shape: f32[2,1,128], index: 15, kind: input, shape index: {}]
  %s16 = inlined_call_operand.vmem [shape: bf16[128,128], index: 16, kind: input, shape index: {}]
  %s17 = inlined_call_operand.vmem [shape: f32[1,128], index: 17, kind: input, shape index: {}]
  %s18 = inlined_call_operand.vmem [shape: bf16[128,128], index: 18, kind: input, shape index: {}]
  %s19 = inlined_call_operand.vmem [shape: f32[1,128], index: 19, kind: input, shape index: {}]
  %s20 = inlined_call_operand.hbm [shape: f32[2,1,128], index: 20, kind: output, shape index: {}]
  %s21 = sld [smem:[#allocation0]]
  $region113: #{forward.1} parent=0
    _
  %s23 = ssub.s32 1, %s21
  %s24 = scalar_select 0, %s23, %s21
  $region1: #{forward.1} parent=0
    #allocation3 [shape = 'u8[1024]{0}', space=vmem, size = 0x400, scoped, tag = 'output window, operand 0']
    #allocation4 [shape = 's32[2]{0}', space=sflag, size = 0x8, scoped, tag = 'scoped memory for forward.1']
    %25 = vsyncpa [#allocation4], 0
    %s26 = scalar_lea.sflag [#allocation4], 1
    %27 = vsyncpa %s26, 0
    loop: start=0, step=1, limit=4
    $region2: #{forward.1} parent=1 // loop_pre_header
      _
    $region3: #{forward.1} parent=1 // loop_header
      %s29 = sphi 0, %s33
      %p30 = scmp.ge.s32.totalorder %s29, 4
      %s39 = sphi 0, %s41
      %s42 = sphi 0, %s39
      %s43 = sphi 0, %s42
      %s59 = sphi 0, %s43
      %s65 = sphi 0, %s67
      %s68 = sphi 0, %s65
      %s69 = sphi 0, %s68
      %s85 = sphi 0, %s69
      %s89 = sphi 0, %s89
      %s91 = sphi 0, %s89
      %s92 = sphi 0, %s91
      %s106 = sphi 0, %s92
      %s110 = sphi 0, %s110
      %s112 = sphi 0, %s110
      %s113 = sphi 0, %s112
      %s127 = sphi 0, %s113
      %s131 = sphi 0, %s131
      %s133 = sphi 0, %s131
      %s134 = sphi 0, %s133
      %s148 = sphi 0, %s134
      %s152 = sphi 0, %s152
      %s154 = sphi 0, %s152
      %s155 = sphi 0, %s154
      %s169 = sphi 0, %s155
      %s173 = sphi 0, %s173
      %s175 = sphi 0, %s173
      %s176 = sphi 0, %s175
      %s190 = sphi 0, %s176
      %s194 = sphi 0, %s194
      %s196 = sphi 0, %s194
      %s197 = sphi 0, %s196
      %s211 = sphi 0, %s197
      %s215 = sphi 0, %s215
      %s217 = sphi 0, %s215
      %s218 = sphi 0, %s217
      %s232 = sphi 0, %s218
      %s236 = sphi 0, %s236
      %s238 = sphi 0, %s236
      %s239 = sphi 0, %s238
      %s253 = sphi 0, %s239
      %s257 = sphi 0, %s257
      %s259 = sphi 0, %s257
      %s260 = sphi 0, %s259
      %s274 = sphi 0, %s260
      %s278 = sphi 0, %s278
      %s280 = sphi 0, %s278
      %s281 = sphi 0, %s280
      %s295 = sphi 0, %s281
      %s299 = sphi 0, %s299
      %s301 = sphi 0, %s299
      %s302 = sphi 0, %s301
      %s316 = sphi 0, %s302
      %s320 = sphi 0, %s320
      %s322 = sphi 0, %s320
      %s323 = sphi 0, %s322
      %s337 = sphi 0, %s323
      %s341 = sphi 0, %s341
      %s343 = sphi 0, %s341
      %s344 = sphi 0, %s343
      %s358 = sphi 0, %s344
      %s362 = sphi 0, %s362
      %s364 = sphi 0, %s362
      %s365 = sphi 0, %s364
      %s379 = sphi 0, %s365
      %s383 = sphi 0, %s383
      %s385 = sphi 0, %s383
      %s386 = sphi 0, %s385
      %s400 = sphi 0, %s386
      %s404 = sphi 0, %s404
      %s406 = sphi 0, %s404
      %s407 = sphi 0, %s406
      %s421 = sphi 0, %s407
      %s425 = sphi 0, %s425
      %s427 = sphi 0, %s425
      %s428 = sphi 0, %s427
      %s442 = sphi 0, %s428
      %s446 = sphi 0, %s446
      %s448 = sphi 0, %s446
      %s449 = sphi 0, %s448
      %s463 = sphi 0, %s449
      %s469 = sphi 0, %s471
      %s472 = sphi 0, %s469
      %s473 = sphi 0, %s472
      %s489 = sphi 0, %s473
    $region4: #{forward.1} parent=1 // loop_header_branch
      %32 = sbr.rel (%p30) target = $region8
    $region5: #{forward.1} parent=1 // loop_body
      %s34 = ssub.s32 %s29, 1
      %s35 = ssub.s32 %s29, 2
      %s36 = sadd.s32 %s29, 1
      %s37 = ssub.s32 %s29, %s36
      %p38 = scmp.eq.s32.totalorder %s37, 0
      %s40 = sadd.s32 %s39, 1
      %s41 = scalar_select %p38, %s39, %s40
      %p44 = pneg %p38
      %p45 = scmp.eq.s32.totalorder %s29, 1
      %p46 = por %p44, %p45
      %p47 = scmp.ne.s32.totalorder %s39, %s42
      %p48 = scmp.eq.s32.totalorder %s29, 0
      %p49 = por %p47, %p48
      %p50 = scmp.ne.s32.totalorder %s39, %s42
      %p51 = scmp.eq.s32.totalorder %s34, 1
      %p52 = por %p50, %p51
      %p53 = scmp.ne.s32.totalorder %s42, %s43
      %p54 = scmp.eq.s32.totalorder %s34, 0
      %p55 = por %p53, %p54
      %p56 = scmp.ne.s32.totalorder %s42, %s43
      %p57 = scmp.eq.s32.totalorder %s35, 1
      %p58 = por %p56, %p57
      %p60 = scmp.ne.s32.totalorder %s43, %s59
      %p61 = scmp.eq.s32.totalorder %s35, 0
      %p62 = por %p60, %p61
      %s63 = ssub.s32 %s29, %s36
      %p64 = scmp.eq.s32.totalorder %s63, 0
      %s66 = sadd.s32 %s65, 1
      %s67 = scalar_select %p64, %s65, %s66
      %p70 = pneg %p64
      %p71 = scmp.eq.s32.totalorder %s29, 1
      %p72 = por %p70, %p71
      %p73 = scmp.ne.s32.totalorder %s65, %s68
      %p74 = scmp.eq.s32.totalorder %s29, 0
      %p75 = por %p73, %p74
      %p76 = scmp.ne.s32.totalorder %s65, %s68
      %p77 = scmp.eq.s32.totalorder %s34, 1
      %p78 = por %p76, %p77
      %p79 = scmp.ne.s32.totalorder %s68, %s69
      %p80 = scmp.eq.s32.totalorder %s34, 0
      %p81 = por %p79, %p80
      %p82 = scmp.ne.s32.totalorder %s68, %s69
      %p83 = scmp.eq.s32.totalorder %s35, 1
      %p84 = por %p82, %p83
      %p86 = scmp.ne.s32.totalorder %s69, %s85
      %p87 = scmp.eq.s32.totalorder %s35, 0
      %p88 = por %p86, %p87
      %s90 = sadd.s32 %s89, 1
      %p93 = scmp.eq.s32.totalorder %s29, 1
      %p94 = scmp.ne.s32.totalorder %s89, %s91
      %p95 = scmp.eq.s32.totalorder %s29, 0
      %p96 = por %p94, %p95
      %p97 = scmp.ne.s32.totalorder %s89, %s91
      %p98 = scmp.eq.s32.totalorder %s34, 1
      %p99 = por %p97, %p98
      %p100 = scmp.ne.s32.totalorder %s91, %s92
      %p101 = scmp.eq.s32.totalorder %s34, 0
      %p102 = por %p100, %p101
      %p103 = scmp.ne.s32.totalorder %s91, %s92
      %p104 = scmp.eq.s32.totalorder %s35, 1
      %p105 = por %p103, %p104
      %p107 = scmp.ne.s32.totalorder %s92, %s106
      %p108 = scmp.eq.s32.totalorder %s35, 0
      %p109 = por %p107, %p108
      %s111 = sadd.s32 %s110, 1
      %p114 = scmp.eq.s32.totalorder %s29, 1
      %p115 = scmp.ne.s32.totalorder %s110, %s112
      %p116 = scmp.eq.s32.totalorder %s29, 0
      %p117 = por %p115, %p116
      %p118 = scmp.ne.s32.totalorder %s110, %s112
      %p119 = scmp.eq.s32.totalorder %s34, 1
      %p120 = por %p118, %p119
      %p121 = scmp.ne.s32.totalorder %s112, %s113
      %p122 = scmp.eq.s32.totalorder %s34, 0
      %p123 = por %p121, %p122
      %p124 = scmp.ne.s32.totalorder %s112, %s113
      %p125 = scmp.eq.s32.totalorder %s35, 1
      %p126 = por %p124, %p125
      %p128 = scmp.ne.s32.totalorder %s113, %s127
      %p129 = scmp.eq.s32.totalorder %s35, 0
      %p130 = por %p128, %p129
      %s132 = sadd.s32 %s131, 1
      %p135 = scmp.eq.s32.totalorder %s29, 1
      %p136 = scmp.ne.s32.totalorder %s131, %s133
      %p137 = scmp.eq.s32.totalorder %s29, 0
      %p138 = por %p136, %p137
      %p139 = scmp.ne.s32.totalorder %s131, %s133
      %p140 = scmp.eq.s32.totalorder %s34, 1
      %p141 = por %p139, %p140
      %p142 = scmp.ne.s32.totalorder %s133, %s134
      %p143 = scmp.eq.s32.totalorder %s34, 0
      %p144 = por %p142, %p143
      %p145 = scmp.ne.s32.totalorder %s133, %s134
      %p146 = scmp.eq.s32.totalorder %s35, 1
      %p147 = por %p145, %p146
      %p149 = scmp.ne.s32.totalorder %s134, %s148
      %p150 = scmp.eq.s32.totalorder %s35, 0
      %p151 = por %p149, %p150
      %s153 = sadd.s32 %s152, 1
      %p156 = scmp.eq.s32.totalorder %s29, 1
      %p157 = scmp.ne.s32.totalorder %s152, %s154
      %p158 = scmp.eq.s32.totalorder %s29, 0
      %p159 = por %p157, %p158
      %p160 = scmp.ne.s32.totalorder %s152, %s154
      %p161 = scmp.eq.s32.totalorder %s34, 1
      %p162 = por %p160, %p161
      %p163 = scmp.ne.s32.totalorder %s154, %s155
      %p164 = scmp.eq.s32.totalorder %s34, 0
      %p165 = por %p163, %p164
      %p166 = scmp.ne.s32.totalorder %s154, %s155
      %p167 = scmp.eq.s32.totalorder %s35, 1
      %p168 = por %p166, %p167
      %p170 = scmp.ne.s32.totalorder %s155, %s169
      %p171 = scmp.eq.s32.totalorder %s35, 0
      %p172 = por %p170, %p171
      %s174 = sadd.s32 %s173, 1
      %p177 = scmp.eq.s32.totalorder %s29, 1
      %p178 = scmp.ne.s32.totalorder %s173, %s175
      %p179 = scmp.eq.s32.totalorder %s29, 0
      %p180 = por %p178, %p179
      %p181 = scmp.ne.s32.totalorder %s173, %s175
      %p182 = scmp.eq.s32.totalorder %s34, 1
      %p183 = por %p181, %p182
      %p184 = scmp.ne.s32.totalorder %s175, %s176
      %p185 = scmp.eq.s32.totalorder %s34, 0
      %p186 = por %p184, %p185
      %p187 = scmp.ne.s32.totalorder %s175, %s176
      %p188 = scmp.eq.s32.totalorder %s35, 1
      %p189 = por %p187, %p188
      %p191 = scmp.ne.s32.totalorder %s176, %s190
      %p192 = scmp.eq.s32.totalorder %s35, 0
      %p193 = por %p191, %p192
      %s195 = sadd.s32 %s194, 1
      %p198 = scmp.eq.s32.totalorder %s29, 1
      %p199 = scmp.ne.s32.totalorder %s194, %s196
      %p200 = scmp.eq.s32.totalorder %s29, 0
      %p201 = por %p199, %p200
      %p202 = scmp.ne.s32.totalorder %s194, %s196
      %p203 = scmp.eq.s32.totalorder %s34, 1
      %p204 = por %p202, %p203
      %p205 = scmp.ne.s32.totalorder %s196, %s197
      %p206 = scmp.eq.s32.totalorder %s34, 0
      %p207 = por %p205, %p206
      %p208 = scmp.ne.s32.totalorder %s196, %s197
      %p209 = scmp.eq.s32.totalorder %s35, 1
      %p210 = por %p208, %p209
      %p212 = scmp.ne.s32.totalorder %s197, %s211
      %p213 = scmp.eq.s32.totalorder %s35, 0
      %p214 = por %p212, %p213
      %s216 = sadd.s32 %s215, 1
      %p219 = scmp.eq.s32.totalorder %s29, 1
      %p220 = scmp.ne.s32.totalorder %s215, %s217
      %p221 = scmp.eq.s32.totalorder %s29, 0
      %p222 = por %p220, %p221
      %p223 = scmp.ne.s32.totalorder %s215, %s217
      %p224 = scmp.eq.s32.totalorder %s34, 1
      %p225 = por %p223, %p224
      %p226 = scmp.ne.s32.totalorder %s217, %s218
      %p227 = scmp.eq.s32.totalorder %s34, 0
      %p228 = por %p226, %p227
      %p229 = scmp.ne.s32.totalorder %s217, %s218
      %p230 = scmp.eq.s32.totalorder %s35, 1
      %p231 = por %p229, %p230
      %p233 = scmp.ne.s32.totalorder %s218, %s232
      %p234 = scmp.eq.s32.totalorder %s35, 0
      %p235 = por %p233, %p234
      %s237 = sadd.s32 %s236, 1
      %p240 = scmp.eq.s32.totalorder %s29, 1
      %p241 = scmp.ne.s32.totalorder %s236, %s238
      %p242 = scmp.eq.s32.totalorder %s29, 0
      %p243 = por %p241, %p242
      %p244 = scmp.ne.s32.totalorder %s236, %s238
      %p245 = scmp.eq.s32.totalorder %s34, 1
      %p246 = por %p244, %p245
      %p247 = scmp.ne.s32.totalorder %s238, %s239
      %p248 = scmp.eq.s32.totalorder %s34, 0
      %p249 = por %p247, %p248
      %p250 = scmp.ne.s32.totalorder %s238, %s239
      %p251 = scmp.eq.s32.totalorder %s35, 1
      %p252 = por %p250, %p251
      %p254 = scmp.ne.s32.totalorder %s239, %s253
      %p255 = scmp.eq.s32.totalorder %s35, 0
      %p256 = por %p254, %p255
      %s258 = sadd.s32 %s257, 1
      %p261 = scmp.eq.s32.totalorder %s29, 1
      %p262 = scmp.ne.s32.totalorder %s257, %s259
      %p263 = scmp.eq.s32.totalorder %s29, 0
      %p264 = por %p262, %p263
      %p265 = scmp.ne.s32.totalorder %s257, %s259
      %p266 = scmp.eq.s32.totalorder %s34, 1
      %p267 = por %p265, %p266
      %p268 = scmp.ne.s32.totalorder %s259, %s260
      %p269 = scmp.eq.s32.totalorder %s34, 0
      %p270 = por %p268, %p269
      %p271 = scmp.ne.s32.totalorder %s259, %s260
      %p272 = scmp.eq.s32.totalorder %s35, 1
      %p273 = por %p271, %p272
      %p275 = scmp.ne.s32.totalorder %s260, %s274
      %p276 = scmp.eq.s32.totalorder %s35, 0
      %p277 = por %p275, %p276
      %s279 = sadd.s32 %s278, 1
      %p282 = scmp.eq.s32.totalorder %s29, 1
      %p283 = scmp.ne.s32.totalorder %s278, %s280
      %p284 = scmp.eq.s32.totalorder %s29, 0
      %p285 = por %p283, %p284
      %p286 = scmp.ne.s32.totalorder %s278, %s280
      %p287 = scmp.eq.s32.totalorder %s34, 1
      %p288 = por %p286, %p287
      %p289 = scmp.ne.s32.totalorder %s280, %s281
      %p290 = scmp.eq.s32.totalorder %s34, 0
      %p291 = por %p289, %p290
      %p292 = scmp.ne.s32.totalorder %s280, %s281
      %p293 = scmp.eq.s32.totalorder %s35, 1
      %p294 = por %p292, %p293
      %p296 = scmp.ne.s32.totalorder %s281, %s295
      %p297 = scmp.eq.s32.totalorder %s35, 0
      %p298 = por %p296, %p297
      %s300 = sadd.s32 %s299, 1
      %p303 = scmp.eq.s32.totalorder %s29, 1
      %p304 = scmp.ne.s32.totalorder %s299, %s301
      %p305 = scmp.eq.s32.totalorder %s29, 0
      %p306 = por %p304, %p305
      %p307 = scmp.ne.s32.totalorder %s299, %s301
      %p308 = scmp.eq.s32.totalorder %s34, 1
      %p309 = por %p307, %p308
      %p310 = scmp.ne.s32.totalorder %s301, %s302
      %p311 = scmp.eq.s32.totalorder %s34, 0
      %p312 = por %p310, %p311
      %p313 = scmp.ne.s32.totalorder %s301, %s302
      %p314 = scmp.eq.s32.totalorder %s35, 1
      %p315 = por %p313, %p314
      %p317 = scmp.ne.s32.totalorder %s302, %s316
      %p318 = scmp.eq.s32.totalorder %s35, 0
      %p319 = por %p317, %p318
      %s321 = sadd.s32 %s320, 1
      %p324 = scmp.eq.s32.totalorder %s29, 1
      %p325 = scmp.ne.s32.totalorder %s320, %s322
      %p326 = scmp.eq.s32.totalorder %s29, 0
      %p327 = por %p325, %p326
      %p328 = scmp.ne.s32.totalorder %s320, %s322
      %p329 = scmp.eq.s32.totalorder %s34, 1
      %p330 = por %p328, %p329
      %p331 = scmp.ne.s32.totalorder %s322, %s323
      %p332 = scmp.eq.s32.totalorder %s34, 0
      %p333 = por %p331, %p332
      %p334 = scmp.ne.s32.totalorder %s322, %s323
      %p335 = scmp.eq.s32.totalorder %s35, 1
      %p336 = por %p334, %p335
      %p338 = scmp.ne.s32.totalorder %s323, %s337
      %p339 = scmp.eq.s32.totalorder %s35, 0
      %p340 = por %p338, %p339
      %s342 = sadd.s32 %s341, 1
      %p345 = scmp.eq.s32.totalorder %s29, 1
      %p346 = scmp.ne.s32.totalorder %s341, %s343
      %p347 = scmp.eq.s32.totalorder %s29, 0
      %p348 = por %p346, %p347
      %p349 = scmp.ne.s32.totalorder %s341, %s343
      %p350 = scmp.eq.s32.totalorder %s34, 1
      %p351 = por %p349, %p350
      %p352 = scmp.ne.s32.totalorder %s343, %s344
      %p353 = scmp.eq.s32.totalorder %s34, 0
      %p354 = por %p352, %p353
      %p355 = scmp.ne.s32.totalorder %s343, %s344
      %p356 = scmp.eq.s32.totalorder %s35, 1
      %p357 = por %p355, %p356
      %p359 = scmp.ne.s32.totalorder %s344, %s358
      %p360 = scmp.eq.s32.totalorder %s35, 0
      %p361 = por %p359, %p360
      %s363 = sadd.s32 %s362, 1
      %p366 = scmp.eq.s32.totalorder %s29, 1
      %p367 = scmp.ne.s32.totalorder %s362, %s364
      %p368 = scmp.eq.s32.totalorder %s29, 0
      %p369 = por %p367, %p368
      %p370 = scmp.ne.s32.totalorder %s362, %s364
      %p371 = scmp.eq.s32.totalorder %s34, 1
      %p372 = por %p370, %p371
      %p373 = scmp.ne.s32.totalorder %s364, %s365
      %p374 = scmp.eq.s32.totalorder %s34, 0
      %p375 = por %p373, %p374
      %p376 = scmp.ne.s32.totalorder %s364, %s365
      %p377 = scmp.eq.s32.totalorder %s35, 1
      %p378 = por %p376, %p377
      %p380 = scmp.ne.s32.totalorder %s365, %s379
      %p381 = scmp.eq.s32.totalorder %s35, 0
      %p382 = por %p380, %p381
      %s384 = sadd.s32 %s383, 1
      %p387 = scmp.eq.s32.totalorder %s29, 1
      %p388 = scmp.ne.s32.totalorder %s383, %s385
      %p389 = scmp.eq.s32.totalorder %s29, 0
      %p390 = por %p388, %p389
      %p391 = scmp.ne.s32.totalorder %s383, %s385
      %p392 = scmp.eq.s32.totalorder %s34, 1
      %p393 = por %p391, %p392
      %p394 = scmp.ne.s32.totalorder %s385, %s386
      %p395 = scmp.eq.s32.totalorder %s34, 0
      %p396 = por %p394, %p395
      %p397 = scmp.ne.s32.totalorder %s385, %s386
      %p398 = scmp.eq.s32.totalorder %s35, 1
      %p399 = por %p397, %p398
      %p401 = scmp.ne.s32.totalorder %s386, %s400
      %p402 = scmp.eq.s32.totalorder %s35, 0
      %p403 = por %p401, %p402
      %s405 = sadd.s32 %s404, 1
      %p408 = scmp.eq.s32.totalorder %s29, 1
      %p409 = scmp.ne.s32.totalorder %s404, %s406
      %p410 = scmp.eq.s32.totalorder %s29, 0
      %p411 = por %p409, %p410
      %p412 = scmp.ne.s32.totalorder %s404, %s406
      %p413 = scmp.eq.s32.totalorder %s34, 1
      %p414 = por %p412, %p413
      %p415 = scmp.ne.s32.totalorder %s406, %s407
      %p416 = scmp.eq.s32.totalorder %s34, 0
      %p417 = por %p415, %p416
      %p418 = scmp.ne.s32.totalorder %s406, %s407
      %p419 = scmp.eq.s32.totalorder %s35, 1
      %p420 = por %p418, %p419
      %p422 = scmp.ne.s32.totalorder %s407, %s421
      %p423 = scmp.eq.s32.totalorder %s35, 0
      %p424 = por %p422, %p423
      %s426 = sadd.s32 %s425, 1
      %p429 = scmp.eq.s32.totalorder %s29, 1
      %p430 = scmp.ne.s32.totalorder %s425, %s427
      %p431 = scmp.eq.s32.totalorder %s29, 0
      %p432 = por %p430, %p431
      %p433 = scmp.ne.s32.totalorder %s425, %s427
      %p434 = scmp.eq.s32.totalorder %s34, 1
      %p435 = por %p433, %p434
      %p436 = scmp.ne.s32.totalorder %s427, %s428
      %p437 = scmp.eq.s32.totalorder %s34, 0
      %p438 = por %p436, %p437
      %p439 = scmp.ne.s32.totalorder %s427, %s428
      %p440 = scmp.eq.s32.totalorder %s35, 1
      %p441 = por %p439, %p440
      %p443 = scmp.ne.s32.totalorder %s428, %s442
      %p444 = scmp.eq.s32.totalorder %s35, 0
      %p445 = por %p443, %p444
      %s447 = sadd.s32 %s446, 1
      %p450 = scmp.eq.s32.totalorder %s29, 1
      %p451 = scmp.ne.s32.totalorder %s446, %s448
      %p452 = scmp.eq.s32.totalorder %s29, 0
      %p453 = por %p451, %p452
      %p454 = scmp.ne.s32.totalorder %s446, %s448
      %p455 = scmp.eq.s32.totalorder %s34, 1
      %p456 = por %p454, %p455
      %p457 = scmp.ne.s32.totalorder %s448, %s449
      %p458 = scmp.eq.s32.totalorder %s34, 0
      %p459 = por %p457, %p458
      %p460 = scmp.ne.s32.totalorder %s448, %s449
      %p461 = scmp.eq.s32.totalorder %s35, 1
      %p462 = por %p460, %p461
      %p464 = scmp.ne.s32.totalorder %s449, %s463
      %p465 = scmp.eq.s32.totalorder %s35, 0
      %p466 = por %p464, %p465
      %s467 = ssub.s32 %s29, %s36
      %p468 = scmp.eq.s32.totalorder %s467, 0
      %s470 = sadd.s32 %s469, 1
      %s471 = scalar_select %p468, %s469, %s470
      %p474 = pneg %p468
      %p475 = scmp.eq.s32.totalorder %s29, 1
      %p476 = por %p474, %p475
      %p477 = scmp.ne.s32.totalorder %s469, %s472
      %p478 = scmp.eq.s32.totalorder %s29, 0
      %p479 = por %p477, %p478
      %p480 = scmp.ne.s32.totalorder %s469, %s472
      %p481 = scmp.eq.s32.totalorder %s34, 1
      %p482 = por %p480, %p481
      %p483 = scmp.ne.s32.totalorder %s472, %s473
      %p484 = scmp.eq.s32.totalorder %s34, 0
      %p485 = por %p483, %p484
      %p486 = scmp.ne.s32.totalorder %s472, %s473
      %p487 = scmp.eq.s32.totalorder %s35, 1
      %p488 = por %p486, %p487
      %p490 = scmp.ne.s32.totalorder %s473, %s489
      %p491 = scmp.eq.s32.totalorder %s35, 0
      %p492 = por %p490, %p491
      %p493 = scmp.le.s32.totalorder 1, %s29
      %p494 = scmp.lt.s32.totalorder %s29, 3
      %p495 = pnand %p493, %p494
      %p496 = pneg %p495
      // Predicated region
      $region9: #{forward.1} parent=5 // pred_check
        _
      $region10: #{forward.1} parent=5 // pred_check_branch
        %498 = sbr.rel (%p495) target = $region12
      $region11: #{forward.1} parent=5 // pred_region
        %s499 = ssub.s32 %s29, 1
        // Predicated region
        $region13: #{forward.1} parent=11 // pred_check
          %p500 = pneg %p102
        $region14: #{forward.1} parent=11 // pred_check_branch
          %502 = sbr.rel (%p500) target = $region16
        $region15: #{forward.1} parent=11 // pred_region
          _
        $region16: #{forward.1} parent=11 // pred_fallthru
          _
        // Predicated region
        $region17: #{forward.1} parent=11 // pred_check
          %p503 = pneg %p123
        $region18: #{forward.1} parent=11 // pred_check_branch
          %505 = sbr.rel (%p503) target = $region20
        $region19: #{forward.1} parent=11 // pred_region
          _
        $region20: #{forward.1} parent=11 // pred_fallthru
          _
        // Predicated region
        $region21: #{forward.1} parent=11 // pred_check
          %p506 = pneg %p144
        $region22: #{forward.1} parent=11 // pred_check_branch
          %508 = sbr.rel (%p506) target = $region24
        $region23: #{forward.1} parent=11 // pred_region
          _
        $region24: #{forward.1} parent=11 // pred_fallthru
          _
        // Predicated region
        $region25: #{forward.1} parent=11 // pred_check
          %p509 = pneg %p165
        $region26: #{forward.1} parent=11 // pred_check_branch
          %511 = sbr.rel (%p509) target = $region28
        $region27: #{forward.1} parent=11 // pred_region
          _
        $region28: #{forward.1} parent=11 // pred_fallthru
          _
        // Predicated region
        $region29: #{forward.1} parent=11 // pred_check
          %p512 = pneg %p186
        $region30: #{forward.1} parent=11 // pred_check_branch
          %514 = sbr.rel (%p512) target = $region32
        $region31: #{forward.1} parent=11 // pred_region
          _
        $region32: #{forward.1} parent=11 // pred_fallthru
          _
        // Predicated region
        $region33: #{forward.1} parent=11 // pred_check
          %p515 = pneg %p207
        $region34: #{forward.1} parent=11 // pred_check_branch
          %517 = sbr.rel (%p515) target = $region36
        $region35: #{forward.1} parent=11 // pred_region
          _
        $region36: #{forward.1} parent=11 // pred_fallthru
          _
        // Predicated region
        $region37: #{forward.1} parent=11 // pred_check
          %p518 = pneg %p228
        $region38: #{forward.1} parent=11 // pred_check_branch
          %520 = sbr.rel (%p518) target = $region40
        $region39: #{forward.1} parent=11 // pred_region
          _
        $region40: #{forward.1} parent=11 // pred_fallthru
          _
        // Predicated region
        $region41: #{forward.1} parent=11 // pred_check
          %p521 = pneg %p249
        $region42: #{forward.1} parent=11 // pred_check_branch
          %523 = sbr.rel (%p521) target = $region44
        $region43: #{forward.1} parent=11 // pred_region
          _
        $region44: #{forward.1} parent=11 // pred_fallthru
          _
        // Predicated region
        $region45: #{forward.1} parent=11 // pred_check
          %p524 = pneg %p270
        $region46: #{forward.1} parent=11 // pred_check_branch
          %526 = sbr.rel (%p524) target = $region48
        $region47: #{forward.1} parent=11 // pred_region
          _
        $region48: #{forward.1} parent=11 // pred_fallthru
          _
        // Predicated region
        $region49: #{forward.1} parent=11 // pred_check
          %p527 = pneg %p291
        $region50: #{forward.1} parent=11 // pred_check_branch
          %529 = sbr.rel (%p527) target = $region52
        $region51: #{forward.1} parent=11 // pred_region
          _
        $region52: #{forward.1} parent=11 // pred_fallthru
          _
        // Predicated region
        $region53: #{forward.1} parent=11 // pred_check
          %p530 = pneg %p312
        $region54: #{forward.1} parent=11 // pred_check_branch
          %532 = sbr.rel (%p530) target = $region56
        $region55: #{forward.1} parent=11 // pred_region
          _
        $region56: #{forward.1} parent=11 // pred_fallthru
          _
        // Predicated region
        $region57: #{forward.1} parent=11 // pred_check
          %p533 = pneg %p333
        $region58: #{forward.1} parent=11 // pred_check_branch
          %535 = sbr.rel (%p533) target = $region60
        $region59: #{forward.1} parent=11 // pred_region
          _
        $region60: #{forward.1} parent=11 // pred_fallthru
          _
        // Predicated region
        $region61: #{forward.1} parent=11 // pred_check
          %p536 = pneg %p354
        $region62: #{forward.1} parent=11 // pred_check_branch
          %538 = sbr.rel (%p536) target = $region64
        $region63: #{forward.1} parent=11 // pred_region
          _
        $region64: #{forward.1} parent=11 // pred_fallthru
          _
        // Predicated region
        $region65: #{forward.1} parent=11 // pred_check
          %p539 = pneg %p375
        $region66: #{forward.1} parent=11 // pred_check_branch
          %541 = sbr.rel (%p539) target = $region68
        $region67: #{forward.1} parent=11 // pred_region
          _
        $region68: #{forward.1} parent=11 // pred_fallthru
          _
        // Predicated region
        $region69: #{forward.1} parent=11 // pred_check
          %p542 = pneg %p396
        $region70: #{forward.1} parent=11 // pred_check_branch
          %544 = sbr.rel (%p542) target = $region72
        $region71: #{forward.1} parent=11 // pred_region
          _
        $region72: #{forward.1} parent=11 // pred_fallthru
          _
        // Predicated region
        $region73: #{forward.1} parent=11 // pred_check
          %p545 = pneg %p417
        $region74: #{forward.1} parent=11 // pred_check_branch
          %547 = sbr.rel (%p545) target = $region76
        $region75: #{forward.1} parent=11 // pred_region
          _
        $region76: #{forward.1} parent=11 // pred_fallthru
          _
        // Predicated region
        $region77: #{forward.1} parent=11 // pred_check
          %p548 = pneg %p438
        $region78: #{forward.1} parent=11 // pred_check_branch
          %550 = sbr.rel (%p548) target = $region80
        $region79: #{forward.1} parent=11 // pred_region
          _
        $region80: #{forward.1} parent=11 // pred_fallthru
          _
        // Predicated region
        $region81: #{forward.1} parent=11 // pred_check
          %p551 = pneg %p459
        $region82: #{forward.1} parent=11 // pred_check_branch
          %553 = sbr.rel (%p551) target = $region84
        $region83: #{forward.1} parent=11 // pred_region
          _
        $region84: #{forward.1} parent=11 // pred_fallthru
          _
      $region12: #{forward.1} parent=5 // pred_fallthru
        _
      %p554 = scmp.lt.s32.totalorder %s29, 2
      // Predicated region
      $region85: #{forward.1} parent=5 // pred_check
        %p555 = pneg %p554
      $region86: #{forward.1} parent=5 // pred_check_branch
        %557 = sbr.rel (%p555) target = $region88
      $region87: #{forward.1} parent=5 // pred_region
        // Predicated region
        $region89: #{forward.1} parent=87 // pred_check
          %p558 = pneg %p49
        $region90: #{forward.1} parent=87 // pred_check_branch
          %560 = sbr.rel (%p558) target = $region92
        $region91: #{forward.1} parent=87 // pred_region
          %p561 = scmp.lt.s32.totalorder %s29, 1
          %s562 = scalar_select %p561, %s29, 1
          %s563 = smul.addr %s562, 16
          %s564 = smul.addr %s563, 8
          %s565 = scalar_lea.vmem %s0, %s564
        $region92: #{forward.1} parent=87 // pred_fallthru
          _
        // Predicated region
        $region93: #{forward.1} parent=87 // pred_check
          %p566 = pneg %p75
        $region94: #{forward.1} parent=87 // pred_check_branch
          %568 = sbr.rel (%p566) target = $region96
        $region95: #{forward.1} parent=87 // pred_region
          %p569 = scmp.lt.s32.totalorder %s29, 1
          %s570 = scalar_select %p569, %s29, 1
          %s571 = scalar_lea.vmem %s1, %s570
        $region96: #{forward.1} parent=87 // pred_fallthru
          _
      $region88: #{forward.1} parent=5 // pred_fallthru
        _
      %p572 = scmp.le.s32.totalorder 1, %s29
      %p573 = scmp.lt.s32.totalorder %s29, 3
      %p574 = pnand %p572, %p573
      %p575 = pneg %p574
      // Predicated region
      $region97: #{forward.1} parent=5 // pred_check
        _
      $region98: #{forward.1} parent=5 // pred_check_branch
        %577 = sbr.rel (%p574) target = $region100
      $region99: #{forward.1} parent=5 // pred_region
        %s578 = ssub.s32 %s29, 1
        %p579 = scmp.lt.s32.totalorder %s34, 1
        %s580 = scalar_select %p579, %s34, 1
        %s581 = smul.addr %s580, 16
        %s582 = smul.addr %s581, 8
        %s583 = scalar_lea.vmem %s0, %s582
        %p584 = pneg %p55
        %p585 = pneg %p52
        %p586 = scmp.lt.s32.totalorder %s34, 1
        %s587 = scalar_select %p586, %s34, 1
        %s588 = scalar_lea.vmem %s1, %s587
        %p589 = pneg %p81
        %p590 = pneg %p78
        %p591 = pneg %p102
        %p592 = pneg %p99
        %p593 = pneg %p123
        %p594 = pneg %p120
        %p595 = pneg %p144
        %p596 = pneg %p141
        %p597 = pneg %p165
        %p598 = pneg %p162
        %p599 = pneg %p186
        %p600 = pneg %p183
        %p601 = pneg %p207
        %p602 = pneg %p204
        %p603 = pneg %p228
        %p604 = pneg %p225
        %p605 = pneg %p249
        %p606 = pneg %p246
        %p607 = pneg %p270
        %p608 = pneg %p267
        %p609 = pneg %p291
        %p610 = pneg %p288
        %p611 = pneg %p312
        %p612 = pneg %p309
        %p613 = pneg %p333
        %p614 = pneg %p330
        %p615 = pneg %p354
        %p616 = pneg %p351
        %p617 = pneg %p375
        %p618 = pneg %p372
        %p619 = pneg %p396
        %p620 = pneg %p393
        %p621 = pneg %p417
        %p622 = pneg %p414
        %p623 = pneg %p438
        %p624 = pneg %p435
        %p625 = pneg %p459
        %p626 = pneg %p456
        %p627 = pneg %p485
        %p628 = pneg %p482
        %s629 = sand.u32 %s472, 1
        %s630 = scalar_lea.sflag [#allocation4], %s629
        %s631 = sand.u32 %s472, 1
        %s632 = scalar_lea.vmem [#allocation3], %s631
        %p633 = scmp.lt.s32.totalorder %s34, 1
        %s634 = scalar_select %p633, %s34, 1
        %s635 = smul.addr %s634, 16
        %s636 = smul.addr %s635, 8
        %s637 = scalar_lea.vmem %s0, %s636
        %p638 = scmp.lt.s32.totalorder %s34, 1
        %s639 = scalar_select %p638, %s34, 1
        %s640 = scalar_lea.vmem %s1, %s639
        %v641 = vld [vmem:[%s640] sm:$0x1]
        %v642 = vld [vmem:[%s637] sm:$0xff]
        %v643 = vld [vmem:[%s637 + $0x8] sm:$0xff]
        %v644 = vld [vmem:[%s637 + $0x10] sm:$0xff]
        %v645 = vld [vmem:[%s637 + $0x18] sm:$0xff]
        %v646 = vld [vmem:[%s637 + $0x20] sm:$0xff]
        %v647 = vld [vmem:[%s637 + $0x28] sm:$0xff]
        %v648 = vld [vmem:[%s637 + $0x30] sm:$0xff]
        %v649 = vld [vmem:[%s637 + $0x38] sm:$0xff]
        %v650 = vld [vmem:[%s637 + $0x40] sm:$0xff]
        %v651 = vld [vmem:[%s637 + $0x48] sm:$0xff]
        %v652 = vld [vmem:[%s637 + $0x50] sm:$0xff]
        %v653 = vld [vmem:[%s637 + $0x58] sm:$0xff]
        %v654 = vld [vmem:[%s637 + $0x60] sm:$0xff]
        %v655 = vld [vmem:[%s637 + $0x68] sm:$0xff]
        %v656 = vld [vmem:[%s637 + $0x70] sm:$0xff]
        %v657 = vld [vmem:[%s637 + $0x78] sm:$0xff]
        %v658 = vld [vmem:[%s2] sm:$0x1]
        %v659 = vld [vmem:[%s3] sm:$0x1]
        %660 = vadd.xlane.f32.xlu0 %v642
        %v661 = vpop.xlane.xlu0 %660
        %662 = vadd.xlane.f32.xlu0 %v643
        %v663 = vpop.xlane.xlu0 %662
        %664 = vadd.xlane.f32.xlu0 %v644
        %v665 = vpop.xlane.xlu0 %664
        %666 = vadd.xlane.f32.xlu0 %v645
        %v667 = vpop.xlane.xlu0 %666
        %668 = vadd.xlane.f32.xlu0 %v646
        %v669 = vpop.xlane.xlu0 %668
        %670 = vadd.xlane.f32.xlu0 %v647
        %v671 = vpop.xlane.xlu0 %670
        %672 = vadd.xlane.f32.xlu0 %v648
        %v673 = vpop.xlane.xlu0 %672
        %674 = vadd.xlane.f32.xlu0 %v649
        %v675 = vpop.xlane.xlu0 %674
        %676 = vadd.xlane.f32.xlu0 %v650
        %v677 = vpop.xlane.xlu0 %676
        %678 = vadd.xlane.f32.xlu0 %v651
        %v679 = vpop.xlane.xlu0 %678
        %680 = vadd.xlane.f32.xlu0 %v652
        %v681 = vpop.xlane.xlu0 %680
        %682 = vadd.xlane.f32.xlu0 %v653
        %v683 = vpop.xlane.xlu0 %682
        %684 = vadd.xlane.f32.xlu0 %v654
        %v685 = vpop.xlane.xlu0 %684
        %686 = vadd.xlane.f32.xlu0 %v655
        %v687 = vpop.xlane.xlu0 %686
        %688 = vadd.xlane.f32.xlu0 %v656
        %v689 = vpop.xlane.xlu0 %688
        %690 = vadd.xlane.f32.xlu0 %v657
        %v691 = vpop.xlane.xlu0 %690
        %v692 = vrcp.pop 128.0
        %v693 = vmul.f32 128.0, %v692
        %v694 = vsub.f32 1.0, %v693
        %v695 = vmul.f32 %v692, %v694
        %v696 = vadd.f32 %v692, %v695
        %vm697 = vweird.f32 %v692
        %v698 = vsel %vm697, %v692, %v696
        %v699 = vmul.f32 %v661, %v698
        %v700 = vmul.f32 %v663, %v698
        %v701 = vmul.f32 %v665, %v698
        %v702 = vmul.f32 %v667, %v698
        %v703 = vmul.f32 %v669, %v698
        %v704 = vmul.f32 %v671, %v698
        %v705 = vmul.f32 %v673, %v698
        %v706 = vmul.f32 %v675, %v698
        %v707 = vmul.f32 %v677, %v698
        %v708 = vmul.f32 %v679, %v698
        %v709 = vmul.f32 %v681, %v698
        %v710 = vmul.f32 %v683, %v698
        %v711 = vmul.f32 %v685, %v698
        %v712 = vmul.f32 %v687, %v698
        %v713 = vmul.f32 %v689, %v698
        %v714 = vmul.f32 %v691, %v698
        %v715 = vsub.f32 %v642, %v699
        %v716 = vsub.f32 %v643, %v700
        %v717 = vsub.f32 %v644, %v701
        %v718 = vsub.f32 %v645, %v702
        %v719 = vsub.f32 %v646, %v703
        %v720 = vsub.f32 %v647, %v704
        %v721 = vsub.f32 %v648, %v705
        %v722 = vsub.f32 %v649, %v706
        %v723 = vsub.f32 %v650, %v707
        %v724 = vsub.f32 %v651, %v708
        %v725 = vsub.f32 %v652, %v709
        %v726 = vsub.f32 %v653, %v710
        %v727 = vsub.f32 %v654, %v711
        %v728 = vsub.f32 %v655, %v712
        %v729 = vsub.f32 %v656, %v713
        %v730 = vsub.f32 %v657, %v714
        %v731 = vmul.f32 %v715, %v715
        %v732 = vmul.f32 %v716, %v716
        %v733 = vmul.f32 %v717, %v717
        %v734 = vmul.f32 %v718, %v718
        %v735 = vmul.f32 %v719, %v719
        %v736 = vmul.f32 %v720, %v720
        %v737 = vmul.f32 %v721, %v721
        %v738 = vmul.f32 %v722, %v722
        %v739 = vmul.f32 %v723, %v723
        %v740 = vmul.f32 %v724, %v724
        %v741 = vmul.f32 %v725, %v725
        %v742 = vmul.f32 %v726, %v726
        %v743 = vmul.f32 %v727, %v727
        %v744 = vmul.f32 %v728, %v728
        %v745 = vmul.f32 %v729, %v729
        %v746 = vmul.f32 %v730, %v730
        %747 = vadd.xlane.f32.xlu0 %v731
        %v748 = vpop.xlane.xlu0 %747
        %749 = vadd.xlane.f32.xlu0 %v732
        %v750 = vpop.xlane.xlu0 %749
        %751 = vadd.xlane.f32.xlu0 %v733
        %v752 = vpop.xlane.xlu0 %751
        %753 = vadd.xlane.f32.xlu0 %v734
        %v754 = vpop.xlane.xlu0 %753
        %755 = vadd.xlane.f32.xlu0 %v735
        %v756 = vpop.xlane.xlu0 %755
        %757 = vadd.xlane.f32.xlu0 %v736
        %v758 = vpop.xlane.xlu0 %757
        %759 = vadd.xlane.f32.xlu0 %v737
        %v760 = vpop.xlane.xlu0 %759
        %761 = vadd.xlane.f32.xlu0 %v738
        %v762 = vpop.xlane.xlu0 %761
        %763 = vadd.xlane.f32.xlu0 %v739
        %v764 = vpop.xlane.xlu0 %763
        %765 = vadd.xlane.f32.xlu0 %v740
        %v766 = vpop.xlane.xlu0 %765
        %767 = vadd.xlane.f32.xlu0 %v741
        %v768 = vpop.xlane.xlu0 %767
        %769 = vadd.xlane.f32.xlu0 %v742
        %v770 = vpop.xlane.xlu0 %769
        %771 = vadd.xlane.f32.xlu0 %v743
        %v772 = vpop.xlane.xlu0 %771
        %773 = vadd.xlane.f32.xlu0 %v744
        %v774 = vpop.xlane.xlu0 %773
        %775 = vadd.xlane.f32.xlu0 %v745
        %v776 = vpop.xlane.xlu0 %775
        %777 = vadd.xlane.f32.xlu0 %v746
        %v778 = vpop.xlane.xlu0 %777
        %v779 = vmul.f32 %v748, %v698
        %v780 = vmul.f32 %v750, %v698
        %v781 = vmul.f32 %v752, %v698
        %v782 = vmul.f32 %v754, %v698
        %v783 = vmul.f32 %v756, %v698
        %v784 = vmul.f32 %v758, %v698
        %v785 = vmul.f32 %v760, %v698
        %v786 = vmul.f32 %v762, %v698
        %v787 = vmul.f32 %v764, %v698
        %v788 = vmul.f32 %v766, %v698
        %v789 = vmul.f32 %v768, %v698
        %v790 = vmul.f32 %v770, %v698
        %v791 = vmul.f32 %v772, %v698
        %v792 = vmul.f32 %v774, %v698
        %v793 = vmul.f32 %v776, %v698
        %v794 = vmul.f32 %v778, %v698
        %v795 = vadd.f32 %v779, 1e-05
        %v796 = vadd.f32 %v780, 1e-05
        %v797 = vadd.f32 %v781, 1e-05
        %v798 = vadd.f32 %v782, 1e-05
        %v799 = vadd.f32 %v783, 1e-05
        %v800 = vadd.f32 %v784, 1e-05
        %v801 = vadd.f32 %v785, 1e-05
        %v802 = vadd.f32 %v786, 1e-05
        %v803 = vadd.f32 %v787, 1e-05
        %v804 = vadd.f32 %v788, 1e-05
        %v805 = vadd.f32 %v789, 1e-05
        %v806 = vadd.f32 %v790, 1e-05
        %v807 = vadd.f32 %v791, 1e-05
        %v808 = vadd.f32 %v792, 1e-05
        %v809 = vadd.f32 %v793, 1e-05
        %v810 = vadd.f32 %v794, 1e-05
        %v811 = vrsqrt.pop %v795
        %v812 = vmul.f32 %v811, %v795
        %v813 = vmul.f32 %v812, %v811
        %v814 = vmul.f32 0.5, %v813
        %v815 = vsub.f32 1.5, %v814
        %v816 = vmul.f32 %v811, %v815
        %vm817 = vweird.f32 %v795
        %vm818 = vweird.f32 %v811
        %vm819 = vmor %vm817, %vm818
        %v820 = vsel %vm819, %v811, %v816
        %v821 = vrsqrt.pop %v796
        %v822 = vmul.f32 %v821, %v796
        %v823 = vmul.f32 %v822, %v821
        %v824 = vmul.f32 0.5, %v823
        %v825 = vsub.f32 1.5, %v824
        %v826 = vmul.f32 %v821, %v825
        %vm827 = vweird.f32 %v796
        %vm828 = vweird.f32 %v821
        %vm829 = vmor %vm827, %vm828
        %v830 = vsel %vm829, %v821, %v826
        %v831 = vrsqrt.pop %v797
        %v832 = vmul.f32 %v831, %v797
        %v833 = vmul.f32 %v832, %v831
        %v834 = vmul.f32 0.5, %v833
        %v835 = vsub.f32 1.5, %v834
        %v836 = vmul.f32 %v831, %v835
        %vm837 = vweird.f32 %v797
        %vm838 = vweird.f32 %v831
        %vm839 = vmor %vm837, %vm838
        %v840 = vsel %vm839, %v831, %v836
        %v841 = vrsqrt.pop %v798
        %v842 = vmul.f32 %v841, %v798
        %v843 = vmul.f32 %v842, %v841
        %v844 = vmul.f32 0.5, %v843
        %v845 = vsub.f32 1.5, %v844
        %v846 = vmul.f32 %v841, %v845
        %vm847 = vweird.f32 %v798
        %vm848 = vweird.f32 %v841
        %vm849 = vmor %vm847, %vm848
        %v850 = vsel %vm849, %v841, %v846
        %v851 = vrsqrt.pop %v799
        %v852 = vmul.f32 %v851, %v799
        %v853 = vmul.f32 %v852, %v851
        %v854 = vmul.f32 0.5, %v853
        %v855 = vsub.f32 1.5, %v854
        %v856 = vmul.f32 %v851, %v855
        %vm857 = vweird.f32 %v799
        %vm858 = vweird.f32 %v851
        %vm859 = vmor %vm857, %vm858
        %v860 = vsel %vm859, %v851, %v856
        %v861 = vrsqrt.pop %v800
        %v862 = vmul.f32 %v861, %v800
        %v863 = vmul.f32 %v862, %v861
        %v864 = vmul.f32 0.5, %v863
        %v865 = vsub.f32 1.5, %v864
        %v866 = vmul.f32 %v861, %v865
        %vm867 = vweird.f32 %v800
        %vm868 = vweird.f32 %v861
        %vm869 = vmor %vm867, %vm868
        %v870 = vsel %vm869, %v861, %v866
        %v871 = vrsqrt.pop %v801
        %v872 = vmul.f32 %v871, %v801
        %v873 = vmul.f32 %v872, %v871
        %v874 = vmul.f32 0.5, %v873
        %v875 = vsub.f32 1.5, %v874
        %v876 = vmul.f32 %v871, %v875
        %vm877 = vweird.f32 %v801
        %vm878 = vweird.f32 %v871
        %vm879 = vmor %vm877, %vm878
        %v880 = vsel %vm879, %v871, %v876
        %v881 = vrsqrt.pop %v802
        %v882 = vmul.f32 %v881, %v802
        %v883 = vmul.f32 %v882, %v881
        %v884 = vmul.f32 0.5, %v883
        %v885 = vsub.f32 1.5, %v884
        %v886 = vmul.f32 %v881, %v885
        %vm887 = vweird.f32 %v802
        %vm888 = vweird.f32 %v881
        %vm889 = vmor %vm887, %vm888
        %v890 = vsel %vm889, %v881, %v886
        %v891 = vrsqrt.pop %v803
        %v892 = vmul.f32 %v891, %v803
        %v893 = vmul.f32 %v892, %v891
        %v894 = vmul.f32 0.5, %v893
        %v895 = vsub.f32 1.5, %v894
        %v896 = vmul.f32 %v891, %v895
        %vm897 = vweird.f32 %v803
        %vm898 = vweird.f32 %v891
        %vm899 = vmor %vm897, %vm898
        %v900 = vsel %vm899, %v891, %v896
        %v901 = vrsqrt.pop %v804
        %v902 = vmul.f32 %v901, %v804
        %v903 = vmul.f32 %v902, %v901
        %v904 = vmul.f32 0.5, %v903
        %v905 = vsub.f32 1.5, %v904
        %v906 = vmul.f32 %v901, %v905
        %vm907 = vweird.f32 %v804
        %vm908 = vweird.f32 %v901
        %vm909 = vmor %vm907, %vm908
        %v910 = vsel %vm909, %v901, %v906
        %v911 = vrsqrt.pop %v805
        %v912 = vmul.f32 %v911, %v805
        %v913 = vmul.f32 %v912, %v911
        %v914 = vmul.f32 0.5, %v913
        %v915 = vsub.f32 1.5, %v914
        %v916 = vmul.f32 %v911, %v915
        %vm917 = vweird.f32 %v805
        %vm918 = vweird.f32 %v911
        %vm919 = vmor %vm917, %vm918
        %v920 = vsel %vm919, %v911, %v916
        %v921 = vrsqrt.pop %v806
        %v922 = vmul.f32 %v921, %v806
        %v923 = vmul.f32 %v922, %v921
        %v924 = vmul.f32 0.5, %v923
        %v925 = vsub.f32 1.5, %v924
        %v926 = vmul.f32 %v921, %v925
        %vm927 = vweird.f32 %v806
        %vm928 = vweird.f32 %v921
        %vm929 = vmor %vm927, %vm928
        %v930 = vsel %vm929, %v921, %v926
        %v931 = vrsqrt.pop %v807
        %v932 = vmul.f32 %v931, %v807
        %v933 = vmul.f32 %v932, %v931
        %v934 = vmul.f32 0.5, %v933
        %v935 = vsub.f32 1.5, %v934
        %v936 = vmul.f32 %v931, %v935
        %vm937 = vweird.f32 %v807
        %vm938 = vweird.f32 %v931
        %vm939 = vmor %vm937, %vm938
        %v940 = vsel %vm939, %v931, %v936
        %v941 = vrsqrt.pop %v808
        %v942 = vmul.f32 %v941, %v808
        %v943 = vmul.f32 %v942, %v941
        %v944 = vmul.f32 0.5, %v943
        %v945 = vsub.f32 1.5, %v944
        %v946 = vmul.f32 %v941, %v945
        %vm947 = vweird.f32 %v808
        %vm948 = vweird.f32 %v941
        %vm949 = vmor %vm947, %vm948
        %v950 = vsel %vm949, %v941, %v946
        %v951 = vrsqrt.pop %v809
        %v952 = vmul.f32 %v951, %v809
        %v953 = vmul.f32 %v952, %v951
        %v954 = vmul.f32 0.5, %v953
        %v955 = vsub.f32 1.5, %v954
        %v956 = vmul.f32 %v951, %v955
        %vm957 = vweird.f32 %v809
        %vm958 = vweird.f32 %v951
        %vm959 = vmor %vm957, %vm958
        %v960 = vsel %vm959, %v951, %v956
        %v961 = vrsqrt.pop %v810
        %v962 = vmul.f32 %v961, %v810
        %v963 = vmul.f32 %v962, %v961
        %v964 = vmul.f32 0.5, %v963
        %v965 = vsub.f32 1.5, %v964
        %v966 = vmul.f32 %v961, %v965
        %vm967 = vweird.f32 %v810
        %vm968 = vweird.f32 %v961
        %vm969 = vmor %vm967, %vm968
        %v970 = vsel %vm969, %v961, %v966
        %v971 = vmul.f32 %v715, %v820
        %v972 = vmul.f32 %v716, %v830
        %v973 = vmul.f32 %v717, %v840
        %v974 = vmul.f32 %v718, %v850
        %v975 = vmul.f32 %v719, %v860
        %v976 = vmul.f32 %v720, %v870
        %v977 = vmul.f32 %v721, %v880
        %v978 = vmul.f32 %v722, %v890
        %v979 = vmul.f32 %v723, %v900
        %v980 = vmul.f32 %v724, %v910
        %v981 = vmul.f32 %v725, %v920
        %v982 = vmul.f32 %v726, %v930
        %v983 = vmul.f32 %v727, %v940
        %v984 = vmul.f32 %v728, %v950
        %v985 = vmul.f32 %v729, %v960
        %v986 = vmul.f32 %v730, %v970
        %v988 = vperm.slane %v658, 0
        %v990 = vmul.f32 %v971, %v988
        %v991 = vmul.f32 %v972, %v988
        %v992 = vmul.f32 %v973, %v988
        %v993 = vmul.f32 %v974, %v988
        %v994 = vmul.f32 %v975, %v988
        %v995 = vmul.f32 %v976, %v988
        %v996 = vmul.f32 %v977, %v988
        %v997 = vmul.f32 %v978, %v988
        %v998 = vmul.f32 %v979, %v988
        %v999 = vmul.f32 %v980, %v988
        %v1000 = vmul.f32 %v981, %v988
        %v1001 = vmul.f32 %v982, %v988
        %v1002 = vmul.f32 %v983, %v988
        %v1003 = vmul.f32 %v984, %v988
        %v1004 = vmul.f32 %v985, %v988
        %v1005 = vmul.f32 %v986, %v988
        %v1007 = vperm.slane %v659, 0
        %v1009 = vadd.f32 %v990, %v1007
        %v1010 = vadd.f32 %v991, %v1007
        %v1011 = vadd.f32 %v992, %v1007
        %v1012 = vadd.f32 %v993, %v1007
        %v1013 = vadd.f32 %v994, %v1007
        %v1014 = vadd.f32 %v995, %v1007
        %v1015 = vadd.f32 %v996, %v1007
        %v1016 = vadd.f32 %v997, %v1007
        %v1017 = vadd.f32 %v998, %v1007
        %v1018 = vadd.f32 %v999, %v1007
        %v1019 = vadd.f32 %v1000, %v1007
        %v1020 = vadd.f32 %v1001, %v1007
        %v1021 = vadd.f32 %v1002, %v1007
        %v1022 = vadd.f32 %v1003, %v1007
        %v1023 = vadd.f32 %v1004, %v1007
        %v1024 = vadd.f32 %v1005, %v1007
        %v1025 = vpack.c.bf16 %v1010, %v1009
        %v1026 = vpack.c.bf16 %v1012, %v1011
        %v1027 = vpack.c.bf16 %v1014, %v1013
        %v1028 = vpack.c.bf16 %v1016, %v1015
        %v1029 = vpack.c.bf16 %v1018, %v1017
        %v1030 = vpack.c.bf16 %v1020, %v1019
        %v1031 = vpack.c.bf16 %v1022, %v1021
        %v1032 = vpack.c.bf16 %v1024, %v1023
        %v1033 = vld [vmem:[%s4] sm:$0xff]
        %v1034 = vld [vmem:[%s4 + $0x8] sm:$0xf]
        %v1035 = vld [vmem:[%s4 + $0xc] sm:$0xff]
        %v1036 = vld [vmem:[%s4 + $0x14] sm:$0xf]
        %v1037 = vld [vmem:[%s4 + $0x18] sm:$0xff]
        %v1038 = vld [vmem:[%s4 + $0x20] sm:$0xf]
        %v1039 = vld [vmem:[%s4 + $0x24] sm:$0xff]
        %v1040 = vld [vmem:[%s4 + $0x2c] sm:$0xf]
        %v1041 = vld [vmem:[%s4 + $0x30] sm:$0xff]
        %v1042 = vld [vmem:[%s4 + $0x38] sm:$0xf]
        %v1043 = vld [vmem:[%s4 + $0x3c] sm:$0xff]
        %v1044 = vld [vmem:[%s4 + $0x44] sm:$0xf]
        %v1045 = vld [vmem:[%s4 + $0x48] sm:$0xff]
        %v1046 = vld [vmem:[%s4 + $0x50] sm:$0xf]
        %v1047 = vld [vmem:[%s4 + $0x54] sm:$0xff]
        %v1048 = vld [vmem:[%s4 + $0x5c] sm:$0xf]
        %v1049 = vld [vmem:[%s4 + $0x60] sm:$0xff]
        %v1050 = vld [vmem:[%s4 + $0x68] sm:$0xf]
        %v1051 = vld [vmem:[%s4 + $0x6c] sm:$0xff]
        %v1052 = vld [vmem:[%s4 + $0x74] sm:$0xf]
        %v1053 = vld [vmem:[%s4 + $0x78] sm:$0xff]
        %v1054 = vld [vmem:[%s4 + $0x80] sm:$0xf]
        %v1055 = vld [vmem:[%s4 + $0x84] sm:$0xff]
        %v1056 = vld [vmem:[%s4 + $0x8c] sm:$0xf]
        %v1057 = vld [vmem:[%s4 + $0x90] sm:$0xff]
        %v1058 = vld [vmem:[%s4 + $0x98] sm:$0xf]
        %v1059 = vld [vmem:[%s4 + $0x9c] sm:$0xff]
        %v1060 = vld [vmem:[%s4 + $0xa4] sm:$0xf]
        %v1061 = vld [vmem:[%s4 + $0xa8] sm:$0xff]
        %v1062 = vld [vmem:[%s4 + $0xb0] sm:$0xf]
        %v1063 = vld [vmem:[%s4 + $0xb4] sm:$0xff]
        %v1064 = vld [vmem:[%s4 + $0xbc] sm:$0xf]
        %v1065 = vld [vmem:[%s5] sm:$0x7]
        %v1067 = vperm.slane %v1065, 0
        %v1068 = vperm.slane %v1065, 1
        %v1069 = vperm.slane %v1065, 2
        %v1105 = vunpack.c.l.b16 %v1033
        %v1106 = vunpack.c.h.b16 %v1033
        %v1107 = vunpack.c.l.b16 %v1034
        %v1108 = vunpack.c.l.b16 %v1035
        %v1109 = vunpack.c.h.b16 %v1035
        %v1110 = vunpack.c.l.b16 %v1036
        %v1111 = vunpack.c.l.b16 %v1037
        %v1112 = vunpack.c.h.b16 %v1037
        %v1113 = vunpack.c.l.b16 %v1038
        %v1114 = vunpack.c.l.b16 %v1039
        %v1115 = vunpack.c.h.b16 %v1039
        %v1116 = vunpack.c.l.b16 %v1040
        %v1117 = vunpack.c.l.b16 %v1041
        %v1118 = vunpack.c.h.b16 %v1041
        %v1119 = vunpack.c.l.b16 %v1042
        %v1120 = vunpack.c.l.b16 %v1043
        %v1121 = vunpack.c.h.b16 %v1043
        %v1122 = vunpack.c.l.b16 %v1044
        %v1123 = vunpack.c.l.b16 %v1045
        %v1124 = vunpack.c.h.b16 %v1045
        %v1125 = vunpack.c.l.b16 %v1046
        %v1126 = vunpack.c.l.b16 %v1047
        %v1127 = vunpack.c.h.b16 %v1047
        %v1128 = vunpack.c.l.b16 %v1048
        %v1129 = vunpack.c.l.b16 %v1049
        %v1130 = vunpack.c.h.b16 %v1049
        %v1131 = vunpack.c.l.b16 %v1050
        %v1132 = vunpack.c.l.b16 %v1051
        %v1133 = vunpack.c.h.b16 %v1051
        %v1134 = vunpack.c.l.b16 %v1052
        %v1135 = vunpack.c.l.b16 %v1053
        %v1136 = vunpack.c.h.b16 %v1053
        %v1137 = vunpack.c.l.b16 %v1054
        %v1138 = vunpack.c.l.b16 %v1055
        %v1139 = vunpack.c.h.b16 %v1055
        %v1140 = vunpack.c.l.b16 %v1056
        %v1141 = vunpack.c.l.b16 %v1057
        %v1142 = vunpack.c.h.b16 %v1057
        %v1143 = vunpack.c.l.b16 %v1058
        %v1144 = vunpack.c.l.b16 %v1059
        %v1145 = vunpack.c.h.b16 %v1059
        %v1146 = vunpack.c.l.b16 %v1060
        %v1147 = vunpack.c.l.b16 %v1061
        %v1148 = vunpack.c.h.b16 %v1061
        %v1149 = vunpack.c.l.b16 %v1062
        %v1150 = vunpack.c.l.b16 %v1063
        %v1151 = vunpack.c.h.b16 %v1063
        %v1152 = vunpack.c.l.b16 %v1064
        %v1153 = vpack.c.b16 %v1108, %v1105
        %v1154 = vpack.c.b16 %v1109, %v1106
        %v1155 = vpack.c.b16 %v1110, %v1107
        %v1156 = vpack.c.b16 %v1114, %v1111
        %v1157 = vpack.c.b16 %v1115, %v1112
        %v1158 = vpack.c.b16 %v1116, %v1113
        %v1159 = vpack.c.b16 %v1120, %v1117
        %v1160 = vpack.c.b16 %v1121, %v1118
        %v1161 = vpack.c.b16 %v1122, %v1119
        %v1162 = vpack.c.b16 %v1126, %v1123
        %v1163 = vpack.c.b16 %v1127, %v1124
        %v1164 = vpack.c.b16 %v1128, %v1125
        %v1165 = vpack.c.b16 %v1132, %v1129
        %v1166 = vpack.c.b16 %v1133, %v1130
        %v1167 = vpack.c.b16 %v1134, %v1131
        %v1168 = vpack.c.b16 %v1138, %v1135
        %v1169 = vpack.c.b16 %v1139, %v1136
        %v1170 = vpack.c.b16 %v1140, %v1137
        %v1171 = vpack.c.b16 %v1144, %v1141
        %v1172 = vpack.c.b16 %v1145, %v1142
        %v1173 = vpack.c.b16 %v1146, %v1143
        %v1174 = vpack.c.b16 %v1150, %v1147
        %v1175 = vpack.c.b16 %v1151, %v1148
        %v1176 = vpack.c.b16 %v1152, %v1149
        %1201 = vmatpush.bf16.msra.mxu0 %v1174
        %1202 = vmatpush.bf16.msra.mxu0 %v1171
        %1203 = vmatpush.bf16.msra.mxu0 %v1168
        %1204 = vmatpush.bf16.msra.mxu0 %v1165
        %1205 = vmatpush.bf16.msra.mxu0 %v1162
        %1206 = vmatpush.bf16.msra.mxu0 %v1159
        %1207 = vmatpush.bf16.msra.mxu0 %v1156
        %1208 = vmatpush.bf16.msra.mxu0 %v1153
        %1209 = vmatmul.bf16.gmra.mxu0 %v1025
        %v1210 = vpop.f32.mrf.mxu0
        %v1211 = vadd.f32 %v1067, %v1210
        %v1212 = vpop.f32.mrf.mxu0
        %v1213 = vadd.f32 %v1067, %v1212
        %1214 = vmatmul.bf16.gmra.mxu0 %v1026
        %v1215 = vpop.f32.mrf.mxu0
        %v1216 = vadd.f32 %v1067, %v1215
        %v1217 = vpop.f32.mrf.mxu0
        %v1218 = vadd.f32 %v1067, %v1217
        %1219 = vmatmul.bf16.gmra.mxu0 %v1027
        %v1220 = vpop.f32.mrf.mxu0
        %v1221 = vadd.f32 %v1067, %v1220
        %v1222 = vpop.f32.mrf.mxu0
        %v1223 = vadd.f32 %v1067, %v1222
        %1224 = vmatmul.bf16.gmra.mxu0 %v1028
        %v1225 = vpop.f32.mrf.mxu0
        %v1226 = vadd.f32 %v1067, %v1225
        %v1227 = vpop.f32.mrf.mxu0
        %v1228 = vadd.f32 %v1067, %v1227
        %1229 = vmatmul.bf16.gmra.mxu0 %v1029
        %v1230 = vpop.f32.mrf.mxu0
        %v1231 = vadd.f32 %v1067, %v1230
        %v1232 = vpop.f32.mrf.mxu0
        %v1233 = vadd.f32 %v1067, %v1232
        %1234 = vmatmul.bf16.gmra.mxu0 %v1030
        %v1235 = vpop.f32.mrf.mxu0
        %v1236 = vadd.f32 %v1067, %v1235
        %v1237 = vpop.f32.mrf.mxu0
        %v1238 = vadd.f32 %v1067, %v1237
        %1239 = vmatmul.bf16.gmra.mxu0 %v1031
        %v1240 = vpop.f32.mrf.mxu0
        %v1241 = vadd.f32 %v1067, %v1240
        %v1242 = vpop.f32.mrf.mxu0
        %v1243 = vadd.f32 %v1067, %v1242
        %1244 = vmatmul.bf16.gmra.mxu0 %v1032
        %v1245 = vpop.f32.mrf.mxu0
        %v1246 = vadd.f32 %v1067, %v1245
        %v1247 = vpop.f32.mrf.mxu0
        %v1248 = vadd.f32 %v1067, %v1247
        %1249 = vdwg.mxu0
        %1250 = vmatpush.bf16.msra.mxu0 %v1175
        %1251 = vmatpush.bf16.msra.mxu0 %v1172
        %1252 = vmatpush.bf16.msra.mxu0 %v1169
        %1253 = vmatpush.bf16.msra.mxu0 %v1166
        %1254 = vmatpush.bf16.msra.mxu0 %v1163
        %1255 = vmatpush.bf16.msra.mxu0 %v1160
        %1256 = vmatpush.bf16.msra.mxu0 %v1157
        %1257 = vmatpush.bf16.msra.mxu0 %v1154
        %1258 = vmatmul.bf16.gmra.mxu0 %v1025
        %v1259 = vpop.f32.mrf.mxu0
        %v1260 = vadd.f32 %v1068, %v1259
        %v1261 = vpop.f32.mrf.mxu0
        %v1262 = vadd.f32 %v1068, %v1261
        %1263 = vmatmul.bf16.gmra.mxu0 %v1026
        %v1264 = vpop.f32.mrf.mxu0
        %v1265 = vadd.f32 %v1068, %v1264
        %v1266 = vpop.f32.mrf.mxu0
        %v1267 = vadd.f32 %v1068, %v1266
        %1268 = vmatmul.bf16.gmra.mxu0 %v1027
        %v1269 = vpop.f32.mrf.mxu0
        %v1270 = vadd.f32 %v1068, %v1269
        %v1271 = vpop.f32.mrf.mxu0
        %v1272 = vadd.f32 %v1068, %v1271
        %1273 = vmatmul.bf16.gmra.mxu0 %v1028
        %v1274 = vpop.f32.mrf.mxu0
        %v1275 = vadd.f32 %v1068, %v1274
        %v1276 = vpop.f32.mrf.mxu0
        %v1277 = vadd.f32 %v1068, %v1276
        %1278 = vmatmul.bf16.gmra.mxu0 %v1029
        %v1279 = vpop.f32.mrf.mxu0
        %v1280 = vadd.f32 %v1068, %v1279
        %v1281 = vpop.f32.mrf.mxu0
        %v1282 = vadd.f32 %v1068, %v1281
        %1283 = vmatmul.bf16.gmra.mxu0 %v1030
        %v1284 = vpop.f32.mrf.mxu0
        %v1285 = vadd.f32 %v1068, %v1284
        %v1286 = vpop.f32.mrf.mxu0
        %v1287 = vadd.f32 %v1068, %v1286
        %1288 = vmatmul.bf16.gmra.mxu0 %v1031
        %v1289 = vpop.f32.mrf.mxu0
        %v1290 = vadd.f32 %v1068, %v1289
        %v1291 = vpop.f32.mrf.mxu0
        %v1292 = vadd.f32 %v1068, %v1291
        %1293 = vmatmul.bf16.gmra.mxu0 %v1032
        %v1294 = vpop.f32.mrf.mxu0
        %v1295 = vadd.f32 %v1068, %v1294
        %v1296 = vpop.f32.mrf.mxu0
        %v1297 = vadd.f32 %v1068, %v1296
        %1298 = vdwg.mxu0
        %1299 = vmatpush.bf16.msra.mxu0 %v1176
        %1300 = vmatpush.bf16.msra.mxu0 %v1173
        %1301 = vmatpush.bf16.msra.mxu0 %v1170
        %1302 = vmatpush.bf16.msra.mxu0 %v1167
        %1303 = vmatpush.bf16.msra.mxu0 %v1164
        %1304 = vmatpush.bf16.msra.mxu0 %v1161
        %1305 = vmatpush.bf16.msra.mxu0 %v1158
        %1306 = vmatpush.bf16.msra.mxu0 %v1155
        %1307 = vmatmul.bf16.gmra.mxu0 %v1025
        %v1308 = vpop.f32.mrf.mxu0
        %v1309 = vadd.f32 %v1069, %v1308
        %v1310 = vpop.f32.mrf.mxu0
        %v1311 = vadd.f32 %v1069, %v1310
        %1312 = vmatmul.bf16.gmra.mxu0 %v1026
        %v1313 = vpop.f32.mrf.mxu0
        %v1314 = vadd.f32 %v1069, %v1313
        %v1315 = vpop.f32.mrf.mxu0
        %v1316 = vadd.f32 %v1069, %v1315
        %1317 = vmatmul.bf16.gmra.mxu0 %v1027
        %v1318 = vpop.f32.mrf.mxu0
        %v1319 = vadd.f32 %v1069, %v1318
        %v1320 = vpop.f32.mrf.mxu0
        %v1321 = vadd.f32 %v1069, %v1320
        %1322 = vmatmul.bf16.gmra.mxu0 %v1028
        %v1323 = vpop.f32.mrf.mxu0
        %v1324 = vadd.f32 %v1069, %v1323
        %v1325 = vpop.f32.mrf.mxu0
        %v1326 = vadd.f32 %v1069, %v1325
        %1327 = vmatmul.bf16.gmra.mxu0 %v1029
        %v1328 = vpop.f32.mrf.mxu0
        %v1329 = vadd.f32 %v1069, %v1328
        %v1330 = vpop.f32.mrf.mxu0
        %v1331 = vadd.f32 %v1069, %v1330
        %1332 = vmatmul.bf16.gmra.mxu0 %v1030
        %v1333 = vpop.f32.mrf.mxu0
        %v1334 = vadd.f32 %v1069, %v1333
        %v1335 = vpop.f32.mrf.mxu0
        %v1336 = vadd.f32 %v1069, %v1335
        %1337 = vmatmul.bf16.gmra.mxu0 %v1031
        %v1338 = vpop.f32.mrf.mxu0
        %v1339 = vadd.f32 %v1069, %v1338
        %v1340 = vpop.f32.mrf.mxu0
        %v1341 = vadd.f32 %v1069, %v1340
        %1342 = vmatmul.bf16.gmra.mxu0 %v1032
        %v1343 = vpop.f32.mrf.mxu0
        %v1344 = vadd.f32 %v1069, %v1343
        %v1345 = vpop.f32.mrf.mxu0
        %v1346 = vadd.f32 %v1069, %v1345
        %1347 = vdwg.mxu0
        %v1348 = vpack.c.bf16 %v1213, %v1211
        %v1349 = vpack.c.bf16 %v1218, %v1216
        %v1350 = vpack.c.bf16 %v1223, %v1221
        %v1351 = vpack.c.bf16 %v1228, %v1226
        %v1352 = vpack.c.bf16 %v1233, %v1231
        %v1353 = vpack.c.bf16 %v1238, %v1236
        %v1354 = vpack.c.bf16 %v1243, %v1241
        %v1355 = vpack.c.bf16 %v1248, %v1246
        %v1356 = vpack.c.bf16 %v1262, %v1260
        %v1357 = vpack.c.bf16 %v1267, %v1265
        %v1358 = vpack.c.bf16 %v1272, %v1270
        %v1359 = vpack.c.bf16 %v1277, %v1275
        %v1360 = vpack.c.bf16 %v1282, %v1280
        %v1361 = vpack.c.bf16 %v1287, %v1285
        %v1362 = vpack.c.bf16 %v1292, %v1290
        %v1363 = vpack.c.bf16 %v1297, %v1295
        %v1364 = vpack.c.bf16 %v1311, %v1309
        %v1365 = vpack.c.bf16 %v1316, %v1314
        %v1366 = vpack.c.bf16 %v1321, %v1319
        %v1367 = vpack.c.bf16 %v1326, %v1324
        %v1368 = vpack.c.bf16 %v1331, %v1329
        %v1369 = vpack.c.bf16 %v1336, %v1334
        %v1370 = vpack.c.bf16 %v1341, %v1339
        %v1371 = vpack.c.bf16 %v1346, %v1344
        %v1373 = vperm.slane %v641, 0
        %vm1375 = vcmask 523264
        %v1377 = vsel %vm1375, %v1348, 0
        %v1380 = vsel %vm1375, %v1349, 0
        %v1383 = vsel %vm1375, %v1350, 0
        %v1386 = vsel %vm1375, %v1351, 0
        %v1389 = vsel %vm1375, %v1352, 0
        %v1392 = vsel %vm1375, %v1353, 0
        %v1395 = vsel %vm1375, %v1354, 0
        %v1398 = vsel %vm1375, %v1355, 0
        %v1401 = vsel %vm1375, %v1356, 0
        %v1404 = vsel %vm1375, %v1357, 0
        %v1407 = vsel %vm1375, %v1358, 0
        %v1410 = vsel %vm1375, %v1359, 0
        %v1413 = vsel %vm1375, %v1360, 0
        %v1416 = vsel %vm1375, %v1361, 0
        %v1419 = vsel %vm1375, %v1362, 0
        %v1422 = vsel %vm1375, %v1363, 0
        %1424 = vmatpush.bf16.xpose.msra.mxu0 %v1422
        %1425 = vmatpush.bf16.xpose.msra.mxu0 %v1419
        %1426 = vmatpush.bf16.xpose.msra.mxu0 %v1416
        %1427 = vmatpush.bf16.xpose.msra.mxu0 %v1413
        %1428 = vmatpush.bf16.xpose.msra.mxu0 %v1410
        %1429 = vmatpush.bf16.xpose.msra.mxu0 %v1407
        %1430 = vmatpush.bf16.xpose.msra.mxu0 %v1404
        %1431 = vmatpush.bf16.xpose.msra.mxu0 %v1401
        %1432 = vmatmul.bf16.gmra.mxu0 %v1377
        %v1433 = vpop.f32.mrf.mxu0
        %v1434 = vadd.f32 %v1373, %v1433
        %v1435 = vpop.f32.mrf.mxu0
        %v1436 = vadd.f32 %v1373, %v1435
        %1437 = vmatmul.bf16.gmra.mxu0 %v1380
        %v1438 = vpop.f32.mrf.mxu0
        %v1439 = vadd.f32 %v1373, %v1438
        %v1440 = vpop.f32.mrf.mxu0
        %v1441 = vadd.f32 %v1373, %v1440
        %1442 = vmatmul.bf16.gmra.mxu0 %v1383
        %v1443 = vpop.f32.mrf.mxu0
        %v1444 = vadd.f32 %v1373, %v1443
        %v1445 = vpop.f32.mrf.mxu0
        %v1446 = vadd.f32 %v1373, %v1445
        %1447 = vmatmul.bf16.gmra.mxu0 %v1386
        %v1448 = vpop.f32.mrf.mxu0
        %v1449 = vadd.f32 %v1373, %v1448
        %v1450 = vpop.f32.mrf.mxu0
        %v1451 = vadd.f32 %v1373, %v1450
        %1452 = vmatmul.bf16.gmra.mxu0 %v1389
        %v1453 = vpop.f32.mrf.mxu0
        %v1454 = vadd.f32 %v1373, %v1453
        %v1455 = vpop.f32.mrf.mxu0
        %v1456 = vadd.f32 %v1373, %v1455
        %1457 = vmatmul.bf16.gmra.mxu0 %v1392
        %v1458 = vpop.f32.mrf.mxu0
        %v1459 = vadd.f32 %v1373, %v1458
        %v1460 = vpop.f32.mrf.mxu0
        %v1461 = vadd.f32 %v1373, %v1460
        %1462 = vmatmul.bf16.gmra.mxu0 %v1395
        %v1463 = vpop.f32.mrf.mxu0
        %v1464 = vadd.f32 %v1373, %v1463
        %v1465 = vpop.f32.mrf.mxu0
        %v1466 = vadd.f32 %v1373, %v1465
        %1467 = vmatmul.bf16.gmra.mxu0 %v1398
        %v1468 = vpop.f32.mrf.mxu0
        %v1469 = vadd.f32 %v1373, %v1468
        %v1470 = vpop.f32.mrf.mxu0
        %v1471 = vadd.f32 %v1373, %v1470
        %1472 = vdwg.mxu0
        %1473 = vmax.xlane.f32.xlu0 %v1434
        %v1474 = vpop.xlane.xlu0 %1473
        %1475 = vmax.xlane.f32.xlu0 %v1436
        %v1476 = vpop.xlane.xlu0 %1475
        %1477 = vmax.xlane.f32.xlu0 %v1439
        %v1478 = vpop.xlane.xlu0 %1477
        %1479 = vmax.xlane.f32.xlu0 %v1441
        %v1480 = vpop.xlane.xlu0 %1479
        %1481 = vmax.xlane.f32.xlu0 %v1444
        %v1482 = vpop.xlane.xlu0 %1481
        %1483 = vmax.xlane.f32.xlu0 %v1446
        %v1484 = vpop.xlane.xlu0 %1483
        %1485 = vmax.xlane.f32.xlu0 %v1449
        %v1486 = vpop.xlane.xlu0 %1485
        %1487 = vmax.xlane.f32.xlu0 %v1451
        %v1488 = vpop.xlane.xlu0 %1487
        %1489 = vmax.xlane.f32.xlu0 %v1454
        %v1490 = vpop.xlane.xlu0 %1489
        %1491 = vmax.xlane.f32.xlu0 %v1456
        %v1492 = vpop.xlane.xlu0 %1491
        %1493 = vmax.xlane.f32.xlu0 %v1459
        %v1494 = vpop.xlane.xlu0 %1493
        %1495 = vmax.xlane.f32.xlu0 %v1461
        %v1496 = vpop.xlane.xlu0 %1495
        %1497 = vmax.xlane.f32.xlu0 %v1464
        %v1498 = vpop.xlane.xlu0 %1497
        %1499 = vmax.xlane.f32.xlu0 %v1466
        %v1500 = vpop.xlane.xlu0 %1499
        %1501 = vmax.xlane.f32.xlu0 %v1469
        %v1502 = vpop.xlane.xlu0 %1501
        %1503 = vmax.xlane.f32.xlu0 %v1471
        %v1504 = vpop.xlane.xlu0 %1503
        %v1505 = vsub.f32 %v1434, %v1474
        %v1506 = vsub.f32 %v1436, %v1476
        %v1507 = vsub.f32 %v1439, %v1478
        %v1508 = vsub.f32 %v1441, %v1480
        %v1509 = vsub.f32 %v1444, %v1482
        %v1510 = vsub.f32 %v1446, %v1484
        %v1511 = vsub.f32 %v1449, %v1486
        %v1512 = vsub.f32 %v1451, %v1488
        %v1513 = vsub.f32 %v1454, %v1490
        %v1514 = vsub.f32 %v1456, %v1492
        %v1515 = vsub.f32 %v1459, %v1494
        %v1516 = vsub.f32 %v1461, %v1496
        %v1517 = vsub.f32 %v1464, %v1498
        %v1518 = vsub.f32 %v1466, %v1500
        %v1519 = vsub.f32 %v1469, %v1502
        %v1520 = vsub.f32 %v1471, %v1504
        %v1521 = vmul.f32 %v1505, 1.442695
        %v1522 = vpow.pop %v1521
        %v1523 = vmul.f32 %v1506, 1.442695
        %v1524 = vpow.pop %v1523
        %v1525 = vmul.f32 %v1507, 1.442695
        %v1526 = vpow.pop %v1525
        %v1527 = vmul.f32 %v1508, 1.442695
        %v1528 = vpow.pop %v1527
        %v1529 = vmul.f32 %v1509, 1.442695
        %v1530 = vpow.pop %v1529
        %v1531 = vmul.f32 %v1510, 1.442695
        %v1532 = vpow.pop %v1531
        %v1533 = vmul.f32 %v1511, 1.442695
        %v1534 = vpow.pop %v1533
        %v1535 = vmul.f32 %v1512, 1.442695
        %v1536 = vpow.pop %v1535
        %v1537 = vmul.f32 %v1513, 1.442695
        %v1538 = vpow.pop %v1537
        %v1539 = vmul.f32 %v1514, 1.442695
        %v1540 = vpow.pop %v1539
        %v1541 = vmul.f32 %v1515, 1.442695
        %v1542 = vpow.pop %v1541
        %v1543 = vmul.f32 %v1516, 1.442695
        %v1544 = vpow.pop %v1543
        %v1545 = vmul.f32 %v1517, 1.442695
        %v1546 = vpow.pop %v1545
        %v1547 = vmul.f32 %v1518, 1.442695
        %v1548 = vpow.pop %v1547
        %v1549 = vmul.f32 %v1519, 1.442695
        %v1550 = vpow.pop %v1549
        %v1551 = vmul.f32 %v1520, 1.442695
        %v1552 = vpow.pop %v1551
        %1553 = vadd.xlane.f32.xlu0 %v1522
        %v1554 = vpop.xlane.xlu0 %1553
        %1555 = vadd.xlane.f32.xlu0 %v1524
        %v1556 = vpop.xlane.xlu0 %1555
        %1557 = vadd.xlane.f32.xlu0 %v1526
        %v1558 = vpop.xlane.xlu0 %1557
        %1559 = vadd.xlane.f32.xlu0 %v1528
        %v1560 = vpop.xlane.xlu0 %1559
        %1561 = vadd.xlane.f32.xlu0 %v1530
        %v1562 = vpop.xlane.xlu0 %1561
        %1563 = vadd.xlane.f32.xlu0 %v1532
        %v1564 = vpop.xlane.xlu0 %1563
        %1565 = vadd.xlane.f32.xlu0 %v1534
        %v1566 = vpop.xlane.xlu0 %1565
        %1567 = vadd.xlane.f32.xlu0 %v1536
        %v1568 = vpop.xlane.xlu0 %1567
        %1569 = vadd.xlane.f32.xlu0 %v1538
        %v1570 = vpop.xlane.xlu0 %1569
        %1571 = vadd.xlane.f32.xlu0 %v1540
        %v1572 = vpop.xlane.xlu0 %1571
        %1573 = vadd.xlane.f32.xlu0 %v1542
        %v1574 = vpop.xlane.xlu0 %1573
        %1575 = vadd.xlane.f32.xlu0 %v1544
        %v1576 = vpop.xlane.xlu0 %1575
        %1577 = vadd.xlane.f32.xlu0 %v1546
        %v1578 = vpop.xlane.xlu0 %1577
        %1579 = vadd.xlane.f32.xlu0 %v1548
        %v1580 = vpop.xlane.xlu0 %1579
        %1581 = vadd.xlane.f32.xlu0 %v1550
        %v1582 = vpop.xlane.xlu0 %1581
        %1583 = vadd.xlane.f32.xlu0 %v1552
        %v1584 = vpop.xlane.xlu0 %1583
        %v1585 = vrcp.pop %v1554
        %v1586 = vrcp.pop %v1556
        %v1587 = vrcp.pop %v1558
        %v1588 = vrcp.pop %v1560
        %v1589 = vrcp.pop %v1562
        %v1590 = vrcp.pop %v1564
        %v1591 = vrcp.pop %v1566
        %v1592 = vrcp.pop %v1568
        %v1593 = vrcp.pop %v1570
        %v1594 = vrcp.pop %v1572
        %v1595 = vrcp.pop %v1574
        %v1596 = vrcp.pop %v1576
        %v1597 = vrcp.pop %v1578
        %v1598 = vrcp.pop %v1580
        %v1599 = vrcp.pop %v1582
        %v1600 = vrcp.pop %v1584
        %v1601 = vmul.f32 %v1522, %v1585
        %v1602 = vmul.f32 %v1524, %v1586
        %v1603 = vmul.f32 %v1526, %v1587
        %v1604 = vmul.f32 %v1528, %v1588
        %v1605 = vmul.f32 %v1530, %v1589
        %v1606 = vmul.f32 %v1532, %v1590
        %v1607 = vmul.f32 %v1534, %v1591
        %v1608 = vmul.f32 %v1536, %v1592
        %v1609 = vmul.f32 %v1538, %v1593
        %v1610 = vmul.f32 %v1540, %v1594
        %v1611 = vmul.f32 %v1542, %v1595
        %v1612 = vmul.f32 %v1544, %v1596
        %v1613 = vmul.f32 %v1546, %v1597
        %v1614 = vmul.f32 %v1548, %v1598
        %v1615 = vmul.f32 %v1550, %v1599
        %v1616 = vmul.f32 %v1552, %v1600
        %v1617 = vpack.c.bf16 %v1602, %v1601
        %v1618 = vpack.c.bf16 %v1604, %v1603
        %v1619 = vpack.c.bf16 %v1606, %v1605
        %v1620 = vpack.c.bf16 %v1608, %v1607
        %v1621 = vpack.c.bf16 %v1610, %v1609
        %v1622 = vpack.c.bf16 %v1612, %v1611
        %v1623 = vpack.c.bf16 %v1614, %v1613
        %v1624 = vpack.c.bf16 %v1616, %v1615
        %1625 = vmatpush.bf16.msra.mxu0 %v1371
        %1626 = vmatpush.bf16.msra.mxu0 %v1370
        %1627 = vmatpush.bf16.msra.mxu0 %v1369
        %1628 = vmatpush.bf16.msra.mxu0 %v1368
        %1629 = vmatpush.bf16.msra.mxu0 %v1367
        %1630 = vmatpush.bf16.msra.mxu0 %v1366
        %1631 = vmatpush.bf16.msra.mxu0 %v1365
        %1632 = vmatpush.bf16.msra.mxu0 %v1364
        %1633 = vmatmul.bf16.gmra.mxu0 %v1617
        %v1634 = vpop.f32.mrf.mxu0
        %v1635 = vadd.f32 0.0, %v1634
        %v1636 = vpop.f32.mrf.mxu0
        %v1637 = vadd.f32 0.0, %v1636
        %1638 = vmatmul.bf16.gmra.mxu0 %v1618
        %v1639 = vpop.f32.mrf.mxu0
        %v1640 = vadd.f32 0.0, %v1639
        %v1641 = vpop.f32.mrf.mxu0
        %v1642 = vadd.f32 0.0, %v1641
        %1643 = vmatmul.bf16.gmra.mxu0 %v1619
        %v1644 = vpop.f32.mrf.mxu0
        %v1645 = vadd.f32 0.0, %v1644
        %v1646 = vpop.f32.mrf.mxu0
        %v1647 = vadd.f32 0.0, %v1646
        %1648 = vmatmul.bf16.gmra.mxu0 %v1620
        %v1649 = vpop.f32.mrf.mxu0
        %v1650 = vadd.f32 0.0, %v1649
        %v1651 = vpop.f32.mrf.mxu0
        %v1652 = vadd.f32 0.0, %v1651
        %1653 = vmatmul.bf16.gmra.mxu0 %v1621
        %v1654 = vpop.f32.mrf.mxu0
        %v1655 = vadd.f32 0.0, %v1654
        %v1656 = vpop.f32.mrf.mxu0
        %v1657 = vadd.f32 0.0, %v1656
        %1658 = vmatmul.bf16.gmra.mxu0 %v1622
        %v1659 = vpop.f32.mrf.mxu0
        %v1660 = vadd.f32 0.0, %v1659
        %v1661 = vpop.f32.mrf.mxu0
        %v1662 = vadd.f32 0.0, %v1661
        %1663 = vmatmul.bf16.gmra.mxu0 %v1623
        %v1664 = vpop.f32.mrf.mxu0
        %v1665 = vadd.f32 0.0, %v1664
        %v1666 = vpop.f32.mrf.mxu0
        %v1667 = vadd.f32 0.0, %v1666
        %1668 = vmatmul.bf16.gmra.mxu0 %v1624
        %v1669 = vpop.f32.mrf.mxu0
        %v1670 = vadd.f32 0.0, %v1669
        %v1671 = vpop.f32.mrf.mxu0
        %v1672 = vadd.f32 0.0, %v1671
        %1673 = vdwg.mxu0
        %1674 = vst.msk [vmem:[#allocation2] sm:$0xff] %vm1375, %v1635
        %1675 = vst.msk [vmem:[#allocation2 + $0x8] sm:$0xff] %vm1375, %v1637
        %1676 = vst.msk [vmem:[#allocation2 + $0x10] sm:$0xff] %vm1375, %v1640
        %1677 = vst.msk [vmem:[#allocation2 + $0x18] sm:$0xff] %vm1375, %v1642
        %1678 = vst.msk [vmem:[#allocation2 + $0x20] sm:$0xff] %vm1375, %v1645
        %1679 = vst.msk [vmem:[#allocation2 + $0x28] sm:$0xff] %vm1375, %v1647
        %1680 = vst.msk [vmem:[#allocation2 + $0x30] sm:$0xff] %vm1375, %v1650
        %1681 = vst.msk [vmem:[#allocation2 + $0x38] sm:$0xff] %vm1375, %v1652
        %1682 = vst.msk [vmem:[#allocation2 + $0x40] sm:$0xff] %vm1375, %v1655
        %1683 = vst.msk [vmem:[#allocation2 + $0x48] sm:$0xff] %vm1375, %v1657
        %1684 = vst.msk [vmem:[#allocation2 + $0x50] sm:$0xff] %vm1375, %v1660
        %1685 = vst.msk [vmem:[#allocation2 + $0x58] sm:$0xff] %vm1375, %v1662
        %1686 = vst.msk [vmem:[#allocation2 + $0x60] sm:$0xff] %vm1375, %v1665
        %1687 = vst.msk [vmem:[#allocation2 + $0x68] sm:$0xff] %vm1375, %v1667
        %1688 = vst.msk [vmem:[#allocation2 + $0x70] sm:$0xff] %vm1375, %v1670
        %1689 = vst.msk [vmem:[#allocation2 + $0x78] sm:$0xff] %vm1375, %v1672
        %1698 = vrot.lane.b32.xlu0 %v1348, 64
        %v1699 = vpop.permute.xlu0 %1698
        %1700 = vrot.lane.b32.xlu0 %v1349, 64
        %v1701 = vpop.permute.xlu0 %1700
        %1702 = vrot.lane.b32.xlu0 %v1350, 64
        %v1703 = vpop.permute.xlu0 %1702
        %1704 = vrot.lane.b32.xlu0 %v1351, 64
        %v1705 = vpop.permute.xlu0 %1704
        %1706 = vrot.lane.b32.xlu0 %v1352, 64
        %v1707 = vpop.permute.xlu0 %1706
        %1708 = vrot.lane.b32.xlu0 %v1353, 64
        %v1709 = vpop.permute.xlu0 %1708
        %1710 = vrot.lane.b32.xlu0 %v1354, 64
        %v1711 = vpop.permute.xlu0 %1710
        %1712 = vrot.lane.b32.xlu0 %v1355, 64
        %v1713 = vpop.permute.xlu0 %1712
        %1722 = vrot.lane.b32.xlu0 %v1356, 64
        %v1723 = vpop.permute.xlu0 %1722
        %1724 = vrot.lane.b32.xlu0 %v1357, 64
        %v1725 = vpop.permute.xlu0 %1724
        %1726 = vrot.lane.b32.xlu0 %v1358, 64
        %v1727 = vpop.permute.xlu0 %1726
        %1728 = vrot.lane.b32.xlu0 %v1359, 64
        %v1729 = vpop.permute.xlu0 %1728
        %1730 = vrot.lane.b32.xlu0 %v1360, 64
        %v1731 = vpop.permute.xlu0 %1730
        %1732 = vrot.lane.b32.xlu0 %v1361, 64
        %v1733 = vpop.permute.xlu0 %1732
        %1734 = vrot.lane.b32.xlu0 %v1362, 64
        %v1735 = vpop.permute.xlu0 %1734
        %1736 = vrot.lane.b32.xlu0 %v1363, 64
        %v1737 = vpop.permute.xlu0 %1736
        %v1739 = vsel %vm1375, %v1699, 0
        %v1742 = vsel %vm1375, %v1701, 0
        %v1745 = vsel %vm1375, %v1703, 0
        %v1748 = vsel %vm1375, %v1705, 0
        %v1751 = vsel %vm1375, %v1707, 0
        %v1754 = vsel %vm1375, %v1709, 0
        %v1757 = vsel %vm1375, %v1711, 0
        %v1760 = vsel %vm1375, %v1713, 0
        %v1763 = vsel %vm1375, %v1723, 0
        %v1766 = vsel %vm1375, %v1725, 0
        %v1769 = vsel %vm1375, %v1727, 0
        %v1772 = vsel %vm1375, %v1729, 0
        %v1775 = vsel %vm1375, %v1731, 0
        %v1778 = vsel %vm1375, %v1733, 0
        %v1781 = vsel %vm1375, %v1735, 0
        %v1784 = vsel %vm1375, %v1737, 0
        %1786 = vmatpush.bf16.xpose.msra.mxu0 %v1784
        %1787 = vmatpush.bf16.xpose.msra.mxu0 %v1781
        %1788 = vmatpush.bf16.xpose.msra.mxu0 %v1778
        %1789 = vmatpush.bf16.xpose.msra.mxu0 %v1775
        %1790 = vmatpush.bf16.xpose.msra.mxu0 %v1772
        %1791 = vmatpush.bf16.xpose.msra.mxu0 %v1769
        %1792 = vmatpush.bf16.xpose.msra.mxu0 %v1766
        %1793 = vmatpush.bf16.xpose.msra.mxu0 %v1763
        %1794 = vmatmul.bf16.gmra.mxu0 %v1739
        %v1795 = vpop.f32.mrf.mxu0
        %v1796 = vadd.f32 %v1373, %v1795
        %v1797 = vpop.f32.mrf.mxu0
        %v1798 = vadd.f32 %v1373, %v1797
        %1799 = vmatmul.bf16.gmra.mxu0 %v1742
        %v1800 = vpop.f32.mrf.mxu0
        %v1801 = vadd.f32 %v1373, %v1800
        %v1802 = vpop.f32.mrf.mxu0
        %v1803 = vadd.f32 %v1373, %v1802
        %1804 = vmatmul.bf16.gmra.mxu0 %v1745
        %v1805 = vpop.f32.mrf.mxu0
        %v1806 = vadd.f32 %v1373, %v1805
        %v1807 = vpop.f32.mrf.mxu0
        %v1808 = vadd.f32 %v1373, %v1807
        %1809 = vmatmul.bf16.gmra.mxu0 %v1748
        %v1810 = vpop.f32.mrf.mxu0
        %v1811 = vadd.f32 %v1373, %v1810
        %v1812 = vpop.f32.mrf.mxu0
        %v1813 = vadd.f32 %v1373, %v1812
        %1814 = vmatmul.bf16.gmra.mxu0 %v1751
        %v1815 = vpop.f32.mrf.mxu0
        %v1816 = vadd.f32 %v1373, %v1815
        %v1817 = vpop.f32.mrf.mxu0
        %v1818 = vadd.f32 %v1373, %v1817
        %1819 = vmatmul.bf16.gmra.mxu0 %v1754
        %v1820 = vpop.f32.mrf.mxu0
        %v1821 = vadd.f32 %v1373, %v1820
        %v1822 = vpop.f32.mrf.mxu0
        %v1823 = vadd.f32 %v1373, %v1822
        %1824 = vmatmul.bf16.gmra.mxu0 %v1757
        %v1825 = vpop.f32.mrf.mxu0
        %v1826 = vadd.f32 %v1373, %v1825
        %v1827 = vpop.f32.mrf.mxu0
        %v1828 = vadd.f32 %v1373, %v1827
        %1829 = vmatmul.bf16.gmra.mxu0 %v1760
        %v1830 = vpop.f32.mrf.mxu0
        %v1831 = vadd.f32 %v1373, %v1830
        %v1832 = vpop.f32.mrf.mxu0
        %v1833 = vadd.f32 %v1373, %v1832
        %1834 = vdwg.mxu0
        %1835 = vmax.xlane.f32.xlu0 %v1796
        %v1836 = vpop.xlane.xlu0 %1835
        %1837 = vmax.xlane.f32.xlu0 %v1798
        %v1838 = vpop.xlane.xlu0 %1837
        %1839 = vmax.xlane.f32.xlu0 %v1801
        %v1840 = vpop.xlane.xlu0 %1839
        %1841 = vmax.xlane.f32.xlu0 %v1803
        %v1842 = vpop.xlane.xlu0 %1841
        %1843 = vmax.xlane.f32.xlu0 %v1806
        %v1844 = vpop.xlane.xlu0 %1843
        %1845 = vmax.xlane.f32.xlu0 %v1808
        %v1846 = vpop.xlane.xlu0 %1845
        %1847 = vmax.xlane.f32.xlu0 %v1811
        %v1848 = vpop.xlane.xlu0 %1847
        %1849 = vmax.xlane.f32.xlu0 %v1813
        %v1850 = vpop.xlane.xlu0 %1849
        %1851 = vmax.xlane.f32.xlu0 %v1816
        %v1852 = vpop.xlane.xlu0 %1851
        %1853 = vmax.xlane.f32.xlu0 %v1818
        %v1854 = vpop.xlane.xlu0 %1853
        %1855 = vmax.xlane.f32.xlu0 %v1821
        %v1856 = vpop.xlane.xlu0 %1855
        %1857 = vmax.xlane.f32.xlu0 %v1823
        %v1858 = vpop.xlane.xlu0 %1857
        %1859 = vmax.xlane.f32.xlu0 %v1826
        %v1860 = vpop.xlane.xlu0 %1859
        %1861 = vmax.xlane.f32.xlu0 %v1828
        %v1862 = vpop.xlane.xlu0 %1861
        %1863 = vmax.xlane.f32.xlu0 %v1831
        %v1864 = vpop.xlane.xlu0 %1863
        %1865 = vmax.xlane.f32.xlu0 %v1833
        %v1866 = vpop.xlane.xlu0 %1865
        %v1867 = vsub.f32 %v1796, %v1836
        %v1868 = vsub.f32 %v1798, %v1838
        %v1869 = vsub.f32 %v1801, %v1840
        %v1870 = vsub.f32 %v1803, %v1842
        %v1871 = vsub.f32 %v1806, %v1844
        %v1872 = vsub.f32 %v1808, %v1846
        %v1873 = vsub.f32 %v1811, %v1848
        %v1874 = vsub.f32 %v1813, %v1850
        %v1875 = vsub.f32 %v1816, %v1852
        %v1876 = vsub.f32 %v1818, %v1854
        %v1877 = vsub.f32 %v1821, %v1856
        %v1878 = vsub.f32 %v1823, %v1858
        %v1879 = vsub.f32 %v1826, %v1860
        %v1880 = vsub.f32 %v1828, %v1862
        %v1881 = vsub.f32 %v1831, %v1864
        %v1882 = vsub.f32 %v1833, %v1866
        %v1883 = vmul.f32 %v1867, 1.442695
        %v1884 = vpow.pop %v1883
        %v1885 = vmul.f32 %v1868, 1.442695
        %v1886 = vpow.pop %v1885
        %v1887 = vmul.f32 %v1869, 1.442695
        %v1888 = vpow.pop %v1887
        %v1889 = vmul.f32 %v1870, 1.442695
        %v1890 = vpow.pop %v1889
        %v1891 = vmul.f32 %v1871, 1.442695
        %v1892 = vpow.pop %v1891
        %v1893 = vmul.f32 %v1872, 1.442695
        %v1894 = vpow.pop %v1893
        %v1895 = vmul.f32 %v1873, 1.442695
        %v1896 = vpow.pop %v1895
        %v1897 = vmul.f32 %v1874, 1.442695
        %v1898 = vpow.pop %v1897
        %v1899 = vmul.f32 %v1875, 1.442695
        %v1900 = vpow.pop %v1899
        %v1901 = vmul.f32 %v1876, 1.442695
        %v1902 = vpow.pop %v1901
        %v1903 = vmul.f32 %v1877, 1.442695
        %v1904 = vpow.pop %v1903
        %v1905 = vmul.f32 %v1878, 1.442695
        %v1906 = vpow.pop %v1905
        %v1907 = vmul.f32 %v1879, 1.442695
        %v1908 = vpow.pop %v1907
        %v1909 = vmul.f32 %v1880, 1.442695
        %v1910 = vpow.pop %v1909
        %v1911 = vmul.f32 %v1881, 1.442695
        %v1912 = vpow.pop %v1911
        %v1913 = vmul.f32 %v1882, 1.442695
        %v1914 = vpow.pop %v1913
        %1915 = vadd.xlane.f32.xlu0 %v1884
        %v1916 = vpop.xlane.xlu0 %1915
        %1917 = vadd.xlane.f32.xlu0 %v1886
        %v1918 = vpop.xlane.xlu0 %1917
        %1919 = vadd.xlane.f32.xlu0 %v1888
        %v1920 = vpop.xlane.xlu0 %1919
        %1921 = vadd.xlane.f32.xlu0 %v1890
        %v1922 = vpop.xlane.xlu0 %1921
        %1923 = vadd.xlane.f32.xlu0 %v1892
        %v1924 = vpop.xlane.xlu0 %1923
        %1925 = vadd.xlane.f32.xlu0 %v1894
        %v1926 = vpop.xlane.xlu0 %1925
        %1927 = vadd.xlane.f32.xlu0 %v1896
        %v1928 = vpop.xlane.xlu0 %1927
        %1929 = vadd.xlane.f32.xlu0 %v1898
        %v1930 = vpop.xlane.xlu0 %1929
        %1931 = vadd.xlane.f32.xlu0 %v1900
        %v1932 = vpop.xlane.xlu0 %1931
        %1933 = vadd.xlane.f32.xlu0 %v1902
        %v1934 = vpop.xlane.xlu0 %1933
        %1935 = vadd.xlane.f32.xlu0 %v1904
        %v1936 = vpop.xlane.xlu0 %1935
        %1937 = vadd.xlane.f32.xlu0 %v1906
        %v1938 = vpop.xlane.xlu0 %1937
        %1939 = vadd.xlane.f32.xlu0 %v1908
        %v1940 = vpop.xlane.xlu0 %1939
        %1941 = vadd.xlane.f32.xlu0 %v1910
        %v1942 = vpop.xlane.xlu0 %1941
        %1943 = vadd.xlane.f32.xlu0 %v1912
        %v1944 = vpop.xlane.xlu0 %1943
        %1945 = vadd.xlane.f32.xlu0 %v1914
        %v1946 = vpop.xlane.xlu0 %1945
        %v1947 = vrcp.pop %v1916
        %v1948 = vrcp.pop %v1918
        %v1949 = vrcp.pop %v1920
        %v1950 = vrcp.pop %v1922
        %v1951 = vrcp.pop %v1924
        %v1952 = vrcp.pop %v1926
        %v1953 = vrcp.pop %v1928
        %v1954 = vrcp.pop %v1930
        %v1955 = vrcp.pop %v1932
        %v1956 = vrcp.pop %v1934
        %v1957 = vrcp.pop %v1936
        %v1958 = vrcp.pop %v1938
        %v1959 = vrcp.pop %v1940
        %v1960 = vrcp.pop %v1942
        %v1961 = vrcp.pop %v1944
        %v1962 = vrcp.pop %v1946
        %v1963 = vmul.f32 %v1884, %v1947
        %v1964 = vmul.f32 %v1886, %v1948
        %v1965 = vmul.f32 %v1888, %v1949
        %v1966 = vmul.f32 %v1890, %v1950
        %v1967 = vmul.f32 %v1892, %v1951
        %v1968 = vmul.f32 %v1894, %v1952
        %v1969 = vmul.f32 %v1896, %v1953
        %v1970 = vmul.f32 %v1898, %v1954
        %v1971 = vmul.f32 %v1900, %v1955
        %v1972 = vmul.f32 %v1902, %v1956
        %v1973 = vmul.f32 %v1904, %v1957
        %v1974 = vmul.f32 %v1906, %v1958
        %v1975 = vmul.f32 %v1908, %v1959
        %v1976 = vmul.f32 %v1910, %v1960
        %v1977 = vmul.f32 %v1912, %v1961
        %v1978 = vmul.f32 %v1914, %v1962
        %v1979 = vpack.c.bf16 %v1964, %v1963
        %v1980 = vpack.c.bf16 %v1966, %v1965
        %v1981 = vpack.c.bf16 %v1968, %v1967
        %v1982 = vpack.c.bf16 %v1970, %v1969
        %v1983 = vpack.c.bf16 %v1972, %v1971
        %v1984 = vpack.c.bf16 %v1974, %v1973
        %v1985 = vpack.c.bf16 %v1976, %v1975
        %v1986 = vpack.c.bf16 %v1978, %v1977
        %1995 = vrot.lane.b32.xlu0 %v1364, 64
        %v1996 = vpop.permute.xlu0 %1995
        %1997 = vrot.lane.b32.xlu0 %v1365, 64
        %v1998 = vpop.permute.xlu0 %1997
        %1999 = vrot.lane.b32.xlu0 %v1366, 64
        %v2000 = vpop.permute.xlu0 %1999
        %2001 = vrot.lane.b32.xlu0 %v1367, 64
        %v2002 = vpop.permute.xlu0 %2001
        %2003 = vrot.lane.b32.xlu0 %v1368, 64
        %v2004 = vpop.permute.xlu0 %2003
        %2005 = vrot.lane.b32.xlu0 %v1369, 64
        %v2006 = vpop.permute.xlu0 %2005
        %2007 = vrot.lane.b32.xlu0 %v1370, 64
        %v2008 = vpop.permute.xlu0 %2007
        %2009 = vrot.lane.b32.xlu0 %v1371, 64
        %v2010 = vpop.permute.xlu0 %2009
        %2019 = vmatpush.bf16.msra.mxu0 %v2010
        %2020 = vmatpush.bf16.msra.mxu0 %v2008
        %2021 = vmatpush.bf16.msra.mxu0 %v2006
        %2022 = vmatpush.bf16.msra.mxu0 %v2004
        %2023 = vmatpush.bf16.msra.mxu0 %v2002
        %2024 = vmatpush.bf16.msra.mxu0 %v2000
        %2025 = vmatpush.bf16.msra.mxu0 %v1998
        %2026 = vmatpush.bf16.msra.mxu0 %v1996
        %2027 = vmatmul.bf16.gmra.mxu0 %v1979
        %v2028 = vpop.f32.mrf.mxu0
        %v2029 = vadd.f32 0.0, %v2028
        %v2030 = vpop.f32.mrf.mxu0
        %v2031 = vadd.f32 0.0, %v2030
        %2032 = vmatmul.bf16.gmra.mxu0 %v1980
        %v2033 = vpop.f32.mrf.mxu0
        %v2034 = vadd.f32 0.0, %v2033
        %v2035 = vpop.f32.mrf.mxu0
        %v2036 = vadd.f32 0.0, %v2035
        %2037 = vmatmul.bf16.gmra.mxu0 %v1981
        %v2038 = vpop.f32.mrf.mxu0
        %v2039 = vadd.f32 0.0, %v2038
        %v2040 = vpop.f32.mrf.mxu0
        %v2041 = vadd.f32 0.0, %v2040
        %2042 = vmatmul.bf16.gmra.mxu0 %v1982
        %v2043 = vpop.f32.mrf.mxu0
        %v2044 = vadd.f32 0.0, %v2043
        %v2045 = vpop.f32.mrf.mxu0
        %v2046 = vadd.f32 0.0, %v2045
        %2047 = vmatmul.bf16.gmra.mxu0 %v1983
        %v2048 = vpop.f32.mrf.mxu0
        %v2049 = vadd.f32 0.0, %v2048
        %v2050 = vpop.f32.mrf.mxu0
        %v2051 = vadd.f32 0.0, %v2050
        %2052 = vmatmul.bf16.gmra.mxu0 %v1984
        %v2053 = vpop.f32.mrf.mxu0
        %v2054 = vadd.f32 0.0, %v2053
        %v2055 = vpop.f32.mrf.mxu0
        %v2056 = vadd.f32 0.0, %v2055
        %2057 = vmatmul.bf16.gmra.mxu0 %v1985
        %v2058 = vpop.f32.mrf.mxu0
        %v2059 = vadd.f32 0.0, %v2058
        %v2060 = vpop.f32.mrf.mxu0
        %v2061 = vadd.f32 0.0, %v2060
        %2062 = vmatmul.bf16.gmra.mxu0 %v1986
        %v2063 = vpop.f32.mrf.mxu0
        %v2064 = vadd.f32 0.0, %v2063
        %v2065 = vpop.f32.mrf.mxu0
        %v2066 = vadd.f32 0.0, %v2065
        %2067 = vdwg.mxu0
        %2084 = vrot.lane.b32.xlu0 %v2029, 64
        %v2085 = vpop.permute.xlu0 %2084
        %2086 = vrot.lane.b32.xlu0 %v2031, 64
        %v2087 = vpop.permute.xlu0 %2086
        %2088 = vrot.lane.b32.xlu0 %v2034, 64
        %v2089 = vpop.permute.xlu0 %2088
        %2090 = vrot.lane.b32.xlu0 %v2036, 64
        %v2091 = vpop.permute.xlu0 %2090
        %2092 = vrot.lane.b32.xlu0 %v2039, 64
        %v2093 = vpop.permute.xlu0 %2092
        %2094 = vrot.lane.b32.xlu0 %v2041, 64
        %v2095 = vpop.permute.xlu0 %2094
        %2096 = vrot.lane.b32.xlu0 %v2044, 64
        %v2097 = vpop.permute.xlu0 %2096
        %2098 = vrot.lane.b32.xlu0 %v2046, 64
        %v2099 = vpop.permute.xlu0 %2098
        %2100 = vrot.lane.b32.xlu0 %v2049, 64
        %v2101 = vpop.permute.xlu0 %2100
        %2102 = vrot.lane.b32.xlu0 %v2051, 64
        %v2103 = vpop.permute.xlu0 %2102
        %2104 = vrot.lane.b32.xlu0 %v2054, 64
        %v2105 = vpop.permute.xlu0 %2104
        %2106 = vrot.lane.b32.xlu0 %v2056, 64
        %v2107 = vpop.permute.xlu0 %2106
        %2108 = vrot.lane.b32.xlu0 %v2059, 64
        %v2109 = vpop.permute.xlu0 %2108
        %2110 = vrot.lane.b32.xlu0 %v2061, 64
        %v2111 = vpop.permute.xlu0 %2110
        %2112 = vrot.lane.b32.xlu0 %v2064, 64
        %v2113 = vpop.permute.xlu0 %2112
        %2114 = vrot.lane.b32.xlu0 %v2066, 64
        %v2115 = vpop.permute.xlu0 %2114
        %vm2132 = vcmask 1048064
        %2133 = vst.msk [vmem:[#allocation2] sm:$0xff] %vm2132, %v2085
        %2134 = vst.msk [vmem:[#allocation2 + $0x8] sm:$0xff] %vm2132, %v2087
        %2135 = vst.msk [vmem:[#allocation2 + $0x10] sm:$0xff] %vm2132, %v2089
        %2136 = vst.msk [vmem:[#allocation2 + $0x18] sm:$0xff] %vm2132, %v2091
        %2137 = vst.msk [vmem:[#allocation2 + $0x20] sm:$0xff] %vm2132, %v2093
        %2138 = vst.msk [vmem:[#allocation2 + $0x28] sm:$0xff] %vm2132, %v2095
        %2139 = vst.msk [vmem:[#allocation2 + $0x30] sm:$0xff] %vm2132, %v2097
        %2140 = vst.msk [vmem:[#allocation2 + $0x38] sm:$0xff] %vm2132, %v2099
        %2141 = vst.msk [vmem:[#allocation2 + $0x40] sm:$0xff] %vm2132, %v2101
        %2142 = vst.msk [vmem:[#allocation2 + $0x48] sm:$0xff] %vm2132, %v2103
        %2143 = vst.msk [vmem:[#allocation2 + $0x50] sm:$0xff] %vm2132, %v2105
        %2144 = vst.msk [vmem:[#allocation2 + $0x58] sm:$0xff] %vm2132, %v2107
        %2145 = vst.msk [vmem:[#allocation2 + $0x60] sm:$0xff] %vm2132, %v2109
        %2146 = vst.msk [vmem:[#allocation2 + $0x68] sm:$0xff] %vm2132, %v2111
        %2147 = vst.msk [vmem:[#allocation2 + $0x70] sm:$0xff] %vm2132, %v2113
        %2148 = vst.msk [vmem:[#allocation2 + $0x78] sm:$0xff] %vm2132, %v2115
        %v2149 = vld [vmem:[#allocation2] sm:$0xff]
        %v2150 = vld [vmem:[#allocation2 + $0x8] sm:$0xff]
        %v2151 = vld [vmem:[#allocation2 + $0x10] sm:$0xff]
        %v2152 = vld [vmem:[#allocation2 + $0x18] sm:$0xff]
        %v2153 = vld [vmem:[#allocation2 + $0x20] sm:$0xff]
        %v2154 = vld [vmem:[#allocation2 + $0x28] sm:$0xff]
        %v2155 = vld [vmem:[#allocation2 + $0x30] sm:$0xff]
        %v2156 = vld [vmem:[#allocation2 + $0x38] sm:$0xff]
        %v2157 = vld [vmem:[#allocation2 + $0x40] sm:$0xff]
        %v2158 = vld [vmem:[#allocation2 + $0x48] sm:$0xff]
        %v2159 = vld [vmem:[#allocation2 + $0x50] sm:$0xff]
        %v2160 = vld [vmem:[#allocation2 + $0x58] sm:$0xff]
        %v2161 = vld [vmem:[#allocation2 + $0x60] sm:$0xff]
        %v2162 = vld [vmem:[#allocation2 + $0x68] sm:$0xff]
        %v2163 = vld [vmem:[#allocation2 + $0x70] sm:$0xff]
        %v2164 = vld [vmem:[#allocation2 + $0x78] sm:$0xff]
        %v2165 = vpack.c.bf16 %v2150, %v2149
        %v2166 = vpack.c.bf16 %v2152, %v2151
        %v2167 = vpack.c.bf16 %v2154, %v2153
        %v2168 = vpack.c.bf16 %v2156, %v2155
        %v2169 = vpack.c.bf16 %v2158, %v2157
        %v2170 = vpack.c.bf16 %v2160, %v2159
        %v2171 = vpack.c.bf16 %v2162, %v2161
        %v2172 = vpack.c.bf16 %v2164, %v2163
        %v2173 = vld [vmem:[%s6] sm:$0xf]
        %v2174 = vld [vmem:[%s6 + $0x4] sm:$0xf]
        %v2175 = vld [vmem:[%s6 + $0x8] sm:$0xf]
        %v2176 = vld [vmem:[%s6 + $0xc] sm:$0xf]
        %v2177 = vld [vmem:[%s6 + $0x10] sm:$0xf]
        %v2178 = vld [vmem:[%s6 + $0x14] sm:$0xf]
        %v2179 = vld [vmem:[%s6 + $0x18] sm:$0xf]
        %v2180 = vld [vmem:[%s6 + $0x1c] sm:$0xf]
        %v2181 = vld [vmem:[%s6 + $0x20] sm:$0xf]
        %v2182 = vld [vmem:[%s6 + $0x24] sm:$0xf]
        %v2183 = vld [vmem:[%s6 + $0x28] sm:$0xf]
        %v2184 = vld [vmem:[%s6 + $0x2c] sm:$0xf]
        %v2185 = vld [vmem:[%s6 + $0x30] sm:$0xf]
        %v2186 = vld [vmem:[%s6 + $0x34] sm:$0xf]
        %v2187 = vld [vmem:[%s6 + $0x38] sm:$0xf]
        %v2188 = vld [vmem:[%s6 + $0x3c] sm:$0xf]
        %v2189 = vld [vmem:[%s7] sm:$0x1]
        %v2191 = vperm.slane %v2189, 0
        %v2209 = vunpack.c.l.b16 %v2173
        %v2210 = vunpack.c.l.b16 %v2174
        %v2211 = vunpack.c.l.b16 %v2175
        %v2212 = vunpack.c.l.b16 %v2176
        %v2213 = vunpack.c.l.b16 %v2177
        %v2214 = vunpack.c.l.b16 %v2178
        %v2215 = vunpack.c.l.b16 %v2179
        %v2216 = vunpack.c.l.b16 %v2180
        %v2217 = vunpack.c.l.b16 %v2181
        %v2218 = vunpack.c.l.b16 %v2182
        %v2219 = vunpack.c.l.b16 %v2183
        %v2220 = vunpack.c.l.b16 %v2184
        %v2221 = vunpack.c.l.b16 %v2185
        %v2222 = vunpack.c.l.b16 %v2186
        %v2223 = vunpack.c.l.b16 %v2187
        %v2224 = vunpack.c.l.b16 %v2188
        %v2225 = vpack.c.b16 %v2210, %v2209
        %v2226 = vpack.c.b16 %v2212, %v2211
        %v2227 = vpack.c.b16 %v2214, %v2213
        %v2228 = vpack.c.b16 %v2216, %v2215
        %v2229 = vpack.c.b16 %v2218, %v2217
        %v2230 = vpack.c.b16 %v2220, %v2219
        %v2231 = vpack.c.b16 %v2222, %v2221
        %v2232 = vpack.c.b16 %v2224, %v2223
        %2241 = vmatpush.bf16.msra.mxu0 %v2232
        %2242 = vmatpush.bf16.msra.mxu0 %v2231
        %2243 = vmatpush.bf16.msra.mxu0 %v2230
        %2244 = vmatpush.bf16.msra.mxu0 %v2229
        %2245 = vmatpush.bf16.msra.mxu0 %v2228
        %2246 = vmatpush.bf16.msra.mxu0 %v2227
        %2247 = vmatpush.bf16.msra.mxu0 %v2226
        %2248 = vmatpush.bf16.msra.mxu0 %v2225
        %2249 = vmatmul.bf16.gmra.mxu0 %v2165
        %v2250 = vpop.f32.mrf.mxu0
        %v2251 = vadd.f32 %v2191, %v2250
        %v2252 = vpop.f32.mrf.mxu0
        %v2253 = vadd.f32 %v2191, %v2252
        %2254 = vmatmul.bf16.gmra.mxu0 %v2166
        %v2255 = vpop.f32.mrf.mxu0
        %v2256 = vadd.f32 %v2191, %v2255
        %v2257 = vpop.f32.mrf.mxu0
        %v2258 = vadd.f32 %v2191, %v2257
        %2259 = vmatmul.bf16.gmra.mxu0 %v2167
        %v2260 = vpop.f32.mrf.mxu0
        %v2261 = vadd.f32 %v2191, %v2260
        %v2262 = vpop.f32.mrf.mxu0
        %v2263 = vadd.f32 %v2191, %v2262
        %2264 = vmatmul.bf16.gmra.mxu0 %v2168
        %v2265 = vpop.f32.mrf.mxu0
        %v2266 = vadd.f32 %v2191, %v2265
        %v2267 = vpop.f32.mrf.mxu0
        %v2268 = vadd.f32 %v2191, %v2267
        %2269 = vmatmul.bf16.gmra.mxu0 %v2169
        %v2270 = vpop.f32.mrf.mxu0
        %v2271 = vadd.f32 %v2191, %v2270
        %v2272 = vpop.f32.mrf.mxu0
        %v2273 = vadd.f32 %v2191, %v2272
        %2274 = vmatmul.bf16.gmra.mxu0 %v2170
        %v2275 = vpop.f32.mrf.mxu0
        %v2276 = vadd.f32 %v2191, %v2275
        %v2277 = vpop.f32.mrf.mxu0
        %v2278 = vadd.f32 %v2191, %v2277
        %2279 = vmatmul.bf16.gmra.mxu0 %v2171
        %v2280 = vpop.f32.mrf.mxu0
        %v2281 = vadd.f32 %v2191, %v2280
        %v2282 = vpop.f32.mrf.mxu0
        %v2283 = vadd.f32 %v2191, %v2282
        %2284 = vmatmul.bf16.gmra.mxu0 %v2172
        %v2285 = vpop.f32.mrf.mxu0
        %v2286 = vadd.f32 %v2191, %v2285
        %v2287 = vpop.f32.mrf.mxu0
        %v2288 = vadd.f32 %v2191, %v2287
        %2289 = vdwg.mxu0
        %v2290 = vadd.f32 %v1009, %v2251
        %v2291 = vadd.f32 %v1010, %v2253
        %v2292 = vadd.f32 %v1011, %v2256
        %v2293 = vadd.f32 %v1012, %v2258
        %v2294 = vadd.f32 %v1013, %v2261
        %v2295 = vadd.f32 %v1014, %v2263
        %v2296 = vadd.f32 %v1015, %v2266
        %v2297 = vadd.f32 %v1016, %v2268
        %v2298 = vadd.f32 %v1017, %v2271
        %v2299 = vadd.f32 %v1018, %v2273
        %v2300 = vadd.f32 %v1019, %v2276
        %v2301 = vadd.f32 %v1020, %v2278
        %v2302 = vadd.f32 %v1021, %v2281
        %v2303 = vadd.f32 %v1022, %v2283
        %v2304 = vadd.f32 %v1023, %v2286
        %v2305 = vadd.f32 %v1024, %v2288
        %v2306 = vld [vmem:[%s8] sm:$0x1]
        %v2307 = vld [vmem:[%s9] sm:$0x1]
        %2308 = vadd.xlane.f32.xlu0 %v2290
        %v2309 = vpop.xlane.xlu0 %2308
        %2310 = vadd.xlane.f32.xlu0 %v2291
        %v2311 = vpop.xlane.xlu0 %2310
        %2312 = vadd.xlane.f32.xlu0 %v2292
        %v2313 = vpop.xlane.xlu0 %2312
        %2314 = vadd.xlane.f32.xlu0 %v2293
        %v2315 = vpop.xlane.xlu0 %2314
        %2316 = vadd.xlane.f32.xlu0 %v2294
        %v2317 = vpop.xlane.xlu0 %2316
        %2318 = vadd.xlane.f32.xlu0 %v2295
        %v2319 = vpop.xlane.xlu0 %2318
        %2320 = vadd.xlane.f32.xlu0 %v2296
        %v2321 = vpop.xlane.xlu0 %2320
        %2322 = vadd.xlane.f32.xlu0 %v2297
        %v2323 = vpop.xlane.xlu0 %2322
        %2324 = vadd.xlane.f32.xlu0 %v2298
        %v2325 = vpop.xlane.xlu0 %2324
        %2326 = vadd.xlane.f32.xlu0 %v2299
        %v2327 = vpop.xlane.xlu0 %2326
        %2328 = vadd.xlane.f32.xlu0 %v2300
        %v2329 = vpop.xlane.xlu0 %2328
        %2330 = vadd.xlane.f32.xlu0 %v2301
        %v2331 = vpop.xlane.xlu0 %2330
        %2332 = vadd.xlane.f32.xlu0 %v2302
        %v2333 = vpop.xlane.xlu0 %2332
        %2334 = vadd.xlane.f32.xlu0 %v2303
        %v2335 = vpop.xlane.xlu0 %2334
        %2336 = vadd.xlane.f32.xlu0 %v2304
        %v2337 = vpop.xlane.xlu0 %2336
        %2338 = vadd.xlane.f32.xlu0 %v2305
        %v2339 = vpop.xlane.xlu0 %2338
        %v2340 = vmul.f32 %v2309, %v698
        %v2341 = vmul.f32 %v2311, %v698
        %v2342 = vmul.f32 %v2313, %v698
        %v2343 = vmul.f32 %v2315, %v698
        %v2344 = vmul.f32 %v2317, %v698
        %v2345 = vmul.f32 %v2319, %v698
        %v2346 = vmul.f32 %v2321, %v698
        %v2347 = vmul.f32 %v2323, %v698
        %v2348 = vmul.f32 %v2325, %v698
        %v2349 = vmul.f32 %v2327, %v698
        %v2350 = vmul.f32 %v2329, %v698
        %v2351 = vmul.f32 %v2331, %v698
        %v2352 = vmul.f32 %v2333, %v698
        %v2353 = vmul.f32 %v2335, %v698
        %v2354 = vmul.f32 %v2337, %v698
        %v2355 = vmul.f32 %v2339, %v698
        %v2356 = vsub.f32 %v2290, %v2340
        %v2357 = vsub.f32 %v2291, %v2341
        %v2358 = vsub.f32 %v2292, %v2342
        %v2359 = vsub.f32 %v2293, %v2343
        %v2360 = vsub.f32 %v2294, %v2344
        %v2361 = vsub.f32 %v2295, %v2345
        %v2362 = vsub.f32 %v2296, %v2346
        %v2363 = vsub.f32 %v2297, %v2347
        %v2364 = vsub.f32 %v2298, %v2348
        %v2365 = vsub.f32 %v2299, %v2349
        %v2366 = vsub.f32 %v2300, %v2350
        %v2367 = vsub.f32 %v2301, %v2351
        %v2368 = vsub.f32 %v2302, %v2352
        %v2369 = vsub.f32 %v2303, %v2353
        %v2370 = vsub.f32 %v2304, %v2354
        %v2371 = vsub.f32 %v2305, %v2355
        %v2372 = vmul.f32 %v2356, %v2356
        %v2373 = vmul.f32 %v2357, %v2357
        %v2374 = vmul.f32 %v2358, %v2358
        %v2375 = vmul.f32 %v2359, %v2359
        %v2376 = vmul.f32 %v2360, %v2360
        %v2377 = vmul.f32 %v2361, %v2361
        %v2378 = vmul.f32 %v2362, %v2362
        %v2379 = vmul.f32 %v2363, %v2363
        %v2380 = vmul.f32 %v2364, %v2364
        %v2381 = vmul.f32 %v2365, %v2365
        %v2382 = vmul.f32 %v2366, %v2366
        %v2383 = vmul.f32 %v2367, %v2367
        %v2384 = vmul.f32 %v2368, %v2368
        %v2385 = vmul.f32 %v2369, %v2369
        %v2386 = vmul.f32 %v2370, %v2370
        %v2387 = vmul.f32 %v2371, %v2371
        %2388 = vadd.xlane.f32.xlu0 %v2372
        %v2389 = vpop.xlane.xlu0 %2388
        %2390 = vadd.xlane.f32.xlu0 %v2373
        %v2391 = vpop.xlane.xlu0 %2390
        %2392 = vadd.xlane.f32.xlu0 %v2374
        %v2393 = vpop.xlane.xlu0 %2392
        %2394 = vadd.xlane.f32.xlu0 %v2375
        %v2395 = vpop.xlane.xlu0 %2394
        %2396 = vadd.xlane.f32.xlu0 %v2376
        %v2397 = vpop.xlane.xlu0 %2396
        %2398 = vadd.xlane.f32.xlu0 %v2377
        %v2399 = vpop.xlane.xlu0 %2398
        %2400 = vadd.xlane.f32.xlu0 %v2378
        %v2401 = vpop.xlane.xlu0 %2400
        %2402 = vadd.xlane.f32.xlu0 %v2379
        %v2403 = vpop.xlane.xlu0 %2402
        %2404 = vadd.xlane.f32.xlu0 %v2380
        %v2405 = vpop.xlane.xlu0 %2404
        %2406 = vadd.xlane.f32.xlu0 %v2381
        %v2407 = vpop.xlane.xlu0 %2406
        %2408 = vadd.xlane.f32.xlu0 %v2382
        %v2409 = vpop.xlane.xlu0 %2408
        %2410 = vadd.xlane.f32.xlu0 %v2383
        %v2411 = vpop.xlane.xlu0 %2410
        %2412 = vadd.xlane.f32.xlu0 %v2384
        %v2413 = vpop.xlane.xlu0 %2412
        %2414 = vadd.xlane.f32.xlu0 %v2385
        %v2415 = vpop.xlane.xlu0 %2414
        %2416 = vadd.xlane.f32.xlu0 %v2386
        %v2417 = vpop.xlane.xlu0 %2416
        %2418 = vadd.xlane.f32.xlu0 %v2387
        %v2419 = vpop.xlane.xlu0 %2418
        %v2420 = vmul.f32 %v2389, %v698
        %v2421 = vmul.f32 %v2391, %v698
        %v2422 = vmul.f32 %v2393, %v698
        %v2423 = vmul.f32 %v2395, %v698
        %v2424 = vmul.f32 %v2397, %v698
        %v2425 = vmul.f32 %v2399, %v698
        %v2426 = vmul.f32 %v2401, %v698
        %v2427 = vmul.f32 %v2403, %v698
        %v2428 = vmul.f32 %v2405, %v698
        %v2429 = vmul.f32 %v2407, %v698
        %v2430 = vmul.f32 %v2409, %v698
        %v2431 = vmul.f32 %v2411, %v698
        %v2432 = vmul.f32 %v2413, %v698
        %v2433 = vmul.f32 %v2415, %v698
        %v2434 = vmul.f32 %v2417, %v698
        %v2435 = vmul.f32 %v2419, %v698
        %v2436 = vadd.f32 %v2420, 1e-05
        %v2437 = vadd.f32 %v2421, 1e-05
        %v2438 = vadd.f32 %v2422, 1e-05
        %v2439 = vadd.f32 %v2423, 1e-05
        %v2440 = vadd.f32 %v2424, 1e-05
        %v2441 = vadd.f32 %v2425, 1e-05
        %v2442 = vadd.f32 %v2426, 1e-05
        %v2443 = vadd.f32 %v2427, 1e-05
        %v2444 = vadd.f32 %v2428, 1e-05
        %v2445 = vadd.f32 %v2429, 1e-05
        %v2446 = vadd.f32 %v2430, 1e-05
        %v2447 = vadd.f32 %v2431, 1e-05
        %v2448 = vadd.f32 %v2432, 1e-05
        %v2449 = vadd.f32 %v2433, 1e-05
        %v2450 = vadd.f32 %v2434, 1e-05
        %v2451 = vadd.f32 %v2435, 1e-05
        %v2452 = vrsqrt.pop %v2436
        %v2453 = vmul.f32 %v2452, %v2436
        %v2454 = vmul.f32 %v2453, %v2452
        %v2455 = vmul.f32 0.5, %v2454
        %v2456 = vsub.f32 1.5, %v2455
        %v2457 = vmul.f32 %v2452, %v2456
        %vm2458 = vweird.f32 %v2436
        %vm2459 = vweird.f32 %v2452
        %vm2460 = vmor %vm2458, %vm2459
        %v2461 = vsel %vm2460, %v2452, %v2457
        %v2462 = vrsqrt.pop %v2437
        %v2463 = vmul.f32 %v2462, %v2437
        %v2464 = vmul.f32 %v2463, %v2462
        %v2465 = vmul.f32 0.5, %v2464
        %v2466 = vsub.f32 1.5, %v2465
        %v2467 = vmul.f32 %v2462, %v2466
        %vm2468 = vweird.f32 %v2437
        %vm2469 = vweird.f32 %v2462
        %vm2470 = vmor %vm2468, %vm2469
        %v2471 = vsel %vm2470, %v2462, %v2467
        %v2472 = vrsqrt.pop %v2438
        %v2473 = vmul.f32 %v2472, %v2438
        %v2474 = vmul.f32 %v2473, %v2472
        %v2475 = vmul.f32 0.5, %v2474
        %v2476 = vsub.f32 1.5, %v2475
        %v2477 = vmul.f32 %v2472, %v2476
        %vm2478 = vweird.f32 %v2438
        %vm2479 = vweird.f32 %v2472
        %vm2480 = vmor %vm2478, %vm2479
        %v2481 = vsel %vm2480, %v2472, %v2477
        %v2482 = vrsqrt.pop %v2439
        %v2483 = vmul.f32 %v2482, %v2439
        %v2484 = vmul.f32 %v2483, %v2482
        %v2485 = vmul.f32 0.5, %v2484
        %v2486 = vsub.f32 1.5, %v2485
        %v2487 = vmul.f32 %v2482, %v2486
        %vm2488 = vweird.f32 %v2439
        %vm2489 = vweird.f32 %v2482
        %vm2490 = vmor %vm2488, %vm2489
        %v2491 = vsel %vm2490, %v2482, %v2487
        %v2492 = vrsqrt.pop %v2440
        %v2493 = vmul.f32 %v2492, %v2440
        %v2494 = vmul.f32 %v2493, %v2492
        %v2495 = vmul.f32 0.5, %v2494
        %v2496 = vsub.f32 1.5, %v2495
        %v2497 = vmul.f32 %v2492, %v2496
        %vm2498 = vweird.f32 %v2440
        %vm2499 = vweird.f32 %v2492
        %vm2500 = vmor %vm2498, %vm2499
        %v2501 = vsel %vm2500, %v2492, %v2497
        %v2502 = vrsqrt.pop %v2441
        %v2503 = vmul.f32 %v2502, %v2441
        %v2504 = vmul.f32 %v2503, %v2502
        %v2505 = vmul.f32 0.5, %v2504
        %v2506 = vsub.f32 1.5, %v2505
        %v2507 = vmul.f32 %v2502, %v2506
        %vm2508 = vweird.f32 %v2441
        %vm2509 = vweird.f32 %v2502
        %vm2510 = vmor %vm2508, %vm2509
        %v2511 = vsel %vm2510, %v2502, %v2507
        %v2512 = vrsqrt.pop %v2442
        %v2513 = vmul.f32 %v2512, %v2442
        %v2514 = vmul.f32 %v2513, %v2512
        %v2515 = vmul.f32 0.5, %v2514
        %v2516 = vsub.f32 1.5, %v2515
        %v2517 = vmul.f32 %v2512, %v2516
        %vm2518 = vweird.f32 %v2442
        %vm2519 = vweird.f32 %v2512
        %vm2520 = vmor %vm2518, %vm2519
        %v2521 = vsel %vm2520, %v2512, %v2517
        %v2522 = vrsqrt.pop %v2443
        %v2523 = vmul.f32 %v2522, %v2443
        %v2524 = vmul.f32 %v2523, %v2522
        %v2525 = vmul.f32 0.5, %v2524
        %v2526 = vsub.f32 1.5, %v2525
        %v2527 = vmul.f32 %v2522, %v2526
        %vm2528 = vweird.f32 %v2443
        %vm2529 = vweird.f32 %v2522
        %vm2530 = vmor %vm2528, %vm2529
        %v2531 = vsel %vm2530, %v2522, %v2527
        %v2532 = vrsqrt.pop %v2444
        %v2533 = vmul.f32 %v2532, %v2444
        %v2534 = vmul.f32 %v2533, %v2532
        %v2535 = vmul.f32 0.5, %v2534
        %v2536 = vsub.f32 1.5, %v2535
        %v2537 = vmul.f32 %v2532, %v2536
        %vm2538 = vweird.f32 %v2444
        %vm2539 = vweird.f32 %v2532
        %vm2540 = vmor %vm2538, %vm2539
        %v2541 = vsel %vm2540, %v2532, %v2537
        %v2542 = vrsqrt.pop %v2445
        %v2543 = vmul.f32 %v2542, %v2445
        %v2544 = vmul.f32 %v2543, %v2542
        %v2545 = vmul.f32 0.5, %v2544
        %v2546 = vsub.f32 1.5, %v2545
        %v2547 = vmul.f32 %v2542, %v2546
        %vm2548 = vweird.f32 %v2445
        %vm2549 = vweird.f32 %v2542
        %vm2550 = vmor %vm2548, %vm2549
        %v2551 = vsel %vm2550, %v2542, %v2547
        %v2552 = vrsqrt.pop %v2446
        %v2553 = vmul.f32 %v2552, %v2446
        %v2554 = vmul.f32 %v2553, %v2552
        %v2555 = vmul.f32 0.5, %v2554
        %v2556 = vsub.f32 1.5, %v2555
        %v2557 = vmul.f32 %v2552, %v2556
        %vm2558 = vweird.f32 %v2446
        %vm2559 = vweird.f32 %v2552
        %vm2560 = vmor %vm2558, %vm2559
        %v2561 = vsel %vm2560, %v2552, %v2557
        %v2562 = vrsqrt.pop %v2447
        %v2563 = vmul.f32 %v2562, %v2447
        %v2564 = vmul.f32 %v2563, %v2562
        %v2565 = vmul.f32 0.5, %v2564
        %v2566 = vsub.f32 1.5, %v2565
        %v2567 = vmul.f32 %v2562, %v2566
        %vm2568 = vweird.f32 %v2447
        %vm2569 = vweird.f32 %v2562
        %vm2570 = vmor %vm2568, %vm2569
        %v2571 = vsel %vm2570, %v2562, %v2567
        %v2572 = vrsqrt.pop %v2448
        %v2573 = vmul.f32 %v2572, %v2448
        %v2574 = vmul.f32 %v2573, %v2572
        %v2575 = vmul.f32 0.5, %v2574
        %v2576 = vsub.f32 1.5, %v2575
        %v2577 = vmul.f32 %v2572, %v2576
        %vm2578 = vweird.f32 %v2448
        %vm2579 = vweird.f32 %v2572
        %vm2580 = vmor %vm2578, %vm2579
        %v2581 = vsel %vm2580, %v2572, %v2577
        %v2582 = vrsqrt.pop %v2449
        %v2583 = vmul.f32 %v2582, %v2449
        %v2584 = vmul.f32 %v2583, %v2582
        %v2585 = vmul.f32 0.5, %v2584
        %v2586 = vsub.f32 1.5, %v2585
        %v2587 = vmul.f32 %v2582, %v2586
        %vm2588 = vweird.f32 %v2449
        %vm2589 = vweird.f32 %v2582
        %vm2590 = vmor %vm2588, %vm2589
        %v2591 = vsel %vm2590, %v2582, %v2587
        %v2592 = vrsqrt.pop %v2450
        %v2593 = vmul.f32 %v2592, %v2450
        %v2594 = vmul.f32 %v2593, %v2592
        %v2595 = vmul.f32 0.5, %v2594
        %v2596 = vsub.f32 1.5, %v2595
        %v2597 = vmul.f32 %v2592, %v2596
        %vm2598 = vweird.f32 %v2450
        %vm2599 = vweird.f32 %v2592
        %vm2600 = vmor %vm2598, %vm2599
        %v2601 = vsel %vm2600, %v2592, %v2597
        %v2602 = vrsqrt.pop %v2451
        %v2603 = vmul.f32 %v2602, %v2451
        %v2604 = vmul.f32 %v2603, %v2602
        %v2605 = vmul.f32 0.5, %v2604
        %v2606 = vsub.f32 1.5, %v2605
        %v2607 = vmul.f32 %v2602, %v2606
        %vm2608 = vweird.f32 %v2451
        %vm2609 = vweird.f32 %v2602
        %vm2610 = vmor %vm2608, %vm2609
        %v2611 = vsel %vm2610, %v2602, %v2607
        %v2612 = vmul.f32 %v2356, %v2461
        %v2613 = vmul.f32 %v2357, %v2471
        %v2614 = vmul.f32 %v2358, %v2481
        %v2615 = vmul.f32 %v2359, %v2491
        %v2616 = vmul.f32 %v2360, %v2501
        %v2617 = vmul.f32 %v2361, %v2511
        %v2618 = vmul.f32 %v2362, %v2521
        %v2619 = vmul.f32 %v2363, %v2531
        %v2620 = vmul.f32 %v2364, %v2541
        %v2621 = vmul.f32 %v2365, %v2551
        %v2622 = vmul.f32 %v2366, %v2561
        %v2623 = vmul.f32 %v2367, %v2571
        %v2624 = vmul.f32 %v2368, %v2581
        %v2625 = vmul.f32 %v2369, %v2591
        %v2626 = vmul.f32 %v2370, %v2601
        %v2627 = vmul.f32 %v2371, %v2611
        %v2629 = vperm.slane %v2306, 0
        %v2631 = vmul.f32 %v2612, %v2629
        %v2632 = vmul.f32 %v2613, %v2629
        %v2633 = vmul.f32 %v2614, %v2629
        %v2634 = vmul.f32 %v2615, %v2629
        %v2635 = vmul.f32 %v2616, %v2629
        %v2636 = vmul.f32 %v2617, %v2629
        %v2637 = vmul.f32 %v2618, %v2629
        %v2638 = vmul.f32 %v2619, %v2629
        %v2639 = vmul.f32 %v2620, %v2629
        %v2640 = vmul.f32 %v2621, %v2629
        %v2641 = vmul.f32 %v2622, %v2629
        %v2642 = vmul.f32 %v2623, %v2629
        %v2643 = vmul.f32 %v2624, %v2629
        %v2644 = vmul.f32 %v2625, %v2629
        %v2645 = vmul.f32 %v2626, %v2629
        %v2646 = vmul.f32 %v2627, %v2629
        %v2648 = vperm.slane %v2307, 0
        %v2650 = vadd.f32 %v2631, %v2648
        %v2651 = vadd.f32 %v2632, %v2648
        %v2652 = vadd.f32 %v2633, %v2648
        %v2653 = vadd.f32 %v2634, %v2648
        %v2654 = vadd.f32 %v2635, %v2648
        %v2655 = vadd.f32 %v2636, %v2648
        %v2656 = vadd.f32 %v2637, %v2648
        %v2657 = vadd.f32 %v2638, %v2648
        %v2658 = vadd.f32 %v2639, %v2648
        %v2659 = vadd.f32 %v2640, %v2648
        %v2660 = vadd.f32 %v2641, %v2648
        %v2661 = vadd.f32 %v2642, %v2648
        %v2662 = vadd.f32 %v2643, %v2648
        %v2663 = vadd.f32 %v2644, %v2648
        %v2664 = vadd.f32 %v2645, %v2648
        %v2665 = vadd.f32 %v2646, %v2648
        %v2666 = vpack.c.bf16 %v2651, %v2650
        %v2667 = vpack.c.bf16 %v2653, %v2652
        %v2668 = vpack.c.bf16 %v2655, %v2654
        %v2669 = vpack.c.bf16 %v2657, %v2656
        %v2670 = vpack.c.bf16 %v2659, %v2658
        %v2671 = vpack.c.bf16 %v2661, %v2660
        %v2672 = vpack.c.bf16 %v2663, %v2662
        %v2673 = vpack.c.bf16 %v2665, %v2664
        %v2674 = vld [vmem:[%s10] sm:$0xff]
        %v2675 = vld [vmem:[%s10 + $0x8] sm:$0xff]
        %v2676 = vld [vmem:[%s10 + $0x10] sm:$0xff]
        %v2677 = vld [vmem:[%s10 + $0x18] sm:$0xff]
        %v2678 = vld [vmem:[%s10 + $0x20] sm:$0xff]
        %v2679 = vld [vmem:[%s10 + $0x28] sm:$0xff]
        %v2680 = vld [vmem:[%s10 + $0x30] sm:$0xff]
        %v2681 = vld [vmem:[%s10 + $0x38] sm:$0xff]
        %v2682 = vld [vmem:[%s10 + $0x40] sm:$0xff]
        %v2683 = vld [vmem:[%s10 + $0x48] sm:$0xff]
        %v2684 = vld [vmem:[%s10 + $0x50] sm:$0xff]
        %v2685 = vld [vmem:[%s10 + $0x58] sm:$0xff]
        %v2686 = vld [vmem:[%s10 + $0x60] sm:$0xff]
        %v2687 = vld [vmem:[%s10 + $0x68] sm:$0xff]
        %v2688 = vld [vmem:[%s10 + $0x70] sm:$0xff]
        %v2689 = vld [vmem:[%s10 + $0x78] sm:$0xff]
        %v2690 = vld [vmem:[%s10 + $0x80] sm:$0xff]
        %v2691 = vld [vmem:[%s10 + $0x88] sm:$0xff]
        %v2692 = vld [vmem:[%s10 + $0x90] sm:$0xff]
        %v2693 = vld [vmem:[%s10 + $0x98] sm:$0xff]
        %v2694 = vld [vmem:[%s10 + $0xa0] sm:$0xff]
        %v2695 = vld [vmem:[%s10 + $0xa8] sm:$0xff]
        %v2696 = vld [vmem:[%s10 + $0xb0] sm:$0xff]
        %v2697 = vld [vmem:[%s10 + $0xb8] sm:$0xff]
        %v2698 = vld [vmem:[%s10 + $0xc0] sm:$0xff]
        %v2699 = vld [vmem:[%s10 + $0xc8] sm:$0xff]
        %v2700 = vld [vmem:[%s10 + $0xd0] sm:$0xff]
        %v2701 = vld [vmem:[%s10 + $0xd8] sm:$0xff]
        %v2702 = vld [vmem:[%s10 + $0xe0] sm:$0xff]
        %v2703 = vld [vmem:[%s10 + $0xe8] sm:$0xff]
        %v2704 = vld [vmem:[%s10 + $0xf0] sm:$0xff]
        %v2705 = vld [vmem:[%s10 + $0xf8] sm:$0xff]
        %v2706 = vld [vmem:[%s11] sm:$0xf]
        %v2708 = vperm.slane %v2706, 0
        %v2709 = vperm.slane %v2706, 1
        %v2710 = vperm.slane %v2706, 2
        %v2711 = vperm.slane %v2706, 3
        %v2748 = vunpack.c.l.b16 %v2674
        %v2749 = vunpack.c.h.b16 %v2674
        %v2750 = vunpack.c.l.b16 %v2675
        %v2751 = vunpack.c.h.b16 %v2675
        %v2752 = vunpack.c.l.b16 %v2676
        %v2753 = vunpack.c.h.b16 %v2676
        %v2754 = vunpack.c.l.b16 %v2677
        %v2755 = vunpack.c.h.b16 %v2677
        %v2756 = vunpack.c.l.b16 %v2678
        %v2757 = vunpack.c.h.b16 %v2678
        %v2758 = vunpack.c.l.b16 %v2679
        %v2759 = vunpack.c.h.b16 %v2679
        %v2760 = vunpack.c.l.b16 %v2680
        %v2761 = vunpack.c.h.b16 %v2680
        %v2762 = vunpack.c.l.b16 %v2681
        %v2763 = vunpack.c.h.b16 %v2681
        %v2764 = vunpack.c.l.b16 %v2682
        %v2765 = vunpack.c.h.b16 %v2682
        %v2766 = vunpack.c.l.b16 %v2683
        %v2767 = vunpack.c.h.b16 %v2683
        %v2768 = vunpack.c.l.b16 %v2684
        %v2769 = vunpack.c.h.b16 %v2684
        %v2770 = vunpack.c.l.b16 %v2685
        %v2771 = vunpack.c.h.b16 %v2685
        %v2772 = vunpack.c.l.b16 %v2686
        %v2773 = vunpack.c.h.b16 %v2686
        %v2774 = vunpack.c.l.b16 %v2687
        %v2775 = vunpack.c.h.b16 %v2687
        %v2776 = vunpack.c.l.b16 %v2688
        %v2777 = vunpack.c.h.b16 %v2688
        %v2778 = vunpack.c.l.b16 %v2689
        %v2779 = vunpack.c.h.b16 %v2689
        %v2780 = vunpack.c.l.b16 %v2690
        %v2781 = vunpack.c.h.b16 %v2690
        %v2782 = vunpack.c.l.b16 %v2691
        %v2783 = vunpack.c.h.b16 %v2691
        %v2784 = vunpack.c.l.b16 %v2692
        %v2785 = vunpack.c.h.b16 %v2692
        %v2786 = vunpack.c.l.b16 %v2693
        %v2787 = vunpack.c.h.b16 %v2693
        %v2788 = vunpack.c.l.b16 %v2694
        %v2789 = vunpack.c.h.b16 %v2694
        %v2790 = vunpack.c.l.b16 %v2695
        %v2791 = vunpack.c.h.b16 %v2695
        %v2792 = vunpack.c.l.b16 %v2696
        %v2793 = vunpack.c.h.b16 %v2696
        %v2794 = vunpack.c.l.b16 %v2697
        %v2795 = vunpack.c.h.b16 %v2697
        %v2796 = vunpack.c.l.b16 %v2698
        %v2797 = vunpack.c.h.b16 %v2698
        %v2798 = vunpack.c.l.b16 %v2699
        %v2799 = vunpack.c.h.b16 %v2699
        %v2800 = vunpack.c.l.b16 %v2700
        %v2801 = vunpack.c.h.b16 %v2700
        %v2802 = vunpack.c.l.b16 %v2701
        %v2803 = vunpack.c.h.b16 %v2701
        %v2804 = vunpack.c.l.b16 %v2702
        %v2805 = vunpack.c.h.b16 %v2702
        %v2806 = vunpack.c.l.b16 %v2703
        %v2807 = vunpack.c.h.b16 %v2703
        %v2808 = vunpack.c.l.b16 %v2704
        %v2809 = vunpack.c.h.b16 %v2704
        %v2810 = vunpack.c.l.b16 %v2705
        %v2811 = vunpack.c.h.b16 %v2705
        %v2812 = vpack.c.b16 %v2752, %v2748
        %v2813 = vpack.c.b16 %v2753, %v2749
        %v2814 = vpack.c.b16 %v2754, %v2750
        %v2815 = vpack.c.b16 %v2755, %v2751
        %v2816 = vpack.c.b16 %v2760, %v2756
        %v2817 = vpack.c.b16 %v2761, %v2757
        %v2818 = vpack.c.b16 %v2762, %v2758
        %v2819 = vpack.c.b16 %v2763, %v2759
        %v2820 = vpack.c.b16 %v2768, %v2764
        %v2821 = vpack.c.b16 %v2769, %v2765
        %v2822 = vpack.c.b16 %v2770, %v2766
        %v2823 = vpack.c.b16 %v2771, %v2767
        %v2824 = vpack.c.b16 %v2776, %v2772
        %v2825 = vpack.c.b16 %v2777, %v2773
        %v2826 = vpack.c.b16 %v2778, %v2774
        %v2827 = vpack.c.b16 %v2779, %v2775
        %v2828 = vpack.c.b16 %v2784, %v2780
        %v2829 = vpack.c.b16 %v2785, %v2781
        %v2830 = vpack.c.b16 %v2786, %v2782
        %v2831 = vpack.c.b16 %v2787, %v2783
        %v2832 = vpack.c.b16 %v2792, %v2788
        %v2833 = vpack.c.b16 %v2793, %v2789
        %v2834 = vpack.c.b16 %v2794, %v2790
        %v2835 = vpack.c.b16 %v2795, %v2791
        %v2836 = vpack.c.b16 %v2800, %v2796
        %v2837 = vpack.c.b16 %v2801, %v2797
        %v2838 = vpack.c.b16 %v2802, %v2798
        %v2839 = vpack.c.b16 %v2803, %v2799
        %v2840 = vpack.c.b16 %v2808, %v2804
        %v2841 = vpack.c.b16 %v2809, %v2805
        %v2842 = vpack.c.b16 %v2810, %v2806
        %v2843 = vpack.c.b16 %v2811, %v2807
        %2876 = vmatpush.bf16.msra.mxu0 %v2840
        %2877 = vmatpush.bf16.msra.mxu0 %v2836
        %2878 = vmatpush.bf16.msra.mxu0 %v2832
        %2879 = vmatpush.bf16.msra.mxu0 %v2828
        %2880 = vmatpush.bf16.msra.mxu0 %v2824
        %2881 = vmatpush.bf16.msra.mxu0 %v2820
        %2882 = vmatpush.bf16.msra.mxu0 %v2816
        %2883 = vmatpush.bf16.msra.mxu0 %v2812
        %2884 = vmatmul.bf16.gmra.mxu0 %v2666
        %v2885 = vpop.f32.mrf.mxu0
        %v2886 = vadd.f32 %v2708, %v2885
        %v2887 = vpop.f32.mrf.mxu0
        %v2888 = vadd.f32 %v2708, %v2887
        %2889 = vmatmul.bf16.gmra.mxu0 %v2667
        %v2890 = vpop.f32.mrf.mxu0
        %v2891 = vadd.f32 %v2708, %v2890
        %v2892 = vpop.f32.mrf.mxu0
        %v2893 = vadd.f32 %v2708, %v2892
        %2894 = vmatmul.bf16.gmra.mxu0 %v2668
        %v2895 = vpop.f32.mrf.mxu0
        %v2896 = vadd.f32 %v2708, %v2895
        %v2897 = vpop.f32.mrf.mxu0
        %v2898 = vadd.f32 %v2708, %v2897
        %2899 = vmatmul.bf16.gmra.mxu0 %v2669
        %v2900 = vpop.f32.mrf.mxu0
        %v2901 = vadd.f32 %v2708, %v2900
        %v2902 = vpop.f32.mrf.mxu0
        %v2903 = vadd.f32 %v2708, %v2902
        %2904 = vmatmul.bf16.gmra.mxu0 %v2670
        %v2905 = vpop.f32.mrf.mxu0
        %v2906 = vadd.f32 %v2708, %v2905
        %v2907 = vpop.f32.mrf.mxu0
        %v2908 = vadd.f32 %v2708, %v2907
        %2909 = vmatmul.bf16.gmra.mxu0 %v2671
        %v2910 = vpop.f32.mrf.mxu0
        %v2911 = vadd.f32 %v2708, %v2910
        %v2912 = vpop.f32.mrf.mxu0
        %v2913 = vadd.f32 %v2708, %v2912
        %2914 = vmatmul.bf16.gmra.mxu0 %v2672
        %v2915 = vpop.f32.mrf.mxu0
        %v2916 = vadd.f32 %v2708, %v2915
        %v2917 = vpop.f32.mrf.mxu0
        %v2918 = vadd.f32 %v2708, %v2917
        %2919 = vmatmul.bf16.gmra.mxu0 %v2673
        %v2920 = vpop.f32.mrf.mxu0
        %v2921 = vadd.f32 %v2708, %v2920
        %v2922 = vpop.f32.mrf.mxu0
        %v2923 = vadd.f32 %v2708, %v2922
        %2924 = vdwg.mxu0
        %2925 = vmatpush.bf16.msra.mxu0 %v2841
        %2926 = vmatpush.bf16.msra.mxu0 %v2837
        %2927 = vmatpush.bf16.msra.mxu0 %v2833
        %2928 = vmatpush.bf16.msra.mxu0 %v2829
        %2929 = vmatpush.bf16.msra.mxu0 %v2825
        %2930 = vmatpush.bf16.msra.mxu0 %v2821
        %2931 = vmatpush.bf16.msra.mxu0 %v2817
        %2932 = vmatpush.bf16.msra.mxu0 %v2813
        %2933 = vmatmul.bf16.gmra.mxu0 %v2666
        %v2934 = vpop.f32.mrf.mxu0
        %v2935 = vadd.f32 %v2709, %v2934
        %v2936 = vpop.f32.mrf.mxu0
        %v2937 = vadd.f32 %v2709, %v2936
        %2938 = vmatmul.bf16.gmra.mxu0 %v2667
        %v2939 = vpop.f32.mrf.mxu0
        %v2940 = vadd.f32 %v2709, %v2939
        %v2941 = vpop.f32.mrf.mxu0
        %v2942 = vadd.f32 %v2709, %v2941
        %2943 = vmatmul.bf16.gmra.mxu0 %v2668
        %v2944 = vpop.f32.mrf.mxu0
        %v2945 = vadd.f32 %v2709, %v2944
        %v2946 = vpop.f32.mrf.mxu0
        %v2947 = vadd.f32 %v2709, %v2946
        %2948 = vmatmul.bf16.gmra.mxu0 %v2669
        %v2949 = vpop.f32.mrf.mxu0
        %v2950 = vadd.f32 %v2709, %v2949
        %v2951 = vpop.f32.mrf.mxu0
        %v2952 = vadd.f32 %v2709, %v2951
        %2953 = vmatmul.bf16.gmra.mxu0 %v2670
        %v2954 = vpop.f32.mrf.mxu0
        %v2955 = vadd.f32 %v2709, %v2954
        %v2956 = vpop.f32.mrf.mxu0
        %v2957 = vadd.f32 %v2709, %v2956
        %2958 = vmatmul.bf16.gmra.mxu0 %v2671
        %v2959 = vpop.f32.mrf.mxu0
        %v2960 = vadd.f32 %v2709, %v2959
        %v2961 = vpop.f32.mrf.mxu0
        %v2962 = vadd.f32 %v2709, %v2961
        %2963 = vmatmul.bf16.gmra.mxu0 %v2672
        %v2964 = vpop.f32.mrf.mxu0
        %v2965 = vadd.f32 %v2709, %v2964
        %v2966 = vpop.f32.mrf.mxu0
        %v2967 = vadd.f32 %v2709, %v2966
        %2968 = vmatmul.bf16.gmra.mxu0 %v2673
        %v2969 = vpop.f32.mrf.mxu0
        %v2970 = vadd.f32 %v2709, %v2969
        %v2971 = vpop.f32.mrf.mxu0
        %v2972 = vadd.f32 %v2709, %v2971
        %2973 = vdwg.mxu0
        %2974 = vmatpush.bf16.msra.mxu0 %v2842
        %2975 = vmatpush.bf16.msra.mxu0 %v2838
        %2976 = vmatpush.bf16.msra.mxu0 %v2834
        %2977 = vmatpush.bf16.msra.mxu0 %v2830
        %2978 = vmatpush.bf16.msra.mxu0 %v2826
        %2979 = vmatpush.bf16.msra.mxu0 %v2822
        %2980 = vmatpush.bf16.msra.mxu0 %v2818
        %2981 = vmatpush.bf16.msra.mxu0 %v2814
        %2982 = vmatmul.bf16.gmra.mxu0 %v2666
        %v2983 = vpop.f32.mrf.mxu0
        %v2984 = vadd.f32 %v2710, %v2983
        %v2985 = vpop.f32.mrf.mxu0
        %v2986 = vadd.f32 %v2710, %v2985
        %2987 = vmatmul.bf16.gmra.mxu0 %v2667
        %v2988 = vpop.f32.mrf.mxu0
        %v2989 = vadd.f32 %v2710, %v2988
        %v2990 = vpop.f32.mrf.mxu0
        %v2991 = vadd.f32 %v2710, %v2990
        %2992 = vmatmul.bf16.gmra.mxu0 %v2668
        %v2993 = vpop.f32.mrf.mxu0
        %v2994 = vadd.f32 %v2710, %v2993
        %v2995 = vpop.f32.mrf.mxu0
        %v2996 = vadd.f32 %v2710, %v2995
        %2997 = vmatmul.bf16.gmra.mxu0 %v2669
        %v2998 = vpop.f32.mrf.mxu0
        %v2999 = vadd.f32 %v2710, %v2998
        %v3000 = vpop.f32.mrf.mxu0
        %v3001 = vadd.f32 %v2710, %v3000
        %3002 = vmatmul.bf16.gmra.mxu0 %v2670
        %v3003 = vpop.f32.mrf.mxu0
        %v3004 = vadd.f32 %v2710, %v3003
        %v3005 = vpop.f32.mrf.mxu0
        %v3006 = vadd.f32 %v2710, %v3005
        %3007 = vmatmul.bf16.gmra.mxu0 %v2671
        %v3008 = vpop.f32.mrf.mxu0
        %v3009 = vadd.f32 %v2710, %v3008
        %v3010 = vpop.f32.mrf.mxu0
        %v3011 = vadd.f32 %v2710, %v3010
        %3012 = vmatmul.bf16.gmra.mxu0 %v2672
        %v3013 = vpop.f32.mrf.mxu0
        %v3014 = vadd.f32 %v2710, %v3013
        %v3015 = vpop.f32.mrf.mxu0
        %v3016 = vadd.f32 %v2710, %v3015
        %3017 = vmatmul.bf16.gmra.mxu0 %v2673
        %v3018 = vpop.f32.mrf.mxu0
        %v3019 = vadd.f32 %v2710, %v3018
        %v3020 = vpop.f32.mrf.mxu0
        %v3021 = vadd.f32 %v2710, %v3020
        %3022 = vdwg.mxu0
        %3023 = vmatpush.bf16.msra.mxu0 %v2843
        %3024 = vmatpush.bf16.msra.mxu0 %v2839
        %3025 = vmatpush.bf16.msra.mxu0 %v2835
        %3026 = vmatpush.bf16.msra.mxu0 %v2831
        %3027 = vmatpush.bf16.msra.mxu0 %v2827
        %3028 = vmatpush.bf16.msra.mxu0 %v2823
        %3029 = vmatpush.bf16.msra.mxu0 %v2819
        %3030 = vmatpush.bf16.msra.mxu0 %v2815
        %3031 = vmatmul.bf16.gmra.mxu0 %v2666
        %v3032 = vpop.f32.mrf.mxu0
        %v3033 = vadd.f32 %v2711, %v3032
        %v3034 = vpop.f32.mrf.mxu0
        %v3035 = vadd.f32 %v2711, %v3034
        %3036 = vmatmul.bf16.gmra.mxu0 %v2667
        %v3037 = vpop.f32.mrf.mxu0
        %v3038 = vadd.f32 %v2711, %v3037
        %v3039 = vpop.f32.mrf.mxu0
        %v3040 = vadd.f32 %v2711, %v3039
        %3041 = vmatmul.bf16.gmra.mxu0 %v2668
        %v3042 = vpop.f32.mrf.mxu0
        %v3043 = vadd.f32 %v2711, %v3042
        %v3044 = vpop.f32.mrf.mxu0
        %v3045 = vadd.f32 %v2711, %v3044
        %3046 = vmatmul.bf16.gmra.mxu0 %v2669
        %v3047 = vpop.f32.mrf.mxu0
        %v3048 = vadd.f32 %v2711, %v3047
        %v3049 = vpop.f32.mrf.mxu0
        %v3050 = vadd.f32 %v2711, %v3049
        %3051 = vmatmul.bf16.gmra.mxu0 %v2670
        %v3052 = vpop.f32.mrf.mxu0
        %v3053 = vadd.f32 %v2711, %v3052
        %v3054 = vpop.f32.mrf.mxu0
        %v3055 = vadd.f32 %v2711, %v3054
        %3056 = vmatmul.bf16.gmra.mxu0 %v2671
        %v3057 = vpop.f32.mrf.mxu0
        %v3058 = vadd.f32 %v2711, %v3057
        %v3059 = vpop.f32.mrf.mxu0
        %v3060 = vadd.f32 %v2711, %v3059
        %3061 = vmatmul.bf16.gmra.mxu0 %v2672
        %v3062 = vpop.f32.mrf.mxu0
        %v3063 = vadd.f32 %v2711, %v3062
        %v3064 = vpop.f32.mrf.mxu0
        %v3065 = vadd.f32 %v2711, %v3064
        %3066 = vmatmul.bf16.gmra.mxu0 %v2673
        %v3067 = vpop.f32.mrf.mxu0
        %v3068 = vadd.f32 %v2711, %v3067
        %v3069 = vpop.f32.mrf.mxu0
        %v3070 = vadd.f32 %v2711, %v3069
        %3071 = vdwg.mxu0
        %v3072 = vmul.f32 %v2886, 0.5
        %v3073 = vmul.f32 %v2935, 0.5
        %v3074 = vmul.f32 %v2984, 0.5
        %v3075 = vmul.f32 %v3033, 0.5
        %v3076 = vmul.f32 %v2888, 0.5
        %v3077 = vmul.f32 %v2937, 0.5
        %v3078 = vmul.f32 %v2986, 0.5
        %v3079 = vmul.f32 %v3035, 0.5
        %v3080 = vmul.f32 %v2891, 0.5
        %v3081 = vmul.f32 %v2940, 0.5
        %v3082 = vmul.f32 %v2989, 0.5
        %v3083 = vmul.f32 %v3038, 0.5
        %v3084 = vmul.f32 %v2893, 0.5
        %v3085 = vmul.f32 %v2942, 0.5
        %v3086 = vmul.f32 %v2991, 0.5
        %v3087 = vmul.f32 %v3040, 0.5
        %v3088 = vmul.f32 %v2896, 0.5
        %v3089 = vmul.f32 %v2945, 0.5
        %v3090 = vmul.f32 %v2994, 0.5
        %v3091 = vmul.f32 %v3043, 0.5
        %v3092 = vmul.f32 %v2898, 0.5
        %v3093 = vmul.f32 %v2947, 0.5
        %v3094 = vmul.f32 %v2996, 0.5
        %v3095 = vmul.f32 %v3045, 0.5
        %v3096 = vmul.f32 %v2901, 0.5
        %v3097 = vmul.f32 %v2950, 0.5
        %v3098 = vmul.f32 %v2999, 0.5
        %v3099 = vmul.f32 %v3048, 0.5
        %v3100 = vmul.f32 %v2903, 0.5
        %v3101 = vmul.f32 %v2952, 0.5
        %v3102 = vmul.f32 %v3001, 0.5
        %v3103 = vmul.f32 %v3050, 0.5
        %v3104 = vmul.f32 %v2906, 0.5
        %v3105 = vmul.f32 %v2955, 0.5
        %v3106 = vmul.f32 %v3004, 0.5
        %v3107 = vmul.f32 %v3053, 0.5
        %v3108 = vmul.f32 %v2908, 0.5
        %v3109 = vmul.f32 %v2957, 0.5
        %v3110 = vmul.f32 %v3006, 0.5
        %v3111 = vmul.f32 %v3055, 0.5
        %v3112 = vmul.f32 %v2911, 0.5
        %v3113 = vmul.f32 %v2960, 0.5
        %v3114 = vmul.f32 %v3009, 0.5
        %v3115 = vmul.f32 %v3058, 0.5
        %v3116 = vmul.f32 %v2913, 0.5
        %v3117 = vmul.f32 %v2962, 0.5
        %v3118 = vmul.f32 %v3011, 0.5
        %v3119 = vmul.f32 %v3060, 0.5
        %v3120 = vmul.f32 %v2916, 0.5
        %v3121 = vmul.f32 %v2965, 0.5
        %v3122 = vmul.f32 %v3014, 0.5
        %v3123 = vmul.f32 %v3063, 0.5
        %v3124 = vmul.f32 %v2918, 0.5
        %v3125 = vmul.f32 %v2967, 0.5
        %v3126 = vmul.f32 %v3016, 0.5
        %v3127 = vmul.f32 %v3065, 0.5
        %v3128 = vmul.f32 %v2921, 0.5
        %v3129 = vmul.f32 %v2970, 0.5
        %v3130 = vmul.f32 %v3019, 0.5
        %v3131 = vmul.f32 %v3068, 0.5
        %v3132 = vmul.f32 %v2923, 0.5
        %v3133 = vmul.f32 %v2972, 0.5
        %v3134 = vmul.f32 %v3021, 0.5
        %v3135 = vmul.f32 %v3070, 0.5
        %v3136 = vmul.f32 %v2886, 0.044715
        %v3137 = vmul.f32 %v2935, 0.044715
        %v3138 = vmul.f32 %v2984, 0.044715
        %v3139 = vmul.f32 %v3033, 0.044715
        %v3140 = vmul.f32 %v2888, 0.044715
        %v3141 = vmul.f32 %v2937, 0.044715
        %v3142 = vmul.f32 %v2986, 0.044715
        %v3143 = vmul.f32 %v3035, 0.044715
        %v3144 = vmul.f32 %v2891, 0.044715
        %v3145 = vmul.f32 %v2940, 0.044715
        %v3146 = vmul.f32 %v2989, 0.044715
        %v3147 = vmul.f32 %v3038, 0.044715
        %v3148 = vmul.f32 %v2893, 0.044715
        %v3149 = vmul.f32 %v2942, 0.044715
        %v3150 = vmul.f32 %v2991, 0.044715
        %v3151 = vmul.f32 %v3040, 0.044715
        %v3152 = vmul.f32 %v2896, 0.044715
        %v3153 = vmul.f32 %v2945, 0.044715
        %v3154 = vmul.f32 %v2994, 0.044715
        %v3155 = vmul.f32 %v3043, 0.044715
        %v3156 = vmul.f32 %v2898, 0.044715
        %v3157 = vmul.f32 %v2947, 0.044715
        %v3158 = vmul.f32 %v2996, 0.044715
        %v3159 = vmul.f32 %v3045, 0.044715
        %v3160 = vmul.f32 %v2901, 0.044715
        %v3161 = vmul.f32 %v2950, 0.044715
        %v3162 = vmul.f32 %v2999, 0.044715
        %v3163 = vmul.f32 %v3048, 0.044715
        %v3164 = vmul.f32 %v2903, 0.044715
        %v3165 = vmul.f32 %v2952, 0.044715
        %v3166 = vmul.f32 %v3001, 0.044715
        %v3167 = vmul.f32 %v3050, 0.044715
        %v3168 = vmul.f32 %v2906, 0.044715
        %v3169 = vmul.f32 %v2955, 0.044715
        %v3170 = vmul.f32 %v3004, 0.044715
        %v3171 = vmul.f32 %v3053, 0.044715
        %v3172 = vmul.f32 %v2908, 0.044715
        %v3173 = vmul.f32 %v2957, 0.044715
        %v3174 = vmul.f32 %v3006, 0.044715
        %v3175 = vmul.f32 %v3055, 0.044715
        %v3176 = vmul.f32 %v2911, 0.044715
        %v3177 = vmul.f32 %v2960, 0.044715
        %v3178 = vmul.f32 %v3009, 0.044715
        %v3179 = vmul.f32 %v3058, 0.044715
        %v3180 = vmul.f32 %v2913, 0.044715
        %v3181 = vmul.f32 %v2962, 0.044715
        %v3182 = vmul.f32 %v3011, 0.044715
        %v3183 = vmul.f32 %v3060, 0.044715
        %v3184 = vmul.f32 %v2916, 0.044715
        %v3185 = vmul.f32 %v2965, 0.044715
        %v3186 = vmul.f32 %v3014, 0.044715
        %v3187 = vmul.f32 %v3063, 0.044715
        %v3188 = vmul.f32 %v2918, 0.044715
        %v3189 = vmul.f32 %v2967, 0.044715
        %v3190 = vmul.f32 %v3016, 0.044715
        %v3191 = vmul.f32 %v3065, 0.044715
        %v3192 = vmul.f32 %v2921, 0.044715
        %v3193 = vmul.f32 %v2970, 0.044715
        %v3194 = vmul.f32 %v3019, 0.044715
        %v3195 = vmul.f32 %v3068, 0.044715
        %v3196 = vmul.f32 %v2923, 0.044715
        %v3197 = vmul.f32 %v2972, 0.044715
        %v3198 = vmul.f32 %v3021, 0.044715
        %v3199 = vmul.f32 %v3070, 0.044715
        %v3200 = vmul.f32 %v3136, %v2886
        %v3201 = vmul.f32 %v3137, %v2935
        %v3202 = vmul.f32 %v3138, %v2984
        %v3203 = vmul.f32 %v3139, %v3033
        %v3204 = vmul.f32 %v3140, %v2888
        %v3205 = vmul.f32 %v3141, %v2937
        %v3206 = vmul.f32 %v3142, %v2986
        %v3207 = vmul.f32 %v3143, %v3035
        %v3208 = vmul.f32 %v3144, %v2891
        %v3209 = vmul.f32 %v3145, %v2940
        %v3210 = vmul.f32 %v3146, %v2989
        %v3211 = vmul.f32 %v3147, %v3038
        %v3212 = vmul.f32 %v3148, %v2893
        %v3213 = vmul.f32 %v3149, %v2942
        %v3214 = vmul.f32 %v3150, %v2991
        %v3215 = vmul.f32 %v3151, %v3040
        %v3216 = vmul.f32 %v3152, %v2896
        %v3217 = vmul.f32 %v3153, %v2945
        %v3218 = vmul.f32 %v3154, %v2994
        %v3219 = vmul.f32 %v3155, %v3043
        %v3220 = vmul.f32 %v3156, %v2898
        %v3221 = vmul.f32 %v3157, %v2947
        %v3222 = vmul.f32 %v3158, %v2996
        %v3223 = vmul.f32 %v3159, %v3045
        %v3224 = vmul.f32 %v3160, %v2901
        %v3225 = vmul.f32 %v3161, %v2950
        %v3226 = vmul.f32 %v3162, %v2999
        %v3227 = vmul.f32 %v3163, %v3048
        %v3228 = vmul.f32 %v3164, %v2903
        %v3229 = vmul.f32 %v3165, %v2952
        %v3230 = vmul.f32 %v3166, %v3001
        %v3231 = vmul.f32 %v3167, %v3050
        %v3232 = vmul.f32 %v3168, %v2906
        %v3233 = vmul.f32 %v3169, %v2955
        %v3234 = vmul.f32 %v3170, %v3004
        %v3235 = vmul.f32 %v3171, %v3053
        %v3236 = vmul.f32 %v3172, %v2908
        %v3237 = vmul.f32 %v3173, %v2957
        %v3238 = vmul.f32 %v3174, %v3006
        %v3239 = vmul.f32 %v3175, %v3055
        %v3240 = vmul.f32 %v3176, %v2911
        %v3241 = vmul.f32 %v3177, %v2960
        %v3242 = vmul.f32 %v3178, %v3009
        %v3243 = vmul.f32 %v3179, %v3058
        %v3244 = vmul.f32 %v3180, %v2913
        %v3245 = vmul.f32 %v3181, %v2962
        %v3246 = vmul.f32 %v3182, %v3011
        %v3247 = vmul.f32 %v3183, %v3060
        %v3248 = vmul.f32 %v3184, %v2916
        %v3249 = vmul.f32 %v3185, %v2965
        %v3250 = vmul.f32 %v3186, %v3014
        %v3251 = vmul.f32 %v3187, %v3063
        %v3252 = vmul.f32 %v3188, %v2918
        %v3253 = vmul.f32 %v3189, %v2967
        %v3254 = vmul.f32 %v3190, %v3016
        %v3255 = vmul.f32 %v3191, %v3065
        %v3256 = vmul.f32 %v3192, %v2921
        %v3257 = vmul.f32 %v3193, %v2970
        %v3258 = vmul.f32 %v3194, %v3019
        %v3259 = vmul.f32 %v3195, %v3068
        %v3260 = vmul.f32 %v3196, %v2923
        %v3261 = vmul.f32 %v3197, %v2972
        %v3262 = vmul.f32 %v3198, %v3021
        %v3263 = vmul.f32 %v3199, %v3070
        %v3264 = vmul.f32 %v3200, %v2886
        %v3265 = vmul.f32 %v3201, %v2935
        %v3266 = vmul.f32 %v3202, %v2984
        %v3267 = vmul.f32 %v3203, %v3033
        %v3268 = vmul.f32 %v3204, %v2888
        %v3269 = vmul.f32 %v3205, %v2937
        %v3270 = vmul.f32 %v3206, %v2986
        %v3271 = vmul.f32 %v3207, %v3035
        %v3272 = vmul.f32 %v3208, %v2891
        %v3273 = vmul.f32 %v3209, %v2940
        %v3274 = vmul.f32 %v3210, %v2989
        %v3275 = vmul.f32 %v3211, %v3038
        %v3276 = vmul.f32 %v3212, %v2893
        %v3277 = vmul.f32 %v3213, %v2942
        %v3278 = vmul.f32 %v3214, %v2991
        %v3279 = vmul.f32 %v3215, %v3040
        %v3280 = vmul.f32 %v3216, %v2896
        %v3281 = vmul.f32 %v3217, %v2945
        %v3282 = vmul.f32 %v3218, %v2994
        %v3283 = vmul.f32 %v3219, %v3043
        %v3284 = vmul.f32 %v3220, %v2898
        %v3285 = vmul.f32 %v3221, %v2947
        %v3286 = vmul.f32 %v3222, %v2996
        %v3287 = vmul.f32 %v3223, %v3045
        %v3288 = vmul.f32 %v3224, %v2901
        %v3289 = vmul.f32 %v3225, %v2950
        %v3290 = vmul.f32 %v3226, %v2999
        %v3291 = vmul.f32 %v3227, %v3048
        %v3292 = vmul.f32 %v3228, %v2903
        %v3293 = vmul.f32 %v3229, %v2952
        %v3294 = vmul.f32 %v3230, %v3001
        %v3295 = vmul.f32 %v3231, %v3050
        %v3296 = vmul.f32 %v3232, %v2906
        %v3297 = vmul.f32 %v3233, %v2955
        %v3298 = vmul.f32 %v3234, %v3004
        %v3299 = vmul.f32 %v3235, %v3053
        %v3300 = vmul.f32 %v3236, %v2908
        %v3301 = vmul.f32 %v3237, %v2957
        %v3302 = vmul.f32 %v3238, %v3006
        %v3303 = vmul.f32 %v3239, %v3055
        %v3304 = vmul.f32 %v3240, %v2911
        %v3305 = vmul.f32 %v3241, %v2960
        %v3306 = vmul.f32 %v3242, %v3009
        %v3307 = vmul.f32 %v3243, %v3058
        %v3308 = vmul.f32 %v3244, %v2913
        %v3309 = vmul.f32 %v3245, %v2962
        %v3310 = vmul.f32 %v3246, %v3011
        %v3311 = vmul.f32 %v3247, %v3060
        %v3312 = vmul.f32 %v3248, %v2916
        %v3313 = vmul.f32 %v3249, %v2965
        %v3314 = vmul.f32 %v3250, %v3014
        %v3315 = vmul.f32 %v3251, %v3063
        %v3316 = vmul.f32 %v3252, %v2918
        %v3317 = vmul.f32 %v3253, %v2967
        %v3318 = vmul.f32 %v3254, %v3016
        %v3319 = vmul.f32 %v3255, %v3065
        %v3320 = vmul.f32 %v3256, %v2921
        %v3321 = vmul.f32 %v3257, %v2970
        %v3322 = vmul.f32 %v3258, %v3019
        %v3323 = vmul.f32 %v3259, %v3068
        %v3324 = vmul.f32 %v3260, %v2923
        %v3325 = vmul.f32 %v3261, %v2972
        %v3326 = vmul.f32 %v3262, %v3021
        %v3327 = vmul.f32 %v3263, %v3070
        %v3328 = vadd.f32 %v2886, %v3264
        %v3329 = vadd.f32 %v2935, %v3265
        %v3330 = vadd.f32 %v2984, %v3266
        %v3331 = vadd.f32 %v3033, %v3267
        %v3332 = vadd.f32 %v2888, %v3268
        %v3333 = vadd.f32 %v2937, %v3269
        %v3334 = vadd.f32 %v2986, %v3270
        %v3335 = vadd.f32 %v3035, %v3271
        %v3336 = vadd.f32 %v2891, %v3272
        %v3337 = vadd.f32 %v2940, %v3273
        %v3338 = vadd.f32 %v2989, %v3274
        %v3339 = vadd.f32 %v3038, %v3275
        %v3340 = vadd.f32 %v2893, %v3276
        %v3341 = vadd.f32 %v2942, %v3277
        %v3342 = vadd.f32 %v2991, %v3278
        %v3343 = vadd.f32 %v3040, %v3279
        %v3344 = vadd.f32 %v2896, %v3280
        %v3345 = vadd.f32 %v2945, %v3281
        %v3346 = vadd.f32 %v2994, %v3282
        %v3347 = vadd.f32 %v3043, %v3283
        %v3348 = vadd.f32 %v2898, %v3284
        %v3349 = vadd.f32 %v2947, %v3285
        %v3350 = vadd.f32 %v2996, %v3286
        %v3351 = vadd.f32 %v3045, %v3287
        %v3352 = vadd.f32 %v2901, %v3288
        %v3353 = vadd.f32 %v2950, %v3289
        %v3354 = vadd.f32 %v2999, %v3290
        %v3355 = vadd.f32 %v3048, %v3291
        %v3356 = vadd.f32 %v2903, %v3292
        %v3357 = vadd.f32 %v2952, %v3293
        %v3358 = vadd.f32 %v3001, %v3294
        %v3359 = vadd.f32 %v3050, %v3295
        %v3360 = vadd.f32 %v2906, %v3296
        %v3361 = vadd.f32 %v2955, %v3297
        %v3362 = vadd.f32 %v3004, %v3298
        %v3363 = vadd.f32 %v3053, %v3299
        %v3364 = vadd.f32 %v2908, %v3300
        %v3365 = vadd.f32 %v2957, %v3301
        %v3366 = vadd.f32 %v3006, %v3302
        %v3367 = vadd.f32 %v3055, %v3303
        %v3368 = vadd.f32 %v2911, %v3304
        %v3369 = vadd.f32 %v2960, %v3305
        %v3370 = vadd.f32 %v3009, %v3306
        %v3371 = vadd.f32 %v3058, %v3307
        %v3372 = vadd.f32 %v2913, %v3308
        %v3373 = vadd.f32 %v2962, %v3309
        %v3374 = vadd.f32 %v3011, %v3310
        %v3375 = vadd.f32 %v3060, %v3311
        %v3376 = vadd.f32 %v2916, %v3312
        %v3377 = vadd.f32 %v2965, %v3313
        %v3378 = vadd.f32 %v3014, %v3314
        %v3379 = vadd.f32 %v3063, %v3315
        %v3380 = vadd.f32 %v2918, %v3316
        %v3381 = vadd.f32 %v2967, %v3317
        %v3382 = vadd.f32 %v3016, %v3318
        %v3383 = vadd.f32 %v3065, %v3319
        %v3384 = vadd.f32 %v2921, %v3320
        %v3385 = vadd.f32 %v2970, %v3321
        %v3386 = vadd.f32 %v3019, %v3322
        %v3387 = vadd.f32 %v3068, %v3323
        %v3388 = vadd.f32 %v2923, %v3324
        %v3389 = vadd.f32 %v2972, %v3325
        %v3390 = vadd.f32 %v3021, %v3326
        %v3391 = vadd.f32 %v3070, %v3327
        %v3392 = vmul.f32 %v3328, 0.7978846
        %v3393 = vmul.f32 %v3329, 0.7978846
        %v3394 = vmul.f32 %v3330, 0.7978846
        %v3395 = vmul.f32 %v3331, 0.7978846
        %v3396 = vmul.f32 %v3332, 0.7978846
        %v3397 = vmul.f32 %v3333, 0.7978846
        %v3398 = vmul.f32 %v3334, 0.7978846
        %v3399 = vmul.f32 %v3335, 0.7978846
        %v3400 = vmul.f32 %v3336, 0.7978846
        %v3401 = vmul.f32 %v3337, 0.7978846
        %v3402 = vmul.f32 %v3338, 0.7978846
        %v3403 = vmul.f32 %v3339, 0.7978846
        %v3404 = vmul.f32 %v3340, 0.7978846
        %v3405 = vmul.f32 %v3341, 0.7978846
        %v3406 = vmul.f32 %v3342, 0.7978846
        %v3407 = vmul.f32 %v3343, 0.7978846
        %v3408 = vmul.f32 %v3344, 0.7978846
        %v3409 = vmul.f32 %v3345, 0.7978846
        %v3410 = vmul.f32 %v3346, 0.7978846
        %v3411 = vmul.f32 %v3347, 0.7978846
        %v3412 = vmul.f32 %v3348, 0.7978846
        %v3413 = vmul.f32 %v3349, 0.7978846
        %v3414 = vmul.f32 %v3350, 0.7978846
        %v3415 = vmul.f32 %v3351, 0.7978846
        %v3416 = vmul.f32 %v3352, 0.7978846
        %v3417 = vmul.f32 %v3353, 0.7978846
        %v3418 = vmul.f32 %v3354, 0.7978846
        %v3419 = vmul.f32 %v3355, 0.7978846
        %v3420 = vmul.f32 %v3356, 0.7978846
        %v3421 = vmul.f32 %v3357, 0.7978846
        %v3422 = vmul.f32 %v3358, 0.7978846
        %v3423 = vmul.f32 %v3359, 0.7978846
        %v3424 = vmul.f32 %v3360, 0.7978846
        %v3425 = vmul.f32 %v3361, 0.7978846
        %v3426 = vmul.f32 %v3362, 0.7978846
        %v3427 = vmul.f32 %v3363, 0.7978846
        %v3428 = vmul.f32 %v3364, 0.7978846
        %v3429 = vmul.f32 %v3365, 0.7978846
        %v3430 = vmul.f32 %v3366, 0.7978846
        %v3431 = vmul.f32 %v3367, 0.7978846
        %v3432 = vmul.f32 %v3368, 0.7978846
        %v3433 = vmul.f32 %v3369, 0.7978846
        %v3434 = vmul.f32 %v3370, 0.7978846
        %v3435 = vmul.f32 %v3371, 0.7978846
        %v3436 = vmul.f32 %v3372, 0.7978846
        %v3437 = vmul.f32 %v3373, 0.7978846
        %v3438 = vmul.f32 %v3374, 0.7978846
        %v3439 = vmul.f32 %v3375, 0.7978846
        %v3440 = vmul.f32 %v3376, 0.7978846
        %v3441 = vmul.f32 %v3377, 0.7978846
        %v3442 = vmul.f32 %v3378, 0.7978846
        %v3443 = vmul.f32 %v3379, 0.7978846
        %v3444 = vmul.f32 %v3380, 0.7978846
        %v3445 = vmul.f32 %v3381, 0.7978846
        %v3446 = vmul.f32 %v3382, 0.7978846
        %v3447 = vmul.f32 %v3383, 0.7978846
        %v3448 = vmul.f32 %v3384, 0.7978846
        %v3449 = vmul.f32 %v3385, 0.7978846
        %v3450 = vmul.f32 %v3386, 0.7978846
        %v3451 = vmul.f32 %v3387, 0.7978846
        %v3452 = vmul.f32 %v3388, 0.7978846
        %v3453 = vmul.f32 %v3389, 0.7978846
        %v3454 = vmul.f32 %v3390, 0.7978846
        %v3455 = vmul.f32 %v3391, 0.7978846
        %v3456 = vtanh.pop %v3392
        %v3457 = vtanh.pop %v3393
        %v3458 = vtanh.pop %v3394
        %v3459 = vtanh.pop %v3395
        %v3460 = vtanh.pop %v3396
        %v3461 = vtanh.pop %v3397
        %v3462 = vtanh.pop %v3398
        %v3463 = vtanh.pop %v3399
        %v3464 = vtanh.pop %v3400
        %v3465 = vtanh.pop %v3401
        %v3466 = vtanh.pop %v3402
        %v3467 = vtanh.pop %v3403
        %v3468 = vtanh.pop %v3404
        %v3469 = vtanh.pop %v3405
        %v3470 = vtanh.pop %v3406
        %v3471 = vtanh.pop %v3407
        %v3472 = vtanh.pop %v3408
        %v3473 = vtanh.pop %v3409
        %v3474 = vtanh.pop %v3410
        %v3475 = vtanh.pop %v3411
        %v3476 = vtanh.pop %v3412
        %v3477 = vtanh.pop %v3413
        %v3478 = vtanh.pop %v3414
        %v3479 = vtanh.pop %v3415
        %v3480 = vtanh.pop %v3416
        %v3481 = vtanh.pop %v3417
        %v3482 = vtanh.pop %v3418
        %v3483 = vtanh.pop %v3419
        %v3484 = vtanh.pop %v3420
        %v3485 = vtanh.pop %v3421
        %v3486 = vtanh.pop %v3422
        %v3487 = vtanh.pop %v3423
        %v3488 = vtanh.pop %v3424
        %v3489 = vtanh.pop %v3425
        %v3490 = vtanh.pop %v3426
        %v3491 = vtanh.pop %v3427
        %v3492 = vtanh.pop %v3428
        %v3493 = vtanh.pop %v3429
        %v3494 = vtanh.pop %v3430
        %v3495 = vtanh.pop %v3431
        %v3496 = vtanh.pop %v3432
        %v3497 = vtanh.pop %v3433
        %v3498 = vtanh.pop %v3434
        %v3499 = vtanh.pop %v3435
        %v3500 = vtanh.pop %v3436
        %v3501 = vtanh.pop %v3437
        %v3502 = vtanh.pop %v3438
        %v3503 = vtanh.pop %v3439
        %v3504 = vtanh.pop %v3440
        %v3505 = vtanh.pop %v3441
        %v3506 = vtanh.pop %v3442
        %v3507 = vtanh.pop %v3443
        %v3508 = vtanh.pop %v3444
        %v3509 = vtanh.pop %v3445
        %v3510 = vtanh.pop %v3446
        %v3511 = vtanh.pop %v3447
        %v3512 = vtanh.pop %v3448
        %v3513 = vtanh.pop %v3449
        %v3514 = vtanh.pop %v3450
        %v3515 = vtanh.pop %v3451
        %v3516 = vtanh.pop %v3452
        %v3517 = vtanh.pop %v3453
        %v3518 = vtanh.pop %v3454
        %v3519 = vtanh.pop %v3455
        %v3520 = vadd.f32 %v3456, 1.0
        %v3521 = vadd.f32 %v3457, 1.0
        %v3522 = vadd.f32 %v3458, 1.0
        %v3523 = vadd.f32 %v3459, 1.0
        %v3524 = vadd.f32 %v3460, 1.0
        %v3525 = vadd.f32 %v3461, 1.0
        %v3526 = vadd.f32 %v3462, 1.0
        %v3527 = vadd.f32 %v3463, 1.0
        %v3528 = vadd.f32 %v3464, 1.0
        %v3529 = vadd.f32 %v3465, 1.0
        %v3530 = vadd.f32 %v3466, 1.0
        %v3531 = vadd.f32 %v3467, 1.0
        %v3532 = vadd.f32 %v3468, 1.0
        %v3533 = vadd.f32 %v3469, 1.0
        %v3534 = vadd.f32 %v3470, 1.0
        %v3535 = vadd.f32 %v3471, 1.0
        %v3536 = vadd.f32 %v3472, 1.0
        %v3537 = vadd.f32 %v3473, 1.0
        %v3538 = vadd.f32 %v3474, 1.0
        %v3539 = vadd.f32 %v3475, 1.0
        %v3540 = vadd.f32 %v3476, 1.0
        %v3541 = vadd.f32 %v3477, 1.0
        %v3542 = vadd.f32 %v3478, 1.0
        %v3543 = vadd.f32 %v3479, 1.0
        %v3544 = vadd.f32 %v3480, 1.0
        %v3545 = vadd.f32 %v3481, 1.0
        %v3546 = vadd.f32 %v3482, 1.0
        %v3547 = vadd.f32 %v3483, 1.0
        %v3548 = vadd.f32 %v3484, 1.0
        %v3549 = vadd.f32 %v3485, 1.0
        %v3550 = vadd.f32 %v3486, 1.0
        %v3551 = vadd.f32 %v3487, 1.0
        %v3552 = vadd.f32 %v3488, 1.0
        %v3553 = vadd.f32 %v3489, 1.0
        %v3554 = vadd.f32 %v3490, 1.0
        %v3555 = vadd.f32 %v3491, 1.0
        %v3556 = vadd.f32 %v3492, 1.0
        %v3557 = vadd.f32 %v3493, 1.0
        %v3558 = vadd.f32 %v3494, 1.0
        %v3559 = vadd.f32 %v3495, 1.0
        %v3560 = vadd.f32 %v3496, 1.0
        %v3561 = vadd.f32 %v3497, 1.0
        %v3562 = vadd.f32 %v3498, 1.0
        %v3563 = vadd.f32 %v3499, 1.0
        %v3564 = vadd.f32 %v3500, 1.0
        %v3565 = vadd.f32 %v3501, 1.0
        %v3566 = vadd.f32 %v3502, 1.0
        %v3567 = vadd.f32 %v3503, 1.0
        %v3568 = vadd.f32 %v3504, 1.0
        %v3569 = vadd.f32 %v3505, 1.0
        %v3570 = vadd.f32 %v3506, 1.0
        %v3571 = vadd.f32 %v3507, 1.0
        %v3572 = vadd.f32 %v3508, 1.0
        %v3573 = vadd.f32 %v3509, 1.0
        %v3574 = vadd.f32 %v3510, 1.0
        %v3575 = vadd.f32 %v3511, 1.0
        %v3576 = vadd.f32 %v3512, 1.0
        %v3577 = vadd.f32 %v3513, 1.0
        %v3578 = vadd.f32 %v3514, 1.0
        %v3579 = vadd.f32 %v3515, 1.0
        %v3580 = vadd.f32 %v3516, 1.0
        %v3581 = vadd.f32 %v3517, 1.0
        %v3582 = vadd.f32 %v3518, 1.0
        %v3583 = vadd.f32 %v3519, 1.0
        %v3584 = vmul.f32 %v3072, %v3520
        %v3585 = vmul.f32 %v3073, %v3521
        %v3586 = vmul.f32 %v3074, %v3522
        %v3587 = vmul.f32 %v3075, %v3523
        %v3588 = vmul.f32 %v3076, %v3524
        %v3589 = vmul.f32 %v3077, %v3525
        %v3590 = vmul.f32 %v3078, %v3526
        %v3591 = vmul.f32 %v3079, %v3527
        %v3592 = vmul.f32 %v3080, %v3528
        %v3593 = vmul.f32 %v3081, %v3529
        %v3594 = vmul.f32 %v3082, %v3530
        %v3595 = vmul.f32 %v3083, %v3531
        %v3596 = vmul.f32 %v3084, %v3532
        %v3597 = vmul.f32 %v3085, %v3533
        %v3598 = vmul.f32 %v3086, %v3534
        %v3599 = vmul.f32 %v3087, %v3535
        %v3600 = vmul.f32 %v3088, %v3536
        %v3601 = vmul.f32 %v3089, %v3537
        %v3602 = vmul.f32 %v3090, %v3538
        %v3603 = vmul.f32 %v3091, %v3539
        %v3604 = vmul.f32 %v3092, %v3540
        %v3605 = vmul.f32 %v3093, %v3541
        %v3606 = vmul.f32 %v3094, %v3542
        %v3607 = vmul.f32 %v3095, %v3543
        %v3608 = vmul.f32 %v3096, %v3544
        %v3609 = vmul.f32 %v3097, %v3545
        %v3610 = vmul.f32 %v3098, %v3546
        %v3611 = vmul.f32 %v3099, %v3547
        %v3612 = vmul.f32 %v3100, %v3548
        %v3613 = vmul.f32 %v3101, %v3549
        %v3614 = vmul.f32 %v3102, %v3550
        %v3615 = vmul.f32 %v3103, %v3551
        %v3616 = vmul.f32 %v3104, %v3552
        %v3617 = vmul.f32 %v3105, %v3553
        %v3618 = vmul.f32 %v3106, %v3554
        %v3619 = vmul.f32 %v3107, %v3555
        %v3620 = vmul.f32 %v3108, %v3556
        %v3621 = vmul.f32 %v3109, %v3557
        %v3622 = vmul.f32 %v3110, %v3558
        %v3623 = vmul.f32 %v3111, %v3559
        %v3624 = vmul.f32 %v3112, %v3560
        %v3625 = vmul.f32 %v3113, %v3561
        %v3626 = vmul.f32 %v3114, %v3562
        %v3627 = vmul.f32 %v3115, %v3563
        %v3628 = vmul.f32 %v3116, %v3564
        %v3629 = vmul.f32 %v3117, %v3565
        %v3630 = vmul.f32 %v3118, %v3566
        %v3631 = vmul.f32 %v3119, %v3567
        %v3632 = vmul.f32 %v3120, %v3568
        %v3633 = vmul.f32 %v3121, %v3569
        %v3634 = vmul.f32 %v3122, %v3570
        %v3635 = vmul.f32 %v3123, %v3571
        %v3636 = vmul.f32 %v3124, %v3572
        %v3637 = vmul.f32 %v3125, %v3573
        %v3638 = vmul.f32 %v3126, %v3574
        %v3639 = vmul.f32 %v3127, %v3575
        %v3640 = vmul.f32 %v3128, %v3576
        %v3641 = vmul.f32 %v3129, %v3577
        %v3642 = vmul.f32 %v3130, %v3578
        %v3643 = vmul.f32 %v3131, %v3579
        %v3644 = vmul.f32 %v3132, %v3580
        %v3645 = vmul.f32 %v3133, %v3581
        %v3646 = vmul.f32 %v3134, %v3582
        %v3647 = vmul.f32 %v3135, %v3583
        %v3648 = vpack.c.bf16 %v3588, %v3584
        %v3649 = vpack.c.bf16 %v3589, %v3585
        %v3650 = vpack.c.bf16 %v3590, %v3586
        %v3651 = vpack.c.bf16 %v3591, %v3587
        %v3652 = vpack.c.bf16 %v3596, %v3592
        %v3653 = vpack.c.bf16 %v3597, %v3593
        %v3654 = vpack.c.bf16 %v3598, %v3594
        %v3655 = vpack.c.bf16 %v3599, %v3595
        %v3656 = vpack.c.bf16 %v3604, %v3600
        %v3657 = vpack.c.bf16 %v3605, %v3601
        %v3658 = vpack.c.bf16 %v3606, %v3602
        %v3659 = vpack.c.bf16 %v3607, %v3603
        %v3660 = vpack.c.bf16 %v3612, %v3608
        %v3661 = vpack.c.bf16 %v3613, %v3609
        %v3662 = vpack.c.bf16 %v3614, %v3610
        %v3663 = vpack.c.bf16 %v3615, %v3611
        %v3664 = vpack.c.bf16 %v3620, %v3616
        %v3665 = vpack.c.bf16 %v3621, %v3617
        %v3666 = vpack.c.bf16 %v3622, %v3618
        %v3667 = vpack.c.bf16 %v3623, %v3619
        %v3668 = vpack.c.bf16 %v3628, %v3624
        %v3669 = vpack.c.bf16 %v3629, %v3625
        %v3670 = vpack.c.bf16 %v3630, %v3626
        %v3671 = vpack.c.bf16 %v3631, %v3627
        %v3672 = vpack.c.bf16 %v3636, %v3632
        %v3673 = vpack.c.bf16 %v3637, %v3633
        %v3674 = vpack.c.bf16 %v3638, %v3634
        %v3675 = vpack.c.bf16 %v3639, %v3635
        %v3676 = vpack.c.bf16 %v3644, %v3640
        %v3677 = vpack.c.bf16 %v3645, %v3641
        %v3678 = vpack.c.bf16 %v3646, %v3642
        %v3679 = vpack.c.bf16 %v3647, %v3643
        %v3680 = vld [vmem:[%s12] sm:$0xf]
        %v3681 = vld [vmem:[%s12 + $0x4] sm:$0xf]
        %v3682 = vld [vmem:[%s12 + $0x8] sm:$0xf]
        %v3683 = vld [vmem:[%s12 + $0xc] sm:$0xf]
        %v3684 = vld [vmem:[%s12 + $0x10] sm:$0xf]
        %v3685 = vld [vmem:[%s12 + $0x14] sm:$0xf]
        %v3686 = vld [vmem:[%s12 + $0x18] sm:$0xf]
        %v3687 = vld [vmem:[%s12 + $0x1c] sm:$0xf]
        %v3688 = vld [vmem:[%s12 + $0x20] sm:$0xf]
        %v3689 = vld [vmem:[%s12 + $0x24] sm:$0xf]
        %v3690 = vld [vmem:[%s12 + $0x28] sm:$0xf]
        %v3691 = vld [vmem:[%s12 + $0x2c] sm:$0xf]
        %v3692 = vld [vmem:[%s12 + $0x30] sm:$0xf]
        %v3693 = vld [vmem:[%s12 + $0x34] sm:$0xf]
        %v3694 = vld [vmem:[%s12 + $0x38] sm:$0xf]
        %v3695 = vld [vmem:[%s12 + $0x3c] sm:$0xf]
        %v3696 = vld [vmem:[%s12 + $0x40] sm:$0xf]
        %v3697 = vld [vmem:[%s12 + $0x44] sm:$0xf]
        %v3698 = vld [vmem:[%s12 + $0x48] sm:$0xf]
        %v3699 = vld [vmem:[%s12 + $0x4c] sm:$0xf]
        %v3700 = vld [vmem:[%s12 + $0x50] sm:$0xf]
        %v3701 = vld [vmem:[%s12 + $0x54] sm:$0xf]
        %v3702 = vld [vmem:[%s12 + $0x58] sm:$0xf]
        %v3703 = vld [vmem:[%s12 + $0x5c] sm:$0xf]
        %v3704 = vld [vmem:[%s12 + $0x60] sm:$0xf]
        %v3705 = vld [vmem:[%s12 + $0x64] sm:$0xf]
        %v3706 = vld [vmem:[%s12 + $0x68] sm:$0xf]
        %v3707 = vld [vmem:[%s12 + $0x6c] sm:$0xf]
        %v3708 = vld [vmem:[%s12 + $0x70] sm:$0xf]
        %v3709 = vld [vmem:[%s12 + $0x74] sm:$0xf]
        %v3710 = vld [vmem:[%s12 + $0x78] sm:$0xf]
        %v3711 = vld [vmem:[%s12 + $0x7c] sm:$0xf]
        %v3712 = vld [vmem:[%s12 + $0x80] sm:$0xf]
        %v3713 = vld [vmem:[%s12 + $0x84] sm:$0xf]
        %v3714 = vld [vmem:[%s12 + $0x88] sm:$0xf]
        %v3715 = vld [vmem:[%s12 + $0x8c] sm:$0xf]
        %v3716 = vld [vmem:[%s12 + $0x90] sm:$0xf]
        %v3717 = vld [vmem:[%s12 + $0x94] sm:$0xf]
        %v3718 = vld [vmem:[%s12 + $0x98] sm:$0xf]
        %v3719 = vld [vmem:[%s12 + $0x9c] sm:$0xf]
        %v3720 = vld [vmem:[%s12 + $0xa0] sm:$0xf]
        %v3721 = vld [vmem:[%s12 + $0xa4] sm:$0xf]
        %v3722 = vld [vmem:[%s12 + $0xa8] sm:$0xf]
        %v3723 = vld [vmem:[%s12 + $0xac] sm:$0xf]
        %v3724 = vld [vmem:[%s12 + $0xb0] sm:$0xf]
        %v3725 = vld [vmem:[%s12 + $0xb4] sm:$0xf]
        %v3726 = vld [vmem:[%s12 + $0xb8] sm:$0xf]
        %v3727 = vld [vmem:[%s12 + $0xbc] sm:$0xf]
        %v3728 = vld [vmem:[%s12 + $0xc0] sm:$0xf]
        %v3729 = vld [vmem:[%s12 + $0xc4] sm:$0xf]
        %v3730 = vld [vmem:[%s12 + $0xc8] sm:$0xf]
        %v3731 = vld [vmem:[%s12 + $0xcc] sm:$0xf]
        %v3732 = vld [vmem:[%s12 + $0xd0] sm:$0xf]
        %v3733 = vld [vmem:[%s12 + $0xd4] sm:$0xf]
        %v3734 = vld [vmem:[%s12 + $0xd8] sm:$0xf]
        %v3735 = vld [vmem:[%s12 + $0xdc] sm:$0xf]
        %v3736 = vld [vmem:[%s12 + $0xe0] sm:$0xf]
        %v3737 = vld [vmem:[%s12 + $0xe4] sm:$0xf]
        %v3738 = vld [vmem:[%s12 + $0xe8] sm:$0xf]
        %v3739 = vld [vmem:[%s12 + $0xec] sm:$0xf]
        %v3740 = vld [vmem:[%s12 + $0xf0] sm:$0xf]
        %v3741 = vld [vmem:[%s12 + $0xf4] sm:$0xf]
        %v3742 = vld [vmem:[%s12 + $0xf8] sm:$0xf]
        %v3743 = vld [vmem:[%s12 + $0xfc] sm:$0xf]
        %v3744 = vld [vmem:[%s13] sm:$0x1]
        %v3746 = vperm.slane %v3744, 0
        %v3812 = vunpack.c.l.b16 %v3680
        %v3813 = vunpack.c.l.b16 %v3681
        %v3814 = vunpack.c.l.b16 %v3682
        %v3815 = vunpack.c.l.b16 %v3683
        %v3816 = vunpack.c.l.b16 %v3684
        %v3817 = vunpack.c.l.b16 %v3685
        %v3818 = vunpack.c.l.b16 %v3686
        %v3819 = vunpack.c.l.b16 %v3687
        %v3820 = vunpack.c.l.b16 %v3688
        %v3821 = vunpack.c.l.b16 %v3689
        %v3822 = vunpack.c.l.b16 %v3690
        %v3823 = vunpack.c.l.b16 %v3691
        %v3824 = vunpack.c.l.b16 %v3692
        %v3825 = vunpack.c.l.b16 %v3693
        %v3826 = vunpack.c.l.b16 %v3694
        %v3827 = vunpack.c.l.b16 %v3695
        %v3828 = vunpack.c.l.b16 %v3696
        %v3829 = vunpack.c.l.b16 %v3697
        %v3830 = vunpack.c.l.b16 %v3698
        %v3831 = vunpack.c.l.b16 %v3699
        %v3832 = vunpack.c.l.b16 %v3700
        %v3833 = vunpack.c.l.b16 %v3701
        %v3834 = vunpack.c.l.b16 %v3702
        %v3835 = vunpack.c.l.b16 %v3703
        %v3836 = vunpack.c.l.b16 %v3704
        %v3837 = vunpack.c.l.b16 %v3705
        %v3838 = vunpack.c.l.b16 %v3706
        %v3839 = vunpack.c.l.b16 %v3707
        %v3840 = vunpack.c.l.b16 %v3708
        %v3841 = vunpack.c.l.b16 %v3709
        %v3842 = vunpack.c.l.b16 %v3710
        %v3843 = vunpack.c.l.b16 %v3711
        %v3844 = vunpack.c.l.b16 %v3712
        %v3845 = vunpack.c.l.b16 %v3713
        %v3846 = vunpack.c.l.b16 %v3714
        %v3847 = vunpack.c.l.b16 %v3715
        %v3848 = vunpack.c.l.b16 %v3716
        %v3849 = vunpack.c.l.b16 %v3717
        %v3850 = vunpack.c.l.b16 %v3718
        %v3851 = vunpack.c.l.b16 %v3719
        %v3852 = vunpack.c.l.b16 %v3720
        %v3853 = vunpack.c.l.b16 %v3721
        %v3854 = vunpack.c.l.b16 %v3722
        %v3855 = vunpack.c.l.b16 %v3723
        %v3856 = vunpack.c.l.b16 %v3724
        %v3857 = vunpack.c.l.b16 %v3725
        %v3858 = vunpack.c.l.b16 %v3726
        %v3859 = vunpack.c.l.b16 %v3727
        %v3860 = vunpack.c.l.b16 %v3728
        %v3861 = vunpack.c.l.b16 %v3729
        %v3862 = vunpack.c.l.b16 %v3730
        %v3863 = vunpack.c.l.b16 %v3731
        %v3864 = vunpack.c.l.b16 %v3732
        %v3865 = vunpack.c.l.b16 %v3733
        %v3866 = vunpack.c.l.b16 %v3734
        %v3867 = vunpack.c.l.b16 %v3735
        %v3868 = vunpack.c.l.b16 %v3736
        %v3869 = vunpack.c.l.b16 %v3737
        %v3870 = vunpack.c.l.b16 %v3738
        %v3871 = vunpack.c.l.b16 %v3739
        %v3872 = vunpack.c.l.b16 %v3740
        %v3873 = vunpack.c.l.b16 %v3741
        %v3874 = vunpack.c.l.b16 %v3742
        %v3875 = vunpack.c.l.b16 %v3743
        %v3876 = vpack.c.b16 %v3813, %v3812
        %v3877 = vpack.c.b16 %v3815, %v3814
        %v3878 = vpack.c.b16 %v3817, %v3816
        %v3879 = vpack.c.b16 %v3819, %v3818
        %v3880 = vpack.c.b16 %v3821, %v3820
        %v3881 = vpack.c.b16 %v3823, %v3822
        %v3882 = vpack.c.b16 %v3825, %v3824
        %v3883 = vpack.c.b16 %v3827, %v3826
        %v3884 = vpack.c.b16 %v3829, %v3828
        %v3885 = vpack.c.b16 %v3831, %v3830
        %v3886 = vpack.c.b16 %v3833, %v3832
        %v3887 = vpack.c.b16 %v3835, %v3834
        %v3888 = vpack.c.b16 %v3837, %v3836
        %v3889 = vpack.c.b16 %v3839, %v3838
        %v3890 = vpack.c.b16 %v3841, %v3840
        %v3891 = vpack.c.b16 %v3843, %v3842
        %v3892 = vpack.c.b16 %v3845, %v3844
        %v3893 = vpack.c.b16 %v3847, %v3846
        %v3894 = vpack.c.b16 %v3849, %v3848
        %v3895 = vpack.c.b16 %v3851, %v3850
        %v3896 = vpack.c.b16 %v3853, %v3852
        %v3897 = vpack.c.b16 %v3855, %v3854
        %v3898 = vpack.c.b16 %v3857, %v3856
        %v3899 = vpack.c.b16 %v3859, %v3858
        %v3900 = vpack.c.b16 %v3861, %v3860
        %v3901 = vpack.c.b16 %v3863, %v3862
        %v3902 = vpack.c.b16 %v3865, %v3864
        %v3903 = vpack.c.b16 %v3867, %v3866
        %v3904 = vpack.c.b16 %v3869, %v3868
        %v3905 = vpack.c.b16 %v3871, %v3870
        %v3906 = vpack.c.b16 %v3873, %v3872
        %v3907 = vpack.c.b16 %v3875, %v3874
        %3940 = vmatpush.bf16.msra.mxu0 %v3883
        %3941 = vmatpush.bf16.msra.mxu0 %v3882
        %3942 = vmatpush.bf16.msra.mxu0 %v3881
        %3943 = vmatpush.bf16.msra.mxu0 %v3880
        %3944 = vmatpush.bf16.msra.mxu0 %v3879
        %3945 = vmatpush.bf16.msra.mxu0 %v3878
        %3946 = vmatpush.bf16.msra.mxu0 %v3877
        %3947 = vmatpush.bf16.msra.mxu0 %v3876
        %3948 = vmatmul.bf16.gmra.mxu0 %v3648
        %v3949 = vpop.f32.mrf.mxu0
        %v3950 = vadd.f32 %v3746, %v3949
        %v3951 = vpop.f32.mrf.mxu0
        %v3952 = vadd.f32 %v3746, %v3951
        %3953 = vmatmul.bf16.gmra.mxu0 %v3652
        %v3954 = vpop.f32.mrf.mxu0
        %v3955 = vadd.f32 %v3746, %v3954
        %v3956 = vpop.f32.mrf.mxu0
        %v3957 = vadd.f32 %v3746, %v3956
        %3958 = vmatmul.bf16.gmra.mxu0 %v3656
        %v3959 = vpop.f32.mrf.mxu0
        %v3960 = vadd.f32 %v3746, %v3959
        %v3961 = vpop.f32.mrf.mxu0
        %v3962 = vadd.f32 %v3746, %v3961
        %3963 = vmatmul.bf16.gmra.mxu0 %v3660
        %v3964 = vpop.f32.mrf.mxu0
        %v3965 = vadd.f32 %v3746, %v3964
        %v3966 = vpop.f32.mrf.mxu0
        %v3967 = vadd.f32 %v3746, %v3966
        %3968 = vmatmul.bf16.gmra.mxu0 %v3664
        %v3969 = vpop.f32.mrf.mxu0
        %v3970 = vadd.f32 %v3746, %v3969
        %v3971 = vpop.f32.mrf.mxu0
        %v3972 = vadd.f32 %v3746, %v3971
        %3973 = vmatmul.bf16.gmra.mxu0 %v3668
        %v3974 = vpop.f32.mrf.mxu0
        %v3975 = vadd.f32 %v3746, %v3974
        %v3976 = vpop.f32.mrf.mxu0
        %v3977 = vadd.f32 %v3746, %v3976
        %3978 = vmatmul.bf16.gmra.mxu0 %v3672
        %v3979 = vpop.f32.mrf.mxu0
        %v3980 = vadd.f32 %v3746, %v3979
        %v3981 = vpop.f32.mrf.mxu0
        %v3982 = vadd.f32 %v3746, %v3981
        %3983 = vmatmul.bf16.gmra.mxu0 %v3676
        %v3984 = vpop.f32.mrf.mxu0
        %v3985 = vadd.f32 %v3746, %v3984
        %v3986 = vpop.f32.mrf.mxu0
        %v3987 = vadd.f32 %v3746, %v3986
        %3988 = vdwg.mxu0
        %3989 = vmatpush.bf16.msra.mxu0 %v3891
        %3990 = vmatpush.bf16.msra.mxu0 %v3890
        %3991 = vmatpush.bf16.msra.mxu0 %v3889
        %3992 = vmatpush.bf16.msra.mxu0 %v3888
        %3993 = vmatpush.bf16.msra.mxu0 %v3887
        %3994 = vmatpush.bf16.msra.mxu0 %v3886
        %3995 = vmatpush.bf16.msra.mxu0 %v3885
        %3996 = vmatpush.bf16.msra.mxu0 %v3884
        %3997 = vmatmul.bf16.gmra.mxu0 %v3649
        %v3998 = vpop.f32.mrf.mxu0
        %v3999 = vadd.f32 %v3950, %v3998
        %v4000 = vpop.f32.mrf.mxu0
        %v4001 = vadd.f32 %v3952, %v4000
        %4002 = vmatmul.bf16.gmra.mxu0 %v3653
        %v4003 = vpop.f32.mrf.mxu0
        %v4004 = vadd.f32 %v3955, %v4003
        %v4005 = vpop.f32.mrf.mxu0
        %v4006 = vadd.f32 %v3957, %v4005
        %4007 = vmatmul.bf16.gmra.mxu0 %v3657
        %v4008 = vpop.f32.mrf.mxu0
        %v4009 = vadd.f32 %v3960, %v4008
        %v4010 = vpop.f32.mrf.mxu0
        %v4011 = vadd.f32 %v3962, %v4010
        %4012 = vmatmul.bf16.gmra.mxu0 %v3661
        %v4013 = vpop.f32.mrf.mxu0
        %v4014 = vadd.f32 %v3965, %v4013
        %v4015 = vpop.f32.mrf.mxu0
        %v4016 = vadd.f32 %v3967, %v4015
        %4017 = vmatmul.bf16.gmra.mxu0 %v3665
        %v4018 = vpop.f32.mrf.mxu0
        %v4019 = vadd.f32 %v3970, %v4018
        %v4020 = vpop.f32.mrf.mxu0
        %v4021 = vadd.f32 %v3972, %v4020
        %4022 = vmatmul.bf16.gmra.mxu0 %v3669
        %v4023 = vpop.f32.mrf.mxu0
        %v4024 = vadd.f32 %v3975, %v4023
        %v4025 = vpop.f32.mrf.mxu0
        %v4026 = vadd.f32 %v3977, %v4025
        %4027 = vmatmul.bf16.gmra.mxu0 %v3673
        %v4028 = vpop.f32.mrf.mxu0
        %v4029 = vadd.f32 %v3980, %v4028
        %v4030 = vpop.f32.mrf.mxu0
        %v4031 = vadd.f32 %v3982, %v4030
        %4032 = vmatmul.bf16.gmra.mxu0 %v3677
        %v4033 = vpop.f32.mrf.mxu0
        %v4034 = vadd.f32 %v3985, %v4033
        %v4035 = vpop.f32.mrf.mxu0
        %v4036 = vadd.f32 %v3987, %v4035
        %4037 = vdwg.mxu0
        %4038 = vmatpush.bf16.msra.mxu0 %v3899
        %4039 = vmatpush.bf16.msra.mxu0 %v3898
        %4040 = vmatpush.bf16.msra.mxu0 %v3897
        %4041 = vmatpush.bf16.msra.mxu0 %v3896
        %4042 = vmatpush.bf16.msra.mxu0 %v3895
        %4043 = vmatpush.bf16.msra.mxu0 %v3894
        %4044 = vmatpush.bf16.msra.mxu0 %v3893
        %4045 = vmatpush.bf16.msra.mxu0 %v3892
        %4046 = vmatmul.bf16.gmra.mxu0 %v3650
        %v4047 = vpop.f32.mrf.mxu0
        %v4048 = vadd.f32 %v3999, %v4047
        %v4049 = vpop.f32.mrf.mxu0
        %v4050 = vadd.f32 %v4001, %v4049
        %4051 = vmatmul.bf16.gmra.mxu0 %v3654
        %v4052 = vpop.f32.mrf.mxu0
        %v4053 = vadd.f32 %v4004, %v4052
        %v4054 = vpop.f32.mrf.mxu0
        %v4055 = vadd.f32 %v4006, %v4054
        %4056 = vmatmul.bf16.gmra.mxu0 %v3658
        %v4057 = vpop.f32.mrf.mxu0
        %v4058 = vadd.f32 %v4009, %v4057
        %v4059 = vpop.f32.mrf.mxu0
        %v4060 = vadd.f32 %v4011, %v4059
        %4061 = vmatmul.bf16.gmra.mxu0 %v3662
        %v4062 = vpop.f32.mrf.mxu0
        %v4063 = vadd.f32 %v4014, %v4062
        %v4064 = vpop.f32.mrf.mxu0
        %v4065 = vadd.f32 %v4016, %v4064
        %4066 = vmatmul.bf16.gmra.mxu0 %v3666
        %v4067 = vpop.f32.mrf.mxu0
        %v4068 = vadd.f32 %v4019, %v4067
        %v4069 = vpop.f32.mrf.mxu0
        %v4070 = vadd.f32 %v4021, %v4069
        %4071 = vmatmul.bf16.gmra.mxu0 %v3670
        %v4072 = vpop.f32.mrf.mxu0
        %v4073 = vadd.f32 %v4024, %v4072
        %v4074 = vpop.f32.mrf.mxu0
        %v4075 = vadd.f32 %v4026, %v4074
        %4076 = vmatmul.bf16.gmra.mxu0 %v3674
        %v4077 = vpop.f32.mrf.mxu0
        %v4078 = vadd.f32 %v4029, %v4077
        %v4079 = vpop.f32.mrf.mxu0
        %v4080 = vadd.f32 %v4031, %v4079
        %4081 = vmatmul.bf16.gmra.mxu0 %v3678
        %v4082 = vpop.f32.mrf.mxu0
        %v4083 = vadd.f32 %v4034, %v4082
        %v4084 = vpop.f32.mrf.mxu0
        %v4085 = vadd.f32 %v4036, %v4084
        %4086 = vdwg.mxu0
        %4087 = vmatpush.bf16.msra.mxu0 %v3907
        %4088 = vmatpush.bf16.msra.mxu0 %v3906
        %4089 = vmatpush.bf16.msra.mxu0 %v3905
        %4090 = vmatpush.bf16.msra.mxu0 %v3904
        %4091 = vmatpush.bf16.msra.mxu0 %v3903
        %4092 = vmatpush.bf16.msra.mxu0 %v3902
        %4093 = vmatpush.bf16.msra.mxu0 %v3901
        %4094 = vmatpush.bf16.msra.mxu0 %v3900
        %4095 = vmatmul.bf16.gmra.mxu0 %v3651
        %v4096 = vpop.f32.mrf.mxu0
        %v4097 = vadd.f32 %v4048, %v4096
        %v4098 = vpop.f32.mrf.mxu0
        %v4099 = vadd.f32 %v4050, %v4098
        %4100 = vmatmul.bf16.gmra.mxu0 %v3655
        %v4101 = vpop.f32.mrf.mxu0
        %v4102 = vadd.f32 %v4053, %v4101
        %v4103 = vpop.f32.mrf.mxu0
        %v4104 = vadd.f32 %v4055, %v4103
        %4105 = vmatmul.bf16.gmra.mxu0 %v3659
        %v4106 = vpop.f32.mrf.mxu0
        %v4107 = vadd.f32 %v4058, %v4106
        %v4108 = vpop.f32.mrf.mxu0
        %v4109 = vadd.f32 %v4060, %v4108
        %4110 = vmatmul.bf16.gmra.mxu0 %v3663
        %v4111 = vpop.f32.mrf.mxu0
        %v4112 = vadd.f32 %v4063, %v4111
        %v4113 = vpop.f32.mrf.mxu0
        %v4114 = vadd.f32 %v4065, %v4113
        %4115 = vmatmul.bf16.gmra.mxu0 %v3667
        %v4116 = vpop.f32.mrf.mxu0
        %v4117 = vadd.f32 %v4068, %v4116
        %v4118 = vpop.f32.mrf.mxu0
        %v4119 = vadd.f32 %v4070, %v4118
        %4120 = vmatmul.bf16.gmra.mxu0 %v3671
        %v4121 = vpop.f32.mrf.mxu0
        %v4122 = vadd.f32 %v4073, %v4121
        %v4123 = vpop.f32.mrf.mxu0
        %v4124 = vadd.f32 %v4075, %v4123
        %4125 = vmatmul.bf16.gmra.mxu0 %v3675
        %v4126 = vpop.f32.mrf.mxu0
        %v4127 = vadd.f32 %v4078, %v4126
        %v4128 = vpop.f32.mrf.mxu0
        %v4129 = vadd.f32 %v4080, %v4128
        %4130 = vmatmul.bf16.gmra.mxu0 %v3679
        %v4131 = vpop.f32.mrf.mxu0
        %v4132 = vadd.f32 %v4083, %v4131
        %v4133 = vpop.f32.mrf.mxu0
        %v4134 = vadd.f32 %v4085, %v4133
        %4135 = vdwg.mxu0
        %v4136 = vadd.f32 %v2650, %v4097
        %v4137 = vadd.f32 %v2651, %v4099
        %v4138 = vadd.f32 %v2652, %v4102
        %v4139 = vadd.f32 %v2653, %v4104
        %v4140 = vadd.f32 %v2654, %v4107
        %v4141 = vadd.f32 %v2655, %v4109
        %v4142 = vadd.f32 %v2656, %v4112
        %v4143 = vadd.f32 %v2657, %v4114
        %v4144 = vadd.f32 %v2658, %v4117
        %v4145 = vadd.f32 %v2659, %v4119
        %v4146 = vadd.f32 %v2660, %v4122
        %v4147 = vadd.f32 %v2661, %v4124
        %v4148 = vadd.f32 %v2662, %v4127
        %v4149 = vadd.f32 %v2663, %v4129
        %v4150 = vadd.f32 %v2664, %v4132
        %v4151 = vadd.f32 %v2665, %v4134
        %v4152 = vld [vmem:[%s14] sm:$0x1]
        %v4153 = vld [vmem:[%s15] sm:$0x1]
        %4154 = vadd.xlane.f32.xlu0 %v4136
        %v4155 = vpop.xlane.xlu0 %4154
        %4156 = vadd.xlane.f32.xlu0 %v4137
        %v4157 = vpop.xlane.xlu0 %4156
        %4158 = vadd.xlane.f32.xlu0 %v4138
        %v4159 = vpop.xlane.xlu0 %4158
        %4160 = vadd.xlane.f32.xlu0 %v4139
        %v4161 = vpop.xlane.xlu0 %4160
        %4162 = vadd.xlane.f32.xlu0 %v4140
        %v4163 = vpop.xlane.xlu0 %4162
        %4164 = vadd.xlane.f32.xlu0 %v4141
        %v4165 = vpop.xlane.xlu0 %4164
        %4166 = vadd.xlane.f32.xlu0 %v4142
        %v4167 = vpop.xlane.xlu0 %4166
        %4168 = vadd.xlane.f32.xlu0 %v4143
        %v4169 = vpop.xlane.xlu0 %4168
        %4170 = vadd.xlane.f32.xlu0 %v4144
        %v4171 = vpop.xlane.xlu0 %4170
        %4172 = vadd.xlane.f32.xlu0 %v4145
        %v4173 = vpop.xlane.xlu0 %4172
        %4174 = vadd.xlane.f32.xlu0 %v4146
        %v4175 = vpop.xlane.xlu0 %4174
        %4176 = vadd.xlane.f32.xlu0 %v4147
        %v4177 = vpop.xlane.xlu0 %4176
        %4178 = vadd.xlane.f32.xlu0 %v4148
        %v4179 = vpop.xlane.xlu0 %4178
        %4180 = vadd.xlane.f32.xlu0 %v4149
        %v4181 = vpop.xlane.xlu0 %4180
        %4182 = vadd.xlane.f32.xlu0 %v4150
        %v4183 = vpop.xlane.xlu0 %4182
        %4184 = vadd.xlane.f32.xlu0 %v4151
        %v4185 = vpop.xlane.xlu0 %4184
        %v4186 = vmul.f32 %v4155, %v698
        %v4187 = vmul.f32 %v4157, %v698
        %v4188 = vmul.f32 %v4159, %v698
        %v4189 = vmul.f32 %v4161, %v698
        %v4190 = vmul.f32 %v4163, %v698
        %v4191 = vmul.f32 %v4165, %v698
        %v4192 = vmul.f32 %v4167, %v698
        %v4193 = vmul.f32 %v4169, %v698
        %v4194 = vmul.f32 %v4171, %v698
        %v4195 = vmul.f32 %v4173, %v698
        %v4196 = vmul.f32 %v4175, %v698
        %v4197 = vmul.f32 %v4177, %v698
        %v4198 = vmul.f32 %v4179, %v698
        %v4199 = vmul.f32 %v4181, %v698
        %v4200 = vmul.f32 %v4183, %v698
        %v4201 = vmul.f32 %v4185, %v698
        %v4202 = vsub.f32 %v4136, %v4186
        %v4203 = vsub.f32 %v4137, %v4187
        %v4204 = vsub.f32 %v4138, %v4188
        %v4205 = vsub.f32 %v4139, %v4189
        %v4206 = vsub.f32 %v4140, %v4190
        %v4207 = vsub.f32 %v4141, %v4191
        %v4208 = vsub.f32 %v4142, %v4192
        %v4209 = vsub.f32 %v4143, %v4193
        %v4210 = vsub.f32 %v4144, %v4194
        %v4211 = vsub.f32 %v4145, %v4195
        %v4212 = vsub.f32 %v4146, %v4196
        %v4213 = vsub.f32 %v4147, %v4197
        %v4214 = vsub.f32 %v4148, %v4198
        %v4215 = vsub.f32 %v4149, %v4199
        %v4216 = vsub.f32 %v4150, %v4200
        %v4217 = vsub.f32 %v4151, %v4201
        %v4218 = vmul.f32 %v4202, %v4202
        %v4219 = vmul.f32 %v4203, %v4203
        %v4220 = vmul.f32 %v4204, %v4204
        %v4221 = vmul.f32 %v4205, %v4205
        %v4222 = vmul.f32 %v4206, %v4206
        %v4223 = vmul.f32 %v4207, %v4207
        %v4224 = vmul.f32 %v4208, %v4208
        %v4225 = vmul.f32 %v4209, %v4209
        %v4226 = vmul.f32 %v4210, %v4210
        %v4227 = vmul.f32 %v4211, %v4211
        %v4228 = vmul.f32 %v4212, %v4212
        %v4229 = vmul.f32 %v4213, %v4213
        %v4230 = vmul.f32 %v4214, %v4214
        %v4231 = vmul.f32 %v4215, %v4215
        %v4232 = vmul.f32 %v4216, %v4216
        %v4233 = vmul.f32 %v4217, %v4217
        %4234 = vadd.xlane.f32.xlu0 %v4218
        %v4235 = vpop.xlane.xlu0 %4234
        %4236 = vadd.xlane.f32.xlu0 %v4219
        %v4237 = vpop.xlane.xlu0 %4236
        %4238 = vadd.xlane.f32.xlu0 %v4220
        %v4239 = vpop.xlane.xlu0 %4238
        %4240 = vadd.xlane.f32.xlu0 %v4221
        %v4241 = vpop.xlane.xlu0 %4240
        %4242 = vadd.xlane.f32.xlu0 %v4222
        %v4243 = vpop.xlane.xlu0 %4242
        %4244 = vadd.xlane.f32.xlu0 %v4223
        %v4245 = vpop.xlane.xlu0 %4244
        %4246 = vadd.xlane.f32.xlu0 %v4224
        %v4247 = vpop.xlane.xlu0 %4246
        %4248 = vadd.xlane.f32.xlu0 %v4225
        %v4249 = vpop.xlane.xlu0 %4248
        %4250 = vadd.xlane.f32.xlu0 %v4226
        %v4251 = vpop.xlane.xlu0 %4250
        %4252 = vadd.xlane.f32.xlu0 %v4227
        %v4253 = vpop.xlane.xlu0 %4252
        %4254 = vadd.xlane.f32.xlu0 %v4228
        %v4255 = vpop.xlane.xlu0 %4254
        %4256 = vadd.xlane.f32.xlu0 %v4229
        %v4257 = vpop.xlane.xlu0 %4256
        %4258 = vadd.xlane.f32.xlu0 %v4230
        %v4259 = vpop.xlane.xlu0 %4258
        %4260 = vadd.xlane.f32.xlu0 %v4231
        %v4261 = vpop.xlane.xlu0 %4260
        %4262 = vadd.xlane.f32.xlu0 %v4232
        %v4263 = vpop.xlane.xlu0 %4262
        %4264 = vadd.xlane.f32.xlu0 %v4233
        %v4265 = vpop.xlane.xlu0 %4264
        %v4266 = vmul.f32 %v4235, %v698
        %v4267 = vmul.f32 %v4237, %v698
        %v4268 = vmul.f32 %v4239, %v698
        %v4269 = vmul.f32 %v4241, %v698
        %v4270 = vmul.f32 %v4243, %v698
        %v4271 = vmul.f32 %v4245, %v698
        %v4272 = vmul.f32 %v4247, %v698
        %v4273 = vmul.f32 %v4249, %v698
        %v4274 = vmul.f32 %v4251, %v698
        %v4275 = vmul.f32 %v4253, %v698
        %v4276 = vmul.f32 %v4255, %v698
        %v4277 = vmul.f32 %v4257, %v698
        %v4278 = vmul.f32 %v4259, %v698
        %v4279 = vmul.f32 %v4261, %v698
        %v4280 = vmul.f32 %v4263, %v698
        %v4281 = vmul.f32 %v4265, %v698
        %v4282 = vadd.f32 %v4266, 1e-05
        %v4283 = vadd.f32 %v4267, 1e-05
        %v4284 = vadd.f32 %v4268, 1e-05
        %v4285 = vadd.f32 %v4269, 1e-05
        %v4286 = vadd.f32 %v4270, 1e-05
        %v4287 = vadd.f32 %v4271, 1e-05
        %v4288 = vadd.f32 %v4272, 1e-05
        %v4289 = vadd.f32 %v4273, 1e-05
        %v4290 = vadd.f32 %v4274, 1e-05
        %v4291 = vadd.f32 %v4275, 1e-05
        %v4292 = vadd.f32 %v4276, 1e-05
        %v4293 = vadd.f32 %v4277, 1e-05
        %v4294 = vadd.f32 %v4278, 1e-05
        %v4295 = vadd.f32 %v4279, 1e-05
        %v4296 = vadd.f32 %v4280, 1e-05
        %v4297 = vadd.f32 %v4281, 1e-05
        %v4298 = vrsqrt.pop %v4282
        %v4299 = vmul.f32 %v4298, %v4282
        %v4300 = vmul.f32 %v4299, %v4298
        %v4301 = vmul.f32 0.5, %v4300
        %v4302 = vsub.f32 1.5, %v4301
        %v4303 = vmul.f32 %v4298, %v4302
        %vm4304 = vweird.f32 %v4282
        %vm4305 = vweird.f32 %v4298
        %vm4306 = vmor %vm4304, %vm4305
        %v4307 = vsel %vm4306, %v4298, %v4303
        %v4308 = vrsqrt.pop %v4283
        %v4309 = vmul.f32 %v4308, %v4283
        %v4310 = vmul.f32 %v4309, %v4308
        %v4311 = vmul.f32 0.5, %v4310
        %v4312 = vsub.f32 1.5, %v4311
        %v4313 = vmul.f32 %v4308, %v4312
        %vm4314 = vweird.f32 %v4283
        %vm4315 = vweird.f32 %v4308
        %vm4316 = vmor %vm4314, %vm4315
        %v4317 = vsel %vm4316, %v4308, %v4313
        %v4318 = vrsqrt.pop %v4284
        %v4319 = vmul.f32 %v4318, %v4284
        %v4320 = vmul.f32 %v4319, %v4318
        %v4321 = vmul.f32 0.5, %v4320
        %v4322 = vsub.f32 1.5, %v4321
        %v4323 = vmul.f32 %v4318, %v4322
        %vm4324 = vweird.f32 %v4284
        %vm4325 = vweird.f32 %v4318
        %vm4326 = vmor %vm4324, %vm4325
        %v4327 = vsel %vm4326, %v4318, %v4323
        %v4328 = vrsqrt.pop %v4285
        %v4329 = vmul.f32 %v4328, %v4285
        %v4330 = vmul.f32 %v4329, %v4328
        %v4331 = vmul.f32 0.5, %v4330
        %v4332 = vsub.f32 1.5, %v4331
        %v4333 = vmul.f32 %v4328, %v4332
        %vm4334 = vweird.f32 %v4285
        %vm4335 = vweird.f32 %v4328
        %vm4336 = vmor %vm4334, %vm4335
        %v4337 = vsel %vm4336, %v4328, %v4333
        %v4338 = vrsqrt.pop %v4286
        %v4339 = vmul.f32 %v4338, %v4286
        %v4340 = vmul.f32 %v4339, %v4338
        %v4341 = vmul.f32 0.5, %v4340
        %v4342 = vsub.f32 1.5, %v4341
        %v4343 = vmul.f32 %v4338, %v4342
        %vm4344 = vweird.f32 %v4286
        %vm4345 = vweird.f32 %v4338
        %vm4346 = vmor %vm4344, %vm4345
        %v4347 = vsel %vm4346, %v4338, %v4343
        %v4348 = vrsqrt.pop %v4287
        %v4349 = vmul.f32 %v4348, %v4287
        %v4350 = vmul.f32 %v4349, %v4348
        %v4351 = vmul.f32 0.5, %v4350
        %v4352 = vsub.f32 1.5, %v4351
        %v4353 = vmul.f32 %v4348, %v4352
        %vm4354 = vweird.f32 %v4287
        %vm4355 = vweird.f32 %v4348
        %vm4356 = vmor %vm4354, %vm4355
        %v4357 = vsel %vm4356, %v4348, %v4353
        %v4358 = vrsqrt.pop %v4288
        %v4359 = vmul.f32 %v4358, %v4288
        %v4360 = vmul.f32 %v4359, %v4358
        %v4361 = vmul.f32 0.5, %v4360
        %v4362 = vsub.f32 1.5, %v4361
        %v4363 = vmul.f32 %v4358, %v4362
        %vm4364 = vweird.f32 %v4288
        %vm4365 = vweird.f32 %v4358
        %vm4366 = vmor %vm4364, %vm4365
        %v4367 = vsel %vm4366, %v4358, %v4363
        %v4368 = vrsqrt.pop %v4289
        %v4369 = vmul.f32 %v4368, %v4289
        %v4370 = vmul.f32 %v4369, %v4368
        %v4371 = vmul.f32 0.5, %v4370
        %v4372 = vsub.f32 1.5, %v4371
        %v4373 = vmul.f32 %v4368, %v4372
        %vm4374 = vweird.f32 %v4289
        %vm4375 = vweird.f32 %v4368
        %vm4376 = vmor %vm4374, %vm4375
        %v4377 = vsel %vm4376, %v4368, %v4373
        %v4378 = vrsqrt.pop %v4290
        %v4379 = vmul.f32 %v4378, %v4290
        %v4380 = vmul.f32 %v4379, %v4378
        %v4381 = vmul.f32 0.5, %v4380
        %v4382 = vsub.f32 1.5, %v4381
        %v4383 = vmul.f32 %v4378, %v4382
        %vm4384 = vweird.f32 %v4290
        %vm4385 = vweird.f32 %v4378
        %vm4386 = vmor %vm4384, %vm4385
        %v4387 = vsel %vm4386, %v4378, %v4383
        %v4388 = vrsqrt.pop %v4291
        %v4389 = vmul.f32 %v4388, %v4291
        %v4390 = vmul.f32 %v4389, %v4388
        %v4391 = vmul.f32 0.5, %v4390
        %v4392 = vsub.f32 1.5, %v4391
        %v4393 = vmul.f32 %v4388, %v4392
        %vm4394 = vweird.f32 %v4291
        %vm4395 = vweird.f32 %v4388
        %vm4396 = vmor %vm4394, %vm4395
        %v4397 = vsel %vm4396, %v4388, %v4393
        %v4398 = vrsqrt.pop %v4292
        %v4399 = vmul.f32 %v4398, %v4292
        %v4400 = vmul.f32 %v4399, %v4398
        %v4401 = vmul.f32 0.5, %v4400
        %v4402 = vsub.f32 1.5, %v4401
        %v4403 = vmul.f32 %v4398, %v4402
        %vm4404 = vweird.f32 %v4292
        %vm4405 = vweird.f32 %v4398
        %vm4406 = vmor %vm4404, %vm4405
        %v4407 = vsel %vm4406, %v4398, %v4403
        %v4408 = vrsqrt.pop %v4293
        %v4409 = vmul.f32 %v4408, %v4293
        %v4410 = vmul.f32 %v4409, %v4408
        %v4411 = vmul.f32 0.5, %v4410
        %v4412 = vsub.f32 1.5, %v4411
        %v4413 = vmul.f32 %v4408, %v4412
        %vm4414 = vweird.f32 %v4293
        %vm4415 = vweird.f32 %v4408
        %vm4416 = vmor %vm4414, %vm4415
        %v4417 = vsel %vm4416, %v4408, %v4413
        %v4418 = vrsqrt.pop %v4294
        %v4419 = vmul.f32 %v4418, %v4294
        %v4420 = vmul.f32 %v4419, %v4418
        %v4421 = vmul.f32 0.5, %v4420
        %v4422 = vsub.f32 1.5, %v4421
        %v4423 = vmul.f32 %v4418, %v4422
        %vm4424 = vweird.f32 %v4294
        %vm4425 = vweird.f32 %v4418
        %vm4426 = vmor %vm4424, %vm4425
        %v4427 = vsel %vm4426, %v4418, %v4423
        %v4428 = vrsqrt.pop %v4295
        %v4429 = vmul.f32 %v4428, %v4295
        %v4430 = vmul.f32 %v4429, %v4428
        %v4431 = vmul.f32 0.5, %v4430
        %v4432 = vsub.f32 1.5, %v4431
        %v4433 = vmul.f32 %v4428, %v4432
        %vm4434 = vweird.f32 %v4295
        %vm4435 = vweird.f32 %v4428
        %vm4436 = vmor %vm4434, %vm4435
        %v4437 = vsel %vm4436, %v4428, %v4433
        %v4438 = vrsqrt.pop %v4296
        %v4439 = vmul.f32 %v4438, %v4296
        %v4440 = vmul.f32 %v4439, %v4438
        %v4441 = vmul.f32 0.5, %v4440
        %v4442 = vsub.f32 1.5, %v4441
        %v4443 = vmul.f32 %v4438, %v4442
        %vm4444 = vweird.f32 %v4296
        %vm4445 = vweird.f32 %v4438
        %vm4446 = vmor %vm4444, %vm4445
        %v4447 = vsel %vm4446, %v4438, %v4443
        %v4448 = vrsqrt.pop %v4297
        %v4449 = vmul.f32 %v4448, %v4297
        %v4450 = vmul.f32 %v4449, %v4448
        %v4451 = vmul.f32 0.5, %v4450
        %v4452 = vsub.f32 1.5, %v4451
        %v4453 = vmul.f32 %v4448, %v4452
        %vm4454 = vweird.f32 %v4297
        %vm4455 = vweird.f32 %v4448
        %vm4456 = vmor %vm4454, %vm4455
        %v4457 = vsel %vm4456, %v4448, %v4453
        %v4458 = vmul.f32 %v4202, %v4307
        %v4459 = vmul.f32 %v4203, %v4317
        %v4460 = vmul.f32 %v4204, %v4327
        %v4461 = vmul.f32 %v4205, %v4337
        %v4462 = vmul.f32 %v4206, %v4347
        %v4463 = vmul.f32 %v4207, %v4357
        %v4464 = vmul.f32 %v4208, %v4367
        %v4465 = vmul.f32 %v4209, %v4377
        %v4466 = vmul.f32 %v4210, %v4387
        %v4467 = vmul.f32 %v4211, %v4397
        %v4468 = vmul.f32 %v4212, %v4407
        %v4469 = vmul.f32 %v4213, %v4417
        %v4470 = vmul.f32 %v4214, %v4427
        %v4471 = vmul.f32 %v4215, %v4437
        %v4472 = vmul.f32 %v4216, %v4447
        %v4473 = vmul.f32 %v4217, %v4457
        %v4475 = vperm.slane %v4152, 0
        %v4477 = vmul.f32 %v4458, %v4475
        %v4478 = vmul.f32 %v4459, %v4475
        %v4479 = vmul.f32 %v4460, %v4475
        %v4480 = vmul.f32 %v4461, %v4475
        %v4481 = vmul.f32 %v4462, %v4475
        %v4482 = vmul.f32 %v4463, %v4475
        %v4483 = vmul.f32 %v4464, %v4475
        %v4484 = vmul.f32 %v4465, %v4475
        %v4485 = vmul.f32 %v4466, %v4475
        %v4486 = vmul.f32 %v4467, %v4475
        %v4487 = vmul.f32 %v4468, %v4475
        %v4488 = vmul.f32 %v4469, %v4475
        %v4489 = vmul.f32 %v4470, %v4475
        %v4490 = vmul.f32 %v4471, %v4475
        %v4491 = vmul.f32 %v4472, %v4475
        %v4492 = vmul.f32 %v4473, %v4475
        %v4494 = vperm.slane %v4153, 0
        %v4496 = vadd.f32 %v4477, %v4494
        %v4497 = vadd.f32 %v4478, %v4494
        %v4498 = vadd.f32 %v4479, %v4494
        %v4499 = vadd.f32 %v4480, %v4494
        %v4500 = vadd.f32 %v4481, %v4494
        %v4501 = vadd.f32 %v4482, %v4494
        %v4502 = vadd.f32 %v4483, %v4494
        %v4503 = vadd.f32 %v4484, %v4494
        %v4504 = vadd.f32 %v4485, %v4494
        %v4505 = vadd.f32 %v4486, %v4494
        %v4506 = vadd.f32 %v4487, %v4494
        %v4507 = vadd.f32 %v4488, %v4494
        %v4508 = vadd.f32 %v4489, %v4494
        %v4509 = vadd.f32 %v4490, %v4494
        %v4510 = vadd.f32 %v4491, %v4494
        %v4511 = vadd.f32 %v4492, %v4494
        %v4512 = vpack.c.bf16 %v4497, %v4496
        %v4513 = vpack.c.bf16 %v4499, %v4498
        %v4514 = vpack.c.bf16 %v4501, %v4500
        %v4515 = vpack.c.bf16 %v4503, %v4502
        %v4516 = vpack.c.bf16 %v4505, %v4504
        %v4517 = vpack.c.bf16 %v4507, %v4506
        %v4518 = vpack.c.bf16 %v4509, %v4508
        %v4519 = vpack.c.bf16 %v4511, %v4510
        %s4520 = scalar_lea.vmem %s4, 192
        %v4521 = vld [vmem:[%s4520] sm:$0xff]
        %v4522 = vld [vmem:[%s4520 + $0x8] sm:$0xf]
        %v4523 = vld [vmem:[%s4520 + $0xc] sm:$0xff]
        %v4524 = vld [vmem:[%s4520 + $0x14] sm:$0xf]
        %v4525 = vld [vmem:[%s4520 + $0x18] sm:$0xff]
        %v4526 = vld [vmem:[%s4520 + $0x20] sm:$0xf]
        %v4527 = vld [vmem:[%s4520 + $0x24] sm:$0xff]
        %v4528 = vld [vmem:[%s4520 + $0x2c] sm:$0xf]
        %v4529 = vld [vmem:[%s4520 + $0x30] sm:$0xff]
        %v4530 = vld [vmem:[%s4520 + $0x38] sm:$0xf]
        %v4531 = vld [vmem:[%s4520 + $0x3c] sm:$0xff]
        %v4532 = vld [vmem:[%s4520 + $0x44] sm:$0xf]
        %v4533 = vld [vmem:[%s4520 + $0x48] sm:$0xff]
        %v4534 = vld [vmem:[%s4520 + $0x50] sm:$0xf]
        %v4535 = vld [vmem:[%s4520 + $0x54] sm:$0xff]
        %v4536 = vld [vmem:[%s4520 + $0x5c] sm:$0xf]
        %v4537 = vld [vmem:[%s4520 + $0x60] sm:$0xff]
        %v4538 = vld [vmem:[%s4520 + $0x68] sm:$0xf]
        %v4539 = vld [vmem:[%s4520 + $0x6c] sm:$0xff]
        %v4540 = vld [vmem:[%s4520 + $0x74] sm:$0xf]
        %v4541 = vld [vmem:[%s4520 + $0x78] sm:$0xff]
        %v4542 = vld [vmem:[%s4520 + $0x80] sm:$0xf]
        %v4543 = vld [vmem:[%s4520 + $0x84] sm:$0xff]
        %v4544 = vld [vmem:[%s4520 + $0x8c] sm:$0xf]
        %v4545 = vld [vmem:[%s4520 + $0x90] sm:$0xff]
        %v4546 = vld [vmem:[%s4520 + $0x98] sm:$0xf]
        %v4547 = vld [vmem:[%s4520 + $0x9c] sm:$0xff]
        %v4548 = vld [vmem:[%s4520 + $0xa4] sm:$0xf]
        %v4549 = vld [vmem:[%s4520 + $0xa8] sm:$0xff]
        %v4550 = vld [vmem:[%s4520 + $0xb0] sm:$0xf]
        %v4551 = vld [vmem:[%s4520 + $0xb4] sm:$0xff]
        %v4552 = vld [vmem:[%s4520 + $0xbc] sm:$0xf]
        %s4553 = scalar_lea.vmem %s5, 3
        %v4554 = vld [vmem:[%s4553] sm:$0x7]
        %v4556 = vperm.slane %v4554, 0
        %v4557 = vperm.slane %v4554, 1
        %v4558 = vperm.slane %v4554, 2
        %v4594 = vunpack.c.l.b16 %v4521
        %v4595 = vunpack.c.h.b16 %v4521
        %v4596 = vunpack.c.l.b16 %v4522
        %v4597 = vunpack.c.l.b16 %v4523
        %v4598 = vunpack.c.h.b16 %v4523
        %v4599 = vunpack.c.l.b16 %v4524
        %v4600 = vunpack.c.l.b16 %v4525
        %v4601 = vunpack.c.h.b16 %v4525
        %v4602 = vunpack.c.l.b16 %v4526
        %v4603 = vunpack.c.l.b16 %v4527
        %v4604 = vunpack.c.h.b16 %v4527
        %v4605 = vunpack.c.l.b16 %v4528
        %v4606 = vunpack.c.l.b16 %v4529
        %v4607 = vunpack.c.h.b16 %v4529
        %v4608 = vunpack.c.l.b16 %v4530
        %v4609 = vunpack.c.l.b16 %v4531
        %v4610 = vunpack.c.h.b16 %v4531
        %v4611 = vunpack.c.l.b16 %v4532
        %v4612 = vunpack.c.l.b16 %v4533
        %v4613 = vunpack.c.h.b16 %v4533
        %v4614 = vunpack.c.l.b16 %v4534
        %v4615 = vunpack.c.l.b16 %v4535
        %v4616 = vunpack.c.h.b16 %v4535
        %v4617 = vunpack.c.l.b16 %v4536
        %v4618 = vunpack.c.l.b16 %v4537
        %v4619 = vunpack.c.h.b16 %v4537
        %v4620 = vunpack.c.l.b16 %v4538
        %v4621 = vunpack.c.l.b16 %v4539
        %v4622 = vunpack.c.h.b16 %v4539
        %v4623 = vunpack.c.l.b16 %v4540
        %v4624 = vunpack.c.l.b16 %v4541
        %v4625 = vunpack.c.h.b16 %v4541
        %v4626 = vunpack.c.l.b16 %v4542
        %v4627 = vunpack.c.l.b16 %v4543
        %v4628 = vunpack.c.h.b16 %v4543
        %v4629 = vunpack.c.l.b16 %v4544
        %v4630 = vunpack.c.l.b16 %v4545
        %v4631 = vunpack.c.h.b16 %v4545
        %v4632 = vunpack.c.l.b16 %v4546
        %v4633 = vunpack.c.l.b16 %v4547
        %v4634 = vunpack.c.h.b16 %v4547
        %v4635 = vunpack.c.l.b16 %v4548
        %v4636 = vunpack.c.l.b16 %v4549
        %v4637 = vunpack.c.h.b16 %v4549
        %v4638 = vunpack.c.l.b16 %v4550
        %v4639 = vunpack.c.l.b16 %v4551
        %v4640 = vunpack.c.h.b16 %v4551
        %v4641 = vunpack.c.l.b16 %v4552
        %v4642 = vpack.c.b16 %v4597, %v4594
        %v4643 = vpack.c.b16 %v4598, %v4595
        %v4644 = vpack.c.b16 %v4599, %v4596
        %v4645 = vpack.c.b16 %v4603, %v4600
        %v4646 = vpack.c.b16 %v4604, %v4601
        %v4647 = vpack.c.b16 %v4605, %v4602
        %v4648 = vpack.c.b16 %v4609, %v4606
        %v4649 = vpack.c.b16 %v4610, %v4607
        %v4650 = vpack.c.b16 %v4611, %v4608
        %v4651 = vpack.c.b16 %v4615, %v4612
        %v4652 = vpack.c.b16 %v4616, %v4613
        %v4653 = vpack.c.b16 %v4617, %v4614
        %v4654 = vpack.c.b16 %v4621, %v4618
        %v4655 = vpack.c.b16 %v4622, %v4619
        %v4656 = vpack.c.b16 %v4623, %v4620
        %v4657 = vpack.c.b16 %v4627, %v4624
        %v4658 = vpack.c.b16 %v4628, %v4625
        %v4659 = vpack.c.b16 %v4629, %v4626
        %v4660 = vpack.c.b16 %v4633, %v4630
        %v4661 = vpack.c.b16 %v4634, %v4631
        %v4662 = vpack.c.b16 %v4635, %v4632
        %v4663 = vpack.c.b16 %v4639, %v4636
        %v4664 = vpack.c.b16 %v4640, %v4637
        %v4665 = vpack.c.b16 %v4641, %v4638
        %4690 = vmatpush.bf16.msra.mxu0 %v4663
        %4691 = vmatpush.bf16.msra.mxu0 %v4660
        %4692 = vmatpush.bf16.msra.mxu0 %v4657
        %4693 = vmatpush.bf16.msra.mxu0 %v4654
        %4694 = vmatpush.bf16.msra.mxu0 %v4651
        %4695 = vmatpush.bf16.msra.mxu0 %v4648
        %4696 = vmatpush.bf16.msra.mxu0 %v4645
        %4697 = vmatpush.bf16.msra.mxu0 %v4642
        %4698 = vmatmul.bf16.gmra.mxu0 %v4512
        %v4699 = vpop.f32.mrf.mxu0
        %v4700 = vadd.f32 %v4556, %v4699
        %v4701 = vpop.f32.mrf.mxu0
        %v4702 = vadd.f32 %v4556, %v4701
        %4703 = vmatmul.bf16.gmra.mxu0 %v4513
        %v4704 = vpop.f32.mrf.mxu0
        %v4705 = vadd.f32 %v4556, %v4704
        %v4706 = vpop.f32.mrf.mxu0
        %v4707 = vadd.f32 %v4556, %v4706
        %4708 = vmatmul.bf16.gmra.mxu0 %v4514
        %v4709 = vpop.f32.mrf.mxu0
        %v4710 = vadd.f32 %v4556, %v4709
        %v4711 = vpop.f32.mrf.mxu0
        %v4712 = vadd.f32 %v4556, %v4711
        %4713 = vmatmul.bf16.gmra.mxu0 %v4515
        %v4714 = vpop.f32.mrf.mxu0
        %v4715 = vadd.f32 %v4556, %v4714
        %v4716 = vpop.f32.mrf.mxu0
        %v4717 = vadd.f32 %v4556, %v4716
        %4718 = vmatmul.bf16.gmra.mxu0 %v4516
        %v4719 = vpop.f32.mrf.mxu0
        %v4720 = vadd.f32 %v4556, %v4719
        %v4721 = vpop.f32.mrf.mxu0
        %v4722 = vadd.f32 %v4556, %v4721
        %4723 = vmatmul.bf16.gmra.mxu0 %v4517
        %v4724 = vpop.f32.mrf.mxu0
        %v4725 = vadd.f32 %v4556, %v4724
        %v4726 = vpop.f32.mrf.mxu0
        %v4727 = vadd.f32 %v4556, %v4726
        %4728 = vmatmul.bf16.gmra.mxu0 %v4518
        %v4729 = vpop.f32.mrf.mxu0
        %v4730 = vadd.f32 %v4556, %v4729
        %v4731 = vpop.f32.mrf.mxu0
        %v4732 = vadd.f32 %v4556, %v4731
        %4733 = vmatmul.bf16.gmra.mxu0 %v4519
        %v4734 = vpop.f32.mrf.mxu0
        %v4735 = vadd.f32 %v4556, %v4734
        %v4736 = vpop.f32.mrf.mxu0
        %v4737 = vadd.f32 %v4556, %v4736
        %4738 = vdwg.mxu0
        %4739 = vmatpush.bf16.msra.mxu0 %v4664
        %4740 = vmatpush.bf16.msra.mxu0 %v4661
        %4741 = vmatpush.bf16.msra.mxu0 %v4658
        %4742 = vmatpush.bf16.msra.mxu0 %v4655
        %4743 = vmatpush.bf16.msra.mxu0 %v4652
        %4744 = vmatpush.bf16.msra.mxu0 %v4649
        %4745 = vmatpush.bf16.msra.mxu0 %v4646
        %4746 = vmatpush.bf16.msra.mxu0 %v4643
        %4747 = vmatmul.bf16.gmra.mxu0 %v4512
        %v4748 = vpop.f32.mrf.mxu0
        %v4749 = vadd.f32 %v4557, %v4748
        %v4750 = vpop.f32.mrf.mxu0
        %v4751 = vadd.f32 %v4557, %v4750
        %4752 = vmatmul.bf16.gmra.mxu0 %v4513
        %v4753 = vpop.f32.mrf.mxu0
        %v4754 = vadd.f32 %v4557, %v4753
        %v4755 = vpop.f32.mrf.mxu0
        %v4756 = vadd.f32 %v4557, %v4755
        %4757 = vmatmul.bf16.gmra.mxu0 %v4514
        %v4758 = vpop.f32.mrf.mxu0
        %v4759 = vadd.f32 %v4557, %v4758
        %v4760 = vpop.f32.mrf.mxu0
        %v4761 = vadd.f32 %v4557, %v4760
        %4762 = vmatmul.bf16.gmra.mxu0 %v4515
        %v4763 = vpop.f32.mrf.mxu0
        %v4764 = vadd.f32 %v4557, %v4763
        %v4765 = vpop.f32.mrf.mxu0
        %v4766 = vadd.f32 %v4557, %v4765
        %4767 = vmatmul.bf16.gmra.mxu0 %v4516
        %v4768 = vpop.f32.mrf.mxu0
        %v4769 = vadd.f32 %v4557, %v4768
        %v4770 = vpop.f32.mrf.mxu0
        %v4771 = vadd.f32 %v4557, %v4770
        %4772 = vmatmul.bf16.gmra.mxu0 %v4517
        %v4773 = vpop.f32.mrf.mxu0
        %v4774 = vadd.f32 %v4557, %v4773
        %v4775 = vpop.f32.mrf.mxu0
        %v4776 = vadd.f32 %v4557, %v4775
        %4777 = vmatmul.bf16.gmra.mxu0 %v4518
        %v4778 = vpop.f32.mrf.mxu0
        %v4779 = vadd.f32 %v4557, %v4778
        %v4780 = vpop.f32.mrf.mxu0
        %v4781 = vadd.f32 %v4557, %v4780
        %4782 = vmatmul.bf16.gmra.mxu0 %v4519
        %v4783 = vpop.f32.mrf.mxu0
        %v4784 = vadd.f32 %v4557, %v4783
        %v4785 = vpop.f32.mrf.mxu0
        %v4786 = vadd.f32 %v4557, %v4785
        %4787 = vdwg.mxu0
        %4788 = vmatpush.bf16.msra.mxu0 %v4665
        %4789 = vmatpush.bf16.msra.mxu0 %v4662
        %4790 = vmatpush.bf16.msra.mxu0 %v4659
        %4791 = vmatpush.bf16.msra.mxu0 %v4656
        %4792 = vmatpush.bf16.msra.mxu0 %v4653
        %4793 = vmatpush.bf16.msra.mxu0 %v4650
        %4794 = vmatpush.bf16.msra.mxu0 %v4647
        %4795 = vmatpush.bf16.msra.mxu0 %v4644
        %4796 = vmatmul.bf16.gmra.mxu0 %v4512
        %v4797 = vpop.f32.mrf.mxu0
        %v4798 = vadd.f32 %v4558, %v4797
        %v4799 = vpop.f32.mrf.mxu0
        %v4800 = vadd.f32 %v4558, %v4799
        %4801 = vmatmul.bf16.gmra.mxu0 %v4513
        %v4802 = vpop.f32.mrf.mxu0
        %v4803 = vadd.f32 %v4558, %v4802
        %v4804 = vpop.f32.mrf.mxu0
        %v4805 = vadd.f32 %v4558, %v4804
        %4806 = vmatmul.bf16.gmra.mxu0 %v4514
        %v4807 = vpop.f32.mrf.mxu0
        %v4808 = vadd.f32 %v4558, %v4807
        %v4809 = vpop.f32.mrf.mxu0
        %v4810 = vadd.f32 %v4558, %v4809
        %4811 = vmatmul.bf16.gmra.mxu0 %v4515
        %v4812 = vpop.f32.mrf.mxu0
        %v4813 = vadd.f32 %v4558, %v4812
        %v4814 = vpop.f32.mrf.mxu0
        %v4815 = vadd.f32 %v4558, %v4814
        %4816 = vmatmul.bf16.gmra.mxu0 %v4516
        %v4817 = vpop.f32.mrf.mxu0
        %v4818 = vadd.f32 %v4558, %v4817
        %v4819 = vpop.f32.mrf.mxu0
        %v4820 = vadd.f32 %v4558, %v4819
        %4821 = vmatmul.bf16.gmra.mxu0 %v4517
        %v4822 = vpop.f32.mrf.mxu0
        %v4823 = vadd.f32 %v4558, %v4822
        %v4824 = vpop.f32.mrf.mxu0
        %v4825 = vadd.f32 %v4558, %v4824
        %4826 = vmatmul.bf16.gmra.mxu0 %v4518
        %v4827 = vpop.f32.mrf.mxu0
        %v4828 = vadd.f32 %v4558, %v4827
        %v4829 = vpop.f32.mrf.mxu0
        %v4830 = vadd.f32 %v4558, %v4829
        %4831 = vmatmul.bf16.gmra.mxu0 %v4519
        %v4832 = vpop.f32.mrf.mxu0
        %v4833 = vadd.f32 %v4558, %v4832
        %v4834 = vpop.f32.mrf.mxu0
        %v4835 = vadd.f32 %v4558, %v4834
        %4836 = vdwg.mxu0
        %v4837 = vpack.c.bf16 %v4702, %v4700
        %v4838 = vpack.c.bf16 %v4707, %v4705
        %v4839 = vpack.c.bf16 %v4712, %v4710
        %v4840 = vpack.c.bf16 %v4717, %v4715
        %v4841 = vpack.c.bf16 %v4722, %v4720
        %v4842 = vpack.c.bf16 %v4727, %v4725
        %v4843 = vpack.c.bf16 %v4732, %v4730
        %v4844 = vpack.c.bf16 %v4737, %v4735
        %v4845 = vpack.c.bf16 %v4751, %v4749
        %v4846 = vpack.c.bf16 %v4756, %v4754
        %v4847 = vpack.c.bf16 %v4761, %v4759
        %v4848 = vpack.c.bf16 %v4766, %v4764
        %v4849 = vpack.c.bf16 %v4771, %v4769
        %v4850 = vpack.c.bf16 %v4776, %v4774
        %v4851 = vpack.c.bf16 %v4781, %v4779
        %v4852 = vpack.c.bf16 %v4786, %v4784
        %v4853 = vpack.c.bf16 %v4800, %v4798
        %v4854 = vpack.c.bf16 %v4805, %v4803
        %v4855 = vpack.c.bf16 %v4810, %v4808
        %v4856 = vpack.c.bf16 %v4815, %v4813
        %v4857 = vpack.c.bf16 %v4820, %v4818
        %v4858 = vpack.c.bf16 %v4825, %v4823
        %v4859 = vpack.c.bf16 %v4830, %v4828
        %v4860 = vpack.c.bf16 %v4835, %v4833
        %v4862 = vsel %vm1375, %v4837, 0
        %v4865 = vsel %vm1375, %v4838, 0
        %v4868 = vsel %vm1375, %v4839, 0
        %v4871 = vsel %vm1375, %v4840, 0
        %v4874 = vsel %vm1375, %v4841, 0
        %v4877 = vsel %vm1375, %v4842, 0
        %v4880 = vsel %vm1375, %v4843, 0
        %v4883 = vsel %vm1375, %v4844, 0
        %v4886 = vsel %vm1375, %v4845, 0
        %v4889 = vsel %vm1375, %v4846, 0
        %v4892 = vsel %vm1375, %v4847, 0
        %v4895 = vsel %vm1375, %v4848, 0
        %v4898 = vsel %vm1375, %v4849, 0
        %v4901 = vsel %vm1375, %v4850, 0
        %v4904 = vsel %vm1375, %v4851, 0
        %v4907 = vsel %vm1375, %v4852, 0
        %4909 = vmatpush.bf16.xpose.msra.mxu0 %v4907
        %4910 = vmatpush.bf16.xpose.msra.mxu0 %v4904
        %4911 = vmatpush.bf16.xpose.msra.mxu0 %v4901
        %4912 = vmatpush.bf16.xpose.msra.mxu0 %v4898
        %4913 = vmatpush.bf16.xpose.msra.mxu0 %v4895
        %4914 = vmatpush.bf16.xpose.msra.mxu0 %v4892
        %4915 = vmatpush.bf16.xpose.msra.mxu0 %v4889
        %4916 = vmatpush.bf16.xpose.msra.mxu0 %v4886
        %4917 = vmatmul.bf16.gmra.mxu0 %v4862
        %v4918 = vpop.f32.mrf.mxu0
        %v4919 = vadd.f32 %v1373, %v4918
        %v4920 = vpop.f32.mrf.mxu0
        %v4921 = vadd.f32 %v1373, %v4920
        %4922 = vmatmul.bf16.gmra.mxu0 %v4865
        %v4923 = vpop.f32.mrf.mxu0
        %v4924 = vadd.f32 %v1373, %v4923
        %v4925 = vpop.f32.mrf.mxu0
        %v4926 = vadd.f32 %v1373, %v4925
        %4927 = vmatmul.bf16.gmra.mxu0 %v4868
        %v4928 = vpop.f32.mrf.mxu0
        %v4929 = vadd.f32 %v1373, %v4928
        %v4930 = vpop.f32.mrf.mxu0
        %v4931 = vadd.f32 %v1373, %v4930
        %4932 = vmatmul.bf16.gmra.mxu0 %v4871
        %v4933 = vpop.f32.mrf.mxu0
        %v4934 = vadd.f32 %v1373, %v4933
        %v4935 = vpop.f32.mrf.mxu0
        %v4936 = vadd.f32 %v1373, %v4935
        %4937 = vmatmul.bf16.gmra.mxu0 %v4874
        %v4938 = vpop.f32.mrf.mxu0
        %v4939 = vadd.f32 %v1373, %v4938
        %v4940 = vpop.f32.mrf.mxu0
        %v4941 = vadd.f32 %v1373, %v4940
        %4942 = vmatmul.bf16.gmra.mxu0 %v4877
        %v4943 = vpop.f32.mrf.mxu0
        %v4944 = vadd.f32 %v1373, %v4943
        %v4945 = vpop.f32.mrf.mxu0
        %v4946 = vadd.f32 %v1373, %v4945
        %4947 = vmatmul.bf16.gmra.mxu0 %v4880
        %v4948 = vpop.f32.mrf.mxu0
        %v4949 = vadd.f32 %v1373, %v4948
        %v4950 = vpop.f32.mrf.mxu0
        %v4951 = vadd.f32 %v1373, %v4950
        %4952 = vmatmul.bf16.gmra.mxu0 %v4883
        %v4953 = vpop.f32.mrf.mxu0
        %v4954 = vadd.f32 %v1373, %v4953
        %v4955 = vpop.f32.mrf.mxu0
        %v4956 = vadd.f32 %v1373, %v4955
        %4957 = vdwg.mxu0
        %4958 = vmax.xlane.f32.xlu0 %v4919
        %v4959 = vpop.xlane.xlu0 %4958
        %4960 = vmax.xlane.f32.xlu0 %v4921
        %v4961 = vpop.xlane.xlu0 %4960
        %4962 = vmax.xlane.f32.xlu0 %v4924
        %v4963 = vpop.xlane.xlu0 %4962
        %4964 = vmax.xlane.f32.xlu0 %v4926
        %v4965 = vpop.xlane.xlu0 %4964
        %4966 = vmax.xlane.f32.xlu0 %v4929
        %v4967 = vpop.xlane.xlu0 %4966
        %4968 = vmax.xlane.f32.xlu0 %v4931
        %v4969 = vpop.xlane.xlu0 %4968
        %4970 = vmax.xlane.f32.xlu0 %v4934
        %v4971 = vpop.xlane.xlu0 %4970
        %4972 = vmax.xlane.f32.xlu0 %v4936
        %v4973 = vpop.xlane.xlu0 %4972
        %4974 = vmax.xlane.f32.xlu0 %v4939
        %v4975 = vpop.xlane.xlu0 %4974
        %4976 = vmax.xlane.f32.xlu0 %v4941
        %v4977 = vpop.xlane.xlu0 %4976
        %4978 = vmax.xlane.f32.xlu0 %v4944
        %v4979 = vpop.xlane.xlu0 %4978
        %4980 = vmax.xlane.f32.xlu0 %v4946
        %v4981 = vpop.xlane.xlu0 %4980
        %4982 = vmax.xlane.f32.xlu0 %v4949
        %v4983 = vpop.xlane.xlu0 %4982
        %4984 = vmax.xlane.f32.xlu0 %v4951
        %v4985 = vpop.xlane.xlu0 %4984
        %4986 = vmax.xlane.f32.xlu0 %v4954
        %v4987 = vpop.xlane.xlu0 %4986
        %4988 = vmax.xlane.f32.xlu0 %v4956
        %v4989 = vpop.xlane.xlu0 %4988
        %v4990 = vsub.f32 %v4919, %v4959
        %v4991 = vsub.f32 %v4921, %v4961
        %v4992 = vsub.f32 %v4924, %v4963
        %v4993 = vsub.f32 %v4926, %v4965
        %v4994 = vsub.f32 %v4929, %v4967
        %v4995 = vsub.f32 %v4931, %v4969
        %v4996 = vsub.f32 %v4934, %v4971
        %v4997 = vsub.f32 %v4936, %v4973
        %v4998 = vsub.f32 %v4939, %v4975
        %v4999 = vsub.f32 %v4941, %v4977
        %v5000 = vsub.f32 %v4944, %v4979
        %v5001 = vsub.f32 %v4946, %v4981
        %v5002 = vsub.f32 %v4949, %v4983
        %v5003 = vsub.f32 %v4951, %v4985
        %v5004 = vsub.f32 %v4954, %v4987
        %v5005 = vsub.f32 %v4956, %v4989
        %v5006 = vmul.f32 %v4990, 1.442695
        %v5007 = vpow.pop %v5006
        %v5008 = vmul.f32 %v4991, 1.442695
        %v5009 = vpow.pop %v5008
        %v5010 = vmul.f32 %v4992, 1.442695
        %v5011 = vpow.pop %v5010
        %v5012 = vmul.f32 %v4993, 1.442695
        %v5013 = vpow.pop %v5012
        %v5014 = vmul.f32 %v4994, 1.442695
        %v5015 = vpow.pop %v5014
        %v5016 = vmul.f32 %v4995, 1.442695
        %v5017 = vpow.pop %v5016
        %v5018 = vmul.f32 %v4996, 1.442695
        %v5019 = vpow.pop %v5018
        %v5020 = vmul.f32 %v4997, 1.442695
        %v5021 = vpow.pop %v5020
        %v5022 = vmul.f32 %v4998, 1.442695
        %v5023 = vpow.pop %v5022
        %v5024 = vmul.f32 %v4999, 1.442695
        %v5025 = vpow.pop %v5024
        %v5026 = vmul.f32 %v5000, 1.442695
        %v5027 = vpow.pop %v5026
        %v5028 = vmul.f32 %v5001, 1.442695
        %v5029 = vpow.pop %v5028
        %v5030 = vmul.f32 %v5002, 1.442695
        %v5031 = vpow.pop %v5030
        %v5032 = vmul.f32 %v5003, 1.442695
        %v5033 = vpow.pop %v5032
        %v5034 = vmul.f32 %v5004, 1.442695
        %v5035 = vpow.pop %v5034
        %v5036 = vmul.f32 %v5005, 1.442695
        %v5037 = vpow.pop %v5036
        %5038 = vadd.xlane.f32.xlu0 %v5007
        %v5039 = vpop.xlane.xlu0 %5038
        %5040 = vadd.xlane.f32.xlu0 %v5009
        %v5041 = vpop.xlane.xlu0 %5040
        %5042 = vadd.xlane.f32.xlu0 %v5011
        %v5043 = vpop.xlane.xlu0 %5042
        %5044 = vadd.xlane.f32.xlu0 %v5013
        %v5045 = vpop.xlane.xlu0 %5044
        %5046 = vadd.xlane.f32.xlu0 %v5015
        %v5047 = vpop.xlane.xlu0 %5046
        %5048 = vadd.xlane.f32.xlu0 %v5017
        %v5049 = vpop.xlane.xlu0 %5048
        %5050 = vadd.xlane.f32.xlu0 %v5019
        %v5051 = vpop.xlane.xlu0 %5050
        %5052 = vadd.xlane.f32.xlu0 %v5021
        %v5053 = vpop.xlane.xlu0 %5052
        %5054 = vadd.xlane.f32.xlu0 %v5023
        %v5055 = vpop.xlane.xlu0 %5054
        %5056 = vadd.xlane.f32.xlu0 %v5025
        %v5057 = vpop.xlane.xlu0 %5056
        %5058 = vadd.xlane.f32.xlu0 %v5027
        %v5059 = vpop.xlane.xlu0 %5058
        %5060 = vadd.xlane.f32.xlu0 %v5029
        %v5061 = vpop.xlane.xlu0 %5060
        %5062 = vadd.xlane.f32.xlu0 %v5031
        %v5063 = vpop.xlane.xlu0 %5062
        %5064 = vadd.xlane.f32.xlu0 %v5033
        %v5065 = vpop.xlane.xlu0 %5064
        %5066 = vadd.xlane.f32.xlu0 %v5035
        %v5067 = vpop.xlane.xlu0 %5066
        %5068 = vadd.xlane.f32.xlu0 %v5037
        %v5069 = vpop.xlane.xlu0 %5068
        %v5070 = vrcp.pop %v5039
        %v5071 = vrcp.pop %v5041
        %v5072 = vrcp.pop %v5043
        %v5073 = vrcp.pop %v5045
        %v5074 = vrcp.pop %v5047
        %v5075 = vrcp.pop %v5049
        %v5076 = vrcp.pop %v5051
        %v5077 = vrcp.pop %v5053
        %v5078 = vrcp.pop %v5055
        %v5079 = vrcp.pop %v5057
        %v5080 = vrcp.pop %v5059
        %v5081 = vrcp.pop %v5061
        %v5082 = vrcp.pop %v5063
        %v5083 = vrcp.pop %v5065
        %v5084 = vrcp.pop %v5067
        %v5085 = vrcp.pop %v5069
        %v5086 = vmul.f32 %v5007, %v5070
        %v5087 = vmul.f32 %v5009, %v5071
        %v5088 = vmul.f32 %v5011, %v5072
        %v5089 = vmul.f32 %v5013, %v5073
        %v5090 = vmul.f32 %v5015, %v5074
        %v5091 = vmul.f32 %v5017, %v5075
        %v5092 = vmul.f32 %v5019, %v5076
        %v5093 = vmul.f32 %v5021, %v5077
        %v5094 = vmul.f32 %v5023, %v5078
        %v5095 = vmul.f32 %v5025, %v5079
        %v5096 = vmul.f32 %v5027, %v5080
        %v5097 = vmul.f32 %v5029, %v5081
        %v5098 = vmul.f32 %v5031, %v5082
        %v5099 = vmul.f32 %v5033, %v5083
        %v5100 = vmul.f32 %v5035, %v5084
        %v5101 = vmul.f32 %v5037, %v5085
        %v5102 = vpack.c.bf16 %v5087, %v5086
        %v5103 = vpack.c.bf16 %v5089, %v5088
        %v5104 = vpack.c.bf16 %v5091, %v5090
        %v5105 = vpack.c.bf16 %v5093, %v5092
        %v5106 = vpack.c.bf16 %v5095, %v5094
        %v5107 = vpack.c.bf16 %v5097, %v5096
        %v5108 = vpack.c.bf16 %v5099, %v5098
        %v5109 = vpack.c.bf16 %v5101, %v5100
        %5110 = vmatpush.bf16.msra.mxu0 %v4860
        %5111 = vmatpush.bf16.msra.mxu0 %v4859
        %5112 = vmatpush.bf16.msra.mxu0 %v4858
        %5113 = vmatpush.bf16.msra.mxu0 %v4857
        %5114 = vmatpush.bf16.msra.mxu0 %v4856
        %5115 = vmatpush.bf16.msra.mxu0 %v4855
        %5116 = vmatpush.bf16.msra.mxu0 %v4854
        %5117 = vmatpush.bf16.msra.mxu0 %v4853
        %5118 = vmatmul.bf16.gmra.mxu0 %v5102
        %v5119 = vpop.f32.mrf.mxu0
        %v5120 = vadd.f32 0.0, %v5119
        %v5121 = vpop.f32.mrf.mxu0
        %v5122 = vadd.f32 0.0, %v5121
        %5123 = vmatmul.bf16.gmra.mxu0 %v5103
        %v5124 = vpop.f32.mrf.mxu0
        %v5125 = vadd.f32 0.0, %v5124
        %v5126 = vpop.f32.mrf.mxu0
        %v5127 = vadd.f32 0.0, %v5126
        %5128 = vmatmul.bf16.gmra.mxu0 %v5104
        %v5129 = vpop.f32.mrf.mxu0
        %v5130 = vadd.f32 0.0, %v5129
        %v5131 = vpop.f32.mrf.mxu0
        %v5132 = vadd.f32 0.0, %v5131
        %5133 = vmatmul.bf16.gmra.mxu0 %v5105
        %v5134 = vpop.f32.mrf.mxu0
        %v5135 = vadd.f32 0.0, %v5134
        %v5136 = vpop.f32.mrf.mxu0
        %v5137 = vadd.f32 0.0, %v5136
        %5138 = vmatmul.bf16.gmra.mxu0 %v5106
        %v5139 = vpop.f32.mrf.mxu0
        %v5140 = vadd.f32 0.0, %v5139
        %v5141 = vpop.f32.mrf.mxu0
        %v5142 = vadd.f32 0.0, %v5141
        %5143 = vmatmul.bf16.gmra.mxu0 %v5107
        %v5144 = vpop.f32.mrf.mxu0
        %v5145 = vadd.f32 0.0, %v5144
        %v5146 = vpop.f32.mrf.mxu0
        %v5147 = vadd.f32 0.0, %v5146
        %5148 = vmatmul.bf16.gmra.mxu0 %v5108
        %v5149 = vpop.f32.mrf.mxu0
        %v5150 = vadd.f32 0.0, %v5149
        %v5151 = vpop.f32.mrf.mxu0
        %v5152 = vadd.f32 0.0, %v5151
        %5153 = vmatmul.bf16.gmra.mxu0 %v5109
        %v5154 = vpop.f32.mrf.mxu0
        %v5155 = vadd.f32 0.0, %v5154
        %v5156 = vpop.f32.mrf.mxu0
        %v5157 = vadd.f32 0.0, %v5156
        %5158 = vdwg.mxu0
        %5159 = vst.msk [vmem:[#allocation2] sm:$0xff] %vm1375, %v5120
        %5160 = vst.msk [vmem:[#allocation2 + $0x8] sm:$0xff] %vm1375, %v5122
        %5161 = vst.msk [vmem:[#allocation2 + $0x10] sm:$0xff] %vm1375, %v5125
        %5162 = vst.msk [vmem:[#allocation2 + $0x18] sm:$0xff] %vm1375, %v5127
        %5163 = vst.msk [vmem:[#allocation2 + $0x20] sm:$0xff] %vm1375, %v5130
        %5164 = vst.msk [vmem:[#allocation2 + $0x28] sm:$0xff] %vm1375, %v5132
        %5165 = vst.msk [vmem:[#allocation2 + $0x30] sm:$0xff] %vm1375, %v5135
        %5166 = vst.msk [vmem:[#allocation2 + $0x38] sm:$0xff] %vm1375, %v5137
        %5167 = vst.msk [vmem:[#allocation2 + $0x40] sm:$0xff] %vm1375, %v5140
        %5168 = vst.msk [vmem:[#allocation2 + $0x48] sm:$0xff] %vm1375, %v5142
        %5169 = vst.msk [vmem:[#allocation2 + $0x50] sm:$0xff] %vm1375, %v5145
        %5170 = vst.msk [vmem:[#allocation2 + $0x58] sm:$0xff] %vm1375, %v5147
        %5171 = vst.msk [vmem:[#allocation2 + $0x60] sm:$0xff] %vm1375, %v5150
        %5172 = vst.msk [vmem:[#allocation2 + $0x68] sm:$0xff] %vm1375, %v5152
        %5173 = vst.msk [vmem:[#allocation2 + $0x70] sm:$0xff] %vm1375, %v5155
        %5174 = vst.msk [vmem:[#allocation2 + $0x78] sm:$0xff] %vm1375, %v5157
        %5183 = vrot.lane.b32.xlu0 %v4837, 64
        %v5184 = vpop.permute.xlu0 %5183
        %5185 = vrot.lane.b32.xlu0 %v4838, 64
        %v5186 = vpop.permute.xlu0 %5185
        %5187 = vrot.lane.b32.xlu0 %v4839, 64
        %v5188 = vpop.permute.xlu0 %5187
        %5189 = vrot.lane.b32.xlu0 %v4840, 64
        %v5190 = vpop.permute.xlu0 %5189
        %5191 = vrot.lane.b32.xlu0 %v4841, 64
        %v5192 = vpop.permute.xlu0 %5191
        %5193 = vrot.lane.b32.xlu0 %v4842, 64
        %v5194 = vpop.permute.xlu0 %5193
        %5195 = vrot.lane.b32.xlu0 %v4843, 64
        %v5196 = vpop.permute.xlu0 %5195
        %5197 = vrot.lane.b32.xlu0 %v4844, 64
        %v5198 = vpop.permute.xlu0 %5197
        %5207 = vrot.lane.b32.xlu0 %v4845, 64
        %v5208 = vpop.permute.xlu0 %5207
        %5209 = vrot.lane.b32.xlu0 %v4846, 64
        %v5210 = vpop.permute.xlu0 %5209
        %5211 = vrot.lane.b32.xlu0 %v4847, 64
        %v5212 = vpop.permute.xlu0 %5211
        %5213 = vrot.lane.b32.xlu0 %v4848, 64
        %v5214 = vpop.permute.xlu0 %5213
        %5215 = vrot.lane.b32.xlu0 %v4849, 64
        %v5216 = vpop.permute.xlu0 %5215
        %5217 = vrot.lane.b32.xlu0 %v4850, 64
        %v5218 = vpop.permute.xlu0 %5217
        %5219 = vrot.lane.b32.xlu0 %v4851, 64
        %v5220 = vpop.permute.xlu0 %5219
        %5221 = vrot.lane.b32.xlu0 %v4852, 64
        %v5222 = vpop.permute.xlu0 %5221
        %v5224 = vsel %vm1375, %v5184, 0
        %v5227 = vsel %vm1375, %v5186, 0
        %v5230 = vsel %vm1375, %v5188, 0
        %v5233 = vsel %vm1375, %v5190, 0
        %v5236 = vsel %vm1375, %v5192, 0
        %v5239 = vsel %vm1375, %v5194, 0
        %v5242 = vsel %vm1375, %v5196, 0
        %v5245 = vsel %vm1375, %v5198, 0
        %v5248 = vsel %vm1375, %v5208, 0
        %v5251 = vsel %vm1375, %v5210, 0
        %v5254 = vsel %vm1375, %v5212, 0
        %v5257 = vsel %vm1375, %v5214, 0
        %v5260 = vsel %vm1375, %v5216, 0
        %v5263 = vsel %vm1375, %v5218, 0
        %v5266 = vsel %vm1375, %v5220, 0
        %v5269 = vsel %vm1375, %v5222, 0
        %5271 = vmatpush.bf16.xpose.msra.mxu0 %v5269
        %5272 = vmatpush.bf16.xpose.msra.mxu0 %v5266
        %5273 = vmatpush.bf16.xpose.msra.mxu0 %v5263
        %5274 = vmatpush.bf16.xpose.msra.mxu0 %v5260
        %5275 = vmatpush.bf16.xpose.msra.mxu0 %v5257
        %5276 = vmatpush.bf16.xpose.msra.mxu0 %v5254
        %5277 = vmatpush.bf16.xpose.msra.mxu0 %v5251
        %5278 = vmatpush.bf16.xpose.msra.mxu0 %v5248
        %5279 = vmatmul.bf16.gmra.mxu0 %v5224
        %v5280 = vpop.f32.mrf.mxu0
        %v5281 = vadd.f32 %v1373, %v5280
        %v5282 = vpop.f32.mrf.mxu0
        %v5283 = vadd.f32 %v1373, %v5282
        %5284 = vmatmul.bf16.gmra.mxu0 %v5227
        %v5285 = vpop.f32.mrf.mxu0
        %v5286 = vadd.f32 %v1373, %v5285
        %v5287 = vpop.f32.mrf.mxu0
        %v5288 = vadd.f32 %v1373, %v5287
        %5289 = vmatmul.bf16.gmra.mxu0 %v5230
        %v5290 = vpop.f32.mrf.mxu0
        %v5291 = vadd.f32 %v1373, %v5290
        %v5292 = vpop.f32.mrf.mxu0
        %v5293 = vadd.f32 %v1373, %v5292
        %5294 = vmatmul.bf16.gmra.mxu0 %v5233
        %v5295 = vpop.f32.mrf.mxu0
        %v5296 = vadd.f32 %v1373, %v5295
        %v5297 = vpop.f32.mrf.mxu0
        %v5298 = vadd.f32 %v1373, %v5297
        %5299 = vmatmul.bf16.gmra.mxu0 %v5236
        %v5300 = vpop.f32.mrf.mxu0
        %v5301 = vadd.f32 %v1373, %v5300
        %v5302 = vpop.f32.mrf.mxu0
        %v5303 = vadd.f32 %v1373, %v5302
        %5304 = vmatmul.bf16.gmra.mxu0 %v5239
        %v5305 = vpop.f32.mrf.mxu0
        %v5306 = vadd.f32 %v1373, %v5305
        %v5307 = vpop.f32.mrf.mxu0
        %v5308 = vadd.f32 %v1373, %v5307
        %5309 = vmatmul.bf16.gmra.mxu0 %v5242
        %v5310 = vpop.f32.mrf.mxu0
        %v5311 = vadd.f32 %v1373, %v5310
        %v5312 = vpop.f32.mrf.mxu0
        %v5313 = vadd.f32 %v1373, %v5312
        %5314 = vmatmul.bf16.gmra.mxu0 %v5245
        %v5315 = vpop.f32.mrf.mxu0
        %v5316 = vadd.f32 %v1373, %v5315
        %v5317 = vpop.f32.mrf.mxu0
        %v5318 = vadd.f32 %v1373, %v5317
        %5319 = vdwg.mxu0
        %5320 = vmax.xlane.f32.xlu0 %v5281
        %v5321 = vpop.xlane.xlu0 %5320
        %5322 = vmax.xlane.f32.xlu0 %v5283
        %v5323 = vpop.xlane.xlu0 %5322
        %5324 = vmax.xlane.f32.xlu0 %v5286
        %v5325 = vpop.xlane.xlu0 %5324
        %5326 = vmax.xlane.f32.xlu0 %v5288
        %v5327 = vpop.xlane.xlu0 %5326
        %5328 = vmax.xlane.f32.xlu0 %v5291
        %v5329 = vpop.xlane.xlu0 %5328
        %5330 = vmax.xlane.f32.xlu0 %v5293
        %v5331 = vpop.xlane.xlu0 %5330
        %5332 = vmax.xlane.f32.xlu0 %v5296
        %v5333 = vpop.xlane.xlu0 %5332
        %5334 = vmax.xlane.f32.xlu0 %v5298
        %v5335 = vpop.xlane.xlu0 %5334
        %5336 = vmax.xlane.f32.xlu0 %v5301
        %v5337 = vpop.xlane.xlu0 %5336
        %5338 = vmax.xlane.f32.xlu0 %v5303
        %v5339 = vpop.xlane.xlu0 %5338
        %5340 = vmax.xlane.f32.xlu0 %v5306
        %v5341 = vpop.xlane.xlu0 %5340
        %5342 = vmax.xlane.f32.xlu0 %v5308
        %v5343 = vpop.xlane.xlu0 %5342
        %5344 = vmax.xlane.f32.xlu0 %v5311
        %v5345 = vpop.xlane.xlu0 %5344
        %5346 = vmax.xlane.f32.xlu0 %v5313
        %v5347 = vpop.xlane.xlu0 %5346
        %5348 = vmax.xlane.f32.xlu0 %v5316
        %v5349 = vpop.xlane.xlu0 %5348
        %5350 = vmax.xlane.f32.xlu0 %v5318
        %v5351 = vpop.xlane.xlu0 %5350
        %v5352 = vsub.f32 %v5281, %v5321
        %v5353 = vsub.f32 %v5283, %v5323
        %v5354 = vsub.f32 %v5286, %v5325
        %v5355 = vsub.f32 %v5288, %v5327
        %v5356 = vsub.f32 %v5291, %v5329
        %v5357 = vsub.f32 %v5293, %v5331
        %v5358 = vsub.f32 %v5296, %v5333
        %v5359 = vsub.f32 %v5298, %v5335
        %v5360 = vsub.f32 %v5301, %v5337
        %v5361 = vsub.f32 %v5303, %v5339
        %v5362 = vsub.f32 %v5306, %v5341
        %v5363 = vsub.f32 %v5308, %v5343
        %v5364 = vsub.f32 %v5311, %v5345
        %v5365 = vsub.f32 %v5313, %v5347
        %v5366 = vsub.f32 %v5316, %v5349
        %v5367 = vsub.f32 %v5318, %v5351
        %v5368 = vmul.f32 %v5352, 1.442695
        %v5369 = vpow.pop %v5368
        %v5370 = vmul.f32 %v5353, 1.442695
        %v5371 = vpow.pop %v5370
        %v5372 = vmul.f32 %v5354, 1.442695
        %v5373 = vpow.pop %v5372
        %v5374 = vmul.f32 %v5355, 1.442695
        %v5375 = vpow.pop %v5374
        %v5376 = vmul.f32 %v5356, 1.442695
        %v5377 = vpow.pop %v5376
        %v5378 = vmul.f32 %v5357, 1.442695
        %v5379 = vpow.pop %v5378
        %v5380 = vmul.f32 %v5358, 1.442695
        %v5381 = vpow.pop %v5380
        %v5382 = vmul.f32 %v5359, 1.442695
        %v5383 = vpow.pop %v5382
        %v5384 = vmul.f32 %v5360, 1.442695
        %v5385 = vpow.pop %v5384
        %v5386 = vmul.f32 %v5361, 1.442695
        %v5387 = vpow.pop %v5386
        %v5388 = vmul.f32 %v5362, 1.442695
        %v5389 = vpow.pop %v5388
        %v5390 = vmul.f32 %v5363, 1.442695
        %v5391 = vpow.pop %v5390
        %v5392 = vmul.f32 %v5364, 1.442695
        %v5393 = vpow.pop %v5392
        %v5394 = vmul.f32 %v5365, 1.442695
        %v5395 = vpow.pop %v5394
        %v5396 = vmul.f32 %v5366, 1.442695
        %v5397 = vpow.pop %v5396
        %v5398 = vmul.f32 %v5367, 1.442695
        %v5399 = vpow.pop %v5398
        %5400 = vadd.xlane.f32.xlu0 %v5369
        %v5401 = vpop.xlane.xlu0 %5400
        %5402 = vadd.xlane.f32.xlu0 %v5371
        %v5403 = vpop.xlane.xlu0 %5402
        %5404 = vadd.xlane.f32.xlu0 %v5373
        %v5405 = vpop.xlane.xlu0 %5404
        %5406 = vadd.xlane.f32.xlu0 %v5375
        %v5407 = vpop.xlane.xlu0 %5406
        %5408 = vadd.xlane.f32.xlu0 %v5377
        %v5409 = vpop.xlane.xlu0 %5408
        %5410 = vadd.xlane.f32.xlu0 %v5379
        %v5411 = vpop.xlane.xlu0 %5410
        %5412 = vadd.xlane.f32.xlu0 %v5381
        %v5413 = vpop.xlane.xlu0 %5412
        %5414 = vadd.xlane.f32.xlu0 %v5383
        %v5415 = vpop.xlane.xlu0 %5414
        %5416 = vadd.xlane.f32.xlu0 %v5385
        %v5417 = vpop.xlane.xlu0 %5416
        %5418 = vadd.xlane.f32.xlu0 %v5387
        %v5419 = vpop.xlane.xlu0 %5418
        %5420 = vadd.xlane.f32.xlu0 %v5389
        %v5421 = vpop.xlane.xlu0 %5420
        %5422 = vadd.xlane.f32.xlu0 %v5391
        %v5423 = vpop.xlane.xlu0 %5422
        %5424 = vadd.xlane.f32.xlu0 %v5393
        %v5425 = vpop.xlane.xlu0 %5424
        %5426 = vadd.xlane.f32.xlu0 %v5395
        %v5427 = vpop.xlane.xlu0 %5426
        %5428 = vadd.xlane.f32.xlu0 %v5397
        %v5429 = vpop.xlane.xlu0 %5428
        %5430 = vadd.xlane.f32.xlu0 %v5399
        %v5431 = vpop.xlane.xlu0 %5430
        %v5432 = vrcp.pop %v5401
        %v5433 = vrcp.pop %v5403
        %v5434 = vrcp.pop %v5405
        %v5435 = vrcp.pop %v5407
        %v5436 = vrcp.pop %v5409
        %v5437 = vrcp.pop %v5411
        %v5438 = vrcp.pop %v5413
        %v5439 = vrcp.pop %v5415
        %v5440 = vrcp.pop %v5417
        %v5441 = vrcp.pop %v5419
        %v5442 = vrcp.pop %v5421
        %v5443 = vrcp.pop %v5423
        %v5444 = vrcp.pop %v5425
        %v5445 = vrcp.pop %v5427
        %v5446 = vrcp.pop %v5429
        %v5447 = vrcp.pop %v5431
        %v5448 = vmul.f32 %v5369, %v5432
        %v5449 = vmul.f32 %v5371, %v5433
        %v5450 = vmul.f32 %v5373, %v5434
        %v5451 = vmul.f32 %v5375, %v5435
        %v5452 = vmul.f32 %v5377, %v5436
        %v5453 = vmul.f32 %v5379, %v5437
        %v5454 = vmul.f32 %v5381, %v5438
        %v5455 = vmul.f32 %v5383, %v5439
        %v5456 = vmul.f32 %v5385, %v5440
        %v5457 = vmul.f32 %v5387, %v5441
        %v5458 = vmul.f32 %v5389, %v5442
        %v5459 = vmul.f32 %v5391, %v5443
        %v5460 = vmul.f32 %v5393, %v5444
        %v5461 = vmul.f32 %v5395, %v5445
        %v5462 = vmul.f32 %v5397, %v5446
        %v5463 = vmul.f32 %v5399, %v5447
        %v5464 = vpack.c.bf16 %v5449, %v5448
        %v5465 = vpack.c.bf16 %v5451, %v5450
        %v5466 = vpack.c.bf16 %v5453, %v5452
        %v5467 = vpack.c.bf16 %v5455, %v5454
        %v5468 = vpack.c.bf16 %v5457, %v5456
        %v5469 = vpack.c.bf16 %v5459, %v5458
        %v5470 = vpack.c.bf16 %v5461, %v5460
        %v5471 = vpack.c.bf16 %v5463, %v5462
        %5480 = vrot.lane.b32.xlu0 %v4853, 64
        %v5481 = vpop.permute.xlu0 %5480
        %5482 = vrot.lane.b32.xlu0 %v4854, 64
        %v5483 = vpop.permute.xlu0 %5482
        %5484 = vrot.lane.b32.xlu0 %v4855, 64
        %v5485 = vpop.permute.xlu0 %5484
        %5486 = vrot.lane.b32.xlu0 %v4856, 64
        %v5487 = vpop.permute.xlu0 %5486
        %5488 = vrot.lane.b32.xlu0 %v4857, 64
        %v5489 = vpop.permute.xlu0 %5488
        %5490 = vrot.lane.b32.xlu0 %v4858, 64
        %v5491 = vpop.permute.xlu0 %5490
        %5492 = vrot.lane.b32.xlu0 %v4859, 64
        %v5493 = vpop.permute.xlu0 %5492
        %5494 = vrot.lane.b32.xlu0 %v4860, 64
        %v5495 = vpop.permute.xlu0 %5494
        %5504 = vmatpush.bf16.msra.mxu0 %v5495
        %5505 = vmatpush.bf16.msra.mxu0 %v5493
        %5506 = vmatpush.bf16.msra.mxu0 %v5491
        %5507 = vmatpush.bf16.msra.mxu0 %v5489
        %5508 = vmatpush.bf16.msra.mxu0 %v5487
        %5509 = vmatpush.bf16.msra.mxu0 %v5485
        %5510 = vmatpush.bf16.msra.mxu0 %v5483
        %5511 = vmatpush.bf16.msra.mxu0 %v5481
        %5512 = vmatmul.bf16.gmra.mxu0 %v5464
        %v5513 = vpop.f32.mrf.mxu0
        %v5514 = vadd.f32 0.0, %v5513
        %v5515 = vpop.f32.mrf.mxu0
        %v5516 = vadd.f32 0.0, %v5515
        %5517 = vmatmul.bf16.gmra.mxu0 %v5465
        %v5518 = vpop.f32.mrf.mxu0
        %v5519 = vadd.f32 0.0, %v5518
        %v5520 = vpop.f32.mrf.mxu0
        %v5521 = vadd.f32 0.0, %v5520
        %5522 = vmatmul.bf16.gmra.mxu0 %v5466
        %v5523 = vpop.f32.mrf.mxu0
        %v5524 = vadd.f32 0.0, %v5523
        %v5525 = vpop.f32.mrf.mxu0
        %v5526 = vadd.f32 0.0, %v5525
        %5527 = vmatmul.bf16.gmra.mxu0 %v5467
        %v5528 = vpop.f32.mrf.mxu0
        %v5529 = vadd.f32 0.0, %v5528
        %v5530 = vpop.f32.mrf.mxu0
        %v5531 = vadd.f32 0.0, %v5530
        %5532 = vmatmul.bf16.gmra.mxu0 %v5468
        %v5533 = vpop.f32.mrf.mxu0
        %v5534 = vadd.f32 0.0, %v5533
        %v5535 = vpop.f32.mrf.mxu0
        %v5536 = vadd.f32 0.0, %v5535
        %5537 = vmatmul.bf16.gmra.mxu0 %v5469
        %v5538 = vpop.f32.mrf.mxu0
        %v5539 = vadd.f32 0.0, %v5538
        %v5540 = vpop.f32.mrf.mxu0
        %v5541 = vadd.f32 0.0, %v5540
        %5542 = vmatmul.bf16.gmra.mxu0 %v5470
        %v5543 = vpop.f32.mrf.mxu0
        %v5544 = vadd.f32 0.0, %v5543
        %v5545 = vpop.f32.mrf.mxu0
        %v5546 = vadd.f32 0.0, %v5545
        %5547 = vmatmul.bf16.gmra.mxu0 %v5471
        %v5548 = vpop.f32.mrf.mxu0
        %v5549 = vadd.f32 0.0, %v5548
        %v5550 = vpop.f32.mrf.mxu0
        %v5551 = vadd.f32 0.0, %v5550
        %5552 = vdwg.mxu0
        %5569 = vrot.lane.b32.xlu0 %v5514, 64
        %v5570 = vpop.permute.xlu0 %5569
        %5571 = vrot.lane.b32.xlu0 %v5516, 64
        %v5572 = vpop.permute.xlu0 %5571
        %5573 = vrot.lane.b32.xlu0 %v5519, 64
        %v5574 = vpop.permute.xlu0 %5573
        %5575 = vrot.lane.b32.xlu0 %v5521, 64
        %v5576 = vpop.permute.xlu0 %5575
        %5577 = vrot.lane.b32.xlu0 %v5524, 64
        %v5578 = vpop.permute.xlu0 %5577
        %5579 = vrot.lane.b32.xlu0 %v5526, 64
        %v5580 = vpop.permute.xlu0 %5579
        %5581 = vrot.lane.b32.xlu0 %v5529, 64
        %v5582 = vpop.permute.xlu0 %5581
        %5583 = vrot.lane.b32.xlu0 %v5531, 64
        %v5584 = vpop.permute.xlu0 %5583
        %5585 = vrot.lane.b32.xlu0 %v5534, 64
        %v5586 = vpop.permute.xlu0 %5585
        %5587 = vrot.lane.b32.xlu0 %v5536, 64
        %v5588 = vpop.permute.xlu0 %5587
        %5589 = vrot.lane.b32.xlu0 %v5539, 64
        %v5590 = vpop.permute.xlu0 %5589
        %5591 = vrot.lane.b32.xlu0 %v5541, 64
        %v5592 = vpop.permute.xlu0 %5591
        %5593 = vrot.lane.b32.xlu0 %v5544, 64
        %v5594 = vpop.permute.xlu0 %5593
        %5595 = vrot.lane.b32.xlu0 %v5546, 64
        %v5596 = vpop.permute.xlu0 %5595
        %5597 = vrot.lane.b32.xlu0 %v5549, 64
        %v5598 = vpop.permute.xlu0 %5597
        %5599 = vrot.lane.b32.xlu0 %v5551, 64
        %v5600 = vpop.permute.xlu0 %5599
        %5617 = vst.msk [vmem:[#allocation2] sm:$0xff] %vm2132, %v5570
        %5618 = vst.msk [vmem:[#allocation2 + $0x8] sm:$0xff] %vm2132, %v5572
        %5619 = vst.msk [vmem:[#allocation2 + $0x10] sm:$0xff] %vm2132, %v5574
        %5620 = vst.msk [vmem:[#allocation2 + $0x18] sm:$0xff] %vm2132, %v5576
        %5621 = vst.msk [vmem:[#allocation2 + $0x20] sm:$0xff] %vm2132, %v5578
        %5622 = vst.msk [vmem:[#allocation2 + $0x28] sm:$0xff] %vm2132, %v5580
        %5623 = vst.msk [vmem:[#allocation2 + $0x30] sm:$0xff] %vm2132, %v5582
        %5624 = vst.msk [vmem:[#allocation2 + $0x38] sm:$0xff] %vm2132, %v5584
        %5625 = vst.msk [vmem:[#allocation2 + $0x40] sm:$0xff] %vm2132, %v5586
        %5626 = vst.msk [vmem:[#allocation2 + $0x48] sm:$0xff] %vm2132, %v5588
        %5627 = vst.msk [vmem:[#allocation2 + $0x50] sm:$0xff] %vm2132, %v5590
        %5628 = vst.msk [vmem:[#allocation2 + $0x58] sm:$0xff] %vm2132, %v5592
        %5629 = vst.msk [vmem:[#allocation2 + $0x60] sm:$0xff] %vm2132, %v5594
        %5630 = vst.msk [vmem:[#allocation2 + $0x68] sm:$0xff] %vm2132, %v5596
        %5631 = vst.msk [vmem:[#allocation2 + $0x70] sm:$0xff] %vm2132, %v5598
        %5632 = vst.msk [vmem:[#allocation2 + $0x78] sm:$0xff] %vm2132, %v5600
        %v5633 = vld [vmem:[#allocation2] sm:$0xff]
        %v5634 = vld [vmem:[#allocation2 + $0x8] sm:$0xff]
        %v5635 = vld [vmem:[#allocation2 + $0x10] sm:$0xff]
        %v5636 = vld [vmem:[#allocation2 + $0x18] sm:$0xff]
        %v5637 = vld [vmem:[#allocation2 + $0x20] sm:$0xff]
        %v5638 = vld [vmem:[#allocation2 + $0x28] sm:$0xff]
        %v5639 = vld [vmem:[#allocation2 + $0x30] sm:$0xff]
        %v5640 = vld [vmem:[#allocation2 + $0x38] sm:$0xff]
        %v5641 = vld [vmem:[#allocation2 + $0x40] sm:$0xff]
        %v5642 = vld [vmem:[#allocation2 + $0x48] sm:$0xff]
        %v5643 = vld [vmem:[#allocation2 + $0x50] sm:$0xff]
        %v5644 = vld [vmem:[#allocation2 + $0x58] sm:$0xff]
        %v5645 = vld [vmem:[#allocation2 + $0x60] sm:$0xff]
        %v5646 = vld [vmem:[#allocation2 + $0x68] sm:$0xff]
        %v5647 = vld [vmem:[#allocation2 + $0x70] sm:$0xff]
        %v5648 = vld [vmem:[#allocation2 + $0x78] sm:$0xff]
        %v5649 = vpack.c.bf16 %v5634, %v5633
        %v5650 = vpack.c.bf16 %v5636, %v5635
        %v5651 = vpack.c.bf16 %v5638, %v5637
        %v5652 = vpack.c.bf16 %v5640, %v5639
        %v5653 = vpack.c.bf16 %v5642, %v5641
        %v5654 = vpack.c.bf16 %v5644, %v5643
        %v5655 = vpack.c.bf16 %v5646, %v5645
        %v5656 = vpack.c.bf16 %v5648, %v5647
        %s5657 = scalar_lea.vmem %s6, 64
        %v5658 = vld [vmem:[%s5657] sm:$0xf]
        %v5659 = vld [vmem:[%s5657 + $0x4] sm:$0xf]
        %v5660 = vld [vmem:[%s5657 + $0x8] sm:$0xf]
        %v5661 = vld [vmem:[%s5657 + $0xc] sm:$0xf]
        %v5662 = vld [vmem:[%s5657 + $0x10] sm:$0xf]
        %v5663 = vld [vmem:[%s5657 + $0x14] sm:$0xf]
        %v5664 = vld [vmem:[%s5657 + $0x18] sm:$0xf]
        %v5665 = vld [vmem:[%s5657 + $0x1c] sm:$0xf]
        %v5666 = vld [vmem:[%s5657 + $0x20] sm:$0xf]
        %v5667 = vld [vmem:[%s5657 + $0x24] sm:$0xf]
        %v5668 = vld [vmem:[%s5657 + $0x28] sm:$0xf]
        %v5669 = vld [vmem:[%s5657 + $0x2c] sm:$0xf]
        %v5670 = vld [vmem:[%s5657 + $0x30] sm:$0xf]
        %v5671 = vld [vmem:[%s5657 + $0x34] sm:$0xf]
        %v5672 = vld [vmem:[%s5657 + $0x38] sm:$0xf]
        %v5673 = vld [vmem:[%s5657 + $0x3c] sm:$0xf]
        %s5674 = scalar_lea.vmem %s7, 1
        %v5675 = vld [vmem:[%s5674] sm:$0x1]
        %v5677 = vperm.slane %v5675, 0
        %v5695 = vunpack.c.l.b16 %v5658
        %v5696 = vunpack.c.l.b16 %v5659
        %v5697 = vunpack.c.l.b16 %v5660
        %v5698 = vunpack.c.l.b16 %v5661
        %v5699 = vunpack.c.l.b16 %v5662
        %v5700 = vunpack.c.l.b16 %v5663
        %v5701 = vunpack.c.l.b16 %v5664
        %v5702 = vunpack.c.l.b16 %v5665
        %v5703 = vunpack.c.l.b16 %v5666
        %v5704 = vunpack.c.l.b16 %v5667
        %v5705 = vunpack.c.l.b16 %v5668
        %v5706 = vunpack.c.l.b16 %v5669
        %v5707 = vunpack.c.l.b16 %v5670
        %v5708 = vunpack.c.l.b16 %v5671
        %v5709 = vunpack.c.l.b16 %v5672
        %v5710 = vunpack.c.l.b16 %v5673
        %v5711 = vpack.c.b16 %v5696, %v5695
        %v5712 = vpack.c.b16 %v5698, %v5697
        %v5713 = vpack.c.b16 %v5700, %v5699
        %v5714 = vpack.c.b16 %v5702, %v5701
        %v5715 = vpack.c.b16 %v5704, %v5703
        %v5716 = vpack.c.b16 %v5706, %v5705
        %v5717 = vpack.c.b16 %v5708, %v5707
        %v5718 = vpack.c.b16 %v5710, %v5709
        %5727 = vmatpush.bf16.msra.mxu0 %v5718
        %5728 = vmatpush.bf16.msra.mxu0 %v5717
        %5729 = vmatpush.bf16.msra.mxu0 %v5716
        %5730 = vmatpush.bf16.msra.mxu0 %v5715
        %5731 = vmatpush.bf16.msra.mxu0 %v5714
        %5732 = vmatpush.bf16.msra.mxu0 %v5713
        %5733 = vmatpush.bf16.msra.mxu0 %v5712
        %5734 = vmatpush.bf16.msra.mxu0 %v5711
        %5735 = vmatmul.bf16.gmra.mxu0 %v5649
        %v5736 = vpop.f32.mrf.mxu0
        %v5737 = vadd.f32 %v5677, %v5736
        %v5738 = vpop.f32.mrf.mxu0
        %v5739 = vadd.f32 %v5677, %v5738
        %5740 = vmatmul.bf16.gmra.mxu0 %v5650
        %v5741 = vpop.f32.mrf.mxu0
        %v5742 = vadd.f32 %v5677, %v5741
        %v5743 = vpop.f32.mrf.mxu0
        %v5744 = vadd.f32 %v5677, %v5743
        %5745 = vmatmul.bf16.gmra.mxu0 %v5651
        %v5746 = vpop.f32.mrf.mxu0
        %v5747 = vadd.f32 %v5677, %v5746
        %v5748 = vpop.f32.mrf.mxu0
        %v5749 = vadd.f32 %v5677, %v5748
        %5750 = vmatmul.bf16.gmra.mxu0 %v5652
        %v5751 = vpop.f32.mrf.mxu0
        %v5752 = vadd.f32 %v5677, %v5751
        %v5753 = vpop.f32.mrf.mxu0
        %v5754 = vadd.f32 %v5677, %v5753
        %5755 = vmatmul.bf16.gmra.mxu0 %v5653
        %v5756 = vpop.f32.mrf.mxu0
        %v5757 = vadd.f32 %v5677, %v5756
        %v5758 = vpop.f32.mrf.mxu0
        %v5759 = vadd.f32 %v5677, %v5758
        %5760 = vmatmul.bf16.gmra.mxu0 %v5654
        %v5761 = vpop.f32.mrf.mxu0
        %v5762 = vadd.f32 %v5677, %v5761
        %v5763 = vpop.f32.mrf.mxu0
        %v5764 = vadd.f32 %v5677, %v5763
        %5765 = vmatmul.bf16.gmra.mxu0 %v5655
        %v5766 = vpop.f32.mrf.mxu0
        %v5767 = vadd.f32 %v5677, %v5766
        %v5768 = vpop.f32.mrf.mxu0
        %v5769 = vadd.f32 %v5677, %v5768
        %5770 = vmatmul.bf16.gmra.mxu0 %v5656
        %v5771 = vpop.f32.mrf.mxu0
        %v5772 = vadd.f32 %v5677, %v5771
        %v5773 = vpop.f32.mrf.mxu0
        %v5774 = vadd.f32 %v5677, %v5773
        %5775 = vdwg.mxu0
        %v5776 = vadd.f32 %v4496, %v5737
        %v5777 = vadd.f32 %v4497, %v5739
        %v5778 = vadd.f32 %v4498, %v5742
        %v5779 = vadd.f32 %v4499, %v5744
        %v5780 = vadd.f32 %v4500, %v5747
        %v5781 = vadd.f32 %v4501, %v5749
        %v5782 = vadd.f32 %v4502, %v5752
        %v5783 = vadd.f32 %v4503, %v5754
        %v5784 = vadd.f32 %v4504, %v5757
        %v5785 = vadd.f32 %v4505, %v5759
        %v5786 = vadd.f32 %v4506, %v5762
        %v5787 = vadd.f32 %v4507, %v5764
        %v5788 = vadd.f32 %v4508, %v5767
        %v5789 = vadd.f32 %v4509, %v5769
        %v5790 = vadd.f32 %v4510, %v5772
        %v5791 = vadd.f32 %v4511, %v5774
        %s5792 = scalar_lea.vmem %s8, 1
        %v5793 = vld [vmem:[%s5792] sm:$0x1]
        %s5794 = scalar_lea.vmem %s9, 1
        %v5795 = vld [vmem:[%s5794] sm:$0x1]
        %5796 = vadd.xlane.f32.xlu0 %v5776
        %v5797 = vpop.xlane.xlu0 %5796
        %5798 = vadd.xlane.f32.xlu0 %v5777
        %v5799 = vpop.xlane.xlu0 %5798
        %5800 = vadd.xlane.f32.xlu0 %v5778
        %v5801 = vpop.xlane.xlu0 %5800
        %5802 = vadd.xlane.f32.xlu0 %v5779
        %v5803 = vpop.xlane.xlu0 %5802
        %5804 = vadd.xlane.f32.xlu0 %v5780
        %v5805 = vpop.xlane.xlu0 %5804
        %5806 = vadd.xlane.f32.xlu0 %v5781
        %v5807 = vpop.xlane.xlu0 %5806
        %5808 = vadd.xlane.f32.xlu0 %v5782
        %v5809 = vpop.xlane.xlu0 %5808
        %5810 = vadd.xlane.f32.xlu0 %v5783
        %v5811 = vpop.xlane.xlu0 %5810
        %5812 = vadd.xlane.f32.xlu0 %v5784
        %v5813 = vpop.xlane.xlu0 %5812
        %5814 = vadd.xlane.f32.xlu0 %v5785
        %v5815 = vpop.xlane.xlu0 %5814
        %5816 = vadd.xlane.f32.xlu0 %v5786
        %v5817 = vpop.xlane.xlu0 %5816
        %5818 = vadd.xlane.f32.xlu0 %v5787
        %v5819 = vpop.xlane.xlu0 %5818
        %5820 = vadd.xlane.f32.xlu0 %v5788
        %v5821 = vpop.xlane.xlu0 %5820
        %5822 = vadd.xlane.f32.xlu0 %v5789
        %v5823 = vpop.xlane.xlu0 %5822
        %5824 = vadd.xlane.f32.xlu0 %v5790
        %v5825 = vpop.xlane.xlu0 %5824
        %5826 = vadd.xlane.f32.xlu0 %v5791
        %v5827 = vpop.xlane.xlu0 %5826
        %v5828 = vmul.f32 %v5797, %v698
        %v5829 = vmul.f32 %v5799, %v698
        %v5830 = vmul.f32 %v5801, %v698
        %v5831 = vmul.f32 %v5803, %v698
        %v5832 = vmul.f32 %v5805, %v698
        %v5833 = vmul.f32 %v5807, %v698
        %v5834 = vmul.f32 %v5809, %v698
        %v5835 = vmul.f32 %v5811, %v698
        %v5836 = vmul.f32 %v5813, %v698
        %v5837 = vmul.f32 %v5815, %v698
        %v5838 = vmul.f32 %v5817, %v698
        %v5839 = vmul.f32 %v5819, %v698
        %v5840 = vmul.f32 %v5821, %v698
        %v5841 = vmul.f32 %v5823, %v698
        %v5842 = vmul.f32 %v5825, %v698
        %v5843 = vmul.f32 %v5827, %v698
        %v5844 = vsub.f32 %v5776, %v5828
        %v5845 = vsub.f32 %v5777, %v5829
        %v5846 = vsub.f32 %v5778, %v5830
        %v5847 = vsub.f32 %v5779, %v5831
        %v5848 = vsub.f32 %v5780, %v5832
        %v5849 = vsub.f32 %v5781, %v5833
        %v5850 = vsub.f32 %v5782, %v5834
        %v5851 = vsub.f32 %v5783, %v5835
        %v5852 = vsub.f32 %v5784, %v5836
        %v5853 = vsub.f32 %v5785, %v5837
        %v5854 = vsub.f32 %v5786, %v5838
        %v5855 = vsub.f32 %v5787, %v5839
        %v5856 = vsub.f32 %v5788, %v5840
        %v5857 = vsub.f32 %v5789, %v5841
        %v5858 = vsub.f32 %v5790, %v5842
        %v5859 = vsub.f32 %v5791, %v5843
        %v5860 = vmul.f32 %v5844, %v5844
        %v5861 = vmul.f32 %v5845, %v5845
        %v5862 = vmul.f32 %v5846, %v5846
        %v5863 = vmul.f32 %v5847, %v5847
        %v5864 = vmul.f32 %v5848, %v5848
        %v5865 = vmul.f32 %v5849, %v5849
        %v5866 = vmul.f32 %v5850, %v5850
        %v5867 = vmul.f32 %v5851, %v5851
        %v5868 = vmul.f32 %v5852, %v5852
        %v5869 = vmul.f32 %v5853, %v5853
        %v5870 = vmul.f32 %v5854, %v5854
        %v5871 = vmul.f32 %v5855, %v5855
        %v5872 = vmul.f32 %v5856, %v5856
        %v5873 = vmul.f32 %v5857, %v5857
        %v5874 = vmul.f32 %v5858, %v5858
        %v5875 = vmul.f32 %v5859, %v5859
        %5876 = vadd.xlane.f32.xlu0 %v5860
        %v5877 = vpop.xlane.xlu0 %5876
        %5878 = vadd.xlane.f32.xlu0 %v5861
        %v5879 = vpop.xlane.xlu0 %5878
        %5880 = vadd.xlane.f32.xlu0 %v5862
        %v5881 = vpop.xlane.xlu0 %5880
        %5882 = vadd.xlane.f32.xlu0 %v5863
        %v5883 = vpop.xlane.xlu0 %5882
        %5884 = vadd.xlane.f32.xlu0 %v5864
        %v5885 = vpop.xlane.xlu0 %5884
        %5886 = vadd.xlane.f32.xlu0 %v5865
        %v5887 = vpop.xlane.xlu0 %5886
        %5888 = vadd.xlane.f32.xlu0 %v5866
        %v5889 = vpop.xlane.xlu0 %5888
        %5890 = vadd.xlane.f32.xlu0 %v5867
        %v5891 = vpop.xlane.xlu0 %5890
        %5892 = vadd.xlane.f32.xlu0 %v5868
        %v5893 = vpop.xlane.xlu0 %5892
        %5894 = vadd.xlane.f32.xlu0 %v5869
        %v5895 = vpop.xlane.xlu0 %5894
        %5896 = vadd.xlane.f32.xlu0 %v5870
        %v5897 = vpop.xlane.xlu0 %5896
        %5898 = vadd.xlane.f32.xlu0 %v5871
        %v5899 = vpop.xlane.xlu0 %5898
        %5900 = vadd.xlane.f32.xlu0 %v5872
        %v5901 = vpop.xlane.xlu0 %5900
        %5902 = vadd.xlane.f32.xlu0 %v5873
        %v5903 = vpop.xlane.xlu0 %5902
        %5904 = vadd.xlane.f32.xlu0 %v5874
        %v5905 = vpop.xlane.xlu0 %5904
        %5906 = vadd.xlane.f32.xlu0 %v5875
        %v5907 = vpop.xlane.xlu0 %5906
        %v5908 = vmul.f32 %v5877, %v698
        %v5909 = vmul.f32 %v5879, %v698
        %v5910 = vmul.f32 %v5881, %v698
        %v5911 = vmul.f32 %v5883, %v698
        %v5912 = vmul.f32 %v5885, %v698
        %v5913 = vmul.f32 %v5887, %v698
        %v5914 = vmul.f32 %v5889, %v698
        %v5915 = vmul.f32 %v5891, %v698
        %v5916 = vmul.f32 %v5893, %v698
        %v5917 = vmul.f32 %v5895, %v698
        %v5918 = vmul.f32 %v5897, %v698
        %v5919 = vmul.f32 %v5899, %v698
        %v5920 = vmul.f32 %v5901, %v698
        %v5921 = vmul.f32 %v5903, %v698
        %v5922 = vmul.f32 %v5905, %v698
        %v5923 = vmul.f32 %v5907, %v698
        %v5924 = vadd.f32 %v5908, 1e-05
        %v5925 = vadd.f32 %v5909, 1e-05
        %v5926 = vadd.f32 %v5910, 1e-05
        %v5927 = vadd.f32 %v5911, 1e-05
        %v5928 = vadd.f32 %v5912, 1e-05
        %v5929 = vadd.f32 %v5913, 1e-05
        %v5930 = vadd.f32 %v5914, 1e-05
        %v5931 = vadd.f32 %v5915, 1e-05
        %v5932 = vadd.f32 %v5916, 1e-05
        %v5933 = vadd.f32 %v5917, 1e-05
        %v5934 = vadd.f32 %v5918, 1e-05
        %v5935 = vadd.f32 %v5919, 1e-05
        %v5936 = vadd.f32 %v5920, 1e-05
        %v5937 = vadd.f32 %v5921, 1e-05
        %v5938 = vadd.f32 %v5922, 1e-05
        %v5939 = vadd.f32 %v5923, 1e-05
        %v5940 = vrsqrt.pop %v5924
        %v5941 = vmul.f32 %v5940, %v5924
        %v5942 = vmul.f32 %v5941, %v5940
        %v5943 = vmul.f32 0.5, %v5942
        %v5944 = vsub.f32 1.5, %v5943
        %v5945 = vmul.f32 %v5940, %v5944
        %vm5946 = vweird.f32 %v5924
        %vm5947 = vweird.f32 %v5940
        %vm5948 = vmor %vm5946, %vm5947
        %v5949 = vsel %vm5948, %v5940, %v5945
        %v5950 = vrsqrt.pop %v5925
        %v5951 = vmul.f32 %v5950, %v5925
        %v5952 = vmul.f32 %v5951, %v5950
        %v5953 = vmul.f32 0.5, %v5952
        %v5954 = vsub.f32 1.5, %v5953
        %v5955 = vmul.f32 %v5950, %v5954
        %vm5956 = vweird.f32 %v5925
        %vm5957 = vweird.f32 %v5950
        %vm5958 = vmor %vm5956, %vm5957
        %v5959 = vsel %vm5958, %v5950, %v5955
        %v5960 = vrsqrt.pop %v5926
        %v5961 = vmul.f32 %v5960, %v5926
        %v5962 = vmul.f32 %v5961, %v5960
        %v5963 = vmul.f32 0.5, %v5962
        %v5964 = vsub.f32 1.5, %v5963
        %v5965 = vmul.f32 %v5960, %v5964
        %vm5966 = vweird.f32 %v5926
        %vm5967 = vweird.f32 %v5960
        %vm5968 = vmor %vm5966, %vm5967
        %v5969 = vsel %vm5968, %v5960, %v5965
        %v5970 = vrsqrt.pop %v5927
        %v5971 = vmul.f32 %v5970, %v5927
        %v5972 = vmul.f32 %v5971, %v5970
        %v5973 = vmul.f32 0.5, %v5972
        %v5974 = vsub.f32 1.5, %v5973
        %v5975 = vmul.f32 %v5970, %v5974
        %vm5976 = vweird.f32 %v5927
        %vm5977 = vweird.f32 %v5970
        %vm5978 = vmor %vm5976, %vm5977
        %v5979 = vsel %vm5978, %v5970, %v5975
        %v5980 = vrsqrt.pop %v5928
        %v5981 = vmul.f32 %v5980, %v5928
        %v5982 = vmul.f32 %v5981, %v5980
        %v5983 = vmul.f32 0.5, %v5982
        %v5984 = vsub.f32 1.5, %v5983
        %v5985 = vmul.f32 %v5980, %v5984
        %vm5986 = vweird.f32 %v5928
        %vm5987 = vweird.f32 %v5980
        %vm5988 = vmor %vm5986, %vm5987
        %v5989 = vsel %vm5988, %v5980, %v5985
        %v5990 = vrsqrt.pop %v5929
        %v5991 = vmul.f32 %v5990, %v5929
        %v5992 = vmul.f32 %v5991, %v5990
        %v5993 = vmul.f32 0.5, %v5992
        %v5994 = vsub.f32 1.5, %v5993
        %v5995 = vmul.f32 %v5990, %v5994
        %vm5996 = vweird.f32 %v5929
        %vm5997 = vweird.f32 %v5990
        %vm5998 = vmor %vm5996, %vm5997
        %v5999 = vsel %vm5998, %v5990, %v5995
        %v6000 = vrsqrt.pop %v5930
        %v6001 = vmul.f32 %v6000, %v5930
        %v6002 = vmul.f32 %v6001, %v6000
        %v6003 = vmul.f32 0.5, %v6002
        %v6004 = vsub.f32 1.5, %v6003
        %v6005 = vmul.f32 %v6000, %v6004
        %vm6006 = vweird.f32 %v5930
        %vm6007 = vweird.f32 %v6000
        %vm6008 = vmor %vm6006, %vm6007
        %v6009 = vsel %vm6008, %v6000, %v6005
        %v6010 = vrsqrt.pop %v5931
        %v6011 = vmul.f32 %v6010, %v5931
        %v6012 = vmul.f32 %v6011, %v6010
        %v6013 = vmul.f32 0.5, %v6012
        %v6014 = vsub.f32 1.5, %v6013
        %v6015 = vmul.f32 %v6010, %v6014
        %vm6016 = vweird.f32 %v5931
        %vm6017 = vweird.f32 %v6010
        %vm6018 = vmor %vm6016, %vm6017
        %v6019 = vsel %vm6018, %v6010, %v6015
        %v6020 = vrsqrt.pop %v5932
        %v6021 = vmul.f32 %v6020, %v5932
        %v6022 = vmul.f32 %v6021, %v6020
        %v6023 = vmul.f32 0.5, %v6022
        %v6024 = vsub.f32 1.5, %v6023
        %v6025 = vmul.f32 %v6020, %v6024
        %vm6026 = vweird.f32 %v5932
        %vm6027 = vweird.f32 %v6020
        %vm6028 = vmor %vm6026, %vm6027
        %v6029 = vsel %vm6028, %v6020, %v6025
        %v6030 = vrsqrt.pop %v5933
        %v6031 = vmul.f32 %v6030, %v5933
        %v6032 = vmul.f32 %v6031, %v6030
        %v6033 = vmul.f32 0.5, %v6032
        %v6034 = vsub.f32 1.5, %v6033
        %v6035 = vmul.f32 %v6030, %v6034
        %vm6036 = vweird.f32 %v5933
        %vm6037 = vweird.f32 %v6030
        %vm6038 = vmor %vm6036, %vm6037
        %v6039 = vsel %vm6038, %v6030, %v6035
        %v6040 = vrsqrt.pop %v5934
        %v6041 = vmul.f32 %v6040, %v5934
        %v6042 = vmul.f32 %v6041, %v6040
        %v6043 = vmul.f32 0.5, %v6042
        %v6044 = vsub.f32 1.5, %v6043
        %v6045 = vmul.f32 %v6040, %v6044
        %vm6046 = vweird.f32 %v5934
        %vm6047 = vweird.f32 %v6040
        %vm6048 = vmor %vm6046, %vm6047
        %v6049 = vsel %vm6048, %v6040, %v6045
        %v6050 = vrsqrt.pop %v5935
        %v6051 = vmul.f32 %v6050, %v5935
        %v6052 = vmul.f32 %v6051, %v6050
        %v6053 = vmul.f32 0.5, %v6052
        %v6054 = vsub.f32 1.5, %v6053
        %v6055 = vmul.f32 %v6050, %v6054
        %vm6056 = vweird.f32 %v5935
        %vm6057 = vweird.f32 %v6050
        %vm6058 = vmor %vm6056, %vm6057
        %v6059 = vsel %vm6058, %v6050, %v6055
        %v6060 = vrsqrt.pop %v5936
        %v6061 = vmul.f32 %v6060, %v5936
        %v6062 = vmul.f32 %v6061, %v6060
        %v6063 = vmul.f32 0.5, %v6062
        %v6064 = vsub.f32 1.5, %v6063
        %v6065 = vmul.f32 %v6060, %v6064
        %vm6066 = vweird.f32 %v5936
        %vm6067 = vweird.f32 %v6060
        %vm6068 = vmor %vm6066, %vm6067
        %v6069 = vsel %vm6068, %v6060, %v6065
        %v6070 = vrsqrt.pop %v5937
        %v6071 = vmul.f32 %v6070, %v5937
        %v6072 = vmul.f32 %v6071, %v6070
        %v6073 = vmul.f32 0.5, %v6072
        %v6074 = vsub.f32 1.5, %v6073
        %v6075 = vmul.f32 %v6070, %v6074
        %vm6076 = vweird.f32 %v5937
        %vm6077 = vweird.f32 %v6070
        %vm6078 = vmor %vm6076, %vm6077
        %v6079 = vsel %vm6078, %v6070, %v6075
        %v6080 = vrsqrt.pop %v5938
        %v6081 = vmul.f32 %v6080, %v5938
        %v6082 = vmul.f32 %v6081, %v6080
        %v6083 = vmul.f32 0.5, %v6082
        %v6084 = vsub.f32 1.5, %v6083
        %v6085 = vmul.f32 %v6080, %v6084
        %vm6086 = vweird.f32 %v5938
        %vm6087 = vweird.f32 %v6080
        %vm6088 = vmor %vm6086, %vm6087
        %v6089 = vsel %vm6088, %v6080, %v6085
        %v6090 = vrsqrt.pop %v5939
        %v6091 = vmul.f32 %v6090, %v5939
        %v6092 = vmul.f32 %v6091, %v6090
        %v6093 = vmul.f32 0.5, %v6092
        %v6094 = vsub.f32 1.5, %v6093
        %v6095 = vmul.f32 %v6090, %v6094
        %vm6096 = vweird.f32 %v5939
        %vm6097 = vweird.f32 %v6090
        %vm6098 = vmor %vm6096, %vm6097
        %v6099 = vsel %vm6098, %v6090, %v6095
        %v6100 = vmul.f32 %v5844, %v5949
        %v6101 = vmul.f32 %v5845, %v5959
        %v6102 = vmul.f32 %v5846, %v5969
        %v6103 = vmul.f32 %v5847, %v5979
        %v6104 = vmul.f32 %v5848, %v5989
        %v6105 = vmul.f32 %v5849, %v5999
        %v6106 = vmul.f32 %v5850, %v6009
        %v6107 = vmul.f32 %v5851, %v6019
        %v6108 = vmul.f32 %v5852, %v6029
        %v6109 = vmul.f32 %v5853, %v6039
        %v6110 = vmul.f32 %v5854, %v6049
        %v6111 = vmul.f32 %v5855, %v6059
        %v6112 = vmul.f32 %v5856, %v6069
        %v6113 = vmul.f32 %v5857, %v6079
        %v6114 = vmul.f32 %v5858, %v6089
        %v6115 = vmul.f32 %v5859, %v6099
        %v6117 = vperm.slane %v5793, 0
        %v6119 = vmul.f32 %v6100, %v6117
        %v6120 = vmul.f32 %v6101, %v6117
        %v6121 = vmul.f32 %v6102, %v6117
        %v6122 = vmul.f32 %v6103, %v6117
        %v6123 = vmul.f32 %v6104, %v6117
        %v6124 = vmul.f32 %v6105, %v6117
        %v6125 = vmul.f32 %v6106, %v6117
        %v6126 = vmul.f32 %v6107, %v6117
        %v6127 = vmul.f32 %v6108, %v6117
        %v6128 = vmul.f32 %v6109, %v6117
        %v6129 = vmul.f32 %v6110, %v6117
        %v6130 = vmul.f32 %v6111, %v6117
        %v6131 = vmul.f32 %v6112, %v6117
        %v6132 = vmul.f32 %v6113, %v6117
        %v6133 = vmul.f32 %v6114, %v6117
        %v6134 = vmul.f32 %v6115, %v6117
        %v6136 = vperm.slane %v5795, 0
        %v6138 = vadd.f32 %v6119, %v6136
        %v6139 = vadd.f32 %v6120, %v6136
        %v6140 = vadd.f32 %v6121, %v6136
        %v6141 = vadd.f32 %v6122, %v6136
        %v6142 = vadd.f32 %v6123, %v6136
        %v6143 = vadd.f32 %v6124, %v6136
        %v6144 = vadd.f32 %v6125, %v6136
        %v6145 = vadd.f32 %v6126, %v6136
        %v6146 = vadd.f32 %v6127, %v6136
        %v6147 = vadd.f32 %v6128, %v6136
        %v6148 = vadd.f32 %v6129, %v6136
        %v6149 = vadd.f32 %v6130, %v6136
        %v6150 = vadd.f32 %v6131, %v6136
        %v6151 = vadd.f32 %v6132, %v6136
        %v6152 = vadd.f32 %v6133, %v6136
        %v6153 = vadd.f32 %v6134, %v6136
        %v6154 = vpack.c.bf16 %v6139, %v6138
        %v6155 = vpack.c.bf16 %v6141, %v6140
        %v6156 = vpack.c.bf16 %v6143, %v6142
        %v6157 = vpack.c.bf16 %v6145, %v6144
        %v6158 = vpack.c.bf16 %v6147, %v6146
        %v6159 = vpack.c.bf16 %v6149, %v6148
        %v6160 = vpack.c.bf16 %v6151, %v6150
        %v6161 = vpack.c.bf16 %v6153, %v6152
        %s6162 = scalar_lea.vmem %s10, 256
        %v6163 = vld [vmem:[%s6162] sm:$0xff]
        %v6164 = vld [vmem:[%s6162 + $0x8] sm:$0xff]
        %v6165 = vld [vmem:[%s6162 + $0x10] sm:$0xff]
        %v6166 = vld [vmem:[%s6162 + $0x18] sm:$0xff]
        %v6167 = vld [vmem:[%s6162 + $0x20] sm:$0xff]
        %v6168 = vld [vmem:[%s6162 + $0x28] sm:$0xff]
        %v6169 = vld [vmem:[%s6162 + $0x30] sm:$0xff]
        %v6170 = vld [vmem:[%s6162 + $0x38] sm:$0xff]
        %v6171 = vld [vmem:[%s6162 + $0x40] sm:$0xff]
        %v6172 = vld [vmem:[%s6162 + $0x48] sm:$0xff]
        %v6173 = vld [vmem:[%s6162 + $0x50] sm:$0xff]
        %v6174 = vld [vmem:[%s6162 + $0x58] sm:$0xff]
        %v6175 = vld [vmem:[%s6162 + $0x60] sm:$0xff]
        %v6176 = vld [vmem:[%s6162 + $0x68] sm:$0xff]
        %v6177 = vld [vmem:[%s6162 + $0x70] sm:$0xff]
        %v6178 = vld [vmem:[%s6162 + $0x78] sm:$0xff]
        %v6179 = vld [vmem:[%s6162 + $0x80] sm:$0xff]
        %v6180 = vld [vmem:[%s6162 + $0x88] sm:$0xff]
        %v6181 = vld [vmem:[%s6162 + $0x90] sm:$0xff]
        %v6182 = vld [vmem:[%s6162 + $0x98] sm:$0xff]
        %v6183 = vld [vmem:[%s6162 + $0xa0] sm:$0xff]
        %v6184 = vld [vmem:[%s6162 + $0xa8] sm:$0xff]
        %v6185 = vld [vmem:[%s6162 + $0xb0] sm:$0xff]
        %v6186 = vld [vmem:[%s6162 + $0xb8] sm:$0xff]
        %v6187 = vld [vmem:[%s6162 + $0xc0] sm:$0xff]
        %v6188 = vld [vmem:[%s6162 + $0xc8] sm:$0xff]
        %v6189 = vld [vmem:[%s6162 + $0xd0] sm:$0xff]
        %v6190 = vld [vmem:[%s6162 + $0xd8] sm:$0xff]
        %v6191 = vld [vmem:[%s6162 + $0xe0] sm:$0xff]
        %v6192 = vld [vmem:[%s6162 + $0xe8] sm:$0xff]
        %v6193 = vld [vmem:[%s6162 + $0xf0] sm:$0xff]
        %v6194 = vld [vmem:[%s6162 + $0xf8] sm:$0xff]
        %s6195 = scalar_lea.vmem %s11, 4
        %v6196 = vld [vmem:[%s6195] sm:$0xf]
        %v6198 = vperm.slane %v6196, 0
        %v6199 = vperm.slane %v6196, 1
        %v6200 = vperm.slane %v6196, 2
        %v6201 = vperm.slane %v6196, 3
        %v6238 = vunpack.c.l.b16 %v6163
        %v6239 = vunpack.c.h.b16 %v6163
        %v6240 = vunpack.c.l.b16 %v6164
        %v6241 = vunpack.c.h.b16 %v6164
        %v6242 = vunpack.c.l.b16 %v6165
        %v6243 = vunpack.c.h.b16 %v6165
        %v6244 = vunpack.c.l.b16 %v6166
        %v6245 = vunpack.c.h.b16 %v6166
        %v6246 = vunpack.c.l.b16 %v6167
        %v6247 = vunpack.c.h.b16 %v6167
        %v6248 = vunpack.c.l.b16 %v6168
        %v6249 = vunpack.c.h.b16 %v6168
        %v6250 = vunpack.c.l.b16 %v6169
        %v6251 = vunpack.c.h.b16 %v6169
        %v6252 = vunpack.c.l.b16 %v6170
        %v6253 = vunpack.c.h.b16 %v6170
        %v6254 = vunpack.c.l.b16 %v6171
        %v6255 = vunpack.c.h.b16 %v6171
        %v6256 = vunpack.c.l.b16 %v6172
        %v6257 = vunpack.c.h.b16 %v6172
        %v6258 = vunpack.c.l.b16 %v6173
        %v6259 = vunpack.c.h.b16 %v6173
        %v6260 = vunpack.c.l.b16 %v6174
        %v6261 = vunpack.c.h.b16 %v6174
        %v6262 = vunpack.c.l.b16 %v6175
        %v6263 = vunpack.c.h.b16 %v6175
        %v6264 = vunpack.c.l.b16 %v6176
        %v6265 = vunpack.c.h.b16 %v6176
        %v6266 = vunpack.c.l.b16 %v6177
        %v6267 = vunpack.c.h.b16 %v6177
        %v6268 = vunpack.c.l.b16 %v6178
        %v6269 = vunpack.c.h.b16 %v6178
        %v6270 = vunpack.c.l.b16 %v6179
        %v6271 = vunpack.c.h.b16 %v6179
        %v6272 = vunpack.c.l.b16 %v6180
        %v6273 = vunpack.c.h.b16 %v6180
        %v6274 = vunpack.c.l.b16 %v6181
        %v6275 = vunpack.c.h.b16 %v6181
        %v6276 = vunpack.c.l.b16 %v6182
        %v6277 = vunpack.c.h.b16 %v6182
        %v6278 = vunpack.c.l.b16 %v6183
        %v6279 = vunpack.c.h.b16 %v6183
        %v6280 = vunpack.c.l.b16 %v6184
        %v6281 = vunpack.c.h.b16 %v6184
        %v6282 = vunpack.c.l.b16 %v6185
        %v6283 = vunpack.c.h.b16 %v6185
        %v6284 = vunpack.c.l.b16 %v6186
        %v6285 = vunpack.c.h.b16 %v6186
        %v6286 = vunpack.c.l.b16 %v6187
        %v6287 = vunpack.c.h.b16 %v6187
        %v6288 = vunpack.c.l.b16 %v6188
        %v6289 = vunpack.c.h.b16 %v6188
        %v6290 = vunpack.c.l.b16 %v6189
        %v6291 = vunpack.c.h.b16 %v6189
        %v6292 = vunpack.c.l.b16 %v6190
        %v6293 = vunpack.c.h.b16 %v6190
        %v6294 = vunpack.c.l.b16 %v6191
        %v6295 = vunpack.c.h.b16 %v6191
        %v6296 = vunpack.c.l.b16 %v6192
        %v6297 = vunpack.c.h.b16 %v6192
        %v6298 = vunpack.c.l.b16 %v6193
        %v6299 = vunpack.c.h.b16 %v6193
        %v6300 = vunpack.c.l.b16 %v6194
        %v6301 = vunpack.c.h.b16 %v6194
        %v6302 = vpack.c.b16 %v6242, %v6238
        %v6303 = vpack.c.b16 %v6243, %v6239
        %v6304 = vpack.c.b16 %v6244, %v6240
        %v6305 = vpack.c.b16 %v6245, %v6241
        %v6306 = vpack.c.b16 %v6250, %v6246
        %v6307 = vpack.c.b16 %v6251, %v6247
        %v6308 = vpack.c.b16 %v6252, %v6248
        %v6309 = vpack.c.b16 %v6253, %v6249
        %v6310 = vpack.c.b16 %v6258, %v6254
        %v6311 = vpack.c.b16 %v6259, %v6255
        %v6312 = vpack.c.b16 %v6260, %v6256
        %v6313 = vpack.c.b16 %v6261, %v6257
        %v6314 = vpack.c.b16 %v6266, %v6262
        %v6315 = vpack.c.b16 %v6267, %v6263
        %v6316 = vpack.c.b16 %v6268, %v6264
        %v6317 = vpack.c.b16 %v6269, %v6265
        %v6318 = vpack.c.b16 %v6274, %v6270
        %v6319 = vpack.c.b16 %v6275, %v6271
        %v6320 = vpack.c.b16 %v6276, %v6272
        %v6321 = vpack.c.b16 %v6277, %v6273
        %v6322 = vpack.c.b16 %v6282, %v6278
        %v6323 = vpack.c.b16 %v6283, %v6279
        %v6324 = vpack.c.b16 %v6284, %v6280
        %v6325 = vpack.c.b16 %v6285, %v6281
        %v6326 = vpack.c.b16 %v6290, %v6286
        %v6327 = vpack.c.b16 %v6291, %v6287
        %v6328 = vpack.c.b16 %v6292, %v6288
        %v6329 = vpack.c.b16 %v6293, %v6289
        %v6330 = vpack.c.b16 %v6298, %v6294
        %v6331 = vpack.c.b16 %v6299, %v6295
        %v6332 = vpack.c.b16 %v6300, %v6296
        %v6333 = vpack.c.b16 %v6301, %v6297
        %6366 = vmatpush.bf16.msra.mxu0 %v6330
        %6367 = vmatpush.bf16.msra.mxu0 %v6326
        %6368 = vmatpush.bf16.msra.mxu0 %v6322
        %6369 = vmatpush.bf16.msra.mxu0 %v6318
        %6370 = vmatpush.bf16.msra.mxu0 %v6314
        %6371 = vmatpush.bf16.msra.mxu0 %v6310
        %6372 = vmatpush.bf16.msra.mxu0 %v6306
        %6373 = vmatpush.bf16.msra.mxu0 %v6302
        %6374 = vmatmul.bf16.gmra.mxu0 %v6154
        %v6375 = vpop.f32.mrf.mxu0
        %v6376 = vadd.f32 %v6198, %v6375
        %v6377 = vpop.f32.mrf.mxu0
        %v6378 = vadd.f32 %v6198, %v6377
        %6379 = vmatmul.bf16.gmra.mxu0 %v6155
        %v6380 = vpop.f32.mrf.mxu0
        %v6381 = vadd.f32 %v6198, %v6380
        %v6382 = vpop.f32.mrf.mxu0
        %v6383 = vadd.f32 %v6198, %v6382
        %6384 = vmatmul.bf16.gmra.mxu0 %v6156
        %v6385 = vpop.f32.mrf.mxu0
        %v6386 = vadd.f32 %v6198, %v6385
        %v6387 = vpop.f32.mrf.mxu0
        %v6388 = vadd.f32 %v6198, %v6387
        %6389 = vmatmul.bf16.gmra.mxu0 %v6157
        %v6390 = vpop.f32.mrf.mxu0
        %v6391 = vadd.f32 %v6198, %v6390
        %v6392 = vpop.f32.mrf.mxu0
        %v6393 = vadd.f32 %v6198, %v6392
        %6394 = vmatmul.bf16.gmra.mxu0 %v6158
        %v6395 = vpop.f32.mrf.mxu0
        %v6396 = vadd.f32 %v6198, %v6395
        %v6397 = vpop.f32.mrf.mxu0
        %v6398 = vadd.f32 %v6198, %v6397
        %6399 = vmatmul.bf16.gmra.mxu0 %v6159
        %v6400 = vpop.f32.mrf.mxu0
        %v6401 = vadd.f32 %v6198, %v6400
        %v6402 = vpop.f32.mrf.mxu0
        %v6403 = vadd.f32 %v6198, %v6402
        %6404 = vmatmul.bf16.gmra.mxu0 %v6160
        %v6405 = vpop.f32.mrf.mxu0
        %v6406 = vadd.f32 %v6198, %v6405
        %v6407 = vpop.f32.mrf.mxu0
        %v6408 = vadd.f32 %v6198, %v6407
        %6409 = vmatmul.bf16.gmra.mxu0 %v6161
        %v6410 = vpop.f32.mrf.mxu0
        %v6411 = vadd.f32 %v6198, %v6410
        %v6412 = vpop.f32.mrf.mxu0
        %v6413 = vadd.f32 %v6198, %v6412
        %6414 = vdwg.mxu0
        %6415 = vmatpush.bf16.msra.mxu0 %v6331
        %6416 = vmatpush.bf16.msra.mxu0 %v6327
        %6417 = vmatpush.bf16.msra.mxu0 %v6323
        %6418 = vmatpush.bf16.msra.mxu0 %v6319
        %6419 = vmatpush.bf16.msra.mxu0 %v6315
        %6420 = vmatpush.bf16.msra.mxu0 %v6311
        %6421 = vmatpush.bf16.msra.mxu0 %v6307
        %6422 = vmatpush.bf16.msra.mxu0 %v6303
        %6423 = vmatmul.bf16.gmra.mxu0 %v6154
        %v6424 = vpop.f32.mrf.mxu0
        %v6425 = vadd.f32 %v6199, %v6424
        %v6426 = vpop.f32.mrf.mxu0
        %v6427 = vadd.f32 %v6199, %v6426
        %6428 = vmatmul.bf16.gmra.mxu0 %v6155
        %v6429 = vpop.f32.mrf.mxu0
        %v6430 = vadd.f32 %v6199, %v6429
        %v6431 = vpop.f32.mrf.mxu0
        %v6432 = vadd.f32 %v6199, %v6431
        %6433 = vmatmul.bf16.gmra.mxu0 %v6156
        %v6434 = vpop.f32.mrf.mxu0
        %v6435 = vadd.f32 %v6199, %v6434
        %v6436 = vpop.f32.mrf.mxu0
        %v6437 = vadd.f32 %v6199, %v6436
        %6438 = vmatmul.bf16.gmra.mxu0 %v6157
        %v6439 = vpop.f32.mrf.mxu0
        %v6440 = vadd.f32 %v6199, %v6439
        %v6441 = vpop.f32.mrf.mxu0
        %v6442 = vadd.f32 %v6199, %v6441
        %6443 = vmatmul.bf16.gmra.mxu0 %v6158
        %v6444 = vpop.f32.mrf.mxu0
        %v6445 = vadd.f32 %v6199, %v6444
        %v6446 = vpop.f32.mrf.mxu0
        %v6447 = vadd.f32 %v6199, %v6446
        %6448 = vmatmul.bf16.gmra.mxu0 %v6159
        %v6449 = vpop.f32.mrf.mxu0
        %v6450 = vadd.f32 %v6199, %v6449
        %v6451 = vpop.f32.mrf.mxu0
        %v6452 = vadd.f32 %v6199, %v6451
        %6453 = vmatmul.bf16.gmra.mxu0 %v6160
        %v6454 = vpop.f32.mrf.mxu0
        %v6455 = vadd.f32 %v6199, %v6454
        %v6456 = vpop.f32.mrf.mxu0
        %v6457 = vadd.f32 %v6199, %v6456
        %6458 = vmatmul.bf16.gmra.mxu0 %v6161
        %v6459 = vpop.f32.mrf.mxu0
        %v6460 = vadd.f32 %v6199, %v6459
        %v6461 = vpop.f32.mrf.mxu0
        %v6462 = vadd.f32 %v6199, %v6461
        %6463 = vdwg.mxu0
        %6464 = vmatpush.bf16.msra.mxu0 %v6332
        %6465 = vmatpush.bf16.msra.mxu0 %v6328
        %6466 = vmatpush.bf16.msra.mxu0 %v6324
        %6467 = vmatpush.bf16.msra.mxu0 %v6320
        %6468 = vmatpush.bf16.msra.mxu0 %v6316
        %6469 = vmatpush.bf16.msra.mxu0 %v6312
        %6470 = vmatpush.bf16.msra.mxu0 %v6308
        %6471 = vmatpush.bf16.msra.mxu0 %v6304
        %6472 = vmatmul.bf16.gmra.mxu0 %v6154
        %v6473 = vpop.f32.mrf.mxu0
        %v6474 = vadd.f32 %v6200, %v6473
        %v6475 = vpop.f32.mrf.mxu0
        %v6476 = vadd.f32 %v6200, %v6475
        %6477 = vmatmul.bf16.gmra.mxu0 %v6155
        %v6478 = vpop.f32.mrf.mxu0
        %v6479 = vadd.f32 %v6200, %v6478
        %v6480 = vpop.f32.mrf.mxu0
        %v6481 = vadd.f32 %v6200, %v6480
        %6482 = vmatmul.bf16.gmra.mxu0 %v6156
        %v6483 = vpop.f32.mrf.mxu0
        %v6484 = vadd.f32 %v6200, %v6483
        %v6485 = vpop.f32.mrf.mxu0
        %v6486 = vadd.f32 %v6200, %v6485
        %6487 = vmatmul.bf16.gmra.mxu0 %v6157
        %v6488 = vpop.f32.mrf.mxu0
        %v6489 = vadd.f32 %v6200, %v6488
        %v6490 = vpop.f32.mrf.mxu0
        %v6491 = vadd.f32 %v6200, %v6490
        %6492 = vmatmul.bf16.gmra.mxu0 %v6158
        %v6493 = vpop.f32.mrf.mxu0
        %v6494 = vadd.f32 %v6200, %v6493
        %v6495 = vpop.f32.mrf.mxu0
        %v6496 = vadd.f32 %v6200, %v6495
        %6497 = vmatmul.bf16.gmra.mxu0 %v6159
        %v6498 = vpop.f32.mrf.mxu0
        %v6499 = vadd.f32 %v6200, %v6498
        %v6500 = vpop.f32.mrf.mxu0
        %v6501 = vadd.f32 %v6200, %v6500
        %6502 = vmatmul.bf16.gmra.mxu0 %v6160
        %v6503 = vpop.f32.mrf.mxu0
        %v6504 = vadd.f32 %v6200, %v6503
        %v6505 = vpop.f32.mrf.mxu0
        %v6506 = vadd.f32 %v6200, %v6505
        %6507 = vmatmul.bf16.gmra.mxu0 %v6161
        %v6508 = vpop.f32.mrf.mxu0
        %v6509 = vadd.f32 %v6200, %v6508
        %v6510 = vpop.f32.mrf.mxu0
        %v6511 = vadd.f32 %v6200, %v6510
        %6512 = vdwg.mxu0
        %6513 = vmatpush.bf16.msra.mxu0 %v6333
        %6514 = vmatpush.bf16.msra.mxu0 %v6329
        %6515 = vmatpush.bf16.msra.mxu0 %v6325
        %6516 = vmatpush.bf16.msra.mxu0 %v6321
        %6517 = vmatpush.bf16.msra.mxu0 %v6317
        %6518 = vmatpush.bf16.msra.mxu0 %v6313
        %6519 = vmatpush.bf16.msra.mxu0 %v6309
        %6520 = vmatpush.bf16.msra.mxu0 %v6305
        %6521 = vmatmul.bf16.gmra.mxu0 %v6154
        %v6522 = vpop.f32.mrf.mxu0
        %v6523 = vadd.f32 %v6201, %v6522
        %v6524 = vpop.f32.mrf.mxu0
        %v6525 = vadd.f32 %v6201, %v6524
        %6526 = vmatmul.bf16.gmra.mxu0 %v6155
        %v6527 = vpop.f32.mrf.mxu0
        %v6528 = vadd.f32 %v6201, %v6527
        %v6529 = vpop.f32.mrf.mxu0
        %v6530 = vadd.f32 %v6201, %v6529
        %6531 = vmatmul.bf16.gmra.mxu0 %v6156
        %v6532 = vpop.f32.mrf.mxu0
        %v6533 = vadd.f32 %v6201, %v6532
        %v6534 = vpop.f32.mrf.mxu0
        %v6535 = vadd.f32 %v6201, %v6534
        %6536 = vmatmul.bf16.gmra.mxu0 %v6157
        %v6537 = vpop.f32.mrf.mxu0
        %v6538 = vadd.f32 %v6201, %v6537
        %v6539 = vpop.f32.mrf.mxu0
        %v6540 = vadd.f32 %v6201, %v6539
        %6541 = vmatmul.bf16.gmra.mxu0 %v6158
        %v6542 = vpop.f32.mrf.mxu0
        %v6543 = vadd.f32 %v6201, %v6542
        %v6544 = vpop.f32.mrf.mxu0
        %v6545 = vadd.f32 %v6201, %v6544
        %6546 = vmatmul.bf16.gmra.mxu0 %v6159
        %v6547 = vpop.f32.mrf.mxu0
        %v6548 = vadd.f32 %v6201, %v6547
        %v6549 = vpop.f32.mrf.mxu0
        %v6550 = vadd.f32 %v6201, %v6549
        %6551 = vmatmul.bf16.gmra.mxu0 %v6160
        %v6552 = vpop.f32.mrf.mxu0
        %v6553 = vadd.f32 %v6201, %v6552
        %v6554 = vpop.f32.mrf.mxu0
        %v6555 = vadd.f32 %v6201, %v6554
        %6556 = vmatmul.bf16.gmra.mxu0 %v6161
        %v6557 = vpop.f32.mrf.mxu0
        %v6558 = vadd.f32 %v6201, %v6557
        %v6559 = vpop.f32.mrf.mxu0
        %v6560 = vadd.f32 %v6201, %v6559
        %6561 = vdwg.mxu0
        %v6562 = vmul.f32 %v6376, 0.5
        %v6563 = vmul.f32 %v6425, 0.5
        %v6564 = vmul.f32 %v6474, 0.5
        %v6565 = vmul.f32 %v6523, 0.5
        %v6566 = vmul.f32 %v6378, 0.5
        %v6567 = vmul.f32 %v6427, 0.5
        %v6568 = vmul.f32 %v6476, 0.5
        %v6569 = vmul.f32 %v6525, 0.5
        %v6570 = vmul.f32 %v6381, 0.5
        %v6571 = vmul.f32 %v6430, 0.5
        %v6572 = vmul.f32 %v6479, 0.5
        %v6573 = vmul.f32 %v6528, 0.5
        %v6574 = vmul.f32 %v6383, 0.5
        %v6575 = vmul.f32 %v6432, 0.5
        %v6576 = vmul.f32 %v6481, 0.5
        %v6577 = vmul.f32 %v6530, 0.5
        %v6578 = vmul.f32 %v6386, 0.5
        %v6579 = vmul.f32 %v6435, 0.5
        %v6580 = vmul.f32 %v6484, 0.5
        %v6581 = vmul.f32 %v6533, 0.5
        %v6582 = vmul.f32 %v6388, 0.5
        %v6583 = vmul.f32 %v6437, 0.5
        %v6584 = vmul.f32 %v6486, 0.5
        %v6585 = vmul.f32 %v6535, 0.5
        %v6586 = vmul.f32 %v6391, 0.5
        %v6587 = vmul.f32 %v6440, 0.5
        %v6588 = vmul.f32 %v6489, 0.5
        %v6589 = vmul.f32 %v6538, 0.5
        %v6590 = vmul.f32 %v6393, 0.5
        %v6591 = vmul.f32 %v6442, 0.5
        %v6592 = vmul.f32 %v6491, 0.5
        %v6593 = vmul.f32 %v6540, 0.5
        %v6594 = vmul.f32 %v6396, 0.5
        %v6595 = vmul.f32 %v6445, 0.5
        %v6596 = vmul.f32 %v6494, 0.5
        %v6597 = vmul.f32 %v6543, 0.5
        %v6598 = vmul.f32 %v6398, 0.5
        %v6599 = vmul.f32 %v6447, 0.5
        %v6600 = vmul.f32 %v6496, 0.5
        %v6601 = vmul.f32 %v6545, 0.5
        %v6602 = vmul.f32 %v6401, 0.5
        %v6603 = vmul.f32 %v6450, 0.5
        %v6604 = vmul.f32 %v6499, 0.5
        %v6605 = vmul.f32 %v6548, 0.5
        %v6606 = vmul.f32 %v6403, 0.5
        %v6607 = vmul.f32 %v6452, 0.5
        %v6608 = vmul.f32 %v6501, 0.5
        %v6609 = vmul.f32 %v6550, 0.5
        %v6610 = vmul.f32 %v6406, 0.5
        %v6611 = vmul.f32 %v6455, 0.5
        %v6612 = vmul.f32 %v6504, 0.5
        %v6613 = vmul.f32 %v6553, 0.5
        %v6614 = vmul.f32 %v6408, 0.5
        %v6615 = vmul.f32 %v6457, 0.5
        %v6616 = vmul.f32 %v6506, 0.5
        %v6617 = vmul.f32 %v6555, 0.5
        %v6618 = vmul.f32 %v6411, 0.5
        %v6619 = vmul.f32 %v6460, 0.5
        %v6620 = vmul.f32 %v6509, 0.5
        %v6621 = vmul.f32 %v6558, 0.5
        %v6622 = vmul.f32 %v6413, 0.5
        %v6623 = vmul.f32 %v6462, 0.5
        %v6624 = vmul.f32 %v6511, 0.5
        %v6625 = vmul.f32 %v6560, 0.5
        %v6626 = vmul.f32 %v6376, 0.044715
        %v6627 = vmul.f32 %v6425, 0.044715
        %v6628 = vmul.f32 %v6474, 0.044715
        %v6629 = vmul.f32 %v6523, 0.044715
        %v6630 = vmul.f32 %v6378, 0.044715
        %v6631 = vmul.f32 %v6427, 0.044715
        %v6632 = vmul.f32 %v6476, 0.044715
        %v6633 = vmul.f32 %v6525, 0.044715
        %v6634 = vmul.f32 %v6381, 0.044715
        %v6635 = vmul.f32 %v6430, 0.044715
        %v6636 = vmul.f32 %v6479, 0.044715
        %v6637 = vmul.f32 %v6528, 0.044715
        %v6638 = vmul.f32 %v6383, 0.044715
        %v6639 = vmul.f32 %v6432, 0.044715
        %v6640 = vmul.f32 %v6481, 0.044715
        %v6641 = vmul.f32 %v6530, 0.044715
        %v6642 = vmul.f32 %v6386, 0.044715
        %v6643 = vmul.f32 %v6435, 0.044715
        %v6644 = vmul.f32 %v6484, 0.044715
        %v6645 = vmul.f32 %v6533, 0.044715
        %v6646 = vmul.f32 %v6388, 0.044715
        %v6647 = vmul.f32 %v6437, 0.044715
        %v6648 = vmul.f32 %v6486, 0.044715
        %v6649 = vmul.f32 %v6535, 0.044715
        %v6650 = vmul.f32 %v6391, 0.044715
        %v6651 = vmul.f32 %v6440, 0.044715
        %v6652 = vmul.f32 %v6489, 0.044715
        %v6653 = vmul.f32 %v6538, 0.044715
        %v6654 = vmul.f32 %v6393, 0.044715
        %v6655 = vmul.f32 %v6442, 0.044715
        %v6656 = vmul.f32 %v6491, 0.044715
        %v6657 = vmul.f32 %v6540, 0.044715
        %v6658 = vmul.f32 %v6396, 0.044715
        %v6659 = vmul.f32 %v6445, 0.044715
        %v6660 = vmul.f32 %v6494, 0.044715
        %v6661 = vmul.f32 %v6543, 0.044715
        %v6662 = vmul.f32 %v6398, 0.044715
        %v6663 = vmul.f32 %v6447, 0.044715
        %v6664 = vmul.f32 %v6496, 0.044715
        %v6665 = vmul.f32 %v6545, 0.044715
        %v6666 = vmul.f32 %v6401, 0.044715
        %v6667 = vmul.f32 %v6450, 0.044715
        %v6668 = vmul.f32 %v6499, 0.044715
        %v6669 = vmul.f32 %v6548, 0.044715
        %v6670 = vmul.f32 %v6403, 0.044715
        %v6671 = vmul.f32 %v6452, 0.044715
        %v6672 = vmul.f32 %v6501, 0.044715
        %v6673 = vmul.f32 %v6550, 0.044715
        %v6674 = vmul.f32 %v6406, 0.044715
        %v6675 = vmul.f32 %v6455, 0.044715
        %v6676 = vmul.f32 %v6504, 0.044715
        %v6677 = vmul.f32 %v6553, 0.044715
        %v6678 = vmul.f32 %v6408, 0.044715
        %v6679 = vmul.f32 %v6457, 0.044715
        %v6680 = vmul.f32 %v6506, 0.044715
        %v6681 = vmul.f32 %v6555, 0.044715
        %v6682 = vmul.f32 %v6411, 0.044715
        %v6683 = vmul.f32 %v6460, 0.044715
        %v6684 = vmul.f32 %v6509, 0.044715
        %v6685 = vmul.f32 %v6558, 0.044715
        %v6686 = vmul.f32 %v6413, 0.044715
        %v6687 = vmul.f32 %v6462, 0.044715
        %v6688 = vmul.f32 %v6511, 0.044715
        %v6689 = vmul.f32 %v6560, 0.044715
        %v6690 = vmul.f32 %v6626, %v6376
        %v6691 = vmul.f32 %v6627, %v6425
        %v6692 = vmul.f32 %v6628, %v6474
        %v6693 = vmul.f32 %v6629, %v6523
        %v6694 = vmul.f32 %v6630, %v6378
        %v6695 = vmul.f32 %v6631, %v6427
        %v6696 = vmul.f32 %v6632, %v6476
        %v6697 = vmul.f32 %v6633, %v6525
        %v6698 = vmul.f32 %v6634, %v6381
        %v6699 = vmul.f32 %v6635, %v6430
        %v6700 = vmul.f32 %v6636, %v6479
        %v6701 = vmul.f32 %v6637, %v6528
        %v6702 = vmul.f32 %v6638, %v6383
        %v6703 = vmul.f32 %v6639, %v6432
        %v6704 = vmul.f32 %v6640, %v6481
        %v6705 = vmul.f32 %v6641, %v6530
        %v6706 = vmul.f32 %v6642, %v6386
        %v6707 = vmul.f32 %v6643, %v6435
        %v6708 = vmul.f32 %v6644, %v6484
        %v6709 = vmul.f32 %v6645, %v6533
        %v6710 = vmul.f32 %v6646, %v6388
        %v6711 = vmul.f32 %v6647, %v6437
        %v6712 = vmul.f32 %v6648, %v6486
        %v6713 = vmul.f32 %v6649, %v6535
        %v6714 = vmul.f32 %v6650, %v6391
        %v6715 = vmul.f32 %v6651, %v6440
        %v6716 = vmul.f32 %v6652, %v6489
        %v6717 = vmul.f32 %v6653, %v6538
        %v6718 = vmul.f32 %v6654, %v6393
        %v6719 = vmul.f32 %v6655, %v6442
        %v6720 = vmul.f32 %v6656, %v6491
        %v6721 = vmul.f32 %v6657, %v6540
        %v6722 = vmul.f32 %v6658, %v6396
        %v6723 = vmul.f32 %v6659, %v6445
        %v6724 = vmul.f32 %v6660, %v6494
        %v6725 = vmul.f32 %v6661, %v6543
        %v6726 = vmul.f32 %v6662, %v6398
        %v6727 = vmul.f32 %v6663, %v6447
        %v6728 = vmul.f32 %v6664, %v6496
        %v6729 = vmul.f32 %v6665, %v6545
        %v6730 = vmul.f32 %v6666, %v6401
        %v6731 = vmul.f32 %v6667, %v6450
        %v6732 = vmul.f32 %v6668, %v6499
        %v6733 = vmul.f32 %v6669, %v6548
        %v6734 = vmul.f32 %v6670, %v6403
        %v6735 = vmul.f32 %v6671, %v6452
        %v6736 = vmul.f32 %v6672, %v6501
        %v6737 = vmul.f32 %v6673, %v6550
        %v6738 = vmul.f32 %v6674, %v6406
        %v6739 = vmul.f32 %v6675, %v6455
        %v6740 = vmul.f32 %v6676, %v6504
        %v6741 = vmul.f32 %v6677, %v6553
        %v6742 = vmul.f32 %v6678, %v6408
        %v6743 = vmul.f32 %v6679, %v6457
        %v6744 = vmul.f32 %v6680, %v6506
        %v6745 = vmul.f32 %v6681, %v6555
        %v6746 = vmul.f32 %v6682, %v6411
        %v6747 = vmul.f32 %v6683, %v6460
        %v6748 = vmul.f32 %v6684, %v6509
        %v6749 = vmul.f32 %v6685, %v6558
        %v6750 = vmul.f32 %v6686, %v6413
        %v6751 = vmul.f32 %v6687, %v6462
        %v6752 = vmul.f32 %v6688, %v6511
        %v6753 = vmul.f32 %v6689, %v6560
        %v6754 = vmul.f32 %v6690, %v6376
        %v6755 = vmul.f32 %v6691, %v6425
        %v6756 = vmul.f32 %v6692, %v6474
        %v6757 = vmul.f32 %v6693, %v6523
        %v6758 = vmul.f32 %v6694, %v6378
        %v6759 = vmul.f32 %v6695, %v6427
        %v6760 = vmul.f32 %v6696, %v6476
        %v6761 = vmul.f32 %v6697, %v6525
        %v6762 = vmul.f32 %v6698, %v6381
        %v6763 = vmul.f32 %v6699, %v6430
        %v6764 = vmul.f32 %v6700, %v6479
        %v6765 = vmul.f32 %v6701, %v6528
        %v6766 = vmul.f32 %v6702, %v6383
        %v6767 = vmul.f32 %v6703, %v6432
        %v6768 = vmul.f32 %v6704, %v6481
        %v6769 = vmul.f32 %v6705, %v6530
        %v6770 = vmul.f32 %v6706, %v6386
        %v6771 = vmul.f32 %v6707, %v6435
        %v6772 = vmul.f32 %v6708, %v6484
        %v6773 = vmul.f32 %v6709, %v6533
        %v6774 = vmul.f32 %v6710, %v6388
        %v6775 = vmul.f32 %v6711, %v6437
        %v6776 = vmul.f32 %v6712, %v6486
        %v6777 = vmul.f32 %v6713, %v6535
        %v6778 = vmul.f32 %v6714, %v6391
        %v6779 = vmul.f32 %v6715, %v6440
        %v6780 = vmul.f32 %v6716, %v6489
        %v6781 = vmul.f32 %v6717, %v6538
        %v6782 = vmul.f32 %v6718, %v6393
        %v6783 = vmul.f32 %v6719, %v6442
        %v6784 = vmul.f32 %v6720, %v6491
        %v6785 = vmul.f32 %v6721, %v6540
        %v6786 = vmul.f32 %v6722, %v6396
        %v6787 = vmul.f32 %v6723, %v6445
        %v6788 = vmul.f32 %v6724, %v6494
        %v6789 = vmul.f32 %v6725, %v6543
        %v6790 = vmul.f32 %v6726, %v6398
        %v6791 = vmul.f32 %v6727, %v6447
        %v6792 = vmul.f32 %v6728, %v6496
        %v6793 = vmul.f32 %v6729, %v6545
        %v6794 = vmul.f32 %v6730, %v6401
        %v6795 = vmul.f32 %v6731, %v6450
        %v6796 = vmul.f32 %v6732, %v6499
        %v6797 = vmul.f32 %v6733, %v6548
        %v6798 = vmul.f32 %v6734, %v6403
        %v6799 = vmul.f32 %v6735, %v6452
        %v6800 = vmul.f32 %v6736, %v6501
        %v6801 = vmul.f32 %v6737, %v6550
        %v6802 = vmul.f32 %v6738, %v6406
        %v6803 = vmul.f32 %v6739, %v6455
        %v6804 = vmul.f32 %v6740, %v6504
        %v6805 = vmul.f32 %v6741, %v6553
        %v6806 = vmul.f32 %v6742, %v6408
        %v6807 = vmul.f32 %v6743, %v6457
        %v6808 = vmul.f32 %v6744, %v6506
        %v6809 = vmul.f32 %v6745, %v6555
        %v6810 = vmul.f32 %v6746, %v6411
        %v6811 = vmul.f32 %v6747, %v6460
        %v6812 = vmul.f32 %v6748, %v6509
        %v6813 = vmul.f32 %v6749, %v6558
        %v6814 = vmul.f32 %v6750, %v6413
        %v6815 = vmul.f32 %v6751, %v6462
        %v6816 = vmul.f32 %v6752, %v6511
        %v6817 = vmul.f32 %v6753, %v6560
        %v6818 = vadd.f32 %v6376, %v6754
        %v6819 = vadd.f32 %v6425, %v6755
        %v6820 = vadd.f32 %v6474, %v6756
        %v6821 = vadd.f32 %v6523, %v6757
        %v6822 = vadd.f32 %v6378, %v6758
        %v6823 = vadd.f32 %v6427, %v6759
        %v6824 = vadd.f32 %v6476, %v6760
        %v6825 = vadd.f32 %v6525, %v6761
        %v6826 = vadd.f32 %v6381, %v6762
        %v6827 = vadd.f32 %v6430, %v6763
        %v6828 = vadd.f32 %v6479, %v6764
        %v6829 = vadd.f32 %v6528, %v6765
        %v6830 = vadd.f32 %v6383, %v6766
        %v6831 = vadd.f32 %v6432, %v6767
        %v6832 = vadd.f32 %v6481, %v6768
        %v6833 = vadd.f32 %v6530, %v6769
        %v6834 = vadd.f32 %v6386, %v6770
        %v6835 = vadd.f32 %v6435, %v6771
        %v6836 = vadd.f32 %v6484, %v6772
        %v6837 = vadd.f32 %v6533, %v6773
        %v6838 = vadd.f32 %v6388, %v6774
        %v6839 = vadd.f32 %v6437, %v6775
        %v6840 = vadd.f32 %v6486, %v6776
        %v6841 = vadd.f32 %v6535, %v6777
        %v6842 = vadd.f32 %v6391, %v6778
        %v6843 = vadd.f32 %v6440, %v6779
        %v6844 = vadd.f32 %v6489, %v6780
        %v6845 = vadd.f32 %v6538, %v6781
        %v6846 = vadd.f32 %v6393, %v6782
        %v6847 = vadd.f32 %v6442, %v6783
        %v6848 = vadd.f32 %v6491, %v6784
        %v6849 = vadd.f32 %v6540, %v6785
        %v6850 = vadd.f32 %v6396, %v6786
        %v6851 = vadd.f32 %v6445, %v6787
        %v6852 = vadd.f32 %v6494, %v6788
        %v6853 = vadd.f32 %v6543, %v6789
        %v6854 = vadd.f32 %v6398, %v6790
        %v6855 = vadd.f32 %v6447, %v6791
        %v6856 = vadd.f32 %v6496, %v6792
        %v6857 = vadd.f32 %v6545, %v6793
        %v6858 = vadd.f32 %v6401, %v6794
        %v6859 = vadd.f32 %v6450, %v6795
        %v6860 = vadd.f32 %v6499, %v6796
        %v6861 = vadd.f32 %v6548, %v6797
        %v6862 = vadd.f32 %v6403, %v6798
        %v6863 = vadd.f32 %v6452, %v6799
        %v6864 = vadd.f32 %v6501, %v6800
        %v6865 = vadd.f32 %v6550, %v6801
        %v6866 = vadd.f32 %v6406, %v6802
        %v6867 = vadd.f32 %v6455, %v6803
        %v6868 = vadd.f32 %v6504, %v6804
        %v6869 = vadd.f32 %v6553, %v6805
        %v6870 = vadd.f32 %v6408, %v6806
        %v6871 = vadd.f32 %v6457, %v6807
        %v6872 = vadd.f32 %v6506, %v6808
        %v6873 = vadd.f32 %v6555, %v6809
        %v6874 = vadd.f32 %v6411, %v6810
        %v6875 = vadd.f32 %v6460, %v6811
        %v6876 = vadd.f32 %v6509, %v6812
        %v6877 = vadd.f32 %v6558, %v6813
        %v6878 = vadd.f32 %v6413, %v6814
        %v6879 = vadd.f32 %v6462, %v6815
        %v6880 = vadd.f32 %v6511, %v6816
        %v6881 = vadd.f32 %v6560, %v6817
        %v6882 = vmul.f32 %v6818, 0.7978846
        %v6883 = vmul.f32 %v6819, 0.7978846
        %v6884 = vmul.f32 %v6820, 0.7978846
        %v6885 = vmul.f32 %v6821, 0.7978846
        %v6886 = vmul.f32 %v6822, 0.7978846
        %v6887 = vmul.f32 %v6823, 0.7978846
        %v6888 = vmul.f32 %v6824, 0.7978846
        %v6889 = vmul.f32 %v6825, 0.7978846
        %v6890 = vmul.f32 %v6826, 0.7978846
        %v6891 = vmul.f32 %v6827, 0.7978846
        %v6892 = vmul.f32 %v6828, 0.7978846
        %v6893 = vmul.f32 %v6829, 0.7978846
        %v6894 = vmul.f32 %v6830, 0.7978846
        %v6895 = vmul.f32 %v6831, 0.7978846
        %v6896 = vmul.f32 %v6832, 0.7978846
        %v6897 = vmul.f32 %v6833, 0.7978846
        %v6898 = vmul.f32 %v6834, 0.7978846
        %v6899 = vmul.f32 %v6835, 0.7978846
        %v6900 = vmul.f32 %v6836, 0.7978846
        %v6901 = vmul.f32 %v6837, 0.7978846
        %v6902 = vmul.f32 %v6838, 0.7978846
        %v6903 = vmul.f32 %v6839, 0.7978846
        %v6904 = vmul.f32 %v6840, 0.7978846
        %v6905 = vmul.f32 %v6841, 0.7978846
        %v6906 = vmul.f32 %v6842, 0.7978846
        %v6907 = vmul.f32 %v6843, 0.7978846
        %v6908 = vmul.f32 %v6844, 0.7978846
        %v6909 = vmul.f32 %v6845, 0.7978846
        %v6910 = vmul.f32 %v6846, 0.7978846
        %v6911 = vmul.f32 %v6847, 0.7978846
        %v6912 = vmul.f32 %v6848, 0.7978846
        %v6913 = vmul.f32 %v6849, 0.7978846
        %v6914 = vmul.f32 %v6850, 0.7978846
        %v6915 = vmul.f32 %v6851, 0.7978846
        %v6916 = vmul.f32 %v6852, 0.7978846
        %v6917 = vmul.f32 %v6853, 0.7978846
        %v6918 = vmul.f32 %v6854, 0.7978846
        %v6919 = vmul.f32 %v6855, 0.7978846
        %v6920 = vmul.f32 %v6856, 0.7978846
        %v6921 = vmul.f32 %v6857, 0.7978846
        %v6922 = vmul.f32 %v6858, 0.7978846
        %v6923 = vmul.f32 %v6859, 0.7978846
        %v6924 = vmul.f32 %v6860, 0.7978846
        %v6925 = vmul.f32 %v6861, 0.7978846
        %v6926 = vmul.f32 %v6862, 0.7978846
        %v6927 = vmul.f32 %v6863, 0.7978846
        %v6928 = vmul.f32 %v6864, 0.7978846
        %v6929 = vmul.f32 %v6865, 0.7978846
        %v6930 = vmul.f32 %v6866, 0.7978846
        %v6931 = vmul.f32 %v6867, 0.7978846
        %v6932 = vmul.f32 %v6868, 0.7978846
        %v6933 = vmul.f32 %v6869, 0.7978846
        %v6934 = vmul.f32 %v6870, 0.7978846
        %v6935 = vmul.f32 %v6871, 0.7978846
        %v6936 = vmul.f32 %v6872, 0.7978846
        %v6937 = vmul.f32 %v6873, 0.7978846
        %v6938 = vmul.f32 %v6874, 0.7978846
        %v6939 = vmul.f32 %v6875, 0.7978846
        %v6940 = vmul.f32 %v6876, 0.7978846
        %v6941 = vmul.f32 %v6877, 0.7978846
        %v6942 = vmul.f32 %v6878, 0.7978846
        %v6943 = vmul.f32 %v6879, 0.7978846
        %v6944 = vmul.f32 %v6880, 0.7978846
        %v6945 = vmul.f32 %v6881, 0.7978846
        %v6946 = vtanh.pop %v6882
        %v6947 = vtanh.pop %v6883
        %v6948 = vtanh.pop %v6884
        %v6949 = vtanh.pop %v6885
        %v6950 = vtanh.pop %v6886
        %v6951 = vtanh.pop %v6887
        %v6952 = vtanh.pop %v6888
        %v6953 = vtanh.pop %v6889
        %v6954 = vtanh.pop %v6890
        %v6955 = vtanh.pop %v6891
        %v6956 = vtanh.pop %v6892
        %v6957 = vtanh.pop %v6893
        %v6958 = vtanh.pop %v6894
        %v6959 = vtanh.pop %v6895
        %v6960 = vtanh.pop %v6896
        %v6961 = vtanh.pop %v6897
        %v6962 = vtanh.pop %v6898
        %v6963 = vtanh.pop %v6899
        %v6964 = vtanh.pop %v6900
        %v6965 = vtanh.pop %v6901
        %v6966 = vtanh.pop %v6902
        %v6967 = vtanh.pop %v6903
        %v6968 = vtanh.pop %v6904
        %v6969 = vtanh.pop %v6905
        %v6970 = vtanh.pop %v6906
        %v6971 = vtanh.pop %v6907
        %v6972 = vtanh.pop %v6908
        %v6973 = vtanh.pop %v6909
        %v6974 = vtanh.pop %v6910
        %v6975 = vtanh.pop %v6911
        %v6976 = vtanh.pop %v6912
        %v6977 = vtanh.pop %v6913
        %v6978 = vtanh.pop %v6914
        %v6979 = vtanh.pop %v6915
        %v6980 = vtanh.pop %v6916
        %v6981 = vtanh.pop %v6917
        %v6982 = vtanh.pop %v6918
        %v6983 = vtanh.pop %v6919
        %v6984 = vtanh.pop %v6920
        %v6985 = vtanh.pop %v6921
        %v6986 = vtanh.pop %v6922
        %v6987 = vtanh.pop %v6923
        %v6988 = vtanh.pop %v6924
        %v6989 = vtanh.pop %v6925
        %v6990 = vtanh.pop %v6926
        %v6991 = vtanh.pop %v6927
        %v6992 = vtanh.pop %v6928
        %v6993 = vtanh.pop %v6929
        %v6994 = vtanh.pop %v6930
        %v6995 = vtanh.pop %v6931
        %v6996 = vtanh.pop %v6932
        %v6997 = vtanh.pop %v6933
        %v6998 = vtanh.pop %v6934
        %v6999 = vtanh.pop %v6935
        %v7000 = vtanh.pop %v6936
        %v7001 = vtanh.pop %v6937
        %v7002 = vtanh.pop %v6938
        %v7003 = vtanh.pop %v6939
        %v7004 = vtanh.pop %v6940
        %v7005 = vtanh.pop %v6941
        %v7006 = vtanh.pop %v6942
        %v7007 = vtanh.pop %v6943
        %v7008 = vtanh.pop %v6944
        %v7009 = vtanh.pop %v6945
        %v7010 = vadd.f32 %v6946, 1.0
        %v7011 = vadd.f32 %v6947, 1.0
        %v7012 = vadd.f32 %v6948, 1.0
        %v7013 = vadd.f32 %v6949, 1.0
        %v7014 = vadd.f32 %v6950, 1.0
        %v7015 = vadd.f32 %v6951, 1.0
        %v7016 = vadd.f32 %v6952, 1.0
        %v7017 = vadd.f32 %v6953, 1.0
        %v7018 = vadd.f32 %v6954, 1.0
        %v7019 = vadd.f32 %v6955, 1.0
        %v7020 = vadd.f32 %v6956, 1.0
        %v7021 = vadd.f32 %v6957, 1.0
        %v7022 = vadd.f32 %v6958, 1.0
        %v7023 = vadd.f32 %v6959, 1.0
        %v7024 = vadd.f32 %v6960, 1.0
        %v7025 = vadd.f32 %v6961, 1.0
        %v7026 = vadd.f32 %v6962, 1.0
        %v7027 = vadd.f32 %v6963, 1.0
        %v7028 = vadd.f32 %v6964, 1.0
        %v7029 = vadd.f32 %v6965, 1.0
        %v7030 = vadd.f32 %v6966, 1.0
        %v7031 = vadd.f32 %v6967, 1.0
        %v7032 = vadd.f32 %v6968, 1.0
        %v7033 = vadd.f32 %v6969, 1.0
        %v7034 = vadd.f32 %v6970, 1.0
        %v7035 = vadd.f32 %v6971, 1.0
        %v7036 = vadd.f32 %v6972, 1.0
        %v7037 = vadd.f32 %v6973, 1.0
        %v7038 = vadd.f32 %v6974, 1.0
        %v7039 = vadd.f32 %v6975, 1.0
        %v7040 = vadd.f32 %v6976, 1.0
        %v7041 = vadd.f32 %v6977, 1.0
        %v7042 = vadd.f32 %v6978, 1.0
        %v7043 = vadd.f32 %v6979, 1.0
        %v7044 = vadd.f32 %v6980, 1.0
        %v7045 = vadd.f32 %v6981, 1.0
        %v7046 = vadd.f32 %v6982, 1.0
        %v7047 = vadd.f32 %v6983, 1.0
        %v7048 = vadd.f32 %v6984, 1.0
        %v7049 = vadd.f32 %v6985, 1.0
        %v7050 = vadd.f32 %v6986, 1.0
        %v7051 = vadd.f32 %v6987, 1.0
        %v7052 = vadd.f32 %v6988, 1.0
        %v7053 = vadd.f32 %v6989, 1.0
        %v7054 = vadd.f32 %v6990, 1.0
        %v7055 = vadd.f32 %v6991, 1.0
        %v7056 = vadd.f32 %v6992, 1.0
        %v7057 = vadd.f32 %v6993, 1.0
        %v7058 = vadd.f32 %v6994, 1.0
        %v7059 = vadd.f32 %v6995, 1.0
        %v7060 = vadd.f32 %v6996, 1.0
        %v7061 = vadd.f32 %v6997, 1.0
        %v7062 = vadd.f32 %v6998, 1.0
        %v7063 = vadd.f32 %v6999, 1.0
        %v7064 = vadd.f32 %v7000, 1.0
        %v7065 = vadd.f32 %v7001, 1.0
        %v7066 = vadd.f32 %v7002, 1.0
        %v7067 = vadd.f32 %v7003, 1.0
        %v7068 = vadd.f32 %v7004, 1.0
        %v7069 = vadd.f32 %v7005, 1.0
        %v7070 = vadd.f32 %v7006, 1.0
        %v7071 = vadd.f32 %v7007, 1.0
        %v7072 = vadd.f32 %v7008, 1.0
        %v7073 = vadd.f32 %v7009, 1.0
        %v7074 = vmul.f32 %v6562, %v7010
        %v7075 = vmul.f32 %v6563, %v7011
        %v7076 = vmul.f32 %v6564, %v7012
        %v7077 = vmul.f32 %v6565, %v7013
        %v7078 = vmul.f32 %v6566, %v7014
        %v7079 = vmul.f32 %v6567, %v7015
        %v7080 = vmul.f32 %v6568, %v7016
        %v7081 = vmul.f32 %v6569, %v7017
        %v7082 = vmul.f32 %v6570, %v7018
        %v7083 = vmul.f32 %v6571, %v7019
        %v7084 = vmul.f32 %v6572, %v7020
        %v7085 = vmul.f32 %v6573, %v7021
        %v7086 = vmul.f32 %v6574, %v7022
        %v7087 = vmul.f32 %v6575, %v7023
        %v7088 = vmul.f32 %v6576, %v7024
        %v7089 = vmul.f32 %v6577, %v7025
        %v7090 = vmul.f32 %v6578, %v7026
        %v7091 = vmul.f32 %v6579, %v7027
        %v7092 = vmul.f32 %v6580, %v7028
        %v7093 = vmul.f32 %v6581, %v7029
        %v7094 = vmul.f32 %v6582, %v7030
        %v7095 = vmul.f32 %v6583, %v7031
        %v7096 = vmul.f32 %v6584, %v7032
        %v7097 = vmul.f32 %v6585, %v7033
        %v7098 = vmul.f32 %v6586, %v7034
        %v7099 = vmul.f32 %v6587, %v7035
        %v7100 = vmul.f32 %v6588, %v7036
        %v7101 = vmul.f32 %v6589, %v7037
        %v7102 = vmul.f32 %v6590, %v7038
        %v7103 = vmul.f32 %v6591, %v7039
        %v7104 = vmul.f32 %v6592, %v7040
        %v7105 = vmul.f32 %v6593, %v7041
        %v7106 = vmul.f32 %v6594, %v7042
        %v7107 = vmul.f32 %v6595, %v7043
        %v7108 = vmul.f32 %v6596, %v7044
        %v7109 = vmul.f32 %v6597, %v7045
        %v7110 = vmul.f32 %v6598, %v7046
        %v7111 = vmul.f32 %v6599, %v7047
        %v7112 = vmul.f32 %v6600, %v7048
        %v7113 = vmul.f32 %v6601, %v7049
        %v7114 = vmul.f32 %v6602, %v7050
        %v7115 = vmul.f32 %v6603, %v7051
        %v7116 = vmul.f32 %v6604, %v7052
        %v7117 = vmul.f32 %v6605, %v7053
        %v7118 = vmul.f32 %v6606, %v7054
        %v7119 = vmul.f32 %v6607, %v7055
        %v7120 = vmul.f32 %v6608, %v7056
        %v7121 = vmul.f32 %v6609, %v7057
        %v7122 = vmul.f32 %v6610, %v7058
        %v7123 = vmul.f32 %v6611, %v7059
        %v7124 = vmul.f32 %v6612, %v7060
        %v7125 = vmul.f32 %v6613, %v7061
        %v7126 = vmul.f32 %v6614, %v7062
        %v7127 = vmul.f32 %v6615, %v7063
        %v7128 = vmul.f32 %v6616, %v7064
        %v7129 = vmul.f32 %v6617, %v7065
        %v7130 = vmul.f32 %v6618, %v7066
        %v7131 = vmul.f32 %v6619, %v7067
        %v7132 = vmul.f32 %v6620, %v7068
        %v7133 = vmul.f32 %v6621, %v7069
        %v7134 = vmul.f32 %v6622, %v7070
        %v7135 = vmul.f32 %v6623, %v7071
        %v7136 = vmul.f32 %v6624, %v7072
        %v7137 = vmul.f32 %v6625, %v7073
        %v7138 = vpack.c.bf16 %v7078, %v7074
        %v7139 = vpack.c.bf16 %v7079, %v7075
        %v7140 = vpack.c.bf16 %v7080, %v7076
        %v7141 = vpack.c.bf16 %v7081, %v7077
        %v7142 = vpack.c.bf16 %v7086, %v7082
        %v7143 = vpack.c.bf16 %v7087, %v7083
        %v7144 = vpack.c.bf16 %v7088, %v7084
        %v7145 = vpack.c.bf16 %v7089, %v7085
        %v7146 = vpack.c.bf16 %v7094, %v7090
        %v7147 = vpack.c.bf16 %v7095, %v7091
        %v7148 = vpack.c.bf16 %v7096, %v7092
        %v7149 = vpack.c.bf16 %v7097, %v7093
        %v7150 = vpack.c.bf16 %v7102, %v7098
        %v7151 = vpack.c.bf16 %v7103, %v7099
        %v7152 = vpack.c.bf16 %v7104, %v7100
        %v7153 = vpack.c.bf16 %v7105, %v7101
        %v7154 = vpack.c.bf16 %v7110, %v7106
        %v7155 = vpack.c.bf16 %v7111, %v7107
        %v7156 = vpack.c.bf16 %v7112, %v7108
        %v7157 = vpack.c.bf16 %v7113, %v7109
        %v7158 = vpack.c.bf16 %v7118, %v7114
        %v7159 = vpack.c.bf16 %v7119, %v7115
        %v7160 = vpack.c.bf16 %v7120, %v7116
        %v7161 = vpack.c.bf16 %v7121, %v7117
        %v7162 = vpack.c.bf16 %v7126, %v7122
        %v7163 = vpack.c.bf16 %v7127, %v7123
        %v7164 = vpack.c.bf16 %v7128, %v7124
        %v7165 = vpack.c.bf16 %v7129, %v7125
        %v7166 = vpack.c.bf16 %v7134, %v7130
        %v7167 = vpack.c.bf16 %v7135, %v7131
        %v7168 = vpack.c.bf16 %v7136, %v7132
        %v7169 = vpack.c.bf16 %v7137, %v7133
        %s7170 = scalar_lea.vmem %s12, 256
        %v7171 = vld [vmem:[%s7170] sm:$0xf]
        %v7172 = vld [vmem:[%s7170 + $0x4] sm:$0xf]
        %v7173 = vld [vmem:[%s7170 + $0x8] sm:$0xf]
        %v7174 = vld [vmem:[%s7170 + $0xc] sm:$0xf]
        %v7175 = vld [vmem:[%s7170 + $0x10] sm:$0xf]
        %v7176 = vld [vmem:[%s7170 + $0x14] sm:$0xf]
        %v7177 = vld [vmem:[%s7170 + $0x18] sm:$0xf]
        %v7178 = vld [vmem:[%s7170 + $0x1c] sm:$0xf]
        %v7179 = vld [vmem:[%s7170 + $0x20] sm:$0xf]
        %v7180 = vld [vmem:[%s7170 + $0x24] sm:$0xf]
        %v7181 = vld [vmem:[%s7170 + $0x28] sm:$0xf]
        %v7182 = vld [vmem:[%s7170 + $0x2c] sm:$0xf]
        %v7183 = vld [vmem:[%s7170 + $0x30] sm:$0xf]
        %v7184 = vld [vmem:[%s7170 + $0x34] sm:$0xf]
        %v7185 = vld [vmem:[%s7170 + $0x38] sm:$0xf]
        %v7186 = vld [vmem:[%s7170 + $0x3c] sm:$0xf]
        %v7187 = vld [vmem:[%s7170 + $0x40] sm:$0xf]
        %v7188 = vld [vmem:[%s7170 + $0x44] sm:$0xf]
        %v7189 = vld [vmem:[%s7170 + $0x48] sm:$0xf]
        %v7190 = vld [vmem:[%s7170 + $0x4c] sm:$0xf]
        %v7191 = vld [vmem:[%s7170 + $0x50] sm:$0xf]
        %v7192 = vld [vmem:[%s7170 + $0x54] sm:$0xf]
        %v7193 = vld [vmem:[%s7170 + $0x58] sm:$0xf]
        %v7194 = vld [vmem:[%s7170 + $0x5c] sm:$0xf]
        %v7195 = vld [vmem:[%s7170 + $0x60] sm:$0xf]
        %v7196 = vld [vmem:[%s7170 + $0x64] sm:$0xf]
        %v7197 = vld [vmem:[%s7170 + $0x68] sm:$0xf]
        %v7198 = vld [vmem:[%s7170 + $0x6c] sm:$0xf]
        %v7199 = vld [vmem:[%s7170 + $0x70] sm:$0xf]
        %v7200 = vld [vmem:[%s7170 + $0x74] sm:$0xf]
        %v7201 = vld [vmem:[%s7170 + $0x78] sm:$0xf]
        %v7202 = vld [vmem:[%s7170 + $0x7c] sm:$0xf]
        %v7203 = vld [vmem:[%s7170 + $0x80] sm:$0xf]
        %v7204 = vld [vmem:[%s7170 + $0x84] sm:$0xf]
        %v7205 = vld [vmem:[%s7170 + $0x88] sm:$0xf]
        %v7206 = vld [vmem:[%s7170 + $0x8c] sm:$0xf]
        %v7207 = vld [vmem:[%s7170 + $0x90] sm:$0xf]
        %v7208 = vld [vmem:[%s7170 + $0x94] sm:$0xf]
        %v7209 = vld [vmem:[%s7170 + $0x98] sm:$0xf]
        %v7210 = vld [vmem:[%s7170 + $0x9c] sm:$0xf]
        %v7211 = vld [vmem:[%s7170 + $0xa0] sm:$0xf]
        %v7212 = vld [vmem:[%s7170 + $0xa4] sm:$0xf]
        %v7213 = vld [vmem:[%s7170 + $0xa8] sm:$0xf]
        %v7214 = vld [vmem:[%s7170 + $0xac] sm:$0xf]
        %v7215 = vld [vmem:[%s7170 + $0xb0] sm:$0xf]
        %v7216 = vld [vmem:[%s7170 + $0xb4] sm:$0xf]
        %v7217 = vld [vmem:[%s7170 + $0xb8] sm:$0xf]
        %v7218 = vld [vmem:[%s7170 + $0xbc] sm:$0xf]
        %v7219 = vld [vmem:[%s7170 + $0xc0] sm:$0xf]
        %v7220 = vld [vmem:[%s7170 + $0xc4] sm:$0xf]
        %v7221 = vld [vmem:[%s7170 + $0xc8] sm:$0xf]
        %v7222 = vld [vmem:[%s7170 + $0xcc] sm:$0xf]
        %v7223 = vld [vmem:[%s7170 + $0xd0] sm:$0xf]
        %v7224 = vld [vmem:[%s7170 + $0xd4] sm:$0xf]
        %v7225 = vld [vmem:[%s7170 + $0xd8] sm:$0xf]
        %v7226 = vld [vmem:[%s7170 + $0xdc] sm:$0xf]
        %v7227 = vld [vmem:[%s7170 + $0xe0] sm:$0xf]
        %v7228 = vld [vmem:[%s7170 + $0xe4] sm:$0xf]
        %v7229 = vld [vmem:[%s7170 + $0xe8] sm:$0xf]
        %v7230 = vld [vmem:[%s7170 + $0xec] sm:$0xf]
        %v7231 = vld [vmem:[%s7170 + $0xf0] sm:$0xf]
        %v7232 = vld [vmem:[%s7170 + $0xf4] sm:$0xf]
        %v7233 = vld [vmem:[%s7170 + $0xf8] sm:$0xf]
        %v7234 = vld [vmem:[%s7170 + $0xfc] sm:$0xf]
        %s7235 = scalar_lea.vmem %s13, 1
        %v7236 = vld [vmem:[%s7235] sm:$0x1]
        %v7238 = vperm.slane %v7236, 0
        %v7304 = vunpack.c.l.b16 %v7171
        %v7305 = vunpack.c.l.b16 %v7172
        %v7306 = vunpack.c.l.b16 %v7173
        %v7307 = vunpack.c.l.b16 %v7174
        %v7308 = vunpack.c.l.b16 %v7175
        %v7309 = vunpack.c.l.b16 %v7176
        %v7310 = vunpack.c.l.b16 %v7177
        %v7311 = vunpack.c.l.b16 %v7178
        %v7312 = vunpack.c.l.b16 %v7179
        %v7313 = vunpack.c.l.b16 %v7180
        %v7314 = vunpack.c.l.b16 %v7181
        %v7315 = vunpack.c.l.b16 %v7182
        %v7316 = vunpack.c.l.b16 %v7183
        %v7317 = vunpack.c.l.b16 %v7184
        %v7318 = vunpack.c.l.b16 %v7185
        %v7319 = vunpack.c.l.b16 %v7186
        %v7320 = vunpack.c.l.b16 %v7187
        %v7321 = vunpack.c.l.b16 %v7188
        %v7322 = vunpack.c.l.b16 %v7189
        %v7323 = vunpack.c.l.b16 %v7190
        %v7324 = vunpack.c.l.b16 %v7191
        %v7325 = vunpack.c.l.b16 %v7192
        %v7326 = vunpack.c.l.b16 %v7193
        %v7327 = vunpack.c.l.b16 %v7194
        %v7328 = vunpack.c.l.b16 %v7195
        %v7329 = vunpack.c.l.b16 %v7196
        %v7330 = vunpack.c.l.b16 %v7197
        %v7331 = vunpack.c.l.b16 %v7198
        %v7332 = vunpack.c.l.b16 %v7199
        %v7333 = vunpack.c.l.b16 %v7200
        %v7334 = vunpack.c.l.b16 %v7201
        %v7335 = vunpack.c.l.b16 %v7202
        %v7336 = vunpack.c.l.b16 %v7203
        %v7337 = vunpack.c.l.b16 %v7204
        %v7338 = vunpack.c.l.b16 %v7205
        %v7339 = vunpack.c.l.b16 %v7206
        %v7340 = vunpack.c.l.b16 %v7207
        %v7341 = vunpack.c.l.b16 %v7208
        %v7342 = vunpack.c.l.b16 %v7209
        %v7343 = vunpack.c.l.b16 %v7210
        %v7344 = vunpack.c.l.b16 %v7211
        %v7345 = vunpack.c.l.b16 %v7212
        %v7346 = vunpack.c.l.b16 %v7213
        %v7347 = vunpack.c.l.b16 %v7214
        %v7348 = vunpack.c.l.b16 %v7215
        %v7349 = vunpack.c.l.b16 %v7216
        %v7350 = vunpack.c.l.b16 %v7217
        %v7351 = vunpack.c.l.b16 %v7218
        %v7352 = vunpack.c.l.b16 %v7219
        %v7353 = vunpack.c.l.b16 %v7220
        %v7354 = vunpack.c.l.b16 %v7221
        %v7355 = vunpack.c.l.b16 %v7222
        %v7356 = vunpack.c.l.b16 %v7223
        %v7357 = vunpack.c.l.b16 %v7224
        %v7358 = vunpack.c.l.b16 %v7225
        %v7359 = vunpack.c.l.b16 %v7226
        %v7360 = vunpack.c.l.b16 %v7227
        %v7361 = vunpack.c.l.b16 %v7228
        %v7362 = vunpack.c.l.b16 %v7229
        %v7363 = vunpack.c.l.b16 %v7230
        %v7364 = vunpack.c.l.b16 %v7231
        %v7365 = vunpack.c.l.b16 %v7232
        %v7366 = vunpack.c.l.b16 %v7233
        %v7367 = vunpack.c.l.b16 %v7234
        %v7368 = vpack.c.b16 %v7305, %v7304
        %v7369 = vpack.c.b16 %v7307, %v7306
        %v7370 = vpack.c.b16 %v7309, %v7308
        %v7371 = vpack.c.b16 %v7311, %v7310
        %v7372 = vpack.c.b16 %v7313, %v7312
        %v7373 = vpack.c.b16 %v7315, %v7314
        %v7374 = vpack.c.b16 %v7317, %v7316
        %v7375 = vpack.c.b16 %v7319, %v7318
        %v7376 = vpack.c.b16 %v7321, %v7320
        %v7377 = vpack.c.b16 %v7323, %v7322
        %v7378 = vpack.c.b16 %v7325, %v7324
        %v7379 = vpack.c.b16 %v7327, %v7326
        %v7380 = vpack.c.b16 %v7329, %v7328
        %v7381 = vpack.c.b16 %v7331, %v7330
        %v7382 = vpack.c.b16 %v7333, %v7332
        %v7383 = vpack.c.b16 %v7335, %v7334
        %v7384 = vpack.c.b16 %v7337, %v7336
        %v7385 = vpack.c.b16 %v7339, %v7338
        %v7386 = vpack.c.b16 %v7341, %v7340
        %v7387 = vpack.c.b16 %v7343, %v7342
        %v7388 = vpack.c.b16 %v7345, %v7344
        %v7389 = vpack.c.b16 %v7347, %v7346
        %v7390 = vpack.c.b16 %v7349, %v7348
        %v7391 = vpack.c.b16 %v7351, %v7350
        %v7392 = vpack.c.b16 %v7353, %v7352
        %v7393 = vpack.c.b16 %v7355, %v7354
        %v7394 = vpack.c.b16 %v7357, %v7356
        %v7395 = vpack.c.b16 %v7359, %v7358
        %v7396 = vpack.c.b16 %v7361, %v7360
        %v7397 = vpack.c.b16 %v7363, %v7362
        %v7398 = vpack.c.b16 %v7365, %v7364
        %v7399 = vpack.c.b16 %v7367, %v7366
        %7432 = vmatpush.bf16.msra.mxu0 %v7375
        %7433 = vmatpush.bf16.msra.mxu0 %v7374
        %7434 = vmatpush.bf16.msra.mxu0 %v7373
        %7435 = vmatpush.bf16.msra.mxu0 %v7372
        %7436 = vmatpush.bf16.msra.mxu0 %v7371
        %7437 = vmatpush.bf16.msra.mxu0 %v7370
        %7438 = vmatpush.bf16.msra.mxu0 %v7369
        %7439 = vmatpush.bf16.msra.mxu0 %v7368
        %7440 = vmatmul.bf16.gmra.mxu0 %v7138
        %v7441 = vpop.f32.mrf.mxu0
        %v7442 = vadd.f32 %v7238, %v7441
        %v7443 = vpop.f32.mrf.mxu0
        %7444 = vmatmul.bf16.gmra.mxu0 %v7142
        %v7445 = vpop.f32.mrf.mxu0
        %v7446 = vpop.f32.mrf.mxu0
        %7447 = vmatmul.bf16.gmra.mxu0 %v7146
        %v7448 = vpop.f32.mrf.mxu0
        %v7449 = vpop.f32.mrf.mxu0
        %7450 = vmatmul.bf16.gmra.mxu0 %v7150
        %v7451 = vpop.f32.mrf.mxu0
        %v7452 = vpop.f32.mrf.mxu0
        %7453 = vmatmul.bf16.gmra.mxu0 %v7154
        %v7454 = vpop.f32.mrf.mxu0
        %v7455 = vpop.f32.mrf.mxu0
        %7456 = vmatmul.bf16.gmra.mxu0 %v7158
        %v7457 = vpop.f32.mrf.mxu0
        %v7458 = vpop.f32.mrf.mxu0
        %7459 = vmatmul.bf16.gmra.mxu0 %v7162
        %v7460 = vpop.f32.mrf.mxu0
        %v7461 = vpop.f32.mrf.mxu0
        %7462 = vmatmul.bf16.gmra.mxu0 %v7166
        %v7463 = vpop.f32.mrf.mxu0
        %v7464 = vpop.f32.mrf.mxu0
        %7465 = vdwg.mxu0
        %7466 = vmatpush.bf16.msra.mxu0 %v7383
        %7467 = vmatpush.bf16.msra.mxu0 %v7382
        %7468 = vmatpush.bf16.msra.mxu0 %v7381
        %7469 = vmatpush.bf16.msra.mxu0 %v7380
        %7470 = vmatpush.bf16.msra.mxu0 %v7379
        %7471 = vmatpush.bf16.msra.mxu0 %v7378
        %7472 = vmatpush.bf16.msra.mxu0 %v7377
        %7473 = vmatpush.bf16.msra.mxu0 %v7376
        %7474 = vmatmul.bf16.gmra.mxu0 %v7139
        %v7475 = vpop.f32.mrf.mxu0
        %v7476 = vadd.f32 %v7442, %v7475
        %v7477 = vpop.f32.mrf.mxu0
        %7478 = vmatmul.bf16.gmra.mxu0 %v7143
        %v7479 = vpop.f32.mrf.mxu0
        %v7480 = vpop.f32.mrf.mxu0
        %7481 = vmatmul.bf16.gmra.mxu0 %v7147
        %v7482 = vpop.f32.mrf.mxu0
        %v7483 = vpop.f32.mrf.mxu0
        %7484 = vmatmul.bf16.gmra.mxu0 %v7151
        %v7485 = vpop.f32.mrf.mxu0
        %v7486 = vpop.f32.mrf.mxu0
        %7487 = vmatmul.bf16.gmra.mxu0 %v7155
        %v7488 = vpop.f32.mrf.mxu0
        %v7489 = vpop.f32.mrf.mxu0
        %7490 = vmatmul.bf16.gmra.mxu0 %v7159
        %v7491 = vpop.f32.mrf.mxu0
        %v7492 = vpop.f32.mrf.mxu0
        %7493 = vmatmul.bf16.gmra.mxu0 %v7163
        %v7494 = vpop.f32.mrf.mxu0
        %v7495 = vpop.f32.mrf.mxu0
        %7496 = vmatmul.bf16.gmra.mxu0 %v7167
        %v7497 = vpop.f32.mrf.mxu0
        %v7498 = vpop.f32.mrf.mxu0
        %7499 = vdwg.mxu0
        %7500 = vmatpush.bf16.msra.mxu0 %v7391
        %7501 = vmatpush.bf16.msra.mxu0 %v7390
        %7502 = vmatpush.bf16.msra.mxu0 %v7389
        %7503 = vmatpush.bf16.msra.mxu0 %v7388
        %7504 = vmatpush.bf16.msra.mxu0 %v7387
        %7505 = vmatpush.bf16.msra.mxu0 %v7386
        %7506 = vmatpush.bf16.msra.mxu0 %v7385
        %7507 = vmatpush.bf16.msra.mxu0 %v7384
        %7508 = vmatmul.bf16.gmra.mxu0 %v7140
        %v7509 = vpop.f32.mrf.mxu0
        %v7510 = vadd.f32 %v7476, %v7509
        %v7511 = vpop.f32.mrf.mxu0
        %7512 = vmatmul.bf16.gmra.mxu0 %v7144
        %v7513 = vpop.f32.mrf.mxu0
        %v7514 = vpop.f32.mrf.mxu0
        %7515 = vmatmul.bf16.gmra.mxu0 %v7148
        %v7516 = vpop.f32.mrf.mxu0
        %v7517 = vpop.f32.mrf.mxu0
        %7518 = vmatmul.bf16.gmra.mxu0 %v7152
        %v7519 = vpop.f32.mrf.mxu0
        %v7520 = vpop.f32.mrf.mxu0
        %7521 = vmatmul.bf16.gmra.mxu0 %v7156
        %v7522 = vpop.f32.mrf.mxu0
        %v7523 = vpop.f32.mrf.mxu0
        %7524 = vmatmul.bf16.gmra.mxu0 %v7160
        %v7525 = vpop.f32.mrf.mxu0
        %v7526 = vpop.f32.mrf.mxu0
        %7527 = vmatmul.bf16.gmra.mxu0 %v7164
        %v7528 = vpop.f32.mrf.mxu0
        %v7529 = vpop.f32.mrf.mxu0
        %7530 = vmatmul.bf16.gmra.mxu0 %v7168
        %v7531 = vpop.f32.mrf.mxu0
        %v7532 = vpop.f32.mrf.mxu0
        %7533 = vdwg.mxu0
        %7534 = vmatpush.bf16.msra.mxu0 %v7399
        %7535 = vmatpush.bf16.msra.mxu0 %v7398
        %7536 = vmatpush.bf16.msra.mxu0 %v7397
        %7537 = vmatpush.bf16.msra.mxu0 %v7396
        %7538 = vmatpush.bf16.msra.mxu0 %v7395
        %7539 = vmatpush.bf16.msra.mxu0 %v7394
        %7540 = vmatpush.bf16.msra.mxu0 %v7393
        %7541 = vmatpush.bf16.msra.mxu0 %v7392
        %7542 = vmatmul.bf16.gmra.mxu0 %v7141
        %v7543 = vpop.f32.mrf.mxu0
        %v7544 = vadd.f32 %v7510, %v7543
        %v7545 = vpop.f32.mrf.mxu0
        %7546 = vmatmul.bf16.gmra.mxu0 %v7145
        %v7547 = vpop.f32.mrf.mxu0
        %v7548 = vpop.f32.mrf.mxu0
        %7549 = vmatmul.bf16.gmra.mxu0 %v7149
        %v7550 = vpop.f32.mrf.mxu0
        %v7551 = vpop.f32.mrf.mxu0
        %7552 = vmatmul.bf16.gmra.mxu0 %v7153
        %v7553 = vpop.f32.mrf.mxu0
        %v7554 = vpop.f32.mrf.mxu0
        %7555 = vmatmul.bf16.gmra.mxu0 %v7157
        %v7556 = vpop.f32.mrf.mxu0
        %v7557 = vpop.f32.mrf.mxu0
        %7558 = vmatmul.bf16.gmra.mxu0 %v7161
        %v7559 = vpop.f32.mrf.mxu0
        %v7560 = vpop.f32.mrf.mxu0
        %7561 = vmatmul.bf16.gmra.mxu0 %v7165
        %v7562 = vpop.f32.mrf.mxu0
        %v7563 = vpop.f32.mrf.mxu0
        %7564 = vmatmul.bf16.gmra.mxu0 %v7169
        %v7565 = vpop.f32.mrf.mxu0
        %v7566 = vpop.f32.mrf.mxu0
        %7567 = vdwg.mxu0
        %v7568 = vadd.f32 %v6138, %v7544
        %s7569 = scalar_lea.vmem %s14, 1
        %v7570 = vld [vmem:[%s7569] sm:$0x1]
        %s7571 = scalar_lea.vmem %s15, 1
        %v7572 = vld [vmem:[%s7571] sm:$0x1]
        %7573 = vadd.xlane.f32.xlu0 %v7568
        %v7574 = vpop.xlane.xlu0 %7573
        %v7575 = vmul.f32 %v7574, %v698
        %v7576 = vsub.f32 %v7568, %v7575
        %v7577 = vmul.f32 %v7576, %v7576
        %7578 = vadd.xlane.f32.xlu0 %v7577
        %v7579 = vpop.xlane.xlu0 %7578
        %v7580 = vmul.f32 %v7579, %v698
        %v7581 = vadd.f32 %v7580, 1e-05
        %v7582 = vrsqrt.pop %v7581
        %v7583 = vmul.f32 %v7582, %v7581
        %v7584 = vmul.f32 %v7583, %v7582
        %v7585 = vmul.f32 0.5, %v7584
        %v7586 = vsub.f32 1.5, %v7585
        %v7587 = vmul.f32 %v7582, %v7586
        %vm7588 = vweird.f32 %v7581
        %vm7589 = vweird.f32 %v7582
        %vm7590 = vmor %vm7588, %vm7589
        %v7591 = vsel %vm7590, %v7582, %v7587
        %v7592 = vmul.f32 %v7576, %v7591
        %v7594 = vperm.slane %v7570, 0
        %v7596 = vmul.f32 %v7592, %v7594
        %v7598 = vperm.slane %v7572, 0
        %v7600 = vadd.f32 %v7596, %v7598
        %v7601 = vpack.c.bf16 %v7600, %v7600
        %v7602 = vld [vmem:[%s16] sm:$0xf]
        %v7603 = vld [vmem:[%s16 + $0x4] sm:$0xf]
        %v7604 = vld [vmem:[%s16 + $0x8] sm:$0xf]
        %v7605 = vld [vmem:[%s16 + $0xc] sm:$0xf]
        %v7606 = vld [vmem:[%s16 + $0x10] sm:$0xf]
        %v7607 = vld [vmem:[%s16 + $0x14] sm:$0xf]
        %v7608 = vld [vmem:[%s16 + $0x18] sm:$0xf]
        %v7609 = vld [vmem:[%s16 + $0x1c] sm:$0xf]
        %v7610 = vld [vmem:[%s16 + $0x20] sm:$0xf]
        %v7611 = vld [vmem:[%s16 + $0x24] sm:$0xf]
        %v7612 = vld [vmem:[%s16 + $0x28] sm:$0xf]
        %v7613 = vld [vmem:[%s16 + $0x2c] sm:$0xf]
        %v7614 = vld [vmem:[%s16 + $0x30] sm:$0xf]
        %v7615 = vld [vmem:[%s16 + $0x34] sm:$0xf]
        %v7616 = vld [vmem:[%s16 + $0x38] sm:$0xf]
        %v7617 = vld [vmem:[%s16 + $0x3c] sm:$0xf]
        %v7618 = vld [vmem:[%s17] sm:$0x1]
        %v7620 = vperm.slane %v7618, 0
        %v7638 = vunpack.c.l.b16 %v7602
        %v7639 = vunpack.c.l.b16 %v7603
        %v7640 = vunpack.c.l.b16 %v7604
        %v7641 = vunpack.c.l.b16 %v7605
        %v7642 = vunpack.c.l.b16 %v7606
        %v7643 = vunpack.c.l.b16 %v7607
        %v7644 = vunpack.c.l.b16 %v7608
        %v7645 = vunpack.c.l.b16 %v7609
        %v7646 = vunpack.c.l.b16 %v7610
        %v7647 = vunpack.c.l.b16 %v7611
        %v7648 = vunpack.c.l.b16 %v7612
        %v7649 = vunpack.c.l.b16 %v7613
        %v7650 = vunpack.c.l.b16 %v7614
        %v7651 = vunpack.c.l.b16 %v7615
        %v7652 = vunpack.c.l.b16 %v7616
        %v7653 = vunpack.c.l.b16 %v7617
        %v7654 = vpack.c.b16 %v7639, %v7638
        %v7655 = vpack.c.b16 %v7641, %v7640
        %v7656 = vpack.c.b16 %v7643, %v7642
        %v7657 = vpack.c.b16 %v7645, %v7644
        %v7658 = vpack.c.b16 %v7647, %v7646
        %v7659 = vpack.c.b16 %v7649, %v7648
        %v7660 = vpack.c.b16 %v7651, %v7650
        %v7661 = vpack.c.b16 %v7653, %v7652
        %7670 = vmatpush.bf16.msra.mxu0 %v7661
        %7671 = vmatpush.bf16.msra.mxu0 %v7660
        %7672 = vmatpush.bf16.msra.mxu0 %v7659
        %7673 = vmatpush.bf16.msra.mxu0 %v7658
        %7674 = vmatpush.bf16.msra.mxu0 %v7657
        %7675 = vmatpush.bf16.msra.mxu0 %v7656
        %7676 = vmatpush.bf16.msra.mxu0 %v7655
        %7677 = vmatpush.bf16.msra.mxu0 %v7654
        %7678 = vmatmul.bf16.gmra.mxu0 %v7601
        %v7679 = vpop.f32.mrf.mxu0
        %v7680 = vadd.f32 %v7620, %v7679
        %v7681 = vpop.f32.mrf.mxu0
        %7682 = vdwg.mxu0
        %v7683 = vtanh.pop %v7680
        %v7684 = vpack.c.bf16 %v7683, %v7683
        %v7685 = vld [vmem:[%s18] sm:$0xf]
        %v7686 = vld [vmem:[%s18 + $0x4] sm:$0xf]
        %v7687 = vld [vmem:[%s18 + $0x8] sm:$0xf]
        %v7688 = vld [vmem:[%s18 + $0xc] sm:$0xf]
        %v7689 = vld [vmem:[%s18 + $0x10] sm:$0xf]
        %v7690 = vld [vmem:[%s18 + $0x14] sm:$0xf]
        %v7691 = vld [vmem:[%s18 + $0x18] sm:$0xf]
        %v7692 = vld [vmem:[%s18 + $0x1c] sm:$0xf]
        %v7693 = vld [vmem:[%s18 + $0x20] sm:$0xf]
        %v7694 = vld [vmem:[%s18 + $0x24] sm:$0xf]
        %v7695 = vld [vmem:[%s18 + $0x28] sm:$0xf]
        %v7696 = vld [vmem:[%s18 + $0x2c] sm:$0xf]
        %v7697 = vld [vmem:[%s18 + $0x30] sm:$0xf]
        %v7698 = vld [vmem:[%s18 + $0x34] sm:$0xf]
        %v7699 = vld [vmem:[%s18 + $0x38] sm:$0xf]
        %v7700 = vld [vmem:[%s18 + $0x3c] sm:$0xf]
        %v7701 = vld [vmem:[%s19] sm:$0x1]
        %v7703 = vperm.slane %v7701, 0
        %v7721 = vunpack.c.l.b16 %v7685
        %v7722 = vunpack.c.l.b16 %v7686
        %v7723 = vunpack.c.l.b16 %v7687
        %v7724 = vunpack.c.l.b16 %v7688
        %v7725 = vunpack.c.l.b16 %v7689
        %v7726 = vunpack.c.l.b16 %v7690
        %v7727 = vunpack.c.l.b16 %v7691
        %v7728 = vunpack.c.l.b16 %v7692
        %v7729 = vunpack.c.l.b16 %v7693
        %v7730 = vunpack.c.l.b16 %v7694
        %v7731 = vunpack.c.l.b16 %v7695
        %v7732 = vunpack.c.l.b16 %v7696
        %v7733 = vunpack.c.l.b16 %v7697
        %v7734 = vunpack.c.l.b16 %v7698
        %v7735 = vunpack.c.l.b16 %v7699
        %v7736 = vunpack.c.l.b16 %v7700
        %v7737 = vpack.c.b16 %v7722, %v7721
        %v7738 = vpack.c.b16 %v7724, %v7723
        %v7739 = vpack.c.b16 %v7726, %v7725
        %v7740 = vpack.c.b16 %v7728, %v7727
        %v7741 = vpack.c.b16 %v7730, %v7729
        %v7742 = vpack.c.b16 %v7732, %v7731
        %v7743 = vpack.c.b16 %v7734, %v7733
        %v7744 = vpack.c.b16 %v7736, %v7735
        %7753 = vmatpush.bf16.msra.mxu0 %v7744
        %7754 = vmatpush.bf16.msra.mxu0 %v7743
        %7755 = vmatpush.bf16.msra.mxu0 %v7742
        %7756 = vmatpush.bf16.msra.mxu0 %v7741
        %7757 = vmatpush.bf16.msra.mxu0 %v7740
        %7758 = vmatpush.bf16.msra.mxu0 %v7739
        %7759 = vmatpush.bf16.msra.mxu0 %v7738
        %7760 = vmatpush.bf16.msra.mxu0 %v7737
        %7761 = vmatmul.bf16.gmra.mxu0 %v7684
        %v7762 = vpop.f32.mrf.mxu0
        %v7763 = vadd.f32 %v7703, %v7762
        %v7764 = vpop.f32.mrf.mxu0
        %7765 = vdwg.mxu0
        %7766 = vst [vmem:[%s632] sm:$0x1] %v7763
        %s7767 = sand.u32 %s472, 1
        %s7768 = scalar_lea.sflag [#allocation4], %s7767
        %s7769 = sand.u32 %s472, 1
        %s7770 = scalar_lea.vmem [#allocation3], %s7769
        // Predicated region
        $region101: #{forward.1} parent=99 // pred_check
          %p7771 = pneg %p482
        $region102: #{forward.1} parent=99 // pred_check_branch
          %7773 = sbr.rel (%p7771) target = $region104
        $region103: #{forward.1} parent=99 // pred_region
          %7775 = vsyncadd %s7768, 0
          %s7776 = scalar_lea.hbm %s20, %s34
          %s7778 = sshll.u32 %s7770, 4
          %s7779 = int_to_ptr.vmem [resolvable:$true] %s7778
          %s7780 = sshll.u32 %s7776, 4
          %s7781 = int_to_ptr.hbm [resolvable:$true] %s7780
          %7783 = dma.vmem_to_hbm [thread:$0]  %s7779, 16, %s7781, %s7768
        $region104: #{forward.1} parent=99 // pred_fallthru
          _
      $region100: #{forward.1} parent=5 // pred_fallthru
        _
      %p7784 = scmp.le.s32.totalorder 2, %s29
      // Predicated region
      $region105: #{forward.1} parent=5 // pred_check
        %p7785 = pneg %p7784
      $region106: #{forward.1} parent=5 // pred_check_branch
        %7787 = sbr.rel (%p7785) target = $region108
      $region107: #{forward.1} parent=5 // pred_region
        %s7788 = ssub.s32 %s29, 2
        // Predicated region
        $region109: #{forward.1} parent=107 // pred_check
          %p7789 = pneg %p488
        $region110: #{forward.1} parent=107 // pred_check_branch
          %7791 = sbr.rel (%p7789) target = $region112
        $region111: #{forward.1} parent=107 // pred_region
          %s7792 = sand.u32 %s473, 1
          %s7793 = scalar_lea.sflag [#allocation4], %s7792
          %s7794 = sand.u32 %s473, 1
          %s7795 = scalar_lea.vmem [#allocation3], %s7794
          %7797 = dma.done %s7793, 16
        $region112: #{forward.1} parent=107 // pred_fallthru
          _
      $region108: #{forward.1} parent=5 // pred_fallthru
        _
    $region6: #{forward.1} parent=1 // loop_footer
      %s33 = sadd.s32 1, %s29
    $region7: #{forward.1} parent=1 // loop_footer_branch
      %28 = sbr.rel target = $region3
    $region8: #{forward.1} parent=1 // loop_exit
      _
    %7798 = vsyncpa [#allocation4], 1
    %s7799 = scalar_lea.sflag [#allocation4], 1
    %7800 = vsyncpa %s7799, 1

</llo_original>
